<compile_context>
chip_gen: v7x
topology: tpu7x:2x2x1
jax: 0.10.0
libtpu: 0.0.40
codegen_flags: <defaults>
</compile_context>

<pallas_src>
import functools

import jax
import jax.numpy as jnp
import numpy as np
from jax.experimental import pallas as pl
from jax.experimental.pallas import tpu as pltpu


# ---------------------------------------------------------------------------
# VMEM / block-size policy
# ---------------------------------------------------------------------------
_VMEM_LIMIT_BYTES = 48 * 1024 * 1024   # <= v7x 64 MiB physical with headroom
_VMEM_BUDGET_BYTES = 40 * 1024 * 1024  # sizing budget: 2x in + 2x out buffers + temps
_MAX_BLOCK_BYTES = 4 * 1024 * 1024     # per in/out block
_SAFE_SUBBLOCK_BYTES = 64 * 1024       # per in-kernel sub-step of the fallback body
                                       # (bounds lane-padded relayout transients)

# Whether the single-transpose bodies lower on this Mosaic version.  Flipped to
# False per path on the first lowering failure; the conservative bodies are
# used from then on.
_PRIMARY_OK = {"unsqueeze2d": True, "squeeze2d": True}


def _pick_group_block(G, group_bytes):
    """Rows (one row = one (batch, channel-group) pair) per grid step.

    The group-row axis is the second-to-minor dim of the lane-dense (G, L)
    output block, so it must be a multiple of 8 or equal to G.  Prefers >=2
    grid steps when G is large enough (v7x megacore) and keeps blocks near the
    VMEM budget (double-buffered in+out plus in-kernel temporaries).
    """
    target = min(_MAX_BLOCK_BYTES, _VMEM_BUDGET_BYTES // 6)
    cap = max(1, target // group_bytes)
    if G < 16:
        # Too small to split into two >=8-row chunks; take everything at once.
        # TODO(synk): add an H-tiling grid axis for very large single-group
        # spatial planes instead of one oversized block.
        return G
    cap = max(8, min(cap, (G + 1) // 2))   # >=2 chunks, >=8 rows (sublane rule)
    best = 0
    for d in range(8, cap + 1, 8):         # prefer exact divisors (no masked tail)
        if G % d == 0:
            best = d
    return best if best else (cap // 8) * 8


def _run_permute(tag, call, primary_kernel, fallback_kernel):
    """Run with the single-transpose body; fall back if Mosaic rejects it."""
    if _PRIMARY_OK[tag]:
        try:
            # block_until_ready so lowering/compile problems surface here
            # (probe) instead of at a later async consumer.
            return jax.block_until_ready(call(primary_kernel))
        except Exception:  # lowering-support guard for the general transpose
            _PRIMARY_OK[tag] = False
    return call(fallback_kernel)


# ---------------------------------------------------------------------------
# Kernel bodies
#   forward: in block (g_blk, f^2, H, W) -> out block (g_blk, L), L = f^2*H*W
#            flat per-group lane order is (h, i, w, j)
#   reverse: in block (g_blk, H, W)      -> out block (g_blk, L), L = H*W
#            flat per-group lane order is (i, j, ho, wo)
# ---------------------------------------------------------------------------
def _unsqueeze2d_body_transpose(x_ref, o_ref, *, factor):
    f = factor
    g, f2, H, W = x_ref.shape
    x5 = x_ref[...].reshape(g, f, f, H, W)        # free split of the channel dim
    y = jnp.transpose(x5, (0, 3, 1, 4, 2))        # (g, h, i, w, j)
    o_ref[...] = y.reshape(g, f2 * H * W)          # one wide lane-dense store


def _unsqueeze2d_body_safe(x_ref, o_ref, *, factor, sub_rows):
    """Slice/concat interleave; processed in row sub-slices so the lane-padded
    (..., W, f)-shaped transients stay a few MiB regardless of block size."""
    f = factor
    g_blk, f2, H, W = x_ref.shape
    L = f2 * H * W
    for gs in range(0, g_blk, sub_rows):
        ge = min(g_blk, gs + sub_rows)
        g = ge - gs
        x5 = x_ref[gs:ge].reshape(g, f, f, H, W)
        rows = []
        for i in range(f):                                       # output row phase
            planes = [x5[:, i, j][..., None] for j in range(f)]  # (g, H, W, 1)
            xi = jnp.concatenate(planes, axis=-1)                # (g, H, W, f)
            rows.append(xi.reshape(g, H, W * f))                 # (w, j) interleave
        r = jnp.concatenate(rows, axis=-1)                       # (g, H, f*f*W): (i, w, j)
        o_ref[gs:ge, :] = r.reshape(g, L)                        # flat (h, i, w, j)


def _squeeze2d_body_transpose(x_ref, o_ref, *, factor):
    f = factor
    g, H, W = x_ref.shape
    Ho, Wo = H // f, W // f
    x5 = x_ref[...].reshape(g, Ho, f, Wo, f)       # (g, ho, i, wo, j)
    y = jnp.transpose(x5, (0, 2, 4, 1, 3))         # (g, i, j, ho, wo)
    o_ref[...] = y.reshape(g, H * W)


def _squeeze2d_body_safe(x_ref, o_ref, *, factor, sub_rows):
    f = factor
    g_blk, H, W = x_ref.shape
    Ho, Wo = H // f, W // f
    for gs in range(0, g_blk, sub_rows):
        ge = min(g_blk, gs + sub_rows)
        g = ge - gs
        x4 = x_ref[gs:ge].reshape(g, Ho, f, W)     # row-phase split along sublanes
        pieces = []
        for i in range(f):
            r4 = x4[:, :, i, :].reshape(g, Ho, Wo, f)   # column-phase split
            for j in range(f):
                pieces.append(r4[:, :, :, j].reshape(g, Ho * Wo))
        o_ref[gs:ge, :] = jnp.concatenate(pieces, axis=-1)   # flat (i, j, ho, wo)


# ---------------------------------------------------------------------------
# Pallas wrappers
# ---------------------------------------------------------------------------
def unsqueeze2d_pallas(x, factor):
    """Depth-to-space, NCHW: (B, C, H, W) -> (B, C/f^2, H*f, W*f)."""
    assert factor >= 1 and isinstance(factor, int)
    if factor == 1:
        return x
    B, C, H, W = x.shape
    f = factor
    f2 = f * f
    assert C % f2 == 0, (C, factor)
    C_out = C // f2
    G = B * C_out                    # one group = one (batch, out-channel) pair
    L = f2 * H * W                   # elements per group (input == output)
    itemsize = x.dtype.itemsize
    g_blk = _pick_group_block(G, L * itemsize)
    g_sub = max(1, min(g_blk, _SAFE_SUBBLOCK_BYTES // (L * itemsize)))
    n_chunks = pl.cdiv(G, g_blk)

    x_grp = x.reshape(G, f2, H, W)   # free contiguous view of NCHW

    def call(kernel):
        return pl.pallas_call(
            kernel,
            out_shape=jax.ShapeDtypeStruct((G, L), x.dtype),
            grid=(n_chunks,),
            in_specs=[pl.BlockSpec((g_blk, f2, H, W), lambda i: (i, 0, 0, 0))],
            # Lane-dense flat output view: (G, L) is a free contiguous reshape
            # of the NCHW result, so stores are wide unmasked vst and the HBM
            # writeback is one dense run per block.
            out_specs=pl.BlockSpec((g_blk, L), lambda i: (i, 0)),
            compiler_params=pltpu.CompilerParams(
                dimension_semantics=("parallel",),
                vmem_limit_bytes=_VMEM_LIMIT_BYTES,
            ),
        )(x_grp)

    primary = functools.partial(_unsqueeze2d_body_transpose, factor=f)
    fallback = functools.partial(_unsqueeze2d_body_safe, factor=f, sub_rows=g_sub)
    out_flat = _run_permute("unsqueeze2d", call, primary, fallback)
    return out_flat.reshape(B, C_out, H * f, W * f)


def squeeze2d_pallas(x, factor):
    """Space-to-depth, NCHW: (B, C, H, W) -> (B, C*f^2, H/f, W/f)."""
    assert factor >= 1 and isinstance(factor, int)
    if factor == 1:
        return x
    B, C, H, W = x.shape
    f = factor
    f2 = f * f
    assert H % f == 0 and W % f == 0, (H, W, factor)
    Ho, Wo = H // f, W // f
    G = B * C                        # one group = one (batch, in-channel) pair
    L = H * W
    itemsize = x.dtype.itemsize
    g_blk = _pick_group_block(G, L * itemsize)
    g_sub = max(1, min(g_blk, _SAFE_SUBBLOCK_BYTES // (L * itemsize)))
    n_chunks = pl.cdiv(G, g_blk)

    x_grp = x.reshape(G, H, W)       # free contiguous view of NCHW

    def call(kernel):
        return pl.pallas_call(
            kernel,
            out_shape=jax.ShapeDtypeStruct((G, L), x.dtype),
            grid=(n_chunks,),
            in_specs=[pl.BlockSpec((g_blk, H, W), lambda i: (i, 0, 0))],
            out_specs=pl.BlockSpec((g_blk, L), lambda i: (i, 0)),
            compiler_params=pltpu.CompilerParams(
                dimension_semantics=("parallel",),
                vmem_limit_bytes=_VMEM_LIMIT_BYTES,
            ),
        )(x_grp)

    primary = functools.partial(_squeeze2d_body_transpose, factor=f)
    fallback = functools.partial(_squeeze2d_body_safe, factor=f, sub_rows=g_sub)
    out_flat = _run_permute("squeeze2d", call, primary, fallback)
    return out_flat.reshape(B, C * f2, Ho, Wo)


# ---------------------------------------------------------------------------
# Module equivalent
# ---------------------------------------------------------------------------
class UnSqueezeLayer:
    """JAX/Pallas equivalent of NF/Basic.py::UnSqueezeLayer (parameter-free)."""

    def __init__(self, factor, dim="2D"):
        self.factor = factor
        self.dim = dim

    def forward(self, x, logdet=None, reverse=False):
        if self.dim != "2D":
            # TODO(synk): '1D'/'3D' variants not implemented; '2D' is the module default.
            raise NotImplementedError("Only dim='2D' is implemented in Pallas.")
        if not reverse:
            return unsqueeze2d_pallas(x, self.factor), logdet
        return squeeze2d_pallas(x, self.factor), logdet

    __call__ = forward


# ---------------------------------------------------------------------------
# Pure-JAX references (for verification)
# ---------------------------------------------------------------------------
def unsqueeze2d_ref(x, f):
    B, C, H, W = x.shape
    x = x.reshape(B, C // (f * f), f, f, H, W)
    x = jnp.transpose(x, (0, 1, 4, 2, 5, 3))
    return x.reshape(B, C // (f * f), H * f, W * f)


def squeeze2d_ref(x, f):
    B, C, H, W = x.shape
    x = x.reshape(B, C, H // f, f, W // f, f)
    x = jnp.transpose(x, (0, 1, 3, 5, 2, 4))
    return x.reshape(B, C * f * f, H // f, W // f)


# ---------------------------------------------------------------------------
if __name__ == "__main__":
    key = jax.random.PRNGKey(0)

    # Config 1: B=2, C=8, H=W=16, factor=2.
    B, C, H, W = 2, 8, 16, 16
    factor = 2
    x = jax.random.normal(key, (B, C, H, W), dtype=jnp.float32)
    layer = UnSqueezeLayer(factor=factor, dim="2D")

    out, logdet = layer(x, logdet=None, reverse=False)        # unsqueeze (forward)
    out = jax.block_until_ready(out)
    np.testing.assert_array_equal(np.asarray(out), np.asarray(unsqueeze2d_ref(x, factor)))

    back, _ = layer(out, logdet=None, reverse=True)            # squeeze (reverse)
    back = jax.block_until_ready(back)
    np.testing.assert_array_equal(np.asarray(back), np.asarray(squeeze2d_ref(out, factor)))
    np.testing.assert_array_equal(np.asarray(back), np.asarray(x))

    # Config 2: factor=4 exercises the generic interleave path.
    x2 = jax.random.normal(jax.random.PRNGKey(1), (2, 16, 8, 8), dtype=jnp.float32)
    layer2 = UnSqueezeLayer(factor=4, dim="2D")
    out2, _ = layer2(x2, logdet=None, reverse=False)
    out2 = jax.block_until_ready(out2)
    np.testing.assert_array_equal(np.asarray(out2), np.asarray(unsqueeze2d_ref(x2, 4)))
    back2, _ = layer2(out2, logdet=None, reverse=True)
    back2 = jax.block_until_ready(back2)
    np.testing.assert_array_equal(np.asarray(back2), np.asarray(x2))

    print("KERNEL_OK")
</pallas_src>

<mosaic_0001>
module attributes {stable_mosaic.version = 11 : i64} {
  func.func @_unsqueeze2d_body_transpose(%arg0: i32, %arg1: memref<4x4x16x16xf32, #tpu.memory_space<vmem>>, %arg2: memref<4x1024xf32, #tpu.memory_space<vmem>>) attributes {dimension_semantics = [#tpu.dimension_semantics<parallel>], iteration_bounds = array<i64: 1>, scalar_prefetch = 0 : i64, scratch_operands = 0 : i64, tpu.core_type = #tpu.core_type<tc>, window_params = [{transform_indices = @transform_0, window_bounds = array<i64: 4, 4, 16, 16>}, {transform_indices = @transform_1, window_bounds = array<i64: 4, 1024>}]} {
    %c0 = arith.constant 0 : index
    %c0_0 = arith.constant 0 : index
    %c0_1 = arith.constant 0 : index
    %c0_2 = arith.constant 0 : index
    %0 = vector.load %arg1[%c0, %c0_0, %c0_1, %c0_2] : memref<4x4x16x16xf32, #tpu.memory_space<vmem>>, vector<4x4x16x16xf32>
    %1 = vector.shape_cast %0 : vector<4x4x16x16xf32> to vector<4x2x2x16x16xf32>
    %2 = tpu.transpose %1, [0, 3, 1, 4, 2] : vector<4x2x2x16x16xf32> -> vector<4x16x2x16x2xf32>
    %3 = vector.shape_cast %2 : vector<4x16x2x16x2xf32> to vector<4x1024xf32>
    %c0_3 = arith.constant 0 : index
    %c0_4 = arith.constant 0 : index
    %4 = vector.load %arg2[%c0_3, %c0_4] : memref<4x1024xf32, #tpu.memory_space<vmem>>, vector<4x1024xf32>
    tpu.vector_store %arg2[%c0_3, %c0_4], %3 {strides = array<i32>} : memref<4x1024xf32, #tpu.memory_space<vmem>>, vector<4x1024xf32>,
    return
  }
  func.func @transform_0(%arg0: i32) -> (i32, i32, i32, i32) {
    %c0_i32 = arith.constant 0 : i32
    %c0_i32_0 = arith.constant 0 : i32
    %c0_i32_1 = arith.constant 0 : i32
    %c0_i32_2 = arith.constant 0 : i32
    return %arg0, %c0_i32, %c0_i32_0, %c0_i32_1 : i32, i32, i32, i32
  }
  func.func @transform_1(%arg0: i32) -> (i32, i32) {
    %c0_i32 = arith.constant 0 : i32
    %c0_i32_0 = arith.constant 0 : i32
    return %arg0, %c0_i32 : i32, i32
  }
}

module attributes {stable_mosaic.version = 11 : i64} {
  func.func @_unsqueeze2d_body_safe(%arg0: i32, %arg1: memref<4x4x16x16xf32, #tpu.memory_space<vmem>>, %arg2: memref<4x1024xf32, #tpu.memory_space<vmem>>) attributes {dimension_semantics = [#tpu.dimension_semantics<parallel>], iteration_bounds = array<i64: 1>, scalar_prefetch = 0 : i64, scratch_operands = 0 : i64, tpu.core_type = #tpu.core_type<tc>, window_params = [{transform_indices = @transform_0, window_bounds = array<i64: 4, 4, 16, 16>}, {transform_indices = @transform_1, window_bounds = array<i64: 4, 1024>}]} {
    %c0 = arith.constant 0 : index
    %c0_0 = arith.constant 0 : index
    %c0_1 = arith.constant 0 : index
    %c0_2 = arith.constant 0 : index
    %0 = vector.load %arg1[%c0, %c0_0, %c0_1, %c0_2] : memref<4x4x16x16xf32, #tpu.memory_space<vmem>>, vector<4x4x16x16xf32>
    %1 = vector.shape_cast %0 : vector<4x4x16x16xf32> to vector<4x2x2x16x16xf32>
    %2 = vector.extract_strided_slice %1 {offsets = [0, 0, 0, 0, 0], sizes = [4, 1, 1, 16, 16], strides = [1, 1, 1, 1, 1]} : vector<4x2x2x16x16xf32> to vector<4x1x1x16x16xf32>
    %3 = vector.shape_cast %2 : vector<4x1x1x16x16xf32> to vector<4x16x16xf32>
    %4 = vector.shape_cast %3 : vector<4x16x16xf32> to vector<4x16x16x1xf32>
    %5 = vector.extract_strided_slice %1 {offsets = [0, 0, 1, 0, 0], sizes = [4, 1, 1, 16, 16], strides = [1, 1, 1, 1, 1]} : vector<4x2x2x16x16xf32> to vector<4x1x1x16x16xf32>
    %6 = vector.shape_cast %5 : vector<4x1x1x16x16xf32> to vector<4x16x16xf32>
    %7 = vector.shape_cast %6 : vector<4x16x16xf32> to vector<4x16x16x1xf32>
    %8 = tpu.concatenate %4, %7 in 3 : vector<4x16x16x1xf32>, vector<4x16x16x1xf32> -> vector<4x16x16x2xf32>
    %9 = vector.shape_cast %8 : vector<4x16x16x2xf32> to vector<4x16x32xf32>
    %10 = vector.extract_strided_slice %1 {offsets = [0, 1, 0, 0, 0], sizes = [4, 1, 1, 16, 16], strides = [1, 1, 1, 1, 1]} : vector<4x2x2x16x16xf32> to vector<4x1x1x16x16xf32>
    %11 = vector.shape_cast %10 : vector<4x1x1x16x16xf32> to vector<4x16x16xf32>
    %12 = vector.shape_cast %11 : vector<4x16x16xf32> to vector<4x16x16x1xf32>
    %13 = vector.extract_strided_slice %1 {offsets = [0, 1, 1, 0, 0], sizes = [4, 1, 1, 16, 16], strides = [1, 1, 1, 1, 1]} : vector<4x2x2x16x16xf32> to vector<4x1x1x16x16xf32>
    %14 = vector.shape_cast %13 : vector<4x1x1x16x16xf32> to vector<4x16x16xf32>
    %15 = vector.shape_cast %14 : vector<4x16x16xf32> to vector<4x16x16x1xf32>
    %16 = tpu.concatenate %12, %15 in 3 : vector<4x16x16x1xf32>, vector<4x16x16x1xf32> -> vector<4x16x16x2xf32>
    %17 = vector.shape_cast %16 : vector<4x16x16x2xf32> to vector<4x16x32xf32>
    %18 = tpu.concatenate %9, %17 in 2 : vector<4x16x32xf32>, vector<4x16x32xf32> -> vector<4x16x64xf32>
    %19 = vector.shape_cast %18 : vector<4x16x64xf32> to vector<4x1024xf32>
    %c0_3 = arith.constant 0 : index
    %c0_4 = arith.constant 0 : index
    %20 = vector.load %arg2[%c0_3, %c0_4] : memref<4x1024xf32, #tpu.memory_space<vmem>>, vector<4x1024xf32>
    tpu.vector_store %arg2[%c0_3, %c0_4], %19 {strides = array<i32>} : memref<4x1024xf32, #tpu.memory_space<vmem>>, vector<4x1024xf32>,
    return
  }
  func.func @transform_0(%arg0: i32) -> (i32, i32, i32, i32) {
    %c0_i32 = arith.constant 0 : i32
    %c0_i32_0 = arith.constant 0 : i32
    %c0_i32_1 = arith.constant 0 : i32
    %c0_i32_2 = arith.constant 0 : i32
    return %arg0, %c0_i32, %c0_i32_0, %c0_i32_1 : i32, i32, i32, i32
  }
  func.func @transform_1(%arg0: i32) -> (i32, i32) {
    %c0_i32 = arith.constant 0 : i32
    %c0_i32_0 = arith.constant 0 : i32
    return %arg0, %c0_i32 : i32, i32
  }
}

</mosaic_0001>

<llo_original>
// kernel: tpu_custom_call.1
$region0: #{tpu_custom_call.1}
  #allocation0 [shape = 'u32[]', space=smem, size = 0x4, offset = 0x4, fixed_abs, tag = 'smem constant byte address 0x4 - core index']
  #allocation1 [shape = 'u32[144,128]{1,0:T(1,128)}', space=vmem, size = 0x12000, scoped, tag = 'internal scratch']
  %s0 = inlined_call_operand.hbm [shape: f32[4,4,16,16], index: 0, kind: input, shape index: {}]
  %s1 = inlined_call_operand.hbm [shape: f32[4,1024], index: 1, kind: output, shape index: {}]
  %s2 = sld [smem:[#allocation0]]
  $region18: #{tpu_custom_call.1} parent=0
    _
  %s4 = ssub.s32 1, %s2
  %s5 = scalar_select 0, %s4, %s2
  $region1: #{tpu_custom_call.1} parent=0
    #allocation2 [shape = 'u8[131072]{0}', space=vmem, size = 0x20000, scoped, tag = 'input window, operand 0, single buffered']
    #allocation3 [shape = 's32[1]{0}', space=sflag, size = 0x4, scoped, tag = 'scoped memory for tpu_custom_call.1']
    #allocation4 [shape = 's32[1]{0}', space=sflag, size = 0x4, scoped, tag = 'scoped memory for tpu_custom_call.1']
    #allocation5 [shape = 'u8[16384]{0}', space=vmem, size = 0x4000, scoped, tag = 'output window, operand 0, single buffered']
    %6 = vsyncpa [#allocation3], 0
    %7 = vsyncpa [#allocation4], 0
    // Predicated region
    $region2: #{tpu_custom_call.1} parent=1 // pred_check
      _
    $region3: #{tpu_custom_call.1} parent=1 // pred_check_branch
      %9 = sbr.rel (0) target = $region5
    $region4: #{tpu_custom_call.1} parent=1 // pred_region
      %s11 = ssub.s32 4096, 4096
      %12 = vsyncadd [#allocation3], %s11
      %s13 = sshll.u32 [#allocation2], 4
      %s14 = int_to_ptr.vmem [resolvable:$true] %s13
      %19 = dma.hbm_to_vmem [thread:$0]  %s0, 4096, %s14, [#allocation3], 128, 128, 8
    $region5: #{tpu_custom_call.1} parent=1 // pred_fallthru
      _
    // Predicated region
    $region6: #{tpu_custom_call.1} parent=1 // pred_check
      _
    $region7: #{tpu_custom_call.1} parent=1 // pred_check_branch
      %21 = sbr.rel (0) target = $region9
    $region8: #{tpu_custom_call.1} parent=1 // pred_region
      %22 = dma.done [#allocation3], 4096
    $region9: #{tpu_custom_call.1} parent=1 // pred_fallthru
      _
    %v23 = vld [vmem:[#allocation2] sm:$0xff]
    %v24 = vld [vmem:[#allocation2 + $0x8] sm:$0xff]
    %v25 = vld [vmem:[#allocation2 + $0x10] sm:$0xff]
    %v26 = vld [vmem:[#allocation2 + $0x18] sm:$0xff]
    %v27 = vld [vmem:[#allocation2 + $0x20] sm:$0xff]
    %v28 = vld [vmem:[#allocation2 + $0x28] sm:$0xff]
    %v29 = vld [vmem:[#allocation2 + $0x30] sm:$0xff]
    %v30 = vld [vmem:[#allocation2 + $0x38] sm:$0xff]
    %v31 = vld [vmem:[#allocation2 + $0x40] sm:$0xff]
    %v32 = vld [vmem:[#allocation2 + $0x48] sm:$0xff]
    %v33 = vld [vmem:[#allocation2 + $0x50] sm:$0xff]
    %v34 = vld [vmem:[#allocation2 + $0x58] sm:$0xff]
    %v35 = vld [vmem:[#allocation2 + $0x60] sm:$0xff]
    %v36 = vld [vmem:[#allocation2 + $0x68] sm:$0xff]
    %v37 = vld [vmem:[#allocation2 + $0x70] sm:$0xff]
    %v38 = vld [vmem:[#allocation2 + $0x78] sm:$0xff]
    %v39 = vld [vmem:[#allocation2 + $0x80] sm:$0xff]
    %v40 = vld [vmem:[#allocation2 + $0x88] sm:$0xff]
    %v41 = vld [vmem:[#allocation2 + $0x90] sm:$0xff]
    %v42 = vld [vmem:[#allocation2 + $0x98] sm:$0xff]
    %v43 = vld [vmem:[#allocation2 + $0xa0] sm:$0xff]
    %v44 = vld [vmem:[#allocation2 + $0xa8] sm:$0xff]
    %v45 = vld [vmem:[#allocation2 + $0xb0] sm:$0xff]
    %v46 = vld [vmem:[#allocation2 + $0xb8] sm:$0xff]
    %v47 = vld [vmem:[#allocation2 + $0xc0] sm:$0xff]
    %v48 = vld [vmem:[#allocation2 + $0xc8] sm:$0xff]
    %v49 = vld [vmem:[#allocation2 + $0xd0] sm:$0xff]
    %v50 = vld [vmem:[#allocation2 + $0xd8] sm:$0xff]
    %v51 = vld [vmem:[#allocation2 + $0xe0] sm:$0xff]
    %v52 = vld [vmem:[#allocation2 + $0xe8] sm:$0xff]
    %v53 = vld [vmem:[#allocation2 + $0xf0] sm:$0xff]
    %v54 = vld [vmem:[#allocation2 + $0xf8] sm:$0xff]
    %v55 = vlaneseq
    %v56 = vshrl.u32 %v55, 7
    %v57 = vsub.s32 0, %v56
    %v58 = vrot.slane %v23, %v57
    %60 = vbcast.lane.b32.xlu0 %v58, 256
    %v61 = vpop.permute.xlu0 %60
    %s63 = sor.u32 256, 8
    %64 = vbcast.lane.b32.xlu0 %v58, %s63
    %v65 = vpop.permute.xlu0 %64
    %v66 = vlaneseq
    %v67 = vshrl.u32 %v66, 7
    %v68 = vsub.s32 1, %v67
    %v69 = vrot.slane %v23, %v68
    %71 = vbcast.lane.b32.xlu0 %v69, 256
    %v72 = vpop.permute.xlu0 %71
    %s74 = sor.u32 256, 8
    %75 = vbcast.lane.b32.xlu0 %v69, %s74
    %v76 = vpop.permute.xlu0 %75
    %v77 = vlaneseq
    %v78 = vshrl.u32 %v77, 7
    %v79 = vsub.s32 2, %v78
    %v80 = vrot.slane %v23, %v79
    %82 = vbcast.lane.b32.xlu0 %v80, 256
    %v83 = vpop.permute.xlu0 %82
    %s85 = sor.u32 256, 8
    %86 = vbcast.lane.b32.xlu0 %v80, %s85
    %v87 = vpop.permute.xlu0 %86
    %v88 = vlaneseq
    %v89 = vshrl.u32 %v88, 7
    %v90 = vsub.s32 3, %v89
    %v91 = vrot.slane %v23, %v90
    %93 = vbcast.lane.b32.xlu0 %v91, 256
    %v94 = vpop.permute.xlu0 %93
    %s96 = sor.u32 256, 8
    %97 = vbcast.lane.b32.xlu0 %v91, %s96
    %v98 = vpop.permute.xlu0 %97
    %v99 = vlaneseq
    %v100 = vshrl.u32 %v99, 7
    %v101 = vsub.s32 4, %v100
    %v102 = vrot.slane %v23, %v101
    %104 = vbcast.lane.b32.xlu0 %v102, 256
    %v105 = vpop.permute.xlu0 %104
    %s107 = sor.u32 256, 8
    %108 = vbcast.lane.b32.xlu0 %v102, %s107
    %v109 = vpop.permute.xlu0 %108
    %v110 = vlaneseq
    %v111 = vshrl.u32 %v110, 7
    %v112 = vsub.s32 5, %v111
    %v113 = vrot.slane %v23, %v112
    %115 = vbcast.lane.b32.xlu0 %v113, 256
    %v116 = vpop.permute.xlu0 %115
    %s118 = sor.u32 256, 8
    %119 = vbcast.lane.b32.xlu0 %v113, %s118
    %v120 = vpop.permute.xlu0 %119
    %v121 = vlaneseq
    %v122 = vshrl.u32 %v121, 7
    %v123 = vsub.s32 6, %v122
    %v124 = vrot.slane %v23, %v123
    %126 = vbcast.lane.b32.xlu0 %v124, 256
    %v127 = vpop.permute.xlu0 %126
    %s129 = sor.u32 256, 8
    %130 = vbcast.lane.b32.xlu0 %v124, %s129
    %v131 = vpop.permute.xlu0 %130
    %v132 = vlaneseq
    %v133 = vshrl.u32 %v132, 7
    %v134 = vsub.s32 7, %v133
    %v135 = vrot.slane %v23, %v134
    %137 = vbcast.lane.b32.xlu0 %v135, 256
    %v138 = vpop.permute.xlu0 %137
    %s140 = sor.u32 256, 8
    %141 = vbcast.lane.b32.xlu0 %v135, %s140
    %v142 = vpop.permute.xlu0 %141
    %v143 = vlaneseq
    %v144 = vshrl.u32 %v143, 7
    %v145 = vsub.s32 0, %v144
    %v146 = vrot.slane %v24, %v145
    %148 = vbcast.lane.b32.xlu0 %v146, 256
    %v149 = vpop.permute.xlu0 %148
    %s151 = sor.u32 256, 8
    %152 = vbcast.lane.b32.xlu0 %v146, %s151
    %v153 = vpop.permute.xlu0 %152
    %v154 = vlaneseq
    %v155 = vshrl.u32 %v154, 7
    %v156 = vsub.s32 1, %v155
    %v157 = vrot.slane %v24, %v156
    %159 = vbcast.lane.b32.xlu0 %v157, 256
    %v160 = vpop.permute.xlu0 %159
    %s162 = sor.u32 256, 8
    %163 = vbcast.lane.b32.xlu0 %v157, %s162
    %v164 = vpop.permute.xlu0 %163
    %v165 = vlaneseq
    %v166 = vshrl.u32 %v165, 7
    %v167 = vsub.s32 2, %v166
    %v168 = vrot.slane %v24, %v167
    %170 = vbcast.lane.b32.xlu0 %v168, 256
    %v171 = vpop.permute.xlu0 %170
    %s173 = sor.u32 256, 8
    %174 = vbcast.lane.b32.xlu0 %v168, %s173
    %v175 = vpop.permute.xlu0 %174
    %v176 = vlaneseq
    %v177 = vshrl.u32 %v176, 7
    %v178 = vsub.s32 3, %v177
    %v179 = vrot.slane %v24, %v178
    %181 = vbcast.lane.b32.xlu0 %v179, 256
    %v182 = vpop.permute.xlu0 %181
    %s184 = sor.u32 256, 8
    %185 = vbcast.lane.b32.xlu0 %v179, %s184
    %v186 = vpop.permute.xlu0 %185
    %v187 = vlaneseq
    %v188 = vshrl.u32 %v187, 7
    %v189 = vsub.s32 4, %v188
    %v190 = vrot.slane %v24, %v189
    %192 = vbcast.lane.b32.xlu0 %v190, 256
    %v193 = vpop.permute.xlu0 %192
    %s195 = sor.u32 256, 8
    %196 = vbcast.lane.b32.xlu0 %v190, %s195
    %v197 = vpop.permute.xlu0 %196
    %v198 = vlaneseq
    %v199 = vshrl.u32 %v198, 7
    %v200 = vsub.s32 5, %v199
    %v201 = vrot.slane %v24, %v200
    %203 = vbcast.lane.b32.xlu0 %v201, 256
    %v204 = vpop.permute.xlu0 %203
    %s206 = sor.u32 256, 8
    %207 = vbcast.lane.b32.xlu0 %v201, %s206
    %v208 = vpop.permute.xlu0 %207
    %v209 = vlaneseq
    %v210 = vshrl.u32 %v209, 7
    %v211 = vsub.s32 6, %v210
    %v212 = vrot.slane %v24, %v211
    %214 = vbcast.lane.b32.xlu0 %v212, 256
    %v215 = vpop.permute.xlu0 %214
    %s217 = sor.u32 256, 8
    %218 = vbcast.lane.b32.xlu0 %v212, %s217
    %v219 = vpop.permute.xlu0 %218
    %v220 = vlaneseq
    %v221 = vshrl.u32 %v220, 7
    %v222 = vsub.s32 7, %v221
    %v223 = vrot.slane %v24, %v222
    %225 = vbcast.lane.b32.xlu0 %v223, 256
    %v226 = vpop.permute.xlu0 %225
    %s228 = sor.u32 256, 8
    %229 = vbcast.lane.b32.xlu0 %v223, %s228
    %v230 = vpop.permute.xlu0 %229
    %v231 = vlaneseq
    %v232 = vshrl.u32 %v231, 7
    %v233 = vsub.s32 0, %v232
    %v234 = vrot.slane %v31, %v233
    %236 = vbcast.lane.b32.xlu0 %v234, 256
    %v237 = vpop.permute.xlu0 %236
    %s239 = sor.u32 256, 8
    %240 = vbcast.lane.b32.xlu0 %v234, %s239
    %v241 = vpop.permute.xlu0 %240
    %v242 = vlaneseq
    %v243 = vshrl.u32 %v242, 7
    %v244 = vsub.s32 1, %v243
    %v245 = vrot.slane %v31, %v244
    %247 = vbcast.lane.b32.xlu0 %v245, 256
    %v248 = vpop.permute.xlu0 %247
    %s250 = sor.u32 256, 8
    %251 = vbcast.lane.b32.xlu0 %v245, %s250
    %v252 = vpop.permute.xlu0 %251
    %v253 = vlaneseq
    %v254 = vshrl.u32 %v253, 7
    %v255 = vsub.s32 2, %v254
    %v256 = vrot.slane %v31, %v255
    %258 = vbcast.lane.b32.xlu0 %v256, 256
    %v259 = vpop.permute.xlu0 %258
    %s261 = sor.u32 256, 8
    %262 = vbcast.lane.b32.xlu0 %v256, %s261
    %v263 = vpop.permute.xlu0 %262
    %v264 = vlaneseq
    %v265 = vshrl.u32 %v264, 7
    %v266 = vsub.s32 3, %v265
    %v267 = vrot.slane %v31, %v266
    %269 = vbcast.lane.b32.xlu0 %v267, 256
    %v270 = vpop.permute.xlu0 %269
    %s272 = sor.u32 256, 8
    %273 = vbcast.lane.b32.xlu0 %v267, %s272
    %v274 = vpop.permute.xlu0 %273
    %v275 = vlaneseq
    %v276 = vshrl.u32 %v275, 7
    %v277 = vsub.s32 4, %v276
    %v278 = vrot.slane %v31, %v277
    %280 = vbcast.lane.b32.xlu0 %v278, 256
    %v281 = vpop.permute.xlu0 %280
    %s283 = sor.u32 256, 8
    %284 = vbcast.lane.b32.xlu0 %v278, %s283
    %v285 = vpop.permute.xlu0 %284
    %v286 = vlaneseq
    %v287 = vshrl.u32 %v286, 7
    %v288 = vsub.s32 5, %v287
    %v289 = vrot.slane %v31, %v288
    %291 = vbcast.lane.b32.xlu0 %v289, 256
    %v292 = vpop.permute.xlu0 %291
    %s294 = sor.u32 256, 8
    %295 = vbcast.lane.b32.xlu0 %v289, %s294
    %v296 = vpop.permute.xlu0 %295
    %v297 = vlaneseq
    %v298 = vshrl.u32 %v297, 7
    %v299 = vsub.s32 6, %v298
    %v300 = vrot.slane %v31, %v299
    %302 = vbcast.lane.b32.xlu0 %v300, 256
    %v303 = vpop.permute.xlu0 %302
    %s305 = sor.u32 256, 8
    %306 = vbcast.lane.b32.xlu0 %v300, %s305
    %v307 = vpop.permute.xlu0 %306
    %v308 = vlaneseq
    %v309 = vshrl.u32 %v308, 7
    %v310 = vsub.s32 7, %v309
    %v311 = vrot.slane %v31, %v310
    %313 = vbcast.lane.b32.xlu0 %v311, 256
    %v314 = vpop.permute.xlu0 %313
    %s316 = sor.u32 256, 8
    %317 = vbcast.lane.b32.xlu0 %v311, %s316
    %v318 = vpop.permute.xlu0 %317
    %v319 = vlaneseq
    %v320 = vshrl.u32 %v319, 7
    %v321 = vsub.s32 0, %v320
    %v322 = vrot.slane %v32, %v321
    %324 = vbcast.lane.b32.xlu0 %v322, 256
    %v325 = vpop.permute.xlu0 %324
    %s327 = sor.u32 256, 8
    %328 = vbcast.lane.b32.xlu0 %v322, %s327
    %v329 = vpop.permute.xlu0 %328
    %v330 = vlaneseq
    %v331 = vshrl.u32 %v330, 7
    %v332 = vsub.s32 1, %v331
    %v333 = vrot.slane %v32, %v332
    %335 = vbcast.lane.b32.xlu0 %v333, 256
    %v336 = vpop.permute.xlu0 %335
    %s338 = sor.u32 256, 8
    %339 = vbcast.lane.b32.xlu0 %v333, %s338
    %v340 = vpop.permute.xlu0 %339
    %v341 = vlaneseq
    %v342 = vshrl.u32 %v341, 7
    %v343 = vsub.s32 2, %v342
    %v344 = vrot.slane %v32, %v343
    %346 = vbcast.lane.b32.xlu0 %v344, 256
    %v347 = vpop.permute.xlu0 %346
    %s349 = sor.u32 256, 8
    %350 = vbcast.lane.b32.xlu0 %v344, %s349
    %v351 = vpop.permute.xlu0 %350
    %v352 = vlaneseq
    %v353 = vshrl.u32 %v352, 7
    %v354 = vsub.s32 3, %v353
    %v355 = vrot.slane %v32, %v354
    %357 = vbcast.lane.b32.xlu0 %v355, 256
    %v358 = vpop.permute.xlu0 %357
    %s360 = sor.u32 256, 8
    %361 = vbcast.lane.b32.xlu0 %v355, %s360
    %v362 = vpop.permute.xlu0 %361
    %v363 = vlaneseq
    %v364 = vshrl.u32 %v363, 7
    %v365 = vsub.s32 4, %v364
    %v366 = vrot.slane %v32, %v365
    %368 = vbcast.lane.b32.xlu0 %v366, 256
    %v369 = vpop.permute.xlu0 %368
    %s371 = sor.u32 256, 8
    %372 = vbcast.lane.b32.xlu0 %v366, %s371
    %v373 = vpop.permute.xlu0 %372
    %v374 = vlaneseq
    %v375 = vshrl.u32 %v374, 7
    %v376 = vsub.s32 5, %v375
    %v377 = vrot.slane %v32, %v376
    %379 = vbcast.lane.b32.xlu0 %v377, 256
    %v380 = vpop.permute.xlu0 %379
    %s382 = sor.u32 256, 8
    %383 = vbcast.lane.b32.xlu0 %v377, %s382
    %v384 = vpop.permute.xlu0 %383
    %v385 = vlaneseq
    %v386 = vshrl.u32 %v385, 7
    %v387 = vsub.s32 6, %v386
    %v388 = vrot.slane %v32, %v387
    %390 = vbcast.lane.b32.xlu0 %v388, 256
    %v391 = vpop.permute.xlu0 %390
    %s393 = sor.u32 256, 8
    %394 = vbcast.lane.b32.xlu0 %v388, %s393
    %v395 = vpop.permute.xlu0 %394
    %v396 = vlaneseq
    %v397 = vshrl.u32 %v396, 7
    %v398 = vsub.s32 7, %v397
    %v399 = vrot.slane %v32, %v398
    %401 = vbcast.lane.b32.xlu0 %v399, 256
    %v402 = vpop.permute.xlu0 %401
    %s404 = sor.u32 256, 8
    %405 = vbcast.lane.b32.xlu0 %v399, %s404
    %v406 = vpop.permute.xlu0 %405
    %v407 = vlaneseq
    %v408 = vshrl.u32 %v407, 7
    %v409 = vsub.s32 0, %v408
    %v410 = vrot.slane %v39, %v409
    %412 = vbcast.lane.b32.xlu0 %v410, 256
    %v413 = vpop.permute.xlu0 %412
    %s415 = sor.u32 256, 8
    %416 = vbcast.lane.b32.xlu0 %v410, %s415
    %v417 = vpop.permute.xlu0 %416
    %v418 = vlaneseq
    %v419 = vshrl.u32 %v418, 7
    %v420 = vsub.s32 1, %v419
    %v421 = vrot.slane %v39, %v420
    %423 = vbcast.lane.b32.xlu0 %v421, 256
    %v424 = vpop.permute.xlu0 %423
    %s426 = sor.u32 256, 8
    %427 = vbcast.lane.b32.xlu0 %v421, %s426
    %v428 = vpop.permute.xlu0 %427
    %v429 = vlaneseq
    %v430 = vshrl.u32 %v429, 7
    %v431 = vsub.s32 2, %v430
    %v432 = vrot.slane %v39, %v431
    %434 = vbcast.lane.b32.xlu0 %v432, 256
    %v435 = vpop.permute.xlu0 %434
    %s437 = sor.u32 256, 8
    %438 = vbcast.lane.b32.xlu0 %v432, %s437
    %v439 = vpop.permute.xlu0 %438
    %v440 = vlaneseq
    %v441 = vshrl.u32 %v440, 7
    %v442 = vsub.s32 3, %v441
    %v443 = vrot.slane %v39, %v442
    %445 = vbcast.lane.b32.xlu0 %v443, 256
    %v446 = vpop.permute.xlu0 %445
    %s448 = sor.u32 256, 8
    %449 = vbcast.lane.b32.xlu0 %v443, %s448
    %v450 = vpop.permute.xlu0 %449
    %v451 = vlaneseq
    %v452 = vshrl.u32 %v451, 7
    %v453 = vsub.s32 4, %v452
    %v454 = vrot.slane %v39, %v453
    %456 = vbcast.lane.b32.xlu0 %v454, 256
    %v457 = vpop.permute.xlu0 %456
    %s459 = sor.u32 256, 8
    %460 = vbcast.lane.b32.xlu0 %v454, %s459
    %v461 = vpop.permute.xlu0 %460
    %v462 = vlaneseq
    %v463 = vshrl.u32 %v462, 7
    %v464 = vsub.s32 5, %v463
    %v465 = vrot.slane %v39, %v464
    %467 = vbcast.lane.b32.xlu0 %v465, 256
    %v468 = vpop.permute.xlu0 %467
    %s470 = sor.u32 256, 8
    %471 = vbcast.lane.b32.xlu0 %v465, %s470
    %v472 = vpop.permute.xlu0 %471
    %v473 = vlaneseq
    %v474 = vshrl.u32 %v473, 7
    %v475 = vsub.s32 6, %v474
    %v476 = vrot.slane %v39, %v475
    %478 = vbcast.lane.b32.xlu0 %v476, 256
    %v479 = vpop.permute.xlu0 %478
    %s481 = sor.u32 256, 8
    %482 = vbcast.lane.b32.xlu0 %v476, %s481
    %v483 = vpop.permute.xlu0 %482
    %v484 = vlaneseq
    %v485 = vshrl.u32 %v484, 7
    %v486 = vsub.s32 7, %v485
    %v487 = vrot.slane %v39, %v486
    %489 = vbcast.lane.b32.xlu0 %v487, 256
    %v490 = vpop.permute.xlu0 %489
    %s492 = sor.u32 256, 8
    %493 = vbcast.lane.b32.xlu0 %v487, %s492
    %v494 = vpop.permute.xlu0 %493
    %v495 = vlaneseq
    %v496 = vshrl.u32 %v495, 7
    %v497 = vsub.s32 0, %v496
    %v498 = vrot.slane %v40, %v497
    %500 = vbcast.lane.b32.xlu0 %v498, 256
    %v501 = vpop.permute.xlu0 %500
    %s503 = sor.u32 256, 8
    %504 = vbcast.lane.b32.xlu0 %v498, %s503
    %v505 = vpop.permute.xlu0 %504
    %v506 = vlaneseq
    %v507 = vshrl.u32 %v506, 7
    %v508 = vsub.s32 1, %v507
    %v509 = vrot.slane %v40, %v508
    %511 = vbcast.lane.b32.xlu0 %v509, 256
    %v512 = vpop.permute.xlu0 %511
    %s514 = sor.u32 256, 8
    %515 = vbcast.lane.b32.xlu0 %v509, %s514
    %v516 = vpop.permute.xlu0 %515
    %v517 = vlaneseq
    %v518 = vshrl.u32 %v517, 7
    %v519 = vsub.s32 2, %v518
    %v520 = vrot.slane %v40, %v519
    %522 = vbcast.lane.b32.xlu0 %v520, 256
    %v523 = vpop.permute.xlu0 %522
    %s525 = sor.u32 256, 8
    %526 = vbcast.lane.b32.xlu0 %v520, %s525
    %v527 = vpop.permute.xlu0 %526
    %v528 = vlaneseq
    %v529 = vshrl.u32 %v528, 7
    %v530 = vsub.s32 3, %v529
    %v531 = vrot.slane %v40, %v530
    %533 = vbcast.lane.b32.xlu0 %v531, 256
    %v534 = vpop.permute.xlu0 %533
    %s536 = sor.u32 256, 8
    %537 = vbcast.lane.b32.xlu0 %v531, %s536
    %v538 = vpop.permute.xlu0 %537
    %v539 = vlaneseq
    %v540 = vshrl.u32 %v539, 7
    %v541 = vsub.s32 4, %v540
    %v542 = vrot.slane %v40, %v541
    %544 = vbcast.lane.b32.xlu0 %v542, 256
    %v545 = vpop.permute.xlu0 %544
    %s547 = sor.u32 256, 8
    %548 = vbcast.lane.b32.xlu0 %v542, %s547
    %v549 = vpop.permute.xlu0 %548
    %v550 = vlaneseq
    %v551 = vshrl.u32 %v550, 7
    %v552 = vsub.s32 5, %v551
    %v553 = vrot.slane %v40, %v552
    %555 = vbcast.lane.b32.xlu0 %v553, 256
    %v556 = vpop.permute.xlu0 %555
    %s558 = sor.u32 256, 8
    %559 = vbcast.lane.b32.xlu0 %v553, %s558
    %v560 = vpop.permute.xlu0 %559
    %v561 = vlaneseq
    %v562 = vshrl.u32 %v561, 7
    %v563 = vsub.s32 6, %v562
    %v564 = vrot.slane %v40, %v563
    %566 = vbcast.lane.b32.xlu0 %v564, 256
    %v567 = vpop.permute.xlu0 %566
    %s569 = sor.u32 256, 8
    %570 = vbcast.lane.b32.xlu0 %v564, %s569
    %v571 = vpop.permute.xlu0 %570
    %v572 = vlaneseq
    %v573 = vshrl.u32 %v572, 7
    %v574 = vsub.s32 7, %v573
    %v575 = vrot.slane %v40, %v574
    %577 = vbcast.lane.b32.xlu0 %v575, 256
    %v578 = vpop.permute.xlu0 %577
    %s580 = sor.u32 256, 8
    %581 = vbcast.lane.b32.xlu0 %v575, %s580
    %v582 = vpop.permute.xlu0 %581
    %v583 = vlaneseq
    %v584 = vshrl.u32 %v583, 7
    %v585 = vsub.s32 0, %v584
    %v586 = vrot.slane %v47, %v585
    %588 = vbcast.lane.b32.xlu0 %v586, 256
    %v589 = vpop.permute.xlu0 %588
    %s591 = sor.u32 256, 8
    %592 = vbcast.lane.b32.xlu0 %v586, %s591
    %v593 = vpop.permute.xlu0 %592
    %v594 = vlaneseq
    %v595 = vshrl.u32 %v594, 7
    %v596 = vsub.s32 1, %v595
    %v597 = vrot.slane %v47, %v596
    %599 = vbcast.lane.b32.xlu0 %v597, 256
    %v600 = vpop.permute.xlu0 %599
    %s602 = sor.u32 256, 8
    %603 = vbcast.lane.b32.xlu0 %v597, %s602
    %v604 = vpop.permute.xlu0 %603
    %v605 = vlaneseq
    %v606 = vshrl.u32 %v605, 7
    %v607 = vsub.s32 2, %v606
    %v608 = vrot.slane %v47, %v607
    %610 = vbcast.lane.b32.xlu0 %v608, 256
    %v611 = vpop.permute.xlu0 %610
    %s613 = sor.u32 256, 8
    %614 = vbcast.lane.b32.xlu0 %v608, %s613
    %v615 = vpop.permute.xlu0 %614
    %v616 = vlaneseq
    %v617 = vshrl.u32 %v616, 7
    %v618 = vsub.s32 3, %v617
    %v619 = vrot.slane %v47, %v618
    %621 = vbcast.lane.b32.xlu0 %v619, 256
    %v622 = vpop.permute.xlu0 %621
    %s624 = sor.u32 256, 8
    %625 = vbcast.lane.b32.xlu0 %v619, %s624
    %v626 = vpop.permute.xlu0 %625
    %v627 = vlaneseq
    %v628 = vshrl.u32 %v627, 7
    %v629 = vsub.s32 4, %v628
    %v630 = vrot.slane %v47, %v629
    %632 = vbcast.lane.b32.xlu0 %v630, 256
    %v633 = vpop.permute.xlu0 %632
    %s635 = sor.u32 256, 8
    %636 = vbcast.lane.b32.xlu0 %v630, %s635
    %v637 = vpop.permute.xlu0 %636
    %v638 = vlaneseq
    %v639 = vshrl.u32 %v638, 7
    %v640 = vsub.s32 5, %v639
    %v641 = vrot.slane %v47, %v640
    %643 = vbcast.lane.b32.xlu0 %v641, 256
    %v644 = vpop.permute.xlu0 %643
    %s646 = sor.u32 256, 8
    %647 = vbcast.lane.b32.xlu0 %v641, %s646
    %v648 = vpop.permute.xlu0 %647
    %v649 = vlaneseq
    %v650 = vshrl.u32 %v649, 7
    %v651 = vsub.s32 6, %v650
    %v652 = vrot.slane %v47, %v651
    %654 = vbcast.lane.b32.xlu0 %v652, 256
    %v655 = vpop.permute.xlu0 %654
    %s657 = sor.u32 256, 8
    %658 = vbcast.lane.b32.xlu0 %v652, %s657
    %v659 = vpop.permute.xlu0 %658
    %v660 = vlaneseq
    %v661 = vshrl.u32 %v660, 7
    %v662 = vsub.s32 7, %v661
    %v663 = vrot.slane %v47, %v662
    %665 = vbcast.lane.b32.xlu0 %v663, 256
    %v666 = vpop.permute.xlu0 %665
    %s668 = sor.u32 256, 8
    %669 = vbcast.lane.b32.xlu0 %v663, %s668
    %v670 = vpop.permute.xlu0 %669
    %v671 = vlaneseq
    %v672 = vshrl.u32 %v671, 7
    %v673 = vsub.s32 0, %v672
    %v674 = vrot.slane %v48, %v673
    %676 = vbcast.lane.b32.xlu0 %v674, 256
    %v677 = vpop.permute.xlu0 %676
    %s679 = sor.u32 256, 8
    %680 = vbcast.lane.b32.xlu0 %v674, %s679
    %v681 = vpop.permute.xlu0 %680
    %v682 = vlaneseq
    %v683 = vshrl.u32 %v682, 7
    %v684 = vsub.s32 1, %v683
    %v685 = vrot.slane %v48, %v684
    %687 = vbcast.lane.b32.xlu0 %v685, 256
    %v688 = vpop.permute.xlu0 %687
    %s690 = sor.u32 256, 8
    %691 = vbcast.lane.b32.xlu0 %v685, %s690
    %v692 = vpop.permute.xlu0 %691
    %v693 = vlaneseq
    %v694 = vshrl.u32 %v693, 7
    %v695 = vsub.s32 2, %v694
    %v696 = vrot.slane %v48, %v695
    %698 = vbcast.lane.b32.xlu0 %v696, 256
    %v699 = vpop.permute.xlu0 %698
    %s701 = sor.u32 256, 8
    %702 = vbcast.lane.b32.xlu0 %v696, %s701
    %v703 = vpop.permute.xlu0 %702
    %v704 = vlaneseq
    %v705 = vshrl.u32 %v704, 7
    %v706 = vsub.s32 3, %v705
    %v707 = vrot.slane %v48, %v706
    %709 = vbcast.lane.b32.xlu0 %v707, 256
    %v710 = vpop.permute.xlu0 %709
    %s712 = sor.u32 256, 8
    %713 = vbcast.lane.b32.xlu0 %v707, %s712
    %v714 = vpop.permute.xlu0 %713
    %v715 = vlaneseq
    %v716 = vshrl.u32 %v715, 7
    %v717 = vsub.s32 4, %v716
    %v718 = vrot.slane %v48, %v717
    %720 = vbcast.lane.b32.xlu0 %v718, 256
    %v721 = vpop.permute.xlu0 %720
    %s723 = sor.u32 256, 8
    %724 = vbcast.lane.b32.xlu0 %v718, %s723
    %v725 = vpop.permute.xlu0 %724
    %v726 = vlaneseq
    %v727 = vshrl.u32 %v726, 7
    %v728 = vsub.s32 5, %v727
    %v729 = vrot.slane %v48, %v728
    %731 = vbcast.lane.b32.xlu0 %v729, 256
    %v732 = vpop.permute.xlu0 %731
    %s734 = sor.u32 256, 8
    %735 = vbcast.lane.b32.xlu0 %v729, %s734
    %v736 = vpop.permute.xlu0 %735
    %v737 = vlaneseq
    %v738 = vshrl.u32 %v737, 7
    %v739 = vsub.s32 6, %v738
    %v740 = vrot.slane %v48, %v739
    %742 = vbcast.lane.b32.xlu0 %v740, 256
    %v743 = vpop.permute.xlu0 %742
    %s745 = sor.u32 256, 8
    %746 = vbcast.lane.b32.xlu0 %v740, %s745
    %v747 = vpop.permute.xlu0 %746
    %v748 = vlaneseq
    %v749 = vshrl.u32 %v748, 7
    %v750 = vsub.s32 7, %v749
    %v751 = vrot.slane %v48, %v750
    %753 = vbcast.lane.b32.xlu0 %v751, 256
    %v754 = vpop.permute.xlu0 %753
    %s756 = sor.u32 256, 8
    %757 = vbcast.lane.b32.xlu0 %v751, %s756
    %v758 = vpop.permute.xlu0 %757
    %v759 = vlaneseq
    %v760 = vshrl.u32 %v759, 7
    %v761 = vsub.s32 0, %v760
    %v762 = vrot.slane %v25, %v761
    %764 = vbcast.lane.b32.xlu0 %v762, 256
    %v765 = vpop.permute.xlu0 %764
    %s767 = sor.u32 256, 8
    %768 = vbcast.lane.b32.xlu0 %v762, %s767
    %v769 = vpop.permute.xlu0 %768
    %v770 = vlaneseq
    %v771 = vshrl.u32 %v770, 7
    %v772 = vsub.s32 1, %v771
    %v773 = vrot.slane %v25, %v772
    %775 = vbcast.lane.b32.xlu0 %v773, 256
    %v776 = vpop.permute.xlu0 %775
    %s778 = sor.u32 256, 8
    %779 = vbcast.lane.b32.xlu0 %v773, %s778
    %v780 = vpop.permute.xlu0 %779
    %v781 = vlaneseq
    %v782 = vshrl.u32 %v781, 7
    %v783 = vsub.s32 2, %v782
    %v784 = vrot.slane %v25, %v783
    %786 = vbcast.lane.b32.xlu0 %v784, 256
    %v787 = vpop.permute.xlu0 %786
    %s789 = sor.u32 256, 8
    %790 = vbcast.lane.b32.xlu0 %v784, %s789
    %v791 = vpop.permute.xlu0 %790
    %v792 = vlaneseq
    %v793 = vshrl.u32 %v792, 7
    %v794 = vsub.s32 3, %v793
    %v795 = vrot.slane %v25, %v794
    %797 = vbcast.lane.b32.xlu0 %v795, 256
    %v798 = vpop.permute.xlu0 %797
    %s800 = sor.u32 256, 8
    %801 = vbcast.lane.b32.xlu0 %v795, %s800
    %v802 = vpop.permute.xlu0 %801
    %v803 = vlaneseq
    %v804 = vshrl.u32 %v803, 7
    %v805 = vsub.s32 4, %v804
    %v806 = vrot.slane %v25, %v805
    %808 = vbcast.lane.b32.xlu0 %v806, 256
    %v809 = vpop.permute.xlu0 %808
    %s811 = sor.u32 256, 8
    %812 = vbcast.lane.b32.xlu0 %v806, %s811
    %v813 = vpop.permute.xlu0 %812
    %v814 = vlaneseq
    %v815 = vshrl.u32 %v814, 7
    %v816 = vsub.s32 5, %v815
    %v817 = vrot.slane %v25, %v816
    %819 = vbcast.lane.b32.xlu0 %v817, 256
    %v820 = vpop.permute.xlu0 %819
    %s822 = sor.u32 256, 8
    %823 = vbcast.lane.b32.xlu0 %v817, %s822
    %v824 = vpop.permute.xlu0 %823
    %v825 = vlaneseq
    %v826 = vshrl.u32 %v825, 7
    %v827 = vsub.s32 6, %v826
    %v828 = vrot.slane %v25, %v827
    %830 = vbcast.lane.b32.xlu0 %v828, 256
    %v831 = vpop.permute.xlu0 %830
    %s833 = sor.u32 256, 8
    %834 = vbcast.lane.b32.xlu0 %v828, %s833
    %v835 = vpop.permute.xlu0 %834
    %v836 = vlaneseq
    %v837 = vshrl.u32 %v836, 7
    %v838 = vsub.s32 7, %v837
    %v839 = vrot.slane %v25, %v838
    %841 = vbcast.lane.b32.xlu0 %v839, 256
    %v842 = vpop.permute.xlu0 %841
    %s844 = sor.u32 256, 8
    %845 = vbcast.lane.b32.xlu0 %v839, %s844
    %v846 = vpop.permute.xlu0 %845
    %v847 = vlaneseq
    %v848 = vshrl.u32 %v847, 7
    %v849 = vsub.s32 0, %v848
    %v850 = vrot.slane %v26, %v849
    %852 = vbcast.lane.b32.xlu0 %v850, 256
    %v853 = vpop.permute.xlu0 %852
    %s855 = sor.u32 256, 8
    %856 = vbcast.lane.b32.xlu0 %v850, %s855
    %v857 = vpop.permute.xlu0 %856
    %v858 = vlaneseq
    %v859 = vshrl.u32 %v858, 7
    %v860 = vsub.s32 1, %v859
    %v861 = vrot.slane %v26, %v860
    %863 = vbcast.lane.b32.xlu0 %v861, 256
    %v864 = vpop.permute.xlu0 %863
    %s866 = sor.u32 256, 8
    %867 = vbcast.lane.b32.xlu0 %v861, %s866
    %v868 = vpop.permute.xlu0 %867
    %v869 = vlaneseq
    %v870 = vshrl.u32 %v869, 7
    %v871 = vsub.s32 2, %v870
    %v872 = vrot.slane %v26, %v871
    %874 = vbcast.lane.b32.xlu0 %v872, 256
    %v875 = vpop.permute.xlu0 %874
    %s877 = sor.u32 256, 8
    %878 = vbcast.lane.b32.xlu0 %v872, %s877
    %v879 = vpop.permute.xlu0 %878
    %v880 = vlaneseq
    %v881 = vshrl.u32 %v880, 7
    %v882 = vsub.s32 3, %v881
    %v883 = vrot.slane %v26, %v882
    %885 = vbcast.lane.b32.xlu0 %v883, 256
    %v886 = vpop.permute.xlu0 %885
    %s888 = sor.u32 256, 8
    %889 = vbcast.lane.b32.xlu0 %v883, %s888
    %v890 = vpop.permute.xlu0 %889
    %v891 = vlaneseq
    %v892 = vshrl.u32 %v891, 7
    %v893 = vsub.s32 4, %v892
    %v894 = vrot.slane %v26, %v893
    %896 = vbcast.lane.b32.xlu0 %v894, 256
    %v897 = vpop.permute.xlu0 %896
    %s899 = sor.u32 256, 8
    %900 = vbcast.lane.b32.xlu0 %v894, %s899
    %v901 = vpop.permute.xlu0 %900
    %v902 = vlaneseq
    %v903 = vshrl.u32 %v902, 7
    %v904 = vsub.s32 5, %v903
    %v905 = vrot.slane %v26, %v904
    %907 = vbcast.lane.b32.xlu0 %v905, 256
    %v908 = vpop.permute.xlu0 %907
    %s910 = sor.u32 256, 8
    %911 = vbcast.lane.b32.xlu0 %v905, %s910
    %v912 = vpop.permute.xlu0 %911
    %v913 = vlaneseq
    %v914 = vshrl.u32 %v913, 7
    %v915 = vsub.s32 6, %v914
    %v916 = vrot.slane %v26, %v915
    %918 = vbcast.lane.b32.xlu0 %v916, 256
    %v919 = vpop.permute.xlu0 %918
    %s921 = sor.u32 256, 8
    %922 = vbcast.lane.b32.xlu0 %v916, %s921
    %v923 = vpop.permute.xlu0 %922
    %v924 = vlaneseq
    %v925 = vshrl.u32 %v924, 7
    %v926 = vsub.s32 7, %v925
    %v927 = vrot.slane %v26, %v926
    %929 = vbcast.lane.b32.xlu0 %v927, 256
    %v930 = vpop.permute.xlu0 %929
    %s932 = sor.u32 256, 8
    %933 = vbcast.lane.b32.xlu0 %v927, %s932
    %v934 = vpop.permute.xlu0 %933
    %v935 = vlaneseq
    %v936 = vshrl.u32 %v935, 7
    %v937 = vsub.s32 0, %v936
    %v938 = vrot.slane %v33, %v937
    %940 = vbcast.lane.b32.xlu0 %v938, 256
    %v941 = vpop.permute.xlu0 %940
    %s943 = sor.u32 256, 8
    %944 = vbcast.lane.b32.xlu0 %v938, %s943
    %v945 = vpop.permute.xlu0 %944
    %v946 = vlaneseq
    %v947 = vshrl.u32 %v946, 7
    %v948 = vsub.s32 1, %v947
    %v949 = vrot.slane %v33, %v948
    %951 = vbcast.lane.b32.xlu0 %v949, 256
    %v952 = vpop.permute.xlu0 %951
    %s954 = sor.u32 256, 8
    %955 = vbcast.lane.b32.xlu0 %v949, %s954
    %v956 = vpop.permute.xlu0 %955
    %v957 = vlaneseq
    %v958 = vshrl.u32 %v957, 7
    %v959 = vsub.s32 2, %v958
    %v960 = vrot.slane %v33, %v959
    %962 = vbcast.lane.b32.xlu0 %v960, 256
    %v963 = vpop.permute.xlu0 %962
    %s965 = sor.u32 256, 8
    %966 = vbcast.lane.b32.xlu0 %v960, %s965
    %v967 = vpop.permute.xlu0 %966
    %v968 = vlaneseq
    %v969 = vshrl.u32 %v968, 7
    %v970 = vsub.s32 3, %v969
    %v971 = vrot.slane %v33, %v970
    %973 = vbcast.lane.b32.xlu0 %v971, 256
    %v974 = vpop.permute.xlu0 %973
    %s976 = sor.u32 256, 8
    %977 = vbcast.lane.b32.xlu0 %v971, %s976
    %v978 = vpop.permute.xlu0 %977
    %v979 = vlaneseq
    %v980 = vshrl.u32 %v979, 7
    %v981 = vsub.s32 4, %v980
    %v982 = vrot.slane %v33, %v981
    %984 = vbcast.lane.b32.xlu0 %v982, 256
    %v985 = vpop.permute.xlu0 %984
    %s987 = sor.u32 256, 8
    %988 = vbcast.lane.b32.xlu0 %v982, %s987
    %v989 = vpop.permute.xlu0 %988
    %v990 = vlaneseq
    %v991 = vshrl.u32 %v990, 7
    %v992 = vsub.s32 5, %v991
    %v993 = vrot.slane %v33, %v992
    %995 = vbcast.lane.b32.xlu0 %v993, 256
    %v996 = vpop.permute.xlu0 %995
    %s998 = sor.u32 256, 8
    %999 = vbcast.lane.b32.xlu0 %v993, %s998
    %v1000 = vpop.permute.xlu0 %999
    %v1001 = vlaneseq
    %v1002 = vshrl.u32 %v1001, 7
    %v1003 = vsub.s32 6, %v1002
    %v1004 = vrot.slane %v33, %v1003
    %1006 = vbcast.lane.b32.xlu0 %v1004, 256
    %v1007 = vpop.permute.xlu0 %1006
    %s1009 = sor.u32 256, 8
    %1010 = vbcast.lane.b32.xlu0 %v1004, %s1009
    %v1011 = vpop.permute.xlu0 %1010
    %v1012 = vlaneseq
    %v1013 = vshrl.u32 %v1012, 7
    %v1014 = vsub.s32 7, %v1013
    %v1015 = vrot.slane %v33, %v1014
    %1017 = vbcast.lane.b32.xlu0 %v1015, 256
    %v1018 = vpop.permute.xlu0 %1017
    %s1020 = sor.u32 256, 8
    %1021 = vbcast.lane.b32.xlu0 %v1015, %s1020
    %v1022 = vpop.permute.xlu0 %1021
    %v1023 = vlaneseq
    %v1024 = vshrl.u32 %v1023, 7
    %v1025 = vsub.s32 0, %v1024
    %v1026 = vrot.slane %v34, %v1025
    %1028 = vbcast.lane.b32.xlu0 %v1026, 256
    %v1029 = vpop.permute.xlu0 %1028
    %s1031 = sor.u32 256, 8
    %1032 = vbcast.lane.b32.xlu0 %v1026, %s1031
    %v1033 = vpop.permute.xlu0 %1032
    %v1034 = vlaneseq
    %v1035 = vshrl.u32 %v1034, 7
    %v1036 = vsub.s32 1, %v1035
    %v1037 = vrot.slane %v34, %v1036
    %1039 = vbcast.lane.b32.xlu0 %v1037, 256
    %v1040 = vpop.permute.xlu0 %1039
    %s1042 = sor.u32 256, 8
    %1043 = vbcast.lane.b32.xlu0 %v1037, %s1042
    %v1044 = vpop.permute.xlu0 %1043
    %v1045 = vlaneseq
    %v1046 = vshrl.u32 %v1045, 7
    %v1047 = vsub.s32 2, %v1046
    %v1048 = vrot.slane %v34, %v1047
    %1050 = vbcast.lane.b32.xlu0 %v1048, 256
    %v1051 = vpop.permute.xlu0 %1050
    %s1053 = sor.u32 256, 8
    %1054 = vbcast.lane.b32.xlu0 %v1048, %s1053
    %v1055 = vpop.permute.xlu0 %1054
    %v1056 = vlaneseq
    %v1057 = vshrl.u32 %v1056, 7
    %v1058 = vsub.s32 3, %v1057
    %v1059 = vrot.slane %v34, %v1058
    %1061 = vbcast.lane.b32.xlu0 %v1059, 256
    %v1062 = vpop.permute.xlu0 %1061
    %s1064 = sor.u32 256, 8
    %1065 = vbcast.lane.b32.xlu0 %v1059, %s1064
    %v1066 = vpop.permute.xlu0 %1065
    %v1067 = vlaneseq
    %v1068 = vshrl.u32 %v1067, 7
    %v1069 = vsub.s32 4, %v1068
    %v1070 = vrot.slane %v34, %v1069
    %1072 = vbcast.lane.b32.xlu0 %v1070, 256
    %v1073 = vpop.permute.xlu0 %1072
    %s1075 = sor.u32 256, 8
    %1076 = vbcast.lane.b32.xlu0 %v1070, %s1075
    %v1077 = vpop.permute.xlu0 %1076
    %v1078 = vlaneseq
    %v1079 = vshrl.u32 %v1078, 7
    %v1080 = vsub.s32 5, %v1079
    %v1081 = vrot.slane %v34, %v1080
    %1083 = vbcast.lane.b32.xlu0 %v1081, 256
    %v1084 = vpop.permute.xlu0 %1083
    %s1086 = sor.u32 256, 8
    %1087 = vbcast.lane.b32.xlu0 %v1081, %s1086
    %v1088 = vpop.permute.xlu0 %1087
    %v1089 = vlaneseq
    %v1090 = vshrl.u32 %v1089, 7
    %v1091 = vsub.s32 6, %v1090
    %v1092 = vrot.slane %v34, %v1091
    %1094 = vbcast.lane.b32.xlu0 %v1092, 256
    %v1095 = vpop.permute.xlu0 %1094
    %s1097 = sor.u32 256, 8
    %1098 = vbcast.lane.b32.xlu0 %v1092, %s1097
    %v1099 = vpop.permute.xlu0 %1098
    %v1100 = vlaneseq
    %v1101 = vshrl.u32 %v1100, 7
    %v1102 = vsub.s32 7, %v1101
    %v1103 = vrot.slane %v34, %v1102
    %1105 = vbcast.lane.b32.xlu0 %v1103, 256
    %v1106 = vpop.permute.xlu0 %1105
    %s1108 = sor.u32 256, 8
    %1109 = vbcast.lane.b32.xlu0 %v1103, %s1108
    %v1110 = vpop.permute.xlu0 %1109
    %v1111 = vlaneseq
    %v1112 = vshrl.u32 %v1111, 7
    %v1113 = vsub.s32 0, %v1112
    %v1114 = vrot.slane %v41, %v1113
    %1116 = vbcast.lane.b32.xlu0 %v1114, 256
    %v1117 = vpop.permute.xlu0 %1116
    %s1119 = sor.u32 256, 8
    %1120 = vbcast.lane.b32.xlu0 %v1114, %s1119
    %v1121 = vpop.permute.xlu0 %1120
    %v1122 = vlaneseq
    %v1123 = vshrl.u32 %v1122, 7
    %v1124 = vsub.s32 1, %v1123
    %v1125 = vrot.slane %v41, %v1124
    %1127 = vbcast.lane.b32.xlu0 %v1125, 256
    %v1128 = vpop.permute.xlu0 %1127
    %s1130 = sor.u32 256, 8
    %1131 = vbcast.lane.b32.xlu0 %v1125, %s1130
    %v1132 = vpop.permute.xlu0 %1131
    %v1133 = vlaneseq
    %v1134 = vshrl.u32 %v1133, 7
    %v1135 = vsub.s32 2, %v1134
    %v1136 = vrot.slane %v41, %v1135
    %1138 = vbcast.lane.b32.xlu0 %v1136, 256
    %v1139 = vpop.permute.xlu0 %1138
    %s1141 = sor.u32 256, 8
    %1142 = vbcast.lane.b32.xlu0 %v1136, %s1141
    %v1143 = vpop.permute.xlu0 %1142
    %v1144 = vlaneseq
    %v1145 = vshrl.u32 %v1144, 7
    %v1146 = vsub.s32 3, %v1145
    %v1147 = vrot.slane %v41, %v1146
    %1149 = vbcast.lane.b32.xlu0 %v1147, 256
    %v1150 = vpop.permute.xlu0 %1149
    %s1152 = sor.u32 256, 8
    %1153 = vbcast.lane.b32.xlu0 %v1147, %s1152
    %v1154 = vpop.permute.xlu0 %1153
    %v1155 = vlaneseq
    %v1156 = vshrl.u32 %v1155, 7
    %v1157 = vsub.s32 4, %v1156
    %v1158 = vrot.slane %v41, %v1157
    %1160 = vbcast.lane.b32.xlu0 %v1158, 256
    %v1161 = vpop.permute.xlu0 %1160
    %s1163 = sor.u32 256, 8
    %1164 = vbcast.lane.b32.xlu0 %v1158, %s1163
    %v1165 = vpop.permute.xlu0 %1164
    %v1166 = vlaneseq
    %v1167 = vshrl.u32 %v1166, 7
    %v1168 = vsub.s32 5, %v1167
    %v1169 = vrot.slane %v41, %v1168
    %1171 = vbcast.lane.b32.xlu0 %v1169, 256
    %v1172 = vpop.permute.xlu0 %1171
    %s1174 = sor.u32 256, 8
    %1175 = vbcast.lane.b32.xlu0 %v1169, %s1174
    %v1176 = vpop.permute.xlu0 %1175
    %v1177 = vlaneseq
    %v1178 = vshrl.u32 %v1177, 7
    %v1179 = vsub.s32 6, %v1178
    %v1180 = vrot.slane %v41, %v1179
    %1182 = vbcast.lane.b32.xlu0 %v1180, 256
    %v1183 = vpop.permute.xlu0 %1182
    %s1185 = sor.u32 256, 8
    %1186 = vbcast.lane.b32.xlu0 %v1180, %s1185
    %v1187 = vpop.permute.xlu0 %1186
    %v1188 = vlaneseq
    %v1189 = vshrl.u32 %v1188, 7
    %v1190 = vsub.s32 7, %v1189
    %v1191 = vrot.slane %v41, %v1190
    %1193 = vbcast.lane.b32.xlu0 %v1191, 256
    %v1194 = vpop.permute.xlu0 %1193
    %s1196 = sor.u32 256, 8
    %1197 = vbcast.lane.b32.xlu0 %v1191, %s1196
    %v1198 = vpop.permute.xlu0 %1197
    %v1199 = vlaneseq
    %v1200 = vshrl.u32 %v1199, 7
    %v1201 = vsub.s32 0, %v1200
    %v1202 = vrot.slane %v42, %v1201
    %1204 = vbcast.lane.b32.xlu0 %v1202, 256
    %v1205 = vpop.permute.xlu0 %1204
    %s1207 = sor.u32 256, 8
    %1208 = vbcast.lane.b32.xlu0 %v1202, %s1207
    %v1209 = vpop.permute.xlu0 %1208
    %v1210 = vlaneseq
    %v1211 = vshrl.u32 %v1210, 7
    %v1212 = vsub.s32 1, %v1211
    %v1213 = vrot.slane %v42, %v1212
    %1215 = vbcast.lane.b32.xlu0 %v1213, 256
    %v1216 = vpop.permute.xlu0 %1215
    %s1218 = sor.u32 256, 8
    %1219 = vbcast.lane.b32.xlu0 %v1213, %s1218
    %v1220 = vpop.permute.xlu0 %1219
    %v1221 = vlaneseq
    %v1222 = vshrl.u32 %v1221, 7
    %v1223 = vsub.s32 2, %v1222
    %v1224 = vrot.slane %v42, %v1223
    %1226 = vbcast.lane.b32.xlu0 %v1224, 256
    %v1227 = vpop.permute.xlu0 %1226
    %s1229 = sor.u32 256, 8
    %1230 = vbcast.lane.b32.xlu0 %v1224, %s1229
    %v1231 = vpop.permute.xlu0 %1230
    %v1232 = vlaneseq
    %v1233 = vshrl.u32 %v1232, 7
    %v1234 = vsub.s32 3, %v1233
    %v1235 = vrot.slane %v42, %v1234
    %1237 = vbcast.lane.b32.xlu0 %v1235, 256
    %v1238 = vpop.permute.xlu0 %1237
    %s1240 = sor.u32 256, 8
    %1241 = vbcast.lane.b32.xlu0 %v1235, %s1240
    %v1242 = vpop.permute.xlu0 %1241
    %v1243 = vlaneseq
    %v1244 = vshrl.u32 %v1243, 7
    %v1245 = vsub.s32 4, %v1244
    %v1246 = vrot.slane %v42, %v1245
    %1248 = vbcast.lane.b32.xlu0 %v1246, 256
    %v1249 = vpop.permute.xlu0 %1248
    %s1251 = sor.u32 256, 8
    %1252 = vbcast.lane.b32.xlu0 %v1246, %s1251
    %v1253 = vpop.permute.xlu0 %1252
    %v1254 = vlaneseq
    %v1255 = vshrl.u32 %v1254, 7
    %v1256 = vsub.s32 5, %v1255
    %v1257 = vrot.slane %v42, %v1256
    %1259 = vbcast.lane.b32.xlu0 %v1257, 256
    %v1260 = vpop.permute.xlu0 %1259
    %s1262 = sor.u32 256, 8
    %1263 = vbcast.lane.b32.xlu0 %v1257, %s1262
    %v1264 = vpop.permute.xlu0 %1263
    %v1265 = vlaneseq
    %v1266 = vshrl.u32 %v1265, 7
    %v1267 = vsub.s32 6, %v1266
    %v1268 = vrot.slane %v42, %v1267
    %1270 = vbcast.lane.b32.xlu0 %v1268, 256
    %v1271 = vpop.permute.xlu0 %1270
    %s1273 = sor.u32 256, 8
    %1274 = vbcast.lane.b32.xlu0 %v1268, %s1273
    %v1275 = vpop.permute.xlu0 %1274
    %v1276 = vlaneseq
    %v1277 = vshrl.u32 %v1276, 7
    %v1278 = vsub.s32 7, %v1277
    %v1279 = vrot.slane %v42, %v1278
    %1281 = vbcast.lane.b32.xlu0 %v1279, 256
    %v1282 = vpop.permute.xlu0 %1281
    %s1284 = sor.u32 256, 8
    %1285 = vbcast.lane.b32.xlu0 %v1279, %s1284
    %v1286 = vpop.permute.xlu0 %1285
    %v1287 = vlaneseq
    %v1288 = vshrl.u32 %v1287, 7
    %v1289 = vsub.s32 0, %v1288
    %v1290 = vrot.slane %v49, %v1289
    %1292 = vbcast.lane.b32.xlu0 %v1290, 256
    %v1293 = vpop.permute.xlu0 %1292
    %s1295 = sor.u32 256, 8
    %1296 = vbcast.lane.b32.xlu0 %v1290, %s1295
    %v1297 = vpop.permute.xlu0 %1296
    %v1298 = vlaneseq
    %v1299 = vshrl.u32 %v1298, 7
    %v1300 = vsub.s32 1, %v1299
    %v1301 = vrot.slane %v49, %v1300
    %1303 = vbcast.lane.b32.xlu0 %v1301, 256
    %v1304 = vpop.permute.xlu0 %1303
    %s1306 = sor.u32 256, 8
    %1307 = vbcast.lane.b32.xlu0 %v1301, %s1306
    %v1308 = vpop.permute.xlu0 %1307
    %v1309 = vlaneseq
    %v1310 = vshrl.u32 %v1309, 7
    %v1311 = vsub.s32 2, %v1310
    %v1312 = vrot.slane %v49, %v1311
    %1314 = vbcast.lane.b32.xlu0 %v1312, 256
    %v1315 = vpop.permute.xlu0 %1314
    %s1317 = sor.u32 256, 8
    %1318 = vbcast.lane.b32.xlu0 %v1312, %s1317
    %v1319 = vpop.permute.xlu0 %1318
    %v1320 = vlaneseq
    %v1321 = vshrl.u32 %v1320, 7
    %v1322 = vsub.s32 3, %v1321
    %v1323 = vrot.slane %v49, %v1322
    %1325 = vbcast.lane.b32.xlu0 %v1323, 256
    %v1326 = vpop.permute.xlu0 %1325
    %s1328 = sor.u32 256, 8
    %1329 = vbcast.lane.b32.xlu0 %v1323, %s1328
    %v1330 = vpop.permute.xlu0 %1329
    %v1331 = vlaneseq
    %v1332 = vshrl.u32 %v1331, 7
    %v1333 = vsub.s32 4, %v1332
    %v1334 = vrot.slane %v49, %v1333
    %1336 = vbcast.lane.b32.xlu0 %v1334, 256
    %v1337 = vpop.permute.xlu0 %1336
    %s1339 = sor.u32 256, 8
    %1340 = vbcast.lane.b32.xlu0 %v1334, %s1339
    %v1341 = vpop.permute.xlu0 %1340
    %v1342 = vlaneseq
    %v1343 = vshrl.u32 %v1342, 7
    %v1344 = vsub.s32 5, %v1343
    %v1345 = vrot.slane %v49, %v1344
    %1347 = vbcast.lane.b32.xlu0 %v1345, 256
    %v1348 = vpop.permute.xlu0 %1347
    %s1350 = sor.u32 256, 8
    %1351 = vbcast.lane.b32.xlu0 %v1345, %s1350
    %v1352 = vpop.permute.xlu0 %1351
    %v1353 = vlaneseq
    %v1354 = vshrl.u32 %v1353, 7
    %v1355 = vsub.s32 6, %v1354
    %v1356 = vrot.slane %v49, %v1355
    %1358 = vbcast.lane.b32.xlu0 %v1356, 256
    %v1359 = vpop.permute.xlu0 %1358
    %s1361 = sor.u32 256, 8
    %1362 = vbcast.lane.b32.xlu0 %v1356, %s1361
    %v1363 = vpop.permute.xlu0 %1362
    %v1364 = vlaneseq
    %v1365 = vshrl.u32 %v1364, 7
    %v1366 = vsub.s32 7, %v1365
    %v1367 = vrot.slane %v49, %v1366
    %1369 = vbcast.lane.b32.xlu0 %v1367, 256
    %v1370 = vpop.permute.xlu0 %1369
    %s1372 = sor.u32 256, 8
    %1373 = vbcast.lane.b32.xlu0 %v1367, %s1372
    %v1374 = vpop.permute.xlu0 %1373
    %v1375 = vlaneseq
    %v1376 = vshrl.u32 %v1375, 7
    %v1377 = vsub.s32 0, %v1376
    %v1378 = vrot.slane %v50, %v1377
    %1380 = vbcast.lane.b32.xlu0 %v1378, 256
    %v1381 = vpop.permute.xlu0 %1380
    %s1383 = sor.u32 256, 8
    %1384 = vbcast.lane.b32.xlu0 %v1378, %s1383
    %v1385 = vpop.permute.xlu0 %1384
    %v1386 = vlaneseq
    %v1387 = vshrl.u32 %v1386, 7
    %v1388 = vsub.s32 1, %v1387
    %v1389 = vrot.slane %v50, %v1388
    %1391 = vbcast.lane.b32.xlu0 %v1389, 256
    %v1392 = vpop.permute.xlu0 %1391
    %s1394 = sor.u32 256, 8
    %1395 = vbcast.lane.b32.xlu0 %v1389, %s1394
    %v1396 = vpop.permute.xlu0 %1395
    %v1397 = vlaneseq
    %v1398 = vshrl.u32 %v1397, 7
    %v1399 = vsub.s32 2, %v1398
    %v1400 = vrot.slane %v50, %v1399
    %1402 = vbcast.lane.b32.xlu0 %v1400, 256
    %v1403 = vpop.permute.xlu0 %1402
    %s1405 = sor.u32 256, 8
    %1406 = vbcast.lane.b32.xlu0 %v1400, %s1405
    %v1407 = vpop.permute.xlu0 %1406
    %v1408 = vlaneseq
    %v1409 = vshrl.u32 %v1408, 7
    %v1410 = vsub.s32 3, %v1409
    %v1411 = vrot.slane %v50, %v1410
    %1413 = vbcast.lane.b32.xlu0 %v1411, 256
    %v1414 = vpop.permute.xlu0 %1413
    %s1416 = sor.u32 256, 8
    %1417 = vbcast.lane.b32.xlu0 %v1411, %s1416
    %v1418 = vpop.permute.xlu0 %1417
    %v1419 = vlaneseq
    %v1420 = vshrl.u32 %v1419, 7
    %v1421 = vsub.s32 4, %v1420
    %v1422 = vrot.slane %v50, %v1421
    %1424 = vbcast.lane.b32.xlu0 %v1422, 256
    %v1425 = vpop.permute.xlu0 %1424
    %s1427 = sor.u32 256, 8
    %1428 = vbcast.lane.b32.xlu0 %v1422, %s1427
    %v1429 = vpop.permute.xlu0 %1428
    %v1430 = vlaneseq
    %v1431 = vshrl.u32 %v1430, 7
    %v1432 = vsub.s32 5, %v1431
    %v1433 = vrot.slane %v50, %v1432
    %1435 = vbcast.lane.b32.xlu0 %v1433, 256
    %v1436 = vpop.permute.xlu0 %1435
    %s1438 = sor.u32 256, 8
    %1439 = vbcast.lane.b32.xlu0 %v1433, %s1438
    %v1440 = vpop.permute.xlu0 %1439
    %v1441 = vlaneseq
    %v1442 = vshrl.u32 %v1441, 7
    %v1443 = vsub.s32 6, %v1442
    %v1444 = vrot.slane %v50, %v1443
    %1446 = vbcast.lane.b32.xlu0 %v1444, 256
    %v1447 = vpop.permute.xlu0 %1446
    %s1449 = sor.u32 256, 8
    %1450 = vbcast.lane.b32.xlu0 %v1444, %s1449
    %v1451 = vpop.permute.xlu0 %1450
    %v1452 = vlaneseq
    %v1453 = vshrl.u32 %v1452, 7
    %v1454 = vsub.s32 7, %v1453
    %v1455 = vrot.slane %v50, %v1454
    %1457 = vbcast.lane.b32.xlu0 %v1455, 256
    %v1458 = vpop.permute.xlu0 %1457
    %s1460 = sor.u32 256, 8
    %1461 = vbcast.lane.b32.xlu0 %v1455, %s1460
    %v1462 = vpop.permute.xlu0 %1461
    %vm1463 = vcmask 7168
    %v1464 = vsel %vm1463, %v61, %v765
    %v1465 = vsel %vm1463, %v65, %v769
    %v1466 = vsel %vm1463, %v72, %v776
    %v1467 = vsel %vm1463, %v76, %v780
    %v1468 = vsel %vm1463, %v83, %v787
    %v1469 = vsel %vm1463, %v87, %v791
    %v1470 = vsel %vm1463, %v94, %v798
    %v1471 = vsel %vm1463, %v98, %v802
    %v1472 = vsel %vm1463, %v105, %v809
    %v1473 = vsel %vm1463, %v109, %v813
    %v1474 = vsel %vm1463, %v116, %v820
    %v1475 = vsel %vm1463, %v120, %v824
    %v1476 = vsel %vm1463, %v127, %v831
    %v1477 = vsel %vm1463, %v131, %v835
    %v1478 = vsel %vm1463, %v138, %v842
    %v1479 = vsel %vm1463, %v142, %v846
    %v1480 = vsel %vm1463, %v149, %v853
    %v1481 = vsel %vm1463, %v153, %v857
    %v1482 = vsel %vm1463, %v160, %v864
    %v1483 = vsel %vm1463, %v164, %v868
    %v1484 = vsel %vm1463, %v171, %v875
    %v1485 = vsel %vm1463, %v175, %v879
    %v1486 = vsel %vm1463, %v182, %v886
    %v1487 = vsel %vm1463, %v186, %v890
    %v1488 = vsel %vm1463, %v193, %v897
    %v1489 = vsel %vm1463, %v197, %v901
    %v1490 = vsel %vm1463, %v204, %v908
    %v1491 = vsel %vm1463, %v208, %v912
    %v1492 = vsel %vm1463, %v215, %v919
    %v1493 = vsel %vm1463, %v219, %v923
    %v1494 = vsel %vm1463, %v226, %v930
    %v1495 = vsel %vm1463, %v230, %v934
    %v1496 = vsel %vm1463, %v237, %v941
    %v1497 = vsel %vm1463, %v241, %v945
    %v1498 = vsel %vm1463, %v248, %v952
    %v1499 = vsel %vm1463, %v252, %v956
    %v1500 = vsel %vm1463, %v259, %v963
    %v1501 = vsel %vm1463, %v263, %v967
    %v1502 = vsel %vm1463, %v270, %v974
    %v1503 = vsel %vm1463, %v274, %v978
    %v1504 = vsel %vm1463, %v281, %v985
    %v1505 = vsel %vm1463, %v285, %v989
    %v1506 = vsel %vm1463, %v292, %v996
    %v1507 = vsel %vm1463, %v296, %v1000
    %v1508 = vsel %vm1463, %v303, %v1007
    %v1509 = vsel %vm1463, %v307, %v1011
    %v1510 = vsel %vm1463, %v314, %v1018
    %v1511 = vsel %vm1463, %v318, %v1022
    %v1512 = vsel %vm1463, %v325, %v1029
    %v1513 = vsel %vm1463, %v329, %v1033
    %v1514 = vsel %vm1463, %v336, %v1040
    %v1515 = vsel %vm1463, %v340, %v1044
    %v1516 = vsel %vm1463, %v347, %v1051
    %v1517 = vsel %vm1463, %v351, %v1055
    %v1518 = vsel %vm1463, %v358, %v1062
    %v1519 = vsel %vm1463, %v362, %v1066
    %v1520 = vsel %vm1463, %v369, %v1073
    %v1521 = vsel %vm1463, %v373, %v1077
    %v1522 = vsel %vm1463, %v380, %v1084
    %v1523 = vsel %vm1463, %v384, %v1088
    %v1524 = vsel %vm1463, %v391, %v1095
    %v1525 = vsel %vm1463, %v395, %v1099
    %v1526 = vsel %vm1463, %v402, %v1106
    %v1527 = vsel %vm1463, %v406, %v1110
    %v1528 = vsel %vm1463, %v413, %v1117
    %v1529 = vsel %vm1463, %v417, %v1121
    %v1530 = vsel %vm1463, %v424, %v1128
    %v1531 = vsel %vm1463, %v428, %v1132
    %v1532 = vsel %vm1463, %v435, %v1139
    %v1533 = vsel %vm1463, %v439, %v1143
    %v1534 = vsel %vm1463, %v446, %v1150
    %v1535 = vsel %vm1463, %v450, %v1154
    %v1536 = vsel %vm1463, %v457, %v1161
    %v1537 = vsel %vm1463, %v461, %v1165
    %v1538 = vsel %vm1463, %v468, %v1172
    %v1539 = vsel %vm1463, %v472, %v1176
    %v1540 = vsel %vm1463, %v479, %v1183
    %v1541 = vsel %vm1463, %v483, %v1187
    %v1542 = vsel %vm1463, %v490, %v1194
    %v1543 = vsel %vm1463, %v494, %v1198
    %v1544 = vsel %vm1463, %v501, %v1205
    %v1545 = vsel %vm1463, %v505, %v1209
    %v1546 = vsel %vm1463, %v512, %v1216
    %v1547 = vsel %vm1463, %v516, %v1220
    %v1548 = vsel %vm1463, %v523, %v1227
    %v1549 = vsel %vm1463, %v527, %v1231
    %v1550 = vsel %vm1463, %v534, %v1238
    %v1551 = vsel %vm1463, %v538, %v1242
    %v1552 = vsel %vm1463, %v545, %v1249
    %v1553 = vsel %vm1463, %v549, %v1253
    %v1554 = vsel %vm1463, %v556, %v1260
    %v1555 = vsel %vm1463, %v560, %v1264
    %v1556 = vsel %vm1463, %v567, %v1271
    %v1557 = vsel %vm1463, %v571, %v1275
    %v1558 = vsel %vm1463, %v578, %v1282
    %v1559 = vsel %vm1463, %v582, %v1286
    %v1560 = vsel %vm1463, %v589, %v1293
    %v1561 = vsel %vm1463, %v593, %v1297
    %v1562 = vsel %vm1463, %v600, %v1304
    %v1563 = vsel %vm1463, %v604, %v1308
    %v1564 = vsel %vm1463, %v611, %v1315
    %v1565 = vsel %vm1463, %v615, %v1319
    %v1566 = vsel %vm1463, %v622, %v1326
    %v1567 = vsel %vm1463, %v626, %v1330
    %v1568 = vsel %vm1463, %v633, %v1337
    %v1569 = vsel %vm1463, %v637, %v1341
    %v1570 = vsel %vm1463, %v644, %v1348
    %v1571 = vsel %vm1463, %v648, %v1352
    %v1572 = vsel %vm1463, %v655, %v1359
    %v1573 = vsel %vm1463, %v659, %v1363
    %v1574 = vsel %vm1463, %v666, %v1370
    %v1575 = vsel %vm1463, %v670, %v1374
    %v1576 = vsel %vm1463, %v677, %v1381
    %v1577 = vsel %vm1463, %v681, %v1385
    %v1578 = vsel %vm1463, %v688, %v1392
    %v1579 = vsel %vm1463, %v692, %v1396
    %v1580 = vsel %vm1463, %v699, %v1403
    %v1581 = vsel %vm1463, %v703, %v1407
    %v1582 = vsel %vm1463, %v710, %v1414
    %v1583 = vsel %vm1463, %v714, %v1418
    %v1584 = vsel %vm1463, %v721, %v1425
    %v1585 = vsel %vm1463, %v725, %v1429
    %v1586 = vsel %vm1463, %v732, %v1436
    %v1587 = vsel %vm1463, %v736, %v1440
    %v1588 = vsel %vm1463, %v743, %v1447
    %v1589 = vsel %vm1463, %v747, %v1451
    %v1590 = vsel %vm1463, %v754, %v1458
    %v1591 = vsel %vm1463, %v758, %v1462
    %v1592 = vcombine.low %v1464, %v1468
    %v1593 = vcombine.high %v1464, %v1468
    %v1595 = vunpack.c.l.s4 1983009808
    %v1596 = vunpack.c.0.s8 %v1595
    %v1597 = vlaneseq
    %v1598 = vshrl.u32 %v1597, 7
    %v1599 = vsub.s32 %v1596, %v1598
    %v1600 = vrot.slane %v1592, %v1599
    %v1602 = vunpack.c.l.s4 1983009808
    %v1603 = vunpack.c.0.s8 %v1602
    %v1604 = vlaneseq
    %v1605 = vshrl.u32 %v1604, 7
    %v1606 = vsub.s32 %v1603, %v1605
    %v1607 = vrot.slane %v1593, %v1606
    %v1608 = vcombine.low %v1466, %v1470
    %v1609 = vcombine.high %v1466, %v1470
    %v1611 = vunpack.c.l.s4 1983009808
    %v1612 = vunpack.c.0.s8 %v1611
    %v1613 = vlaneseq
    %v1614 = vshrl.u32 %v1613, 7
    %v1615 = vsub.s32 %v1612, %v1614
    %v1616 = vrot.slane %v1608, %v1615
    %v1618 = vunpack.c.l.s4 1983009808
    %v1619 = vunpack.c.0.s8 %v1618
    %v1620 = vlaneseq
    %v1621 = vshrl.u32 %v1620, 7
    %v1622 = vsub.s32 %v1619, %v1621
    %v1623 = vrot.slane %v1609, %v1622
    %v1624 = vcombine.low %v1472, %v1476
    %v1625 = vcombine.high %v1472, %v1476
    %v1627 = vunpack.c.l.s4 1983009808
    %v1628 = vunpack.c.0.s8 %v1627
    %v1629 = vlaneseq
    %v1630 = vshrl.u32 %v1629, 7
    %v1631 = vsub.s32 %v1628, %v1630
    %v1632 = vrot.slane %v1624, %v1631
    %v1634 = vunpack.c.l.s4 1983009808
    %v1635 = vunpack.c.0.s8 %v1634
    %v1636 = vlaneseq
    %v1637 = vshrl.u32 %v1636, 7
    %v1638 = vsub.s32 %v1635, %v1637
    %v1639 = vrot.slane %v1625, %v1638
    %v1640 = vcombine.low %v1474, %v1478
    %v1641 = vcombine.high %v1474, %v1478
    %v1643 = vunpack.c.l.s4 1983009808
    %v1644 = vunpack.c.0.s8 %v1643
    %v1645 = vlaneseq
    %v1646 = vshrl.u32 %v1645, 7
    %v1647 = vsub.s32 %v1644, %v1646
    %v1648 = vrot.slane %v1640, %v1647
    %v1650 = vunpack.c.l.s4 1983009808
    %v1651 = vunpack.c.0.s8 %v1650
    %v1652 = vlaneseq
    %v1653 = vshrl.u32 %v1652, 7
    %v1654 = vsub.s32 %v1651, %v1653
    %v1655 = vrot.slane %v1641, %v1654
    %v1656 = vcombine.low %v1600, %v1616
    %v1657 = vcombine.high %v1600, %v1616
    %v1659 = vunpack.c.l.s4 1934713408
    %v1660 = vunpack.c.0.s8 %v1659
    %v1661 = vlaneseq
    %v1662 = vshrl.u32 %v1661, 7
    %v1663 = vsub.s32 %v1660, %v1662
    %v1664 = vrot.slane %v1656, %v1663
    %v1666 = vunpack.c.l.s4 1934713408
    %v1667 = vunpack.c.0.s8 %v1666
    %v1668 = vlaneseq
    %v1669 = vshrl.u32 %v1668, 7
    %v1670 = vsub.s32 %v1667, %v1669
    %v1671 = vrot.slane %v1657, %v1670
    %v1672 = vcombine.low %v1607, %v1623
    %v1673 = vcombine.high %v1607, %v1623
    %v1675 = vunpack.c.l.s4 1934713408
    %v1676 = vunpack.c.0.s8 %v1675
    %v1677 = vlaneseq
    %v1678 = vshrl.u32 %v1677, 7
    %v1679 = vsub.s32 %v1676, %v1678
    %v1680 = vrot.slane %v1672, %v1679
    %v1682 = vunpack.c.l.s4 1934713408
    %v1683 = vunpack.c.0.s8 %v1682
    %v1684 = vlaneseq
    %v1685 = vshrl.u32 %v1684, 7
    %v1686 = vsub.s32 %v1683, %v1685
    %v1687 = vrot.slane %v1673, %v1686
    %v1688 = vcombine.low %v1632, %v1648
    %v1689 = vcombine.high %v1632, %v1648
    %v1691 = vunpack.c.l.s4 1934713408
    %v1692 = vunpack.c.0.s8 %v1691
    %v1693 = vlaneseq
    %v1694 = vshrl.u32 %v1693, 7
    %v1695 = vsub.s32 %v1692, %v1694
    %v1696 = vrot.slane %v1688, %v1695
    %v1698 = vunpack.c.l.s4 1934713408
    %v1699 = vunpack.c.0.s8 %v1698
    %v1700 = vlaneseq
    %v1701 = vshrl.u32 %v1700, 7
    %v1702 = vsub.s32 %v1699, %v1701
    %v1703 = vrot.slane %v1689, %v1702
    %v1704 = vcombine.low %v1639, %v1655
    %v1705 = vcombine.high %v1639, %v1655
    %v1707 = vunpack.c.l.s4 1934713408
    %v1708 = vunpack.c.0.s8 %v1707
    %v1709 = vlaneseq
    %v1710 = vshrl.u32 %v1709, 7
    %v1711 = vsub.s32 %v1708, %v1710
    %v1712 = vrot.slane %v1704, %v1711
    %v1714 = vunpack.c.l.s4 1934713408
    %v1715 = vunpack.c.0.s8 %v1714
    %v1716 = vlaneseq
    %v1717 = vshrl.u32 %v1716, 7
    %v1718 = vsub.s32 %v1715, %v1717
    %v1719 = vrot.slane %v1705, %v1718
    %v1720 = vcombine.low %v1664, %v1696
    %v1721 = vcombine.high %v1664, %v1696
    %v1722 = vcombine.low %v1671, %v1703
    %v1723 = vcombine.high %v1671, %v1703
    %v1724 = vcombine.low %v1680, %v1712
    %v1725 = vcombine.high %v1680, %v1712
    %v1726 = vcombine.low %v1687, %v1719
    %v1727 = vcombine.high %v1687, %v1719
    %v1728 = vcombine.low %v1480, %v1484
    %v1729 = vcombine.high %v1480, %v1484
    %v1731 = vunpack.c.l.s4 1983009808
    %v1732 = vunpack.c.0.s8 %v1731
    %v1733 = vlaneseq
    %v1734 = vshrl.u32 %v1733, 7
    %v1735 = vsub.s32 %v1732, %v1734
    %v1736 = vrot.slane %v1728, %v1735
    %v1738 = vunpack.c.l.s4 1983009808
    %v1739 = vunpack.c.0.s8 %v1738
    %v1740 = vlaneseq
    %v1741 = vshrl.u32 %v1740, 7
    %v1742 = vsub.s32 %v1739, %v1741
    %v1743 = vrot.slane %v1729, %v1742
    %v1744 = vcombine.low %v1482, %v1486
    %v1745 = vcombine.high %v1482, %v1486
    %v1747 = vunpack.c.l.s4 1983009808
    %v1748 = vunpack.c.0.s8 %v1747
    %v1749 = vlaneseq
    %v1750 = vshrl.u32 %v1749, 7
    %v1751 = vsub.s32 %v1748, %v1750
    %v1752 = vrot.slane %v1744, %v1751
    %v1754 = vunpack.c.l.s4 1983009808
    %v1755 = vunpack.c.0.s8 %v1754
    %v1756 = vlaneseq
    %v1757 = vshrl.u32 %v1756, 7
    %v1758 = vsub.s32 %v1755, %v1757
    %v1759 = vrot.slane %v1745, %v1758
    %v1760 = vcombine.low %v1488, %v1492
    %v1761 = vcombine.high %v1488, %v1492
    %v1763 = vunpack.c.l.s4 1983009808
    %v1764 = vunpack.c.0.s8 %v1763
    %v1765 = vlaneseq
    %v1766 = vshrl.u32 %v1765, 7
    %v1767 = vsub.s32 %v1764, %v1766
    %v1768 = vrot.slane %v1760, %v1767
    %v1770 = vunpack.c.l.s4 1983009808
    %v1771 = vunpack.c.0.s8 %v1770
    %v1772 = vlaneseq
    %v1773 = vshrl.u32 %v1772, 7
    %v1774 = vsub.s32 %v1771, %v1773
    %v1775 = vrot.slane %v1761, %v1774
    %v1776 = vcombine.low %v1490, %v1494
    %v1777 = vcombine.high %v1490, %v1494
    %v1779 = vunpack.c.l.s4 1983009808
    %v1780 = vunpack.c.0.s8 %v1779
    %v1781 = vlaneseq
    %v1782 = vshrl.u32 %v1781, 7
    %v1783 = vsub.s32 %v1780, %v1782
    %v1784 = vrot.slane %v1776, %v1783
    %v1786 = vunpack.c.l.s4 1983009808
    %v1787 = vunpack.c.0.s8 %v1786
    %v1788 = vlaneseq
    %v1789 = vshrl.u32 %v1788, 7
    %v1790 = vsub.s32 %v1787, %v1789
    %v1791 = vrot.slane %v1777, %v1790
    %v1792 = vcombine.low %v1736, %v1752
    %v1793 = vcombine.high %v1736, %v1752
    %v1795 = vunpack.c.l.s4 1934713408
    %v1796 = vunpack.c.0.s8 %v1795
    %v1797 = vlaneseq
    %v1798 = vshrl.u32 %v1797, 7
    %v1799 = vsub.s32 %v1796, %v1798
    %v1800 = vrot.slane %v1792, %v1799
    %v1802 = vunpack.c.l.s4 1934713408
    %v1803 = vunpack.c.0.s8 %v1802
    %v1804 = vlaneseq
    %v1805 = vshrl.u32 %v1804, 7
    %v1806 = vsub.s32 %v1803, %v1805
    %v1807 = vrot.slane %v1793, %v1806
    %v1808 = vcombine.low %v1743, %v1759
    %v1809 = vcombine.high %v1743, %v1759
    %v1811 = vunpack.c.l.s4 1934713408
    %v1812 = vunpack.c.0.s8 %v1811
    %v1813 = vlaneseq
    %v1814 = vshrl.u32 %v1813, 7
    %v1815 = vsub.s32 %v1812, %v1814
    %v1816 = vrot.slane %v1808, %v1815
    %v1818 = vunpack.c.l.s4 1934713408
    %v1819 = vunpack.c.0.s8 %v1818
    %v1820 = vlaneseq
    %v1821 = vshrl.u32 %v1820, 7
    %v1822 = vsub.s32 %v1819, %v1821
    %v1823 = vrot.slane %v1809, %v1822
    %v1824 = vcombine.low %v1768, %v1784
    %v1825 = vcombine.high %v1768, %v1784
    %v1827 = vunpack.c.l.s4 1934713408
    %v1828 = vunpack.c.0.s8 %v1827
    %v1829 = vlaneseq
    %v1830 = vshrl.u32 %v1829, 7
    %v1831 = vsub.s32 %v1828, %v1830
    %v1832 = vrot.slane %v1824, %v1831
    %v1834 = vunpack.c.l.s4 1934713408
    %v1835 = vunpack.c.0.s8 %v1834
    %v1836 = vlaneseq
    %v1837 = vshrl.u32 %v1836, 7
    %v1838 = vsub.s32 %v1835, %v1837
    %v1839 = vrot.slane %v1825, %v1838
    %v1840 = vcombine.low %v1775, %v1791
    %v1841 = vcombine.high %v1775, %v1791
    %v1843 = vunpack.c.l.s4 1934713408
    %v1844 = vunpack.c.0.s8 %v1843
    %v1845 = vlaneseq
    %v1846 = vshrl.u32 %v1845, 7
    %v1847 = vsub.s32 %v1844, %v1846
    %v1848 = vrot.slane %v1840, %v1847
    %v1850 = vunpack.c.l.s4 1934713408
    %v1851 = vunpack.c.0.s8 %v1850
    %v1852 = vlaneseq
    %v1853 = vshrl.u32 %v1852, 7
    %v1854 = vsub.s32 %v1851, %v1853
    %v1855 = vrot.slane %v1841, %v1854
    %v1856 = vcombine.low %v1800, %v1832
    %v1857 = vcombine.high %v1800, %v1832
    %v1858 = vcombine.low %v1807, %v1839
    %v1859 = vcombine.high %v1807, %v1839
    %v1860 = vcombine.low %v1816, %v1848
    %v1861 = vcombine.high %v1816, %v1848
    %v1862 = vcombine.low %v1823, %v1855
    %v1863 = vcombine.high %v1823, %v1855
    %v1864 = vcombine.low %v1465, %v1469
    %v1865 = vcombine.high %v1465, %v1469
    %v1867 = vunpack.c.l.s4 1983009808
    %v1868 = vunpack.c.0.s8 %v1867
    %v1869 = vlaneseq
    %v1870 = vshrl.u32 %v1869, 7
    %v1871 = vsub.s32 %v1868, %v1870
    %v1872 = vrot.slane %v1864, %v1871
    %v1874 = vunpack.c.l.s4 1983009808
    %v1875 = vunpack.c.0.s8 %v1874
    %v1876 = vlaneseq
    %v1877 = vshrl.u32 %v1876, 7
    %v1878 = vsub.s32 %v1875, %v1877
    %v1879 = vrot.slane %v1865, %v1878
    %v1880 = vcombine.low %v1467, %v1471
    %v1881 = vcombine.high %v1467, %v1471
    %v1883 = vunpack.c.l.s4 1983009808
    %v1884 = vunpack.c.0.s8 %v1883
    %v1885 = vlaneseq
    %v1886 = vshrl.u32 %v1885, 7
    %v1887 = vsub.s32 %v1884, %v1886
    %v1888 = vrot.slane %v1880, %v1887
    %v1890 = vunpack.c.l.s4 1983009808
    %v1891 = vunpack.c.0.s8 %v1890
    %v1892 = vlaneseq
    %v1893 = vshrl.u32 %v1892, 7
    %v1894 = vsub.s32 %v1891, %v1893
    %v1895 = vrot.slane %v1881, %v1894
    %v1896 = vcombine.low %v1473, %v1477
    %v1897 = vcombine.high %v1473, %v1477
    %v1899 = vunpack.c.l.s4 1983009808
    %v1900 = vunpack.c.0.s8 %v1899
    %v1901 = vlaneseq
    %v1902 = vshrl.u32 %v1901, 7
    %v1903 = vsub.s32 %v1900, %v1902
    %v1904 = vrot.slane %v1896, %v1903
    %v1906 = vunpack.c.l.s4 1983009808
    %v1907 = vunpack.c.0.s8 %v1906
    %v1908 = vlaneseq
    %v1909 = vshrl.u32 %v1908, 7
    %v1910 = vsub.s32 %v1907, %v1909
    %v1911 = vrot.slane %v1897, %v1910
    %v1912 = vcombine.low %v1475, %v1479
    %v1913 = vcombine.high %v1475, %v1479
    %v1915 = vunpack.c.l.s4 1983009808
    %v1916 = vunpack.c.0.s8 %v1915
    %v1917 = vlaneseq
    %v1918 = vshrl.u32 %v1917, 7
    %v1919 = vsub.s32 %v1916, %v1918
    %v1920 = vrot.slane %v1912, %v1919
    %v1922 = vunpack.c.l.s4 1983009808
    %v1923 = vunpack.c.0.s8 %v1922
    %v1924 = vlaneseq
    %v1925 = vshrl.u32 %v1924, 7
    %v1926 = vsub.s32 %v1923, %v1925
    %v1927 = vrot.slane %v1913, %v1926
    %v1928 = vcombine.low %v1872, %v1888
    %v1929 = vcombine.high %v1872, %v1888
    %v1931 = vunpack.c.l.s4 1934713408
    %v1932 = vunpack.c.0.s8 %v1931
    %v1933 = vlaneseq
    %v1934 = vshrl.u32 %v1933, 7
    %v1935 = vsub.s32 %v1932, %v1934
    %v1936 = vrot.slane %v1928, %v1935
    %v1938 = vunpack.c.l.s4 1934713408
    %v1939 = vunpack.c.0.s8 %v1938
    %v1940 = vlaneseq
    %v1941 = vshrl.u32 %v1940, 7
    %v1942 = vsub.s32 %v1939, %v1941
    %v1943 = vrot.slane %v1929, %v1942
    %v1944 = vcombine.low %v1879, %v1895
    %v1945 = vcombine.high %v1879, %v1895
    %v1947 = vunpack.c.l.s4 1934713408
    %v1948 = vunpack.c.0.s8 %v1947
    %v1949 = vlaneseq
    %v1950 = vshrl.u32 %v1949, 7
    %v1951 = vsub.s32 %v1948, %v1950
    %v1952 = vrot.slane %v1944, %v1951
    %v1954 = vunpack.c.l.s4 1934713408
    %v1955 = vunpack.c.0.s8 %v1954
    %v1956 = vlaneseq
    %v1957 = vshrl.u32 %v1956, 7
    %v1958 = vsub.s32 %v1955, %v1957
    %v1959 = vrot.slane %v1945, %v1958
    %v1960 = vcombine.low %v1904, %v1920
    %v1961 = vcombine.high %v1904, %v1920
    %v1963 = vunpack.c.l.s4 1934713408
    %v1964 = vunpack.c.0.s8 %v1963
    %v1965 = vlaneseq
    %v1966 = vshrl.u32 %v1965, 7
    %v1967 = vsub.s32 %v1964, %v1966
    %v1968 = vrot.slane %v1960, %v1967
    %v1970 = vunpack.c.l.s4 1934713408
    %v1971 = vunpack.c.0.s8 %v1970
    %v1972 = vlaneseq
    %v1973 = vshrl.u32 %v1972, 7
    %v1974 = vsub.s32 %v1971, %v1973
    %v1975 = vrot.slane %v1961, %v1974
    %v1976 = vcombine.low %v1911, %v1927
    %v1977 = vcombine.high %v1911, %v1927
    %v1979 = vunpack.c.l.s4 1934713408
    %v1980 = vunpack.c.0.s8 %v1979
    %v1981 = vlaneseq
    %v1982 = vshrl.u32 %v1981, 7
    %v1983 = vsub.s32 %v1980, %v1982
    %v1984 = vrot.slane %v1976, %v1983
    %v1986 = vunpack.c.l.s4 1934713408
    %v1987 = vunpack.c.0.s8 %v1986
    %v1988 = vlaneseq
    %v1989 = vshrl.u32 %v1988, 7
    %v1990 = vsub.s32 %v1987, %v1989
    %v1991 = vrot.slane %v1977, %v1990
    %v1992 = vcombine.low %v1936, %v1968
    %v1993 = vcombine.high %v1936, %v1968
    %v1994 = vcombine.low %v1943, %v1975
    %v1995 = vcombine.high %v1943, %v1975
    %v1996 = vcombine.low %v1952, %v1984
    %v1997 = vcombine.high %v1952, %v1984
    %v1998 = vcombine.low %v1959, %v1991
    %v1999 = vcombine.high %v1959, %v1991
    %v2000 = vcombine.low %v1481, %v1485
    %v2001 = vcombine.high %v1481, %v1485
    %v2003 = vunpack.c.l.s4 1983009808
    %v2004 = vunpack.c.0.s8 %v2003
    %v2005 = vlaneseq
    %v2006 = vshrl.u32 %v2005, 7
    %v2007 = vsub.s32 %v2004, %v2006
    %v2008 = vrot.slane %v2000, %v2007
    %v2010 = vunpack.c.l.s4 1983009808
    %v2011 = vunpack.c.0.s8 %v2010
    %v2012 = vlaneseq
    %v2013 = vshrl.u32 %v2012, 7
    %v2014 = vsub.s32 %v2011, %v2013
    %v2015 = vrot.slane %v2001, %v2014
    %v2016 = vcombine.low %v1483, %v1487
    %v2017 = vcombine.high %v1483, %v1487
    %v2019 = vunpack.c.l.s4 1983009808
    %v2020 = vunpack.c.0.s8 %v2019
    %v2021 = vlaneseq
    %v2022 = vshrl.u32 %v2021, 7
    %v2023 = vsub.s32 %v2020, %v2022
    %v2024 = vrot.slane %v2016, %v2023
    %v2026 = vunpack.c.l.s4 1983009808
    %v2027 = vunpack.c.0.s8 %v2026
    %v2028 = vlaneseq
    %v2029 = vshrl.u32 %v2028, 7
    %v2030 = vsub.s32 %v2027, %v2029
    %v2031 = vrot.slane %v2017, %v2030
    %v2032 = vcombine.low %v1489, %v1493
    %v2033 = vcombine.high %v1489, %v1493
    %v2035 = vunpack.c.l.s4 1983009808
    %v2036 = vunpack.c.0.s8 %v2035
    %v2037 = vlaneseq
    %v2038 = vshrl.u32 %v2037, 7
    %v2039 = vsub.s32 %v2036, %v2038
    %v2040 = vrot.slane %v2032, %v2039
    %v2042 = vunpack.c.l.s4 1983009808
    %v2043 = vunpack.c.0.s8 %v2042
    %v2044 = vlaneseq
    %v2045 = vshrl.u32 %v2044, 7
    %v2046 = vsub.s32 %v2043, %v2045
    %v2047 = vrot.slane %v2033, %v2046
    %v2048 = vcombine.low %v1491, %v1495
    %v2049 = vcombine.high %v1491, %v1495
    %v2051 = vunpack.c.l.s4 1983009808
    %v2052 = vunpack.c.0.s8 %v2051
    %v2053 = vlaneseq
    %v2054 = vshrl.u32 %v2053, 7
    %v2055 = vsub.s32 %v2052, %v2054
    %v2056 = vrot.slane %v2048, %v2055
    %v2058 = vunpack.c.l.s4 1983009808
    %v2059 = vunpack.c.0.s8 %v2058
    %v2060 = vlaneseq
    %v2061 = vshrl.u32 %v2060, 7
    %v2062 = vsub.s32 %v2059, %v2061
    %v2063 = vrot.slane %v2049, %v2062
    %v2064 = vcombine.low %v2008, %v2024
    %v2065 = vcombine.high %v2008, %v2024
    %v2067 = vunpack.c.l.s4 1934713408
    %v2068 = vunpack.c.0.s8 %v2067
    %v2069 = vlaneseq
    %v2070 = vshrl.u32 %v2069, 7
    %v2071 = vsub.s32 %v2068, %v2070
    %v2072 = vrot.slane %v2064, %v2071
    %v2074 = vunpack.c.l.s4 1934713408
    %v2075 = vunpack.c.0.s8 %v2074
    %v2076 = vlaneseq
    %v2077 = vshrl.u32 %v2076, 7
    %v2078 = vsub.s32 %v2075, %v2077
    %v2079 = vrot.slane %v2065, %v2078
    %v2080 = vcombine.low %v2015, %v2031
    %v2081 = vcombine.high %v2015, %v2031
    %v2083 = vunpack.c.l.s4 1934713408
    %v2084 = vunpack.c.0.s8 %v2083
    %v2085 = vlaneseq
    %v2086 = vshrl.u32 %v2085, 7
    %v2087 = vsub.s32 %v2084, %v2086
    %v2088 = vrot.slane %v2080, %v2087
    %v2090 = vunpack.c.l.s4 1934713408
    %v2091 = vunpack.c.0.s8 %v2090
    %v2092 = vlaneseq
    %v2093 = vshrl.u32 %v2092, 7
    %v2094 = vsub.s32 %v2091, %v2093
    %v2095 = vrot.slane %v2081, %v2094
    %v2096 = vcombine.low %v2040, %v2056
    %v2097 = vcombine.high %v2040, %v2056
    %v2099 = vunpack.c.l.s4 1934713408
    %v2100 = vunpack.c.0.s8 %v2099
    %v2101 = vlaneseq
    %v2102 = vshrl.u32 %v2101, 7
    %v2103 = vsub.s32 %v2100, %v2102
    %v2104 = vrot.slane %v2096, %v2103
    %v2106 = vunpack.c.l.s4 1934713408
    %v2107 = vunpack.c.0.s8 %v2106
    %v2108 = vlaneseq
    %v2109 = vshrl.u32 %v2108, 7
    %v2110 = vsub.s32 %v2107, %v2109
    %v2111 = vrot.slane %v2097, %v2110
    %v2112 = vcombine.low %v2047, %v2063
    %v2113 = vcombine.high %v2047, %v2063
    %v2115 = vunpack.c.l.s4 1934713408
    %v2116 = vunpack.c.0.s8 %v2115
    %v2117 = vlaneseq
    %v2118 = vshrl.u32 %v2117, 7
    %v2119 = vsub.s32 %v2116, %v2118
    %v2120 = vrot.slane %v2112, %v2119
    %v2122 = vunpack.c.l.s4 1934713408
    %v2123 = vunpack.c.0.s8 %v2122
    %v2124 = vlaneseq
    %v2125 = vshrl.u32 %v2124, 7
    %v2126 = vsub.s32 %v2123, %v2125
    %v2127 = vrot.slane %v2113, %v2126
    %v2128 = vcombine.low %v2072, %v2104
    %v2129 = vcombine.high %v2072, %v2104
    %v2130 = vcombine.low %v2079, %v2111
    %v2131 = vcombine.high %v2079, %v2111
    %v2132 = vcombine.low %v2088, %v2120
    %v2133 = vcombine.high %v2088, %v2120
    %v2134 = vcombine.low %v2095, %v2127
    %v2135 = vcombine.high %v2095, %v2127
    %v2136 = vcombine.low %v1496, %v1500
    %v2137 = vcombine.high %v1496, %v1500
    %v2139 = vunpack.c.l.s4 1983009808
    %v2140 = vunpack.c.0.s8 %v2139
    %v2141 = vlaneseq
    %v2142 = vshrl.u32 %v2141, 7
    %v2143 = vsub.s32 %v2140, %v2142
    %v2144 = vrot.slane %v2136, %v2143
    %v2146 = vunpack.c.l.s4 1983009808
    %v2147 = vunpack.c.0.s8 %v2146
    %v2148 = vlaneseq
    %v2149 = vshrl.u32 %v2148, 7
    %v2150 = vsub.s32 %v2147, %v2149
    %v2151 = vrot.slane %v2137, %v2150
    %v2152 = vcombine.low %v1498, %v1502
    %v2153 = vcombine.high %v1498, %v1502
    %v2155 = vunpack.c.l.s4 1983009808
    %v2156 = vunpack.c.0.s8 %v2155
    %v2157 = vlaneseq
    %v2158 = vshrl.u32 %v2157, 7
    %v2159 = vsub.s32 %v2156, %v2158
    %v2160 = vrot.slane %v2152, %v2159
    %v2162 = vunpack.c.l.s4 1983009808
    %v2163 = vunpack.c.0.s8 %v2162
    %v2164 = vlaneseq
    %v2165 = vshrl.u32 %v2164, 7
    %v2166 = vsub.s32 %v2163, %v2165
    %v2167 = vrot.slane %v2153, %v2166
    %v2168 = vcombine.low %v1504, %v1508
    %v2169 = vcombine.high %v1504, %v1508
    %v2171 = vunpack.c.l.s4 1983009808
    %v2172 = vunpack.c.0.s8 %v2171
    %v2173 = vlaneseq
    %v2174 = vshrl.u32 %v2173, 7
    %v2175 = vsub.s32 %v2172, %v2174
    %v2176 = vrot.slane %v2168, %v2175
    %v2178 = vunpack.c.l.s4 1983009808
    %v2179 = vunpack.c.0.s8 %v2178
    %v2180 = vlaneseq
    %v2181 = vshrl.u32 %v2180, 7
    %v2182 = vsub.s32 %v2179, %v2181
    %v2183 = vrot.slane %v2169, %v2182
    %v2184 = vcombine.low %v1506, %v1510
    %v2185 = vcombine.high %v1506, %v1510
    %v2187 = vunpack.c.l.s4 1983009808
    %v2188 = vunpack.c.0.s8 %v2187
    %v2189 = vlaneseq
    %v2190 = vshrl.u32 %v2189, 7
    %v2191 = vsub.s32 %v2188, %v2190
    %v2192 = vrot.slane %v2184, %v2191
    %v2194 = vunpack.c.l.s4 1983009808
    %v2195 = vunpack.c.0.s8 %v2194
    %v2196 = vlaneseq
    %v2197 = vshrl.u32 %v2196, 7
    %v2198 = vsub.s32 %v2195, %v2197
    %v2199 = vrot.slane %v2185, %v2198
    %v2200 = vcombine.low %v2144, %v2160
    %v2201 = vcombine.high %v2144, %v2160
    %v2203 = vunpack.c.l.s4 1934713408
    %v2204 = vunpack.c.0.s8 %v2203
    %v2205 = vlaneseq
    %v2206 = vshrl.u32 %v2205, 7
    %v2207 = vsub.s32 %v2204, %v2206
    %v2208 = vrot.slane %v2200, %v2207
    %v2210 = vunpack.c.l.s4 1934713408
    %v2211 = vunpack.c.0.s8 %v2210
    %v2212 = vlaneseq
    %v2213 = vshrl.u32 %v2212, 7
    %v2214 = vsub.s32 %v2211, %v2213
    %v2215 = vrot.slane %v2201, %v2214
    %v2216 = vcombine.low %v2151, %v2167
    %v2217 = vcombine.high %v2151, %v2167
    %v2219 = vunpack.c.l.s4 1934713408
    %v2220 = vunpack.c.0.s8 %v2219
    %v2221 = vlaneseq
    %v2222 = vshrl.u32 %v2221, 7
    %v2223 = vsub.s32 %v2220, %v2222
    %v2224 = vrot.slane %v2216, %v2223
    %v2226 = vunpack.c.l.s4 1934713408
    %v2227 = vunpack.c.0.s8 %v2226
    %v2228 = vlaneseq
    %v2229 = vshrl.u32 %v2228, 7
    %v2230 = vsub.s32 %v2227, %v2229
    %v2231 = vrot.slane %v2217, %v2230
    %v2232 = vcombine.low %v2176, %v2192
    %v2233 = vcombine.high %v2176, %v2192
    %v2235 = vunpack.c.l.s4 1934713408
    %v2236 = vunpack.c.0.s8 %v2235
    %v2237 = vlaneseq
    %v2238 = vshrl.u32 %v2237, 7
    %v2239 = vsub.s32 %v2236, %v2238
    %v2240 = vrot.slane %v2232, %v2239
    %v2242 = vunpack.c.l.s4 1934713408
    %v2243 = vunpack.c.0.s8 %v2242
    %v2244 = vlaneseq
    %v2245 = vshrl.u32 %v2244, 7
    %v2246 = vsub.s32 %v2243, %v2245
    %v2247 = vrot.slane %v2233, %v2246
    %v2248 = vcombine.low %v2183, %v2199
    %v2249 = vcombine.high %v2183, %v2199
    %v2251 = vunpack.c.l.s4 1934713408
    %v2252 = vunpack.c.0.s8 %v2251
    %v2253 = vlaneseq
    %v2254 = vshrl.u32 %v2253, 7
    %v2255 = vsub.s32 %v2252, %v2254
    %v2256 = vrot.slane %v2248, %v2255
    %v2258 = vunpack.c.l.s4 1934713408
    %v2259 = vunpack.c.0.s8 %v2258
    %v2260 = vlaneseq
    %v2261 = vshrl.u32 %v2260, 7
    %v2262 = vsub.s32 %v2259, %v2261
    %v2263 = vrot.slane %v2249, %v2262
    %v2264 = vcombine.low %v2208, %v2240
    %v2265 = vcombine.high %v2208, %v2240
    %v2266 = vcombine.low %v2215, %v2247
    %v2267 = vcombine.high %v2215, %v2247
    %v2268 = vcombine.low %v2224, %v2256
    %v2269 = vcombine.high %v2224, %v2256
    %v2270 = vcombine.low %v2231, %v2263
    %v2271 = vcombine.high %v2231, %v2263
    %v2272 = vcombine.low %v1512, %v1516
    %v2273 = vcombine.high %v1512, %v1516
    %v2275 = vunpack.c.l.s4 1983009808
    %v2276 = vunpack.c.0.s8 %v2275
    %v2277 = vlaneseq
    %v2278 = vshrl.u32 %v2277, 7
    %v2279 = vsub.s32 %v2276, %v2278
    %v2280 = vrot.slane %v2272, %v2279
    %v2282 = vunpack.c.l.s4 1983009808
    %v2283 = vunpack.c.0.s8 %v2282
    %v2284 = vlaneseq
    %v2285 = vshrl.u32 %v2284, 7
    %v2286 = vsub.s32 %v2283, %v2285
    %v2287 = vrot.slane %v2273, %v2286
    %v2288 = vcombine.low %v1514, %v1518
    %v2289 = vcombine.high %v1514, %v1518
    %v2291 = vunpack.c.l.s4 1983009808
    %v2292 = vunpack.c.0.s8 %v2291
    %v2293 = vlaneseq
    %v2294 = vshrl.u32 %v2293, 7
    %v2295 = vsub.s32 %v2292, %v2294
    %v2296 = vrot.slane %v2288, %v2295
    %v2298 = vunpack.c.l.s4 1983009808
    %v2299 = vunpack.c.0.s8 %v2298
    %v2300 = vlaneseq
    %v2301 = vshrl.u32 %v2300, 7
    %v2302 = vsub.s32 %v2299, %v2301
    %v2303 = vrot.slane %v2289, %v2302
    %v2304 = vcombine.low %v1520, %v1524
    %v2305 = vcombine.high %v1520, %v1524
    %v2307 = vunpack.c.l.s4 1983009808
    %v2308 = vunpack.c.0.s8 %v2307
    %v2309 = vlaneseq
    %v2310 = vshrl.u32 %v2309, 7
    %v2311 = vsub.s32 %v2308, %v2310
    %v2312 = vrot.slane %v2304, %v2311
    %v2314 = vunpack.c.l.s4 1983009808
    %v2315 = vunpack.c.0.s8 %v2314
    %v2316 = vlaneseq
    %v2317 = vshrl.u32 %v2316, 7
    %v2318 = vsub.s32 %v2315, %v2317
    %v2319 = vrot.slane %v2305, %v2318
    %v2320 = vcombine.low %v1522, %v1526
    %v2321 = vcombine.high %v1522, %v1526
    %v2323 = vunpack.c.l.s4 1983009808
    %v2324 = vunpack.c.0.s8 %v2323
    %v2325 = vlaneseq
    %v2326 = vshrl.u32 %v2325, 7
    %v2327 = vsub.s32 %v2324, %v2326
    %v2328 = vrot.slane %v2320, %v2327
    %v2330 = vunpack.c.l.s4 1983009808
    %v2331 = vunpack.c.0.s8 %v2330
    %v2332 = vlaneseq
    %v2333 = vshrl.u32 %v2332, 7
    %v2334 = vsub.s32 %v2331, %v2333
    %v2335 = vrot.slane %v2321, %v2334
    %v2336 = vcombine.low %v2280, %v2296
    %v2337 = vcombine.high %v2280, %v2296
    %v2339 = vunpack.c.l.s4 1934713408
    %v2340 = vunpack.c.0.s8 %v2339
    %v2341 = vlaneseq
    %v2342 = vshrl.u32 %v2341, 7
    %v2343 = vsub.s32 %v2340, %v2342
    %v2344 = vrot.slane %v2336, %v2343
    %v2346 = vunpack.c.l.s4 1934713408
    %v2347 = vunpack.c.0.s8 %v2346
    %v2348 = vlaneseq
    %v2349 = vshrl.u32 %v2348, 7
    %v2350 = vsub.s32 %v2347, %v2349
    %v2351 = vrot.slane %v2337, %v2350
    %v2352 = vcombine.low %v2287, %v2303
    %v2353 = vcombine.high %v2287, %v2303
    %v2355 = vunpack.c.l.s4 1934713408
    %v2356 = vunpack.c.0.s8 %v2355
    %v2357 = vlaneseq
    %v2358 = vshrl.u32 %v2357, 7
    %v2359 = vsub.s32 %v2356, %v2358
    %v2360 = vrot.slane %v2352, %v2359
    %v2362 = vunpack.c.l.s4 1934713408
    %v2363 = vunpack.c.0.s8 %v2362
    %v2364 = vlaneseq
    %v2365 = vshrl.u32 %v2364, 7
    %v2366 = vsub.s32 %v2363, %v2365
    %v2367 = vrot.slane %v2353, %v2366
    %v2368 = vcombine.low %v2312, %v2328
    %v2369 = vcombine.high %v2312, %v2328
    %v2371 = vunpack.c.l.s4 1934713408
    %v2372 = vunpack.c.0.s8 %v2371
    %v2373 = vlaneseq
    %v2374 = vshrl.u32 %v2373, 7
    %v2375 = vsub.s32 %v2372, %v2374
    %v2376 = vrot.slane %v2368, %v2375
    %v2378 = vunpack.c.l.s4 1934713408
    %v2379 = vunpack.c.0.s8 %v2378
    %v2380 = vlaneseq
    %v2381 = vshrl.u32 %v2380, 7
    %v2382 = vsub.s32 %v2379, %v2381
    %v2383 = vrot.slane %v2369, %v2382
    %v2384 = vcombine.low %v2319, %v2335
    %v2385 = vcombine.high %v2319, %v2335
    %v2387 = vunpack.c.l.s4 1934713408
    %v2388 = vunpack.c.0.s8 %v2387
    %v2389 = vlaneseq
    %v2390 = vshrl.u32 %v2389, 7
    %v2391 = vsub.s32 %v2388, %v2390
    %v2392 = vrot.slane %v2384, %v2391
    %v2394 = vunpack.c.l.s4 1934713408
    %v2395 = vunpack.c.0.s8 %v2394
    %v2396 = vlaneseq
    %v2397 = vshrl.u32 %v2396, 7
    %v2398 = vsub.s32 %v2395, %v2397
    %v2399 = vrot.slane %v2385, %v2398
    %v2400 = vcombine.low %v2344, %v2376
    %v2401 = vcombine.high %v2344, %v2376
    %v2402 = vcombine.low %v2351, %v2383
    %v2403 = vcombine.high %v2351, %v2383
    %v2404 = vcombine.low %v2360, %v2392
    %v2405 = vcombine.high %v2360, %v2392
    %v2406 = vcombine.low %v2367, %v2399
    %v2407 = vcombine.high %v2367, %v2399
    %v2408 = vcombine.low %v1497, %v1501
    %v2409 = vcombine.high %v1497, %v1501
    %v2411 = vunpack.c.l.s4 1983009808
    %v2412 = vunpack.c.0.s8 %v2411
    %v2413 = vlaneseq
    %v2414 = vshrl.u32 %v2413, 7
    %v2415 = vsub.s32 %v2412, %v2414
    %v2416 = vrot.slane %v2408, %v2415
    %v2418 = vunpack.c.l.s4 1983009808
    %v2419 = vunpack.c.0.s8 %v2418
    %v2420 = vlaneseq
    %v2421 = vshrl.u32 %v2420, 7
    %v2422 = vsub.s32 %v2419, %v2421
    %v2423 = vrot.slane %v2409, %v2422
    %v2424 = vcombine.low %v1499, %v1503
    %v2425 = vcombine.high %v1499, %v1503
    %v2427 = vunpack.c.l.s4 1983009808
    %v2428 = vunpack.c.0.s8 %v2427
    %v2429 = vlaneseq
    %v2430 = vshrl.u32 %v2429, 7
    %v2431 = vsub.s32 %v2428, %v2430
    %v2432 = vrot.slane %v2424, %v2431
    %v2434 = vunpack.c.l.s4 1983009808
    %v2435 = vunpack.c.0.s8 %v2434
    %v2436 = vlaneseq
    %v2437 = vshrl.u32 %v2436, 7
    %v2438 = vsub.s32 %v2435, %v2437
    %v2439 = vrot.slane %v2425, %v2438
    %v2440 = vcombine.low %v1505, %v1509
    %v2441 = vcombine.high %v1505, %v1509
    %v2443 = vunpack.c.l.s4 1983009808
    %v2444 = vunpack.c.0.s8 %v2443
    %v2445 = vlaneseq
    %v2446 = vshrl.u32 %v2445, 7
    %v2447 = vsub.s32 %v2444, %v2446
    %v2448 = vrot.slane %v2440, %v2447
    %v2450 = vunpack.c.l.s4 1983009808
    %v2451 = vunpack.c.0.s8 %v2450
    %v2452 = vlaneseq
    %v2453 = vshrl.u32 %v2452, 7
    %v2454 = vsub.s32 %v2451, %v2453
    %v2455 = vrot.slane %v2441, %v2454
    %v2456 = vcombine.low %v1507, %v1511
    %v2457 = vcombine.high %v1507, %v1511
    %v2459 = vunpack.c.l.s4 1983009808
    %v2460 = vunpack.c.0.s8 %v2459
    %v2461 = vlaneseq
    %v2462 = vshrl.u32 %v2461, 7
    %v2463 = vsub.s32 %v2460, %v2462
    %v2464 = vrot.slane %v2456, %v2463
    %v2466 = vunpack.c.l.s4 1983009808
    %v2467 = vunpack.c.0.s8 %v2466
    %v2468 = vlaneseq
    %v2469 = vshrl.u32 %v2468, 7
    %v2470 = vsub.s32 %v2467, %v2469
    %v2471 = vrot.slane %v2457, %v2470
    %v2472 = vcombine.low %v2416, %v2432
    %v2473 = vcombine.high %v2416, %v2432
    %v2475 = vunpack.c.l.s4 1934713408
    %v2476 = vunpack.c.0.s8 %v2475
    %v2477 = vlaneseq
    %v2478 = vshrl.u32 %v2477, 7
    %v2479 = vsub.s32 %v2476, %v2478
    %v2480 = vrot.slane %v2472, %v2479
    %v2482 = vunpack.c.l.s4 1934713408
    %v2483 = vunpack.c.0.s8 %v2482
    %v2484 = vlaneseq
    %v2485 = vshrl.u32 %v2484, 7
    %v2486 = vsub.s32 %v2483, %v2485
    %v2487 = vrot.slane %v2473, %v2486
    %v2488 = vcombine.low %v2423, %v2439
    %v2489 = vcombine.high %v2423, %v2439
    %v2491 = vunpack.c.l.s4 1934713408
    %v2492 = vunpack.c.0.s8 %v2491
    %v2493 = vlaneseq
    %v2494 = vshrl.u32 %v2493, 7
    %v2495 = vsub.s32 %v2492, %v2494
    %v2496 = vrot.slane %v2488, %v2495
    %v2498 = vunpack.c.l.s4 1934713408
    %v2499 = vunpack.c.0.s8 %v2498
    %v2500 = vlaneseq
    %v2501 = vshrl.u32 %v2500, 7
    %v2502 = vsub.s32 %v2499, %v2501
    %v2503 = vrot.slane %v2489, %v2502
    %v2504 = vcombine.low %v2448, %v2464
    %v2505 = vcombine.high %v2448, %v2464
    %v2507 = vunpack.c.l.s4 1934713408
    %v2508 = vunpack.c.0.s8 %v2507
    %v2509 = vlaneseq
    %v2510 = vshrl.u32 %v2509, 7
    %v2511 = vsub.s32 %v2508, %v2510
    %v2512 = vrot.slane %v2504, %v2511
    %v2514 = vunpack.c.l.s4 1934713408
    %v2515 = vunpack.c.0.s8 %v2514
    %v2516 = vlaneseq
    %v2517 = vshrl.u32 %v2516, 7
    %v2518 = vsub.s32 %v2515, %v2517
    %v2519 = vrot.slane %v2505, %v2518
    %v2520 = vcombine.low %v2455, %v2471
    %v2521 = vcombine.high %v2455, %v2471
    %v2523 = vunpack.c.l.s4 1934713408
    %v2524 = vunpack.c.0.s8 %v2523
    %v2525 = vlaneseq
    %v2526 = vshrl.u32 %v2525, 7
    %v2527 = vsub.s32 %v2524, %v2526
    %v2528 = vrot.slane %v2520, %v2527
    %v2530 = vunpack.c.l.s4 1934713408
    %v2531 = vunpack.c.0.s8 %v2530
    %v2532 = vlaneseq
    %v2533 = vshrl.u32 %v2532, 7
    %v2534 = vsub.s32 %v2531, %v2533
    %v2535 = vrot.slane %v2521, %v2534
    %v2536 = vcombine.low %v2480, %v2512
    %v2537 = vcombine.high %v2480, %v2512
    %v2538 = vcombine.low %v2487, %v2519
    %v2539 = vcombine.high %v2487, %v2519
    %v2540 = vcombine.low %v2496, %v2528
    %v2541 = vcombine.high %v2496, %v2528
    %v2542 = vcombine.low %v2503, %v2535
    %v2543 = vcombine.high %v2503, %v2535
    %v2544 = vcombine.low %v1513, %v1517
    %v2545 = vcombine.high %v1513, %v1517
    %v2547 = vunpack.c.l.s4 1983009808
    %v2548 = vunpack.c.0.s8 %v2547
    %v2549 = vlaneseq
    %v2550 = vshrl.u32 %v2549, 7
    %v2551 = vsub.s32 %v2548, %v2550
    %v2552 = vrot.slane %v2544, %v2551
    %v2554 = vunpack.c.l.s4 1983009808
    %v2555 = vunpack.c.0.s8 %v2554
    %v2556 = vlaneseq
    %v2557 = vshrl.u32 %v2556, 7
    %v2558 = vsub.s32 %v2555, %v2557
    %v2559 = vrot.slane %v2545, %v2558
    %v2560 = vcombine.low %v1515, %v1519
    %v2561 = vcombine.high %v1515, %v1519
    %v2563 = vunpack.c.l.s4 1983009808
    %v2564 = vunpack.c.0.s8 %v2563
    %v2565 = vlaneseq
    %v2566 = vshrl.u32 %v2565, 7
    %v2567 = vsub.s32 %v2564, %v2566
    %v2568 = vrot.slane %v2560, %v2567
    %v2570 = vunpack.c.l.s4 1983009808
    %v2571 = vunpack.c.0.s8 %v2570
    %v2572 = vlaneseq
    %v2573 = vshrl.u32 %v2572, 7
    %v2574 = vsub.s32 %v2571, %v2573
    %v2575 = vrot.slane %v2561, %v2574
    %v2576 = vcombine.low %v1521, %v1525
    %v2577 = vcombine.high %v1521, %v1525
    %v2579 = vunpack.c.l.s4 1983009808
    %v2580 = vunpack.c.0.s8 %v2579
    %v2581 = vlaneseq
    %v2582 = vshrl.u32 %v2581, 7
    %v2583 = vsub.s32 %v2580, %v2582
    %v2584 = vrot.slane %v2576, %v2583
    %v2586 = vunpack.c.l.s4 1983009808
    %v2587 = vunpack.c.0.s8 %v2586
    %v2588 = vlaneseq
    %v2589 = vshrl.u32 %v2588, 7
    %v2590 = vsub.s32 %v2587, %v2589
    %v2591 = vrot.slane %v2577, %v2590
    %v2592 = vcombine.low %v1523, %v1527
    %v2593 = vcombine.high %v1523, %v1527
    %v2595 = vunpack.c.l.s4 1983009808
    %v2596 = vunpack.c.0.s8 %v2595
    %v2597 = vlaneseq
    %v2598 = vshrl.u32 %v2597, 7
    %v2599 = vsub.s32 %v2596, %v2598
    %v2600 = vrot.slane %v2592, %v2599
    %v2602 = vunpack.c.l.s4 1983009808
    %v2603 = vunpack.c.0.s8 %v2602
    %v2604 = vlaneseq
    %v2605 = vshrl.u32 %v2604, 7
    %v2606 = vsub.s32 %v2603, %v2605
    %v2607 = vrot.slane %v2593, %v2606
    %v2608 = vcombine.low %v2552, %v2568
    %v2609 = vcombine.high %v2552, %v2568
    %v2611 = vunpack.c.l.s4 1934713408
    %v2612 = vunpack.c.0.s8 %v2611
    %v2613 = vlaneseq
    %v2614 = vshrl.u32 %v2613, 7
    %v2615 = vsub.s32 %v2612, %v2614
    %v2616 = vrot.slane %v2608, %v2615
    %v2618 = vunpack.c.l.s4 1934713408
    %v2619 = vunpack.c.0.s8 %v2618
    %v2620 = vlaneseq
    %v2621 = vshrl.u32 %v2620, 7
    %v2622 = vsub.s32 %v2619, %v2621
    %v2623 = vrot.slane %v2609, %v2622
    %v2624 = vcombine.low %v2559, %v2575
    %v2625 = vcombine.high %v2559, %v2575
    %v2627 = vunpack.c.l.s4 1934713408
    %v2628 = vunpack.c.0.s8 %v2627
    %v2629 = vlaneseq
    %v2630 = vshrl.u32 %v2629, 7
    %v2631 = vsub.s32 %v2628, %v2630
    %v2632 = vrot.slane %v2624, %v2631
    %v2634 = vunpack.c.l.s4 1934713408
    %v2635 = vunpack.c.0.s8 %v2634
    %v2636 = vlaneseq
    %v2637 = vshrl.u32 %v2636, 7
    %v2638 = vsub.s32 %v2635, %v2637
    %v2639 = vrot.slane %v2625, %v2638
    %v2640 = vcombine.low %v2584, %v2600
    %v2641 = vcombine.high %v2584, %v2600
    %v2643 = vunpack.c.l.s4 1934713408
    %v2644 = vunpack.c.0.s8 %v2643
    %v2645 = vlaneseq
    %v2646 = vshrl.u32 %v2645, 7
    %v2647 = vsub.s32 %v2644, %v2646
    %v2648 = vrot.slane %v2640, %v2647
    %v2650 = vunpack.c.l.s4 1934713408
    %v2651 = vunpack.c.0.s8 %v2650
    %v2652 = vlaneseq
    %v2653 = vshrl.u32 %v2652, 7
    %v2654 = vsub.s32 %v2651, %v2653
    %v2655 = vrot.slane %v2641, %v2654
    %v2656 = vcombine.low %v2591, %v2607
    %v2657 = vcombine.high %v2591, %v2607
    %v2659 = vunpack.c.l.s4 1934713408
    %v2660 = vunpack.c.0.s8 %v2659
    %v2661 = vlaneseq
    %v2662 = vshrl.u32 %v2661, 7
    %v2663 = vsub.s32 %v2660, %v2662
    %v2664 = vrot.slane %v2656, %v2663
    %v2666 = vunpack.c.l.s4 1934713408
    %v2667 = vunpack.c.0.s8 %v2666
    %v2668 = vlaneseq
    %v2669 = vshrl.u32 %v2668, 7
    %v2670 = vsub.s32 %v2667, %v2669
    %v2671 = vrot.slane %v2657, %v2670
    %v2672 = vcombine.low %v2616, %v2648
    %v2673 = vcombine.high %v2616, %v2648
    %v2674 = vcombine.low %v2623, %v2655
    %v2675 = vcombine.high %v2623, %v2655
    %v2676 = vcombine.low %v2632, %v2664
    %v2677 = vcombine.high %v2632, %v2664
    %v2678 = vcombine.low %v2639, %v2671
    %v2679 = vcombine.high %v2639, %v2671
    %v2680 = vcombine.low %v1528, %v1532
    %v2681 = vcombine.high %v1528, %v1532
    %v2683 = vunpack.c.l.s4 1983009808
    %v2684 = vunpack.c.0.s8 %v2683
    %v2685 = vlaneseq
    %v2686 = vshrl.u32 %v2685, 7
    %v2687 = vsub.s32 %v2684, %v2686
    %v2688 = vrot.slane %v2680, %v2687
    %v2690 = vunpack.c.l.s4 1983009808
    %v2691 = vunpack.c.0.s8 %v2690
    %v2692 = vlaneseq
    %v2693 = vshrl.u32 %v2692, 7
    %v2694 = vsub.s32 %v2691, %v2693
    %v2695 = vrot.slane %v2681, %v2694
    %v2696 = vcombine.low %v1530, %v1534
    %v2697 = vcombine.high %v1530, %v1534
    %v2699 = vunpack.c.l.s4 1983009808
    %v2700 = vunpack.c.0.s8 %v2699
    %v2701 = vlaneseq
    %v2702 = vshrl.u32 %v2701, 7
    %v2703 = vsub.s32 %v2700, %v2702
    %v2704 = vrot.slane %v2696, %v2703
    %v2706 = vunpack.c.l.s4 1983009808
    %v2707 = vunpack.c.0.s8 %v2706
    %v2708 = vlaneseq
    %v2709 = vshrl.u32 %v2708, 7
    %v2710 = vsub.s32 %v2707, %v2709
    %v2711 = vrot.slane %v2697, %v2710
    %v2712 = vcombine.low %v1536, %v1540
    %v2713 = vcombine.high %v1536, %v1540
    %v2715 = vunpack.c.l.s4 1983009808
    %v2716 = vunpack.c.0.s8 %v2715
    %v2717 = vlaneseq
    %v2718 = vshrl.u32 %v2717, 7
    %v2719 = vsub.s32 %v2716, %v2718
    %v2720 = vrot.slane %v2712, %v2719
    %v2722 = vunpack.c.l.s4 1983009808
    %v2723 = vunpack.c.0.s8 %v2722
    %v2724 = vlaneseq
    %v2725 = vshrl.u32 %v2724, 7
    %v2726 = vsub.s32 %v2723, %v2725
    %v2727 = vrot.slane %v2713, %v2726
    %v2728 = vcombine.low %v1538, %v1542
    %v2729 = vcombine.high %v1538, %v1542
    %v2731 = vunpack.c.l.s4 1983009808
    %v2732 = vunpack.c.0.s8 %v2731
    %v2733 = vlaneseq
    %v2734 = vshrl.u32 %v2733, 7
    %v2735 = vsub.s32 %v2732, %v2734
    %v2736 = vrot.slane %v2728, %v2735
    %v2738 = vunpack.c.l.s4 1983009808
    %v2739 = vunpack.c.0.s8 %v2738
    %v2740 = vlaneseq
    %v2741 = vshrl.u32 %v2740, 7
    %v2742 = vsub.s32 %v2739, %v2741
    %v2743 = vrot.slane %v2729, %v2742
    %v2744 = vcombine.low %v2688, %v2704
    %v2745 = vcombine.high %v2688, %v2704
    %v2747 = vunpack.c.l.s4 1934713408
    %v2748 = vunpack.c.0.s8 %v2747
    %v2749 = vlaneseq
    %v2750 = vshrl.u32 %v2749, 7
    %v2751 = vsub.s32 %v2748, %v2750
    %v2752 = vrot.slane %v2744, %v2751
    %v2754 = vunpack.c.l.s4 1934713408
    %v2755 = vunpack.c.0.s8 %v2754
    %v2756 = vlaneseq
    %v2757 = vshrl.u32 %v2756, 7
    %v2758 = vsub.s32 %v2755, %v2757
    %v2759 = vrot.slane %v2745, %v2758
    %v2760 = vcombine.low %v2695, %v2711
    %v2761 = vcombine.high %v2695, %v2711
    %v2763 = vunpack.c.l.s4 1934713408
    %v2764 = vunpack.c.0.s8 %v2763
    %v2765 = vlaneseq
    %v2766 = vshrl.u32 %v2765, 7
    %v2767 = vsub.s32 %v2764, %v2766
    %v2768 = vrot.slane %v2760, %v2767
    %v2770 = vunpack.c.l.s4 1934713408
    %v2771 = vunpack.c.0.s8 %v2770
    %v2772 = vlaneseq
    %v2773 = vshrl.u32 %v2772, 7
    %v2774 = vsub.s32 %v2771, %v2773
    %v2775 = vrot.slane %v2761, %v2774
    %v2776 = vcombine.low %v2720, %v2736
    %v2777 = vcombine.high %v2720, %v2736
    %v2779 = vunpack.c.l.s4 1934713408
    %v2780 = vunpack.c.0.s8 %v2779
    %v2781 = vlaneseq
    %v2782 = vshrl.u32 %v2781, 7
    %v2783 = vsub.s32 %v2780, %v2782
    %v2784 = vrot.slane %v2776, %v2783
    %v2786 = vunpack.c.l.s4 1934713408
    %v2787 = vunpack.c.0.s8 %v2786
    %v2788 = vlaneseq
    %v2789 = vshrl.u32 %v2788, 7
    %v2790 = vsub.s32 %v2787, %v2789
    %v2791 = vrot.slane %v2777, %v2790
    %v2792 = vcombine.low %v2727, %v2743
    %v2793 = vcombine.high %v2727, %v2743
    %v2795 = vunpack.c.l.s4 1934713408
    %v2796 = vunpack.c.0.s8 %v2795
    %v2797 = vlaneseq
    %v2798 = vshrl.u32 %v2797, 7
    %v2799 = vsub.s32 %v2796, %v2798
    %v2800 = vrot.slane %v2792, %v2799
    %v2802 = vunpack.c.l.s4 1934713408
    %v2803 = vunpack.c.0.s8 %v2802
    %v2804 = vlaneseq
    %v2805 = vshrl.u32 %v2804, 7
    %v2806 = vsub.s32 %v2803, %v2805
    %v2807 = vrot.slane %v2793, %v2806
    %v2808 = vcombine.low %v2752, %v2784
    %v2809 = vcombine.high %v2752, %v2784
    %v2810 = vcombine.low %v2759, %v2791
    %v2811 = vcombine.high %v2759, %v2791
    %v2812 = vcombine.low %v2768, %v2800
    %v2813 = vcombine.high %v2768, %v2800
    %v2814 = vcombine.low %v2775, %v2807
    %v2815 = vcombine.high %v2775, %v2807
    %v2816 = vcombine.low %v1544, %v1548
    %v2817 = vcombine.high %v1544, %v1548
    %v2819 = vunpack.c.l.s4 1983009808
    %v2820 = vunpack.c.0.s8 %v2819
    %v2821 = vlaneseq
    %v2822 = vshrl.u32 %v2821, 7
    %v2823 = vsub.s32 %v2820, %v2822
    %v2824 = vrot.slane %v2816, %v2823
    %v2826 = vunpack.c.l.s4 1983009808
    %v2827 = vunpack.c.0.s8 %v2826
    %v2828 = vlaneseq
    %v2829 = vshrl.u32 %v2828, 7
    %v2830 = vsub.s32 %v2827, %v2829
    %v2831 = vrot.slane %v2817, %v2830
    %v2832 = vcombine.low %v1546, %v1550
    %v2833 = vcombine.high %v1546, %v1550
    %v2835 = vunpack.c.l.s4 1983009808
    %v2836 = vunpack.c.0.s8 %v2835
    %v2837 = vlaneseq
    %v2838 = vshrl.u32 %v2837, 7
    %v2839 = vsub.s32 %v2836, %v2838
    %v2840 = vrot.slane %v2832, %v2839
    %v2842 = vunpack.c.l.s4 1983009808
    %v2843 = vunpack.c.0.s8 %v2842
    %v2844 = vlaneseq
    %v2845 = vshrl.u32 %v2844, 7
    %v2846 = vsub.s32 %v2843, %v2845
    %v2847 = vrot.slane %v2833, %v2846
    %v2848 = vcombine.low %v1552, %v1556
    %v2849 = vcombine.high %v1552, %v1556
    %v2851 = vunpack.c.l.s4 1983009808
    %v2852 = vunpack.c.0.s8 %v2851
    %v2853 = vlaneseq
    %v2854 = vshrl.u32 %v2853, 7
    %v2855 = vsub.s32 %v2852, %v2854
    %v2856 = vrot.slane %v2848, %v2855
    %v2858 = vunpack.c.l.s4 1983009808
    %v2859 = vunpack.c.0.s8 %v2858
    %v2860 = vlaneseq
    %v2861 = vshrl.u32 %v2860, 7
    %v2862 = vsub.s32 %v2859, %v2861
    %v2863 = vrot.slane %v2849, %v2862
    %v2864 = vcombine.low %v1554, %v1558
    %v2865 = vcombine.high %v1554, %v1558
    %v2867 = vunpack.c.l.s4 1983009808
    %v2868 = vunpack.c.0.s8 %v2867
    %v2869 = vlaneseq
    %v2870 = vshrl.u32 %v2869, 7
    %v2871 = vsub.s32 %v2868, %v2870
    %v2872 = vrot.slane %v2864, %v2871
    %v2874 = vunpack.c.l.s4 1983009808
    %v2875 = vunpack.c.0.s8 %v2874
    %v2876 = vlaneseq
    %v2877 = vshrl.u32 %v2876, 7
    %v2878 = vsub.s32 %v2875, %v2877
    %v2879 = vrot.slane %v2865, %v2878
    %v2880 = vcombine.low %v2824, %v2840
    %v2881 = vcombine.high %v2824, %v2840
    %v2883 = vunpack.c.l.s4 1934713408
    %v2884 = vunpack.c.0.s8 %v2883
    %v2885 = vlaneseq
    %v2886 = vshrl.u32 %v2885, 7
    %v2887 = vsub.s32 %v2884, %v2886
    %v2888 = vrot.slane %v2880, %v2887
    %v2890 = vunpack.c.l.s4 1934713408
    %v2891 = vunpack.c.0.s8 %v2890
    %v2892 = vlaneseq
    %v2893 = vshrl.u32 %v2892, 7
    %v2894 = vsub.s32 %v2891, %v2893
    %v2895 = vrot.slane %v2881, %v2894
    %v2896 = vcombine.low %v2831, %v2847
    %v2897 = vcombine.high %v2831, %v2847
    %v2899 = vunpack.c.l.s4 1934713408
    %v2900 = vunpack.c.0.s8 %v2899
    %v2901 = vlaneseq
    %v2902 = vshrl.u32 %v2901, 7
    %v2903 = vsub.s32 %v2900, %v2902
    %v2904 = vrot.slane %v2896, %v2903
    %v2906 = vunpack.c.l.s4 1934713408
    %v2907 = vunpack.c.0.s8 %v2906
    %v2908 = vlaneseq
    %v2909 = vshrl.u32 %v2908, 7
    %v2910 = vsub.s32 %v2907, %v2909
    %v2911 = vrot.slane %v2897, %v2910
    %v2912 = vcombine.low %v2856, %v2872
    %v2913 = vcombine.high %v2856, %v2872
    %v2915 = vunpack.c.l.s4 1934713408
    %v2916 = vunpack.c.0.s8 %v2915
    %v2917 = vlaneseq
    %v2918 = vshrl.u32 %v2917, 7
    %v2919 = vsub.s32 %v2916, %v2918
    %v2920 = vrot.slane %v2912, %v2919
    %v2922 = vunpack.c.l.s4 1934713408
    %v2923 = vunpack.c.0.s8 %v2922
    %v2924 = vlaneseq
    %v2925 = vshrl.u32 %v2924, 7
    %v2926 = vsub.s32 %v2923, %v2925
    %v2927 = vrot.slane %v2913, %v2926
    %v2928 = vcombine.low %v2863, %v2879
    %v2929 = vcombine.high %v2863, %v2879
    %v2931 = vunpack.c.l.s4 1934713408
    %v2932 = vunpack.c.0.s8 %v2931
    %v2933 = vlaneseq
    %v2934 = vshrl.u32 %v2933, 7
    %v2935 = vsub.s32 %v2932, %v2934
    %v2936 = vrot.slane %v2928, %v2935
    %v2938 = vunpack.c.l.s4 1934713408
    %v2939 = vunpack.c.0.s8 %v2938
    %v2940 = vlaneseq
    %v2941 = vshrl.u32 %v2940, 7
    %v2942 = vsub.s32 %v2939, %v2941
    %v2943 = vrot.slane %v2929, %v2942
    %v2944 = vcombine.low %v2888, %v2920
    %v2945 = vcombine.high %v2888, %v2920
    %v2946 = vcombine.low %v2895, %v2927
    %v2947 = vcombine.high %v2895, %v2927
    %v2948 = vcombine.low %v2904, %v2936
    %v2949 = vcombine.high %v2904, %v2936
    %v2950 = vcombine.low %v2911, %v2943
    %v2951 = vcombine.high %v2911, %v2943
    %v2952 = vcombine.low %v1529, %v1533
    %v2953 = vcombine.high %v1529, %v1533
    %v2955 = vunpack.c.l.s4 1983009808
    %v2956 = vunpack.c.0.s8 %v2955
    %v2957 = vlaneseq
    %v2958 = vshrl.u32 %v2957, 7
    %v2959 = vsub.s32 %v2956, %v2958
    %v2960 = vrot.slane %v2952, %v2959
    %v2962 = vunpack.c.l.s4 1983009808
    %v2963 = vunpack.c.0.s8 %v2962
    %v2964 = vlaneseq
    %v2965 = vshrl.u32 %v2964, 7
    %v2966 = vsub.s32 %v2963, %v2965
    %v2967 = vrot.slane %v2953, %v2966
    %v2968 = vcombine.low %v1531, %v1535
    %v2969 = vcombine.high %v1531, %v1535
    %v2971 = vunpack.c.l.s4 1983009808
    %v2972 = vunpack.c.0.s8 %v2971
    %v2973 = vlaneseq
    %v2974 = vshrl.u32 %v2973, 7
    %v2975 = vsub.s32 %v2972, %v2974
    %v2976 = vrot.slane %v2968, %v2975
    %v2978 = vunpack.c.l.s4 1983009808
    %v2979 = vunpack.c.0.s8 %v2978
    %v2980 = vlaneseq
    %v2981 = vshrl.u32 %v2980, 7
    %v2982 = vsub.s32 %v2979, %v2981
    %v2983 = vrot.slane %v2969, %v2982
    %v2984 = vcombine.low %v1537, %v1541
    %v2985 = vcombine.high %v1537, %v1541
    %v2987 = vunpack.c.l.s4 1983009808
    %v2988 = vunpack.c.0.s8 %v2987
    %v2989 = vlaneseq
    %v2990 = vshrl.u32 %v2989, 7
    %v2991 = vsub.s32 %v2988, %v2990
    %v2992 = vrot.slane %v2984, %v2991
    %v2994 = vunpack.c.l.s4 1983009808
    %v2995 = vunpack.c.0.s8 %v2994
    %v2996 = vlaneseq
    %v2997 = vshrl.u32 %v2996, 7
    %v2998 = vsub.s32 %v2995, %v2997
    %v2999 = vrot.slane %v2985, %v2998
    %v3000 = vcombine.low %v1539, %v1543
    %v3001 = vcombine.high %v1539, %v1543
    %v3003 = vunpack.c.l.s4 1983009808
    %v3004 = vunpack.c.0.s8 %v3003
    %v3005 = vlaneseq
    %v3006 = vshrl.u32 %v3005, 7
    %v3007 = vsub.s32 %v3004, %v3006
    %v3008 = vrot.slane %v3000, %v3007
    %v3010 = vunpack.c.l.s4 1983009808
    %v3011 = vunpack.c.0.s8 %v3010
    %v3012 = vlaneseq
    %v3013 = vshrl.u32 %v3012, 7
    %v3014 = vsub.s32 %v3011, %v3013
    %v3015 = vrot.slane %v3001, %v3014
    %v3016 = vcombine.low %v2960, %v2976
    %v3017 = vcombine.high %v2960, %v2976
    %v3019 = vunpack.c.l.s4 1934713408
    %v3020 = vunpack.c.0.s8 %v3019
    %v3021 = vlaneseq
    %v3022 = vshrl.u32 %v3021, 7
    %v3023 = vsub.s32 %v3020, %v3022
    %v3024 = vrot.slane %v3016, %v3023
    %v3026 = vunpack.c.l.s4 1934713408
    %v3027 = vunpack.c.0.s8 %v3026
    %v3028 = vlaneseq
    %v3029 = vshrl.u32 %v3028, 7
    %v3030 = vsub.s32 %v3027, %v3029
    %v3031 = vrot.slane %v3017, %v3030
    %v3032 = vcombine.low %v2967, %v2983
    %v3033 = vcombine.high %v2967, %v2983
    %v3035 = vunpack.c.l.s4 1934713408
    %v3036 = vunpack.c.0.s8 %v3035
    %v3037 = vlaneseq
    %v3038 = vshrl.u32 %v3037, 7
    %v3039 = vsub.s32 %v3036, %v3038
    %v3040 = vrot.slane %v3032, %v3039
    %v3042 = vunpack.c.l.s4 1934713408
    %v3043 = vunpack.c.0.s8 %v3042
    %v3044 = vlaneseq
    %v3045 = vshrl.u32 %v3044, 7
    %v3046 = vsub.s32 %v3043, %v3045
    %v3047 = vrot.slane %v3033, %v3046
    %v3048 = vcombine.low %v2992, %v3008
    %v3049 = vcombine.high %v2992, %v3008
    %v3051 = vunpack.c.l.s4 1934713408
    %v3052 = vunpack.c.0.s8 %v3051
    %v3053 = vlaneseq
    %v3054 = vshrl.u32 %v3053, 7
    %v3055 = vsub.s32 %v3052, %v3054
    %v3056 = vrot.slane %v3048, %v3055
    %v3058 = vunpack.c.l.s4 1934713408
    %v3059 = vunpack.c.0.s8 %v3058
    %v3060 = vlaneseq
    %v3061 = vshrl.u32 %v3060, 7
    %v3062 = vsub.s32 %v3059, %v3061
    %v3063 = vrot.slane %v3049, %v3062
    %v3064 = vcombine.low %v2999, %v3015
    %v3065 = vcombine.high %v2999, %v3015
    %v3067 = vunpack.c.l.s4 1934713408
    %v3068 = vunpack.c.0.s8 %v3067
    %v3069 = vlaneseq
    %v3070 = vshrl.u32 %v3069, 7
    %v3071 = vsub.s32 %v3068, %v3070
    %v3072 = vrot.slane %v3064, %v3071
    %v3074 = vunpack.c.l.s4 1934713408
    %v3075 = vunpack.c.0.s8 %v3074
    %v3076 = vlaneseq
    %v3077 = vshrl.u32 %v3076, 7
    %v3078 = vsub.s32 %v3075, %v3077
    %v3079 = vrot.slane %v3065, %v3078
    %v3080 = vcombine.low %v3024, %v3056
    %v3081 = vcombine.high %v3024, %v3056
    %v3082 = vcombine.low %v3031, %v3063
    %v3083 = vcombine.high %v3031, %v3063
    %v3084 = vcombine.low %v3040, %v3072
    %v3085 = vcombine.high %v3040, %v3072
    %v3086 = vcombine.low %v3047, %v3079
    %v3087 = vcombine.high %v3047, %v3079
    %v3088 = vcombine.low %v1545, %v1549
    %v3089 = vcombine.high %v1545, %v1549
    %v3091 = vunpack.c.l.s4 1983009808
    %v3092 = vunpack.c.0.s8 %v3091
    %v3093 = vlaneseq
    %v3094 = vshrl.u32 %v3093, 7
    %v3095 = vsub.s32 %v3092, %v3094
    %v3096 = vrot.slane %v3088, %v3095
    %v3098 = vunpack.c.l.s4 1983009808
    %v3099 = vunpack.c.0.s8 %v3098
    %v3100 = vlaneseq
    %v3101 = vshrl.u32 %v3100, 7
    %v3102 = vsub.s32 %v3099, %v3101
    %v3103 = vrot.slane %v3089, %v3102
    %v3104 = vcombine.low %v1547, %v1551
    %v3105 = vcombine.high %v1547, %v1551
    %v3107 = vunpack.c.l.s4 1983009808
    %v3108 = vunpack.c.0.s8 %v3107
    %v3109 = vlaneseq
    %v3110 = vshrl.u32 %v3109, 7
    %v3111 = vsub.s32 %v3108, %v3110
    %v3112 = vrot.slane %v3104, %v3111
    %v3114 = vunpack.c.l.s4 1983009808
    %v3115 = vunpack.c.0.s8 %v3114
    %v3116 = vlaneseq
    %v3117 = vshrl.u32 %v3116, 7
    %v3118 = vsub.s32 %v3115, %v3117
    %v3119 = vrot.slane %v3105, %v3118
    %v3120 = vcombine.low %v1553, %v1557
    %v3121 = vcombine.high %v1553, %v1557
    %v3123 = vunpack.c.l.s4 1983009808
    %v3124 = vunpack.c.0.s8 %v3123
    %v3125 = vlaneseq
    %v3126 = vshrl.u32 %v3125, 7
    %v3127 = vsub.s32 %v3124, %v3126
    %v3128 = vrot.slane %v3120, %v3127
    %v3130 = vunpack.c.l.s4 1983009808
    %v3131 = vunpack.c.0.s8 %v3130
    %v3132 = vlaneseq
    %v3133 = vshrl.u32 %v3132, 7
    %v3134 = vsub.s32 %v3131, %v3133
    %v3135 = vrot.slane %v3121, %v3134
    %v3136 = vcombine.low %v1555, %v1559
    %v3137 = vcombine.high %v1555, %v1559
    %v3139 = vunpack.c.l.s4 1983009808
    %v3140 = vunpack.c.0.s8 %v3139
    %v3141 = vlaneseq
    %v3142 = vshrl.u32 %v3141, 7
    %v3143 = vsub.s32 %v3140, %v3142
    %v3144 = vrot.slane %v3136, %v3143
    %v3146 = vunpack.c.l.s4 1983009808
    %v3147 = vunpack.c.0.s8 %v3146
    %v3148 = vlaneseq
    %v3149 = vshrl.u32 %v3148, 7
    %v3150 = vsub.s32 %v3147, %v3149
    %v3151 = vrot.slane %v3137, %v3150
    %v3152 = vcombine.low %v3096, %v3112
    %v3153 = vcombine.high %v3096, %v3112
    %v3155 = vunpack.c.l.s4 1934713408
    %v3156 = vunpack.c.0.s8 %v3155
    %v3157 = vlaneseq
    %v3158 = vshrl.u32 %v3157, 7
    %v3159 = vsub.s32 %v3156, %v3158
    %v3160 = vrot.slane %v3152, %v3159
    %v3162 = vunpack.c.l.s4 1934713408
    %v3163 = vunpack.c.0.s8 %v3162
    %v3164 = vlaneseq
    %v3165 = vshrl.u32 %v3164, 7
    %v3166 = vsub.s32 %v3163, %v3165
    %v3167 = vrot.slane %v3153, %v3166
    %v3168 = vcombine.low %v3103, %v3119
    %v3169 = vcombine.high %v3103, %v3119
    %v3171 = vunpack.c.l.s4 1934713408
    %v3172 = vunpack.c.0.s8 %v3171
    %v3173 = vlaneseq
    %v3174 = vshrl.u32 %v3173, 7
    %v3175 = vsub.s32 %v3172, %v3174
    %v3176 = vrot.slane %v3168, %v3175
    %v3178 = vunpack.c.l.s4 1934713408
    %v3179 = vunpack.c.0.s8 %v3178
    %v3180 = vlaneseq
    %v3181 = vshrl.u32 %v3180, 7
    %v3182 = vsub.s32 %v3179, %v3181
    %v3183 = vrot.slane %v3169, %v3182
    %v3184 = vcombine.low %v3128, %v3144
    %v3185 = vcombine.high %v3128, %v3144
    %v3187 = vunpack.c.l.s4 1934713408
    %v3188 = vunpack.c.0.s8 %v3187
    %v3189 = vlaneseq
    %v3190 = vshrl.u32 %v3189, 7
    %v3191 = vsub.s32 %v3188, %v3190
    %v3192 = vrot.slane %v3184, %v3191
    %v3194 = vunpack.c.l.s4 1934713408
    %v3195 = vunpack.c.0.s8 %v3194
    %v3196 = vlaneseq
    %v3197 = vshrl.u32 %v3196, 7
    %v3198 = vsub.s32 %v3195, %v3197
    %v3199 = vrot.slane %v3185, %v3198
    %v3200 = vcombine.low %v3135, %v3151
    %v3201 = vcombine.high %v3135, %v3151
    %v3203 = vunpack.c.l.s4 1934713408
    %v3204 = vunpack.c.0.s8 %v3203
    %v3205 = vlaneseq
    %v3206 = vshrl.u32 %v3205, 7
    %v3207 = vsub.s32 %v3204, %v3206
    %v3208 = vrot.slane %v3200, %v3207
    %v3210 = vunpack.c.l.s4 1934713408
    %v3211 = vunpack.c.0.s8 %v3210
    %v3212 = vlaneseq
    %v3213 = vshrl.u32 %v3212, 7
    %v3214 = vsub.s32 %v3211, %v3213
    %v3215 = vrot.slane %v3201, %v3214
    %v3216 = vcombine.low %v3160, %v3192
    %v3217 = vcombine.high %v3160, %v3192
    %v3218 = vcombine.low %v3167, %v3199
    %v3219 = vcombine.high %v3167, %v3199
    %v3220 = vcombine.low %v3176, %v3208
    %v3221 = vcombine.high %v3176, %v3208
    %v3222 = vcombine.low %v3183, %v3215
    %v3223 = vcombine.high %v3183, %v3215
    %v3224 = vcombine.low %v1560, %v1564
    %v3225 = vcombine.high %v1560, %v1564
    %v3227 = vunpack.c.l.s4 1983009808
    %v3228 = vunpack.c.0.s8 %v3227
    %v3229 = vlaneseq
    %v3230 = vshrl.u32 %v3229, 7
    %v3231 = vsub.s32 %v3228, %v3230
    %v3232 = vrot.slane %v3224, %v3231
    %v3234 = vunpack.c.l.s4 1983009808
    %v3235 = vunpack.c.0.s8 %v3234
    %v3236 = vlaneseq
    %v3237 = vshrl.u32 %v3236, 7
    %v3238 = vsub.s32 %v3235, %v3237
    %v3239 = vrot.slane %v3225, %v3238
    %v3240 = vcombine.low %v1562, %v1566
    %v3241 = vcombine.high %v1562, %v1566
    %v3243 = vunpack.c.l.s4 1983009808
    %v3244 = vunpack.c.0.s8 %v3243
    %v3245 = vlaneseq
    %v3246 = vshrl.u32 %v3245, 7
    %v3247 = vsub.s32 %v3244, %v3246
    %v3248 = vrot.slane %v3240, %v3247
    %v3250 = vunpack.c.l.s4 1983009808
    %v3251 = vunpack.c.0.s8 %v3250
    %v3252 = vlaneseq
    %v3253 = vshrl.u32 %v3252, 7
    %v3254 = vsub.s32 %v3251, %v3253
    %v3255 = vrot.slane %v3241, %v3254
    %v3256 = vcombine.low %v1568, %v1572
    %v3257 = vcombine.high %v1568, %v1572
    %v3259 = vunpack.c.l.s4 1983009808
    %v3260 = vunpack.c.0.s8 %v3259
    %v3261 = vlaneseq
    %v3262 = vshrl.u32 %v3261, 7
    %v3263 = vsub.s32 %v3260, %v3262
    %v3264 = vrot.slane %v3256, %v3263
    %v3266 = vunpack.c.l.s4 1983009808
    %v3267 = vunpack.c.0.s8 %v3266
    %v3268 = vlaneseq
    %v3269 = vshrl.u32 %v3268, 7
    %v3270 = vsub.s32 %v3267, %v3269
    %v3271 = vrot.slane %v3257, %v3270
    %v3272 = vcombine.low %v1570, %v1574
    %v3273 = vcombine.high %v1570, %v1574
    %v3275 = vunpack.c.l.s4 1983009808
    %v3276 = vunpack.c.0.s8 %v3275
    %v3277 = vlaneseq
    %v3278 = vshrl.u32 %v3277, 7
    %v3279 = vsub.s32 %v3276, %v3278
    %v3280 = vrot.slane %v3272, %v3279
    %v3282 = vunpack.c.l.s4 1983009808
    %v3283 = vunpack.c.0.s8 %v3282
    %v3284 = vlaneseq
    %v3285 = vshrl.u32 %v3284, 7
    %v3286 = vsub.s32 %v3283, %v3285
    %v3287 = vrot.slane %v3273, %v3286
    %v3288 = vcombine.low %v3232, %v3248
    %v3289 = vcombine.high %v3232, %v3248
    %v3291 = vunpack.c.l.s4 1934713408
    %v3292 = vunpack.c.0.s8 %v3291
    %v3293 = vlaneseq
    %v3294 = vshrl.u32 %v3293, 7
    %v3295 = vsub.s32 %v3292, %v3294
    %v3296 = vrot.slane %v3288, %v3295
    %v3298 = vunpack.c.l.s4 1934713408
    %v3299 = vunpack.c.0.s8 %v3298
    %v3300 = vlaneseq
    %v3301 = vshrl.u32 %v3300, 7
    %v3302 = vsub.s32 %v3299, %v3301
    %v3303 = vrot.slane %v3289, %v3302
    %v3304 = vcombine.low %v3239, %v3255
    %v3305 = vcombine.high %v3239, %v3255
    %v3307 = vunpack.c.l.s4 1934713408
    %v3308 = vunpack.c.0.s8 %v3307
    %v3309 = vlaneseq
    %v3310 = vshrl.u32 %v3309, 7
    %v3311 = vsub.s32 %v3308, %v3310
    %v3312 = vrot.slane %v3304, %v3311
    %v3314 = vunpack.c.l.s4 1934713408
    %v3315 = vunpack.c.0.s8 %v3314
    %v3316 = vlaneseq
    %v3317 = vshrl.u32 %v3316, 7
    %v3318 = vsub.s32 %v3315, %v3317
    %v3319 = vrot.slane %v3305, %v3318
    %v3320 = vcombine.low %v3264, %v3280
    %v3321 = vcombine.high %v3264, %v3280
    %v3323 = vunpack.c.l.s4 1934713408
    %v3324 = vunpack.c.0.s8 %v3323
    %v3325 = vlaneseq
    %v3326 = vshrl.u32 %v3325, 7
    %v3327 = vsub.s32 %v3324, %v3326
    %v3328 = vrot.slane %v3320, %v3327
    %v3330 = vunpack.c.l.s4 1934713408
    %v3331 = vunpack.c.0.s8 %v3330
    %v3332 = vlaneseq
    %v3333 = vshrl.u32 %v3332, 7
    %v3334 = vsub.s32 %v3331, %v3333
    %v3335 = vrot.slane %v3321, %v3334
    %v3336 = vcombine.low %v3271, %v3287
    %v3337 = vcombine.high %v3271, %v3287
    %v3339 = vunpack.c.l.s4 1934713408
    %v3340 = vunpack.c.0.s8 %v3339
    %v3341 = vlaneseq
    %v3342 = vshrl.u32 %v3341, 7
    %v3343 = vsub.s32 %v3340, %v3342
    %v3344 = vrot.slane %v3336, %v3343
    %v3346 = vunpack.c.l.s4 1934713408
    %v3347 = vunpack.c.0.s8 %v3346
    %v3348 = vlaneseq
    %v3349 = vshrl.u32 %v3348, 7
    %v3350 = vsub.s32 %v3347, %v3349
    %v3351 = vrot.slane %v3337, %v3350
    %v3352 = vcombine.low %v3296, %v3328
    %v3353 = vcombine.high %v3296, %v3328
    %v3354 = vcombine.low %v3303, %v3335
    %v3355 = vcombine.high %v3303, %v3335
    %v3356 = vcombine.low %v3312, %v3344
    %v3357 = vcombine.high %v3312, %v3344
    %v3358 = vcombine.low %v3319, %v3351
    %v3359 = vcombine.high %v3319, %v3351
    %v3360 = vcombine.low %v1576, %v1580
    %v3361 = vcombine.high %v1576, %v1580
    %v3363 = vunpack.c.l.s4 1983009808
    %v3364 = vunpack.c.0.s8 %v3363
    %v3365 = vlaneseq
    %v3366 = vshrl.u32 %v3365, 7
    %v3367 = vsub.s32 %v3364, %v3366
    %v3368 = vrot.slane %v3360, %v3367
    %v3370 = vunpack.c.l.s4 1983009808
    %v3371 = vunpack.c.0.s8 %v3370
    %v3372 = vlaneseq
    %v3373 = vshrl.u32 %v3372, 7
    %v3374 = vsub.s32 %v3371, %v3373
    %v3375 = vrot.slane %v3361, %v3374
    %v3376 = vcombine.low %v1578, %v1582
    %v3377 = vcombine.high %v1578, %v1582
    %v3379 = vunpack.c.l.s4 1983009808
    %v3380 = vunpack.c.0.s8 %v3379
    %v3381 = vlaneseq
    %v3382 = vshrl.u32 %v3381, 7
    %v3383 = vsub.s32 %v3380, %v3382
    %v3384 = vrot.slane %v3376, %v3383
    %v3386 = vunpack.c.l.s4 1983009808
    %v3387 = vunpack.c.0.s8 %v3386
    %v3388 = vlaneseq
    %v3389 = vshrl.u32 %v3388, 7
    %v3390 = vsub.s32 %v3387, %v3389
    %v3391 = vrot.slane %v3377, %v3390
    %v3392 = vcombine.low %v1584, %v1588
    %v3393 = vcombine.high %v1584, %v1588
    %v3395 = vunpack.c.l.s4 1983009808
    %v3396 = vunpack.c.0.s8 %v3395
    %v3397 = vlaneseq
    %v3398 = vshrl.u32 %v3397, 7
    %v3399 = vsub.s32 %v3396, %v3398
    %v3400 = vrot.slane %v3392, %v3399
    %v3402 = vunpack.c.l.s4 1983009808
    %v3403 = vunpack.c.0.s8 %v3402
    %v3404 = vlaneseq
    %v3405 = vshrl.u32 %v3404, 7
    %v3406 = vsub.s32 %v3403, %v3405
    %v3407 = vrot.slane %v3393, %v3406
    %v3408 = vcombine.low %v1586, %v1590
    %v3409 = vcombine.high %v1586, %v1590
    %v3411 = vunpack.c.l.s4 1983009808
    %v3412 = vunpack.c.0.s8 %v3411
    %v3413 = vlaneseq
    %v3414 = vshrl.u32 %v3413, 7
    %v3415 = vsub.s32 %v3412, %v3414
    %v3416 = vrot.slane %v3408, %v3415
    %v3418 = vunpack.c.l.s4 1983009808
    %v3419 = vunpack.c.0.s8 %v3418
    %v3420 = vlaneseq
    %v3421 = vshrl.u32 %v3420, 7
    %v3422 = vsub.s32 %v3419, %v3421
    %v3423 = vrot.slane %v3409, %v3422
    %v3424 = vcombine.low %v3368, %v3384
    %v3425 = vcombine.high %v3368, %v3384
    %v3427 = vunpack.c.l.s4 1934713408
    %v3428 = vunpack.c.0.s8 %v3427
    %v3429 = vlaneseq
    %v3430 = vshrl.u32 %v3429, 7
    %v3431 = vsub.s32 %v3428, %v3430
    %v3432 = vrot.slane %v3424, %v3431
    %v3434 = vunpack.c.l.s4 1934713408
    %v3435 = vunpack.c.0.s8 %v3434
    %v3436 = vlaneseq
    %v3437 = vshrl.u32 %v3436, 7
    %v3438 = vsub.s32 %v3435, %v3437
    %v3439 = vrot.slane %v3425, %v3438
    %v3440 = vcombine.low %v3375, %v3391
    %v3441 = vcombine.high %v3375, %v3391
    %v3443 = vunpack.c.l.s4 1934713408
    %v3444 = vunpack.c.0.s8 %v3443
    %v3445 = vlaneseq
    %v3446 = vshrl.u32 %v3445, 7
    %v3447 = vsub.s32 %v3444, %v3446
    %v3448 = vrot.slane %v3440, %v3447
    %v3450 = vunpack.c.l.s4 1934713408
    %v3451 = vunpack.c.0.s8 %v3450
    %v3452 = vlaneseq
    %v3453 = vshrl.u32 %v3452, 7
    %v3454 = vsub.s32 %v3451, %v3453
    %v3455 = vrot.slane %v3441, %v3454
    %v3456 = vcombine.low %v3400, %v3416
    %v3457 = vcombine.high %v3400, %v3416
    %v3459 = vunpack.c.l.s4 1934713408
    %v3460 = vunpack.c.0.s8 %v3459
    %v3461 = vlaneseq
    %v3462 = vshrl.u32 %v3461, 7
    %v3463 = vsub.s32 %v3460, %v3462
    %v3464 = vrot.slane %v3456, %v3463
    %v3466 = vunpack.c.l.s4 1934713408
    %v3467 = vunpack.c.0.s8 %v3466
    %v3468 = vlaneseq
    %v3469 = vshrl.u32 %v3468, 7
    %v3470 = vsub.s32 %v3467, %v3469
    %v3471 = vrot.slane %v3457, %v3470
    %v3472 = vcombine.low %v3407, %v3423
    %v3473 = vcombine.high %v3407, %v3423
    %v3475 = vunpack.c.l.s4 1934713408
    %v3476 = vunpack.c.0.s8 %v3475
    %v3477 = vlaneseq
    %v3478 = vshrl.u32 %v3477, 7
    %v3479 = vsub.s32 %v3476, %v3478
    %v3480 = vrot.slane %v3472, %v3479
    %v3482 = vunpack.c.l.s4 1934713408
    %v3483 = vunpack.c.0.s8 %v3482
    %v3484 = vlaneseq
    %v3485 = vshrl.u32 %v3484, 7
    %v3486 = vsub.s32 %v3483, %v3485
    %v3487 = vrot.slane %v3473, %v3486
    %v3488 = vcombine.low %v3432, %v3464
    %v3489 = vcombine.high %v3432, %v3464
    %v3490 = vcombine.low %v3439, %v3471
    %v3491 = vcombine.high %v3439, %v3471
    %v3492 = vcombine.low %v3448, %v3480
    %v3493 = vcombine.high %v3448, %v3480
    %v3494 = vcombine.low %v3455, %v3487
    %v3495 = vcombine.high %v3455, %v3487
    %v3496 = vcombine.low %v1561, %v1565
    %v3497 = vcombine.high %v1561, %v1565
    %v3499 = vunpack.c.l.s4 1983009808
    %v3500 = vunpack.c.0.s8 %v3499
    %v3501 = vlaneseq
    %v3502 = vshrl.u32 %v3501, 7
    %v3503 = vsub.s32 %v3500, %v3502
    %v3504 = vrot.slane %v3496, %v3503
    %v3506 = vunpack.c.l.s4 1983009808
    %v3507 = vunpack.c.0.s8 %v3506
    %v3508 = vlaneseq
    %v3509 = vshrl.u32 %v3508, 7
    %v3510 = vsub.s32 %v3507, %v3509
    %v3511 = vrot.slane %v3497, %v3510
    %v3512 = vcombine.low %v1563, %v1567
    %v3513 = vcombine.high %v1563, %v1567
    %v3515 = vunpack.c.l.s4 1983009808
    %v3516 = vunpack.c.0.s8 %v3515
    %v3517 = vlaneseq
    %v3518 = vshrl.u32 %v3517, 7
    %v3519 = vsub.s32 %v3516, %v3518
    %v3520 = vrot.slane %v3512, %v3519
    %v3522 = vunpack.c.l.s4 1983009808
    %v3523 = vunpack.c.0.s8 %v3522
    %v3524 = vlaneseq
    %v3525 = vshrl.u32 %v3524, 7
    %v3526 = vsub.s32 %v3523, %v3525
    %v3527 = vrot.slane %v3513, %v3526
    %v3528 = vcombine.low %v1569, %v1573
    %v3529 = vcombine.high %v1569, %v1573
    %v3531 = vunpack.c.l.s4 1983009808
    %v3532 = vunpack.c.0.s8 %v3531
    %v3533 = vlaneseq
    %v3534 = vshrl.u32 %v3533, 7
    %v3535 = vsub.s32 %v3532, %v3534
    %v3536 = vrot.slane %v3528, %v3535
    %v3538 = vunpack.c.l.s4 1983009808
    %v3539 = vunpack.c.0.s8 %v3538
    %v3540 = vlaneseq
    %v3541 = vshrl.u32 %v3540, 7
    %v3542 = vsub.s32 %v3539, %v3541
    %v3543 = vrot.slane %v3529, %v3542
    %v3544 = vcombine.low %v1571, %v1575
    %v3545 = vcombine.high %v1571, %v1575
    %v3547 = vunpack.c.l.s4 1983009808
    %v3548 = vunpack.c.0.s8 %v3547
    %v3549 = vlaneseq
    %v3550 = vshrl.u32 %v3549, 7
    %v3551 = vsub.s32 %v3548, %v3550
    %v3552 = vrot.slane %v3544, %v3551
    %v3554 = vunpack.c.l.s4 1983009808
    %v3555 = vunpack.c.0.s8 %v3554
    %v3556 = vlaneseq
    %v3557 = vshrl.u32 %v3556, 7
    %v3558 = vsub.s32 %v3555, %v3557
    %v3559 = vrot.slane %v3545, %v3558
    %v3560 = vcombine.low %v3504, %v3520
    %v3561 = vcombine.high %v3504, %v3520
    %v3563 = vunpack.c.l.s4 1934713408
    %v3564 = vunpack.c.0.s8 %v3563
    %v3565 = vlaneseq
    %v3566 = vshrl.u32 %v3565, 7
    %v3567 = vsub.s32 %v3564, %v3566
    %v3568 = vrot.slane %v3560, %v3567
    %v3570 = vunpack.c.l.s4 1934713408
    %v3571 = vunpack.c.0.s8 %v3570
    %v3572 = vlaneseq
    %v3573 = vshrl.u32 %v3572, 7
    %v3574 = vsub.s32 %v3571, %v3573
    %v3575 = vrot.slane %v3561, %v3574
    %v3576 = vcombine.low %v3511, %v3527
    %v3577 = vcombine.high %v3511, %v3527
    %v3579 = vunpack.c.l.s4 1934713408
    %v3580 = vunpack.c.0.s8 %v3579
    %v3581 = vlaneseq
    %v3582 = vshrl.u32 %v3581, 7
    %v3583 = vsub.s32 %v3580, %v3582
    %v3584 = vrot.slane %v3576, %v3583
    %v3586 = vunpack.c.l.s4 1934713408
    %v3587 = vunpack.c.0.s8 %v3586
    %v3588 = vlaneseq
    %v3589 = vshrl.u32 %v3588, 7
    %v3590 = vsub.s32 %v3587, %v3589
    %v3591 = vrot.slane %v3577, %v3590
    %v3592 = vcombine.low %v3536, %v3552
    %v3593 = vcombine.high %v3536, %v3552
    %v3595 = vunpack.c.l.s4 1934713408
    %v3596 = vunpack.c.0.s8 %v3595
    %v3597 = vlaneseq
    %v3598 = vshrl.u32 %v3597, 7
    %v3599 = vsub.s32 %v3596, %v3598
    %v3600 = vrot.slane %v3592, %v3599
    %v3602 = vunpack.c.l.s4 1934713408
    %v3603 = vunpack.c.0.s8 %v3602
    %v3604 = vlaneseq
    %v3605 = vshrl.u32 %v3604, 7
    %v3606 = vsub.s32 %v3603, %v3605
    %v3607 = vrot.slane %v3593, %v3606
    %v3608 = vcombine.low %v3543, %v3559
    %v3609 = vcombine.high %v3543, %v3559
    %v3611 = vunpack.c.l.s4 1934713408
    %v3612 = vunpack.c.0.s8 %v3611
    %v3613 = vlaneseq
    %v3614 = vshrl.u32 %v3613, 7
    %v3615 = vsub.s32 %v3612, %v3614
    %v3616 = vrot.slane %v3608, %v3615
    %v3618 = vunpack.c.l.s4 1934713408
    %v3619 = vunpack.c.0.s8 %v3618
    %v3620 = vlaneseq
    %v3621 = vshrl.u32 %v3620, 7
    %v3622 = vsub.s32 %v3619, %v3621
    %v3623 = vrot.slane %v3609, %v3622
    %v3624 = vcombine.low %v3568, %v3600
    %v3625 = vcombine.high %v3568, %v3600
    %v3626 = vcombine.low %v3575, %v3607
    %v3627 = vcombine.high %v3575, %v3607
    %v3628 = vcombine.low %v3584, %v3616
    %v3629 = vcombine.high %v3584, %v3616
    %v3630 = vcombine.low %v3591, %v3623
    %v3631 = vcombine.high %v3591, %v3623
    %v3632 = vcombine.low %v1577, %v1581
    %v3633 = vcombine.high %v1577, %v1581
    %v3635 = vunpack.c.l.s4 1983009808
    %v3636 = vunpack.c.0.s8 %v3635
    %v3637 = vlaneseq
    %v3638 = vshrl.u32 %v3637, 7
    %v3639 = vsub.s32 %v3636, %v3638
    %v3640 = vrot.slane %v3632, %v3639
    %v3642 = vunpack.c.l.s4 1983009808
    %v3643 = vunpack.c.0.s8 %v3642
    %v3644 = vlaneseq
    %v3645 = vshrl.u32 %v3644, 7
    %v3646 = vsub.s32 %v3643, %v3645
    %v3647 = vrot.slane %v3633, %v3646
    %v3648 = vcombine.low %v1579, %v1583
    %v3649 = vcombine.high %v1579, %v1583
    %v3651 = vunpack.c.l.s4 1983009808
    %v3652 = vunpack.c.0.s8 %v3651
    %v3653 = vlaneseq
    %v3654 = vshrl.u32 %v3653, 7
    %v3655 = vsub.s32 %v3652, %v3654
    %v3656 = vrot.slane %v3648, %v3655
    %v3658 = vunpack.c.l.s4 1983009808
    %v3659 = vunpack.c.0.s8 %v3658
    %v3660 = vlaneseq
    %v3661 = vshrl.u32 %v3660, 7
    %v3662 = vsub.s32 %v3659, %v3661
    %v3663 = vrot.slane %v3649, %v3662
    %v3664 = vcombine.low %v1585, %v1589
    %v3665 = vcombine.high %v1585, %v1589
    %v3667 = vunpack.c.l.s4 1983009808
    %v3668 = vunpack.c.0.s8 %v3667
    %v3669 = vlaneseq
    %v3670 = vshrl.u32 %v3669, 7
    %v3671 = vsub.s32 %v3668, %v3670
    %v3672 = vrot.slane %v3664, %v3671
    %v3674 = vunpack.c.l.s4 1983009808
    %v3675 = vunpack.c.0.s8 %v3674
    %v3676 = vlaneseq
    %v3677 = vshrl.u32 %v3676, 7
    %v3678 = vsub.s32 %v3675, %v3677
    %v3679 = vrot.slane %v3665, %v3678
    %v3680 = vcombine.low %v1587, %v1591
    %v3681 = vcombine.high %v1587, %v1591
    %v3683 = vunpack.c.l.s4 1983009808
    %v3684 = vunpack.c.0.s8 %v3683
    %v3685 = vlaneseq
    %v3686 = vshrl.u32 %v3685, 7
    %v3687 = vsub.s32 %v3684, %v3686
    %v3688 = vrot.slane %v3680, %v3687
    %v3690 = vunpack.c.l.s4 1983009808
    %v3691 = vunpack.c.0.s8 %v3690
    %v3692 = vlaneseq
    %v3693 = vshrl.u32 %v3692, 7
    %v3694 = vsub.s32 %v3691, %v3693
    %v3695 = vrot.slane %v3681, %v3694
    %v3696 = vcombine.low %v3640, %v3656
    %v3697 = vcombine.high %v3640, %v3656
    %v3699 = vunpack.c.l.s4 1934713408
    %v3700 = vunpack.c.0.s8 %v3699
    %v3701 = vlaneseq
    %v3702 = vshrl.u32 %v3701, 7
    %v3703 = vsub.s32 %v3700, %v3702
    %v3704 = vrot.slane %v3696, %v3703
    %v3706 = vunpack.c.l.s4 1934713408
    %v3707 = vunpack.c.0.s8 %v3706
    %v3708 = vlaneseq
    %v3709 = vshrl.u32 %v3708, 7
    %v3710 = vsub.s32 %v3707, %v3709
    %v3711 = vrot.slane %v3697, %v3710
    %v3712 = vcombine.low %v3647, %v3663
    %v3713 = vcombine.high %v3647, %v3663
    %v3715 = vunpack.c.l.s4 1934713408
    %v3716 = vunpack.c.0.s8 %v3715
    %v3717 = vlaneseq
    %v3718 = vshrl.u32 %v3717, 7
    %v3719 = vsub.s32 %v3716, %v3718
    %v3720 = vrot.slane %v3712, %v3719
    %v3722 = vunpack.c.l.s4 1934713408
    %v3723 = vunpack.c.0.s8 %v3722
    %v3724 = vlaneseq
    %v3725 = vshrl.u32 %v3724, 7
    %v3726 = vsub.s32 %v3723, %v3725
    %v3727 = vrot.slane %v3713, %v3726
    %v3728 = vcombine.low %v3672, %v3688
    %v3729 = vcombine.high %v3672, %v3688
    %v3731 = vunpack.c.l.s4 1934713408
    %v3732 = vunpack.c.0.s8 %v3731
    %v3733 = vlaneseq
    %v3734 = vshrl.u32 %v3733, 7
    %v3735 = vsub.s32 %v3732, %v3734
    %v3736 = vrot.slane %v3728, %v3735
    %v3738 = vunpack.c.l.s4 1934713408
    %v3739 = vunpack.c.0.s8 %v3738
    %v3740 = vlaneseq
    %v3741 = vshrl.u32 %v3740, 7
    %v3742 = vsub.s32 %v3739, %v3741
    %v3743 = vrot.slane %v3729, %v3742
    %v3744 = vcombine.low %v3679, %v3695
    %v3745 = vcombine.high %v3679, %v3695
    %v3747 = vunpack.c.l.s4 1934713408
    %v3748 = vunpack.c.0.s8 %v3747
    %v3749 = vlaneseq
    %v3750 = vshrl.u32 %v3749, 7
    %v3751 = vsub.s32 %v3748, %v3750
    %v3752 = vrot.slane %v3744, %v3751
    %v3754 = vunpack.c.l.s4 1934713408
    %v3755 = vunpack.c.0.s8 %v3754
    %v3756 = vlaneseq
    %v3757 = vshrl.u32 %v3756, 7
    %v3758 = vsub.s32 %v3755, %v3757
    %v3759 = vrot.slane %v3745, %v3758
    %v3760 = vcombine.low %v3704, %v3736
    %v3761 = vcombine.high %v3704, %v3736
    %v3762 = vcombine.low %v3711, %v3743
    %v3763 = vcombine.high %v3711, %v3743
    %v3764 = vcombine.low %v3720, %v3752
    %v3765 = vcombine.high %v3720, %v3752
    %v3766 = vcombine.low %v3727, %v3759
    %v3767 = vcombine.high %v3727, %v3759
    %3776 = vrot.lane.b32.xlu0 %v1721, 2
    %v3777 = vpop.permute.xlu0 %3776
    %3778 = vrot.lane.b32.xlu0 %v1857, 2
    %v3779 = vpop.permute.xlu0 %3778
    %3780 = vrot.lane.b32.xlu0 %v2265, 2
    %v3781 = vpop.permute.xlu0 %3780
    %3782 = vrot.lane.b32.xlu0 %v2401, 2
    %v3783 = vpop.permute.xlu0 %3782
    %3784 = vrot.lane.b32.xlu0 %v2809, 2
    %v3785 = vpop.permute.xlu0 %3784
    %3786 = vrot.lane.b32.xlu0 %v2945, 2
    %v3787 = vpop.permute.xlu0 %3786
    %3788 = vrot.lane.b32.xlu0 %v3353, 2
    %v3789 = vpop.permute.xlu0 %3788
    %3790 = vrot.lane.b32.xlu0 %v3489, 2
    %v3791 = vpop.permute.xlu0 %3790
    %3808 = vrot.lane.b32.xlu0 %v1722, 4
    %v3809 = vpop.permute.xlu0 %3808
    %3810 = vrot.lane.b32.xlu0 %v1858, 4
    %v3811 = vpop.permute.xlu0 %3810
    %3812 = vrot.lane.b32.xlu0 %v2266, 4
    %v3813 = vpop.permute.xlu0 %3812
    %3814 = vrot.lane.b32.xlu0 %v2402, 4
    %v3815 = vpop.permute.xlu0 %3814
    %3816 = vrot.lane.b32.xlu0 %v2810, 4
    %v3817 = vpop.permute.xlu0 %3816
    %3818 = vrot.lane.b32.xlu0 %v2946, 4
    %v3819 = vpop.permute.xlu0 %3818
    %3820 = vrot.lane.b32.xlu0 %v3354, 4
    %v3821 = vpop.permute.xlu0 %3820
    %3822 = vrot.lane.b32.xlu0 %v3490, 4
    %v3823 = vpop.permute.xlu0 %3822
    %3840 = vrot.lane.b32.xlu0 %v1723, 6
    %v3841 = vpop.permute.xlu0 %3840
    %3842 = vrot.lane.b32.xlu0 %v1859, 6
    %v3843 = vpop.permute.xlu0 %3842
    %3844 = vrot.lane.b32.xlu0 %v2267, 6
    %v3845 = vpop.permute.xlu0 %3844
    %3846 = vrot.lane.b32.xlu0 %v2403, 6
    %v3847 = vpop.permute.xlu0 %3846
    %3848 = vrot.lane.b32.xlu0 %v2811, 6
    %v3849 = vpop.permute.xlu0 %3848
    %3850 = vrot.lane.b32.xlu0 %v2947, 6
    %v3851 = vpop.permute.xlu0 %3850
    %3852 = vrot.lane.b32.xlu0 %v3355, 6
    %v3853 = vpop.permute.xlu0 %3852
    %3854 = vrot.lane.b32.xlu0 %v3491, 6
    %v3855 = vpop.permute.xlu0 %3854
    %3872 = vrot.lane.b32.xlu0 %v1724, 8
    %v3873 = vpop.permute.xlu0 %3872
    %3874 = vrot.lane.b32.xlu0 %v1860, 8
    %v3875 = vpop.permute.xlu0 %3874
    %3876 = vrot.lane.b32.xlu0 %v2268, 8
    %v3877 = vpop.permute.xlu0 %3876
    %3878 = vrot.lane.b32.xlu0 %v2404, 8
    %v3879 = vpop.permute.xlu0 %3878
    %3880 = vrot.lane.b32.xlu0 %v2812, 8
    %v3881 = vpop.permute.xlu0 %3880
    %3882 = vrot.lane.b32.xlu0 %v2948, 8
    %v3883 = vpop.permute.xlu0 %3882
    %3884 = vrot.lane.b32.xlu0 %v3356, 8
    %v3885 = vpop.permute.xlu0 %3884
    %3886 = vrot.lane.b32.xlu0 %v3492, 8
    %v3887 = vpop.permute.xlu0 %3886
    %3904 = vrot.lane.b32.xlu0 %v1725, 10
    %v3905 = vpop.permute.xlu0 %3904
    %3906 = vrot.lane.b32.xlu0 %v1861, 10
    %v3907 = vpop.permute.xlu0 %3906
    %3908 = vrot.lane.b32.xlu0 %v2269, 10
    %v3909 = vpop.permute.xlu0 %3908
    %3910 = vrot.lane.b32.xlu0 %v2405, 10
    %v3911 = vpop.permute.xlu0 %3910
    %3912 = vrot.lane.b32.xlu0 %v2813, 10
    %v3913 = vpop.permute.xlu0 %3912
    %3914 = vrot.lane.b32.xlu0 %v2949, 10
    %v3915 = vpop.permute.xlu0 %3914
    %3916 = vrot.lane.b32.xlu0 %v3357, 10
    %v3917 = vpop.permute.xlu0 %3916
    %3918 = vrot.lane.b32.xlu0 %v3493, 10
    %v3919 = vpop.permute.xlu0 %3918
    %3936 = vrot.lane.b32.xlu0 %v1726, 12
    %v3937 = vpop.permute.xlu0 %3936
    %3938 = vrot.lane.b32.xlu0 %v1862, 12
    %v3939 = vpop.permute.xlu0 %3938
    %3940 = vrot.lane.b32.xlu0 %v2270, 12
    %v3941 = vpop.permute.xlu0 %3940
    %3942 = vrot.lane.b32.xlu0 %v2406, 12
    %v3943 = vpop.permute.xlu0 %3942
    %3944 = vrot.lane.b32.xlu0 %v2814, 12
    %v3945 = vpop.permute.xlu0 %3944
    %3946 = vrot.lane.b32.xlu0 %v2950, 12
    %v3947 = vpop.permute.xlu0 %3946
    %3948 = vrot.lane.b32.xlu0 %v3358, 12
    %v3949 = vpop.permute.xlu0 %3948
    %3950 = vrot.lane.b32.xlu0 %v3494, 12
    %v3951 = vpop.permute.xlu0 %3950
    %3968 = vrot.lane.b32.xlu0 %v1727, 14
    %v3969 = vpop.permute.xlu0 %3968
    %3970 = vrot.lane.b32.xlu0 %v1863, 14
    %v3971 = vpop.permute.xlu0 %3970
    %3972 = vrot.lane.b32.xlu0 %v2271, 14
    %v3973 = vpop.permute.xlu0 %3972
    %3974 = vrot.lane.b32.xlu0 %v2407, 14
    %v3975 = vpop.permute.xlu0 %3974
    %3976 = vrot.lane.b32.xlu0 %v2815, 14
    %v3977 = vpop.permute.xlu0 %3976
    %3978 = vrot.lane.b32.xlu0 %v2951, 14
    %v3979 = vpop.permute.xlu0 %3978
    %3980 = vrot.lane.b32.xlu0 %v3359, 14
    %v3981 = vpop.permute.xlu0 %3980
    %3982 = vrot.lane.b32.xlu0 %v3495, 14
    %v3983 = vpop.permute.xlu0 %3982
    %4000 = vrot.lane.b32.xlu0 %v1992, 16
    %v4001 = vpop.permute.xlu0 %4000
    %4002 = vrot.lane.b32.xlu0 %v2128, 16
    %v4003 = vpop.permute.xlu0 %4002
    %4004 = vrot.lane.b32.xlu0 %v2536, 16
    %v4005 = vpop.permute.xlu0 %4004
    %4006 = vrot.lane.b32.xlu0 %v2672, 16
    %v4007 = vpop.permute.xlu0 %4006
    %4008 = vrot.lane.b32.xlu0 %v3080, 16
    %v4009 = vpop.permute.xlu0 %4008
    %4010 = vrot.lane.b32.xlu0 %v3216, 16
    %v4011 = vpop.permute.xlu0 %4010
    %4012 = vrot.lane.b32.xlu0 %v3624, 16
    %v4013 = vpop.permute.xlu0 %4012
    %4014 = vrot.lane.b32.xlu0 %v3760, 16
    %v4015 = vpop.permute.xlu0 %4014
    %4032 = vrot.lane.b32.xlu0 %v1993, 18
    %v4033 = vpop.permute.xlu0 %4032
    %4034 = vrot.lane.b32.xlu0 %v2129, 18
    %v4035 = vpop.permute.xlu0 %4034
    %4036 = vrot.lane.b32.xlu0 %v2537, 18
    %v4037 = vpop.permute.xlu0 %4036
    %4038 = vrot.lane.b32.xlu0 %v2673, 18
    %v4039 = vpop.permute.xlu0 %4038
    %4040 = vrot.lane.b32.xlu0 %v3081, 18
    %v4041 = vpop.permute.xlu0 %4040
    %4042 = vrot.lane.b32.xlu0 %v3217, 18
    %v4043 = vpop.permute.xlu0 %4042
    %4044 = vrot.lane.b32.xlu0 %v3625, 18
    %v4045 = vpop.permute.xlu0 %4044
    %4046 = vrot.lane.b32.xlu0 %v3761, 18
    %v4047 = vpop.permute.xlu0 %4046
    %4064 = vrot.lane.b32.xlu0 %v1994, 20
    %v4065 = vpop.permute.xlu0 %4064
    %4066 = vrot.lane.b32.xlu0 %v2130, 20
    %v4067 = vpop.permute.xlu0 %4066
    %4068 = vrot.lane.b32.xlu0 %v2538, 20
    %v4069 = vpop.permute.xlu0 %4068
    %4070 = vrot.lane.b32.xlu0 %v2674, 20
    %v4071 = vpop.permute.xlu0 %4070
    %4072 = vrot.lane.b32.xlu0 %v3082, 20
    %v4073 = vpop.permute.xlu0 %4072
    %4074 = vrot.lane.b32.xlu0 %v3218, 20
    %v4075 = vpop.permute.xlu0 %4074
    %4076 = vrot.lane.b32.xlu0 %v3626, 20
    %v4077 = vpop.permute.xlu0 %4076
    %4078 = vrot.lane.b32.xlu0 %v3762, 20
    %v4079 = vpop.permute.xlu0 %4078
    %4096 = vrot.lane.b32.xlu0 %v1995, 22
    %v4097 = vpop.permute.xlu0 %4096
    %4098 = vrot.lane.b32.xlu0 %v2131, 22
    %v4099 = vpop.permute.xlu0 %4098
    %4100 = vrot.lane.b32.xlu0 %v2539, 22
    %v4101 = vpop.permute.xlu0 %4100
    %4102 = vrot.lane.b32.xlu0 %v2675, 22
    %v4103 = vpop.permute.xlu0 %4102
    %4104 = vrot.lane.b32.xlu0 %v3083, 22
    %v4105 = vpop.permute.xlu0 %4104
    %4106 = vrot.lane.b32.xlu0 %v3219, 22
    %v4107 = vpop.permute.xlu0 %4106
    %4108 = vrot.lane.b32.xlu0 %v3627, 22
    %v4109 = vpop.permute.xlu0 %4108
    %4110 = vrot.lane.b32.xlu0 %v3763, 22
    %v4111 = vpop.permute.xlu0 %4110
    %4128 = vrot.lane.b32.xlu0 %v1996, 24
    %v4129 = vpop.permute.xlu0 %4128
    %4130 = vrot.lane.b32.xlu0 %v2132, 24
    %v4131 = vpop.permute.xlu0 %4130
    %4132 = vrot.lane.b32.xlu0 %v2540, 24
    %v4133 = vpop.permute.xlu0 %4132
    %4134 = vrot.lane.b32.xlu0 %v2676, 24
    %v4135 = vpop.permute.xlu0 %4134
    %4136 = vrot.lane.b32.xlu0 %v3084, 24
    %v4137 = vpop.permute.xlu0 %4136
    %4138 = vrot.lane.b32.xlu0 %v3220, 24
    %v4139 = vpop.permute.xlu0 %4138
    %4140 = vrot.lane.b32.xlu0 %v3628, 24
    %v4141 = vpop.permute.xlu0 %4140
    %4142 = vrot.lane.b32.xlu0 %v3764, 24
    %v4143 = vpop.permute.xlu0 %4142
    %4160 = vrot.lane.b32.xlu0 %v1997, 26
    %v4161 = vpop.permute.xlu0 %4160
    %4162 = vrot.lane.b32.xlu0 %v2133, 26
    %v4163 = vpop.permute.xlu0 %4162
    %4164 = vrot.lane.b32.xlu0 %v2541, 26
    %v4165 = vpop.permute.xlu0 %4164
    %4166 = vrot.lane.b32.xlu0 %v2677, 26
    %v4167 = vpop.permute.xlu0 %4166
    %4168 = vrot.lane.b32.xlu0 %v3085, 26
    %v4169 = vpop.permute.xlu0 %4168
    %4170 = vrot.lane.b32.xlu0 %v3221, 26
    %v4171 = vpop.permute.xlu0 %4170
    %4172 = vrot.lane.b32.xlu0 %v3629, 26
    %v4173 = vpop.permute.xlu0 %4172
    %4174 = vrot.lane.b32.xlu0 %v3765, 26
    %v4175 = vpop.permute.xlu0 %4174
    %4192 = vrot.lane.b32.xlu0 %v1998, 28
    %v4193 = vpop.permute.xlu0 %4192
    %4194 = vrot.lane.b32.xlu0 %v2134, 28
    %v4195 = vpop.permute.xlu0 %4194
    %4196 = vrot.lane.b32.xlu0 %v2542, 28
    %v4197 = vpop.permute.xlu0 %4196
    %4198 = vrot.lane.b32.xlu0 %v2678, 28
    %v4199 = vpop.permute.xlu0 %4198
    %4200 = vrot.lane.b32.xlu0 %v3086, 28
    %v4201 = vpop.permute.xlu0 %4200
    %4202 = vrot.lane.b32.xlu0 %v3222, 28
    %v4203 = vpop.permute.xlu0 %4202
    %4204 = vrot.lane.b32.xlu0 %v3630, 28
    %v4205 = vpop.permute.xlu0 %4204
    %4206 = vrot.lane.b32.xlu0 %v3766, 28
    %v4207 = vpop.permute.xlu0 %4206
    %4224 = vrot.lane.b32.xlu0 %v1999, 30
    %v4225 = vpop.permute.xlu0 %4224
    %4226 = vrot.lane.b32.xlu0 %v2135, 30
    %v4227 = vpop.permute.xlu0 %4226
    %4228 = vrot.lane.b32.xlu0 %v2543, 30
    %v4229 = vpop.permute.xlu0 %4228
    %4230 = vrot.lane.b32.xlu0 %v2679, 30
    %v4231 = vpop.permute.xlu0 %4230
    %4232 = vrot.lane.b32.xlu0 %v3087, 30
    %v4233 = vpop.permute.xlu0 %4232
    %4234 = vrot.lane.b32.xlu0 %v3223, 30
    %v4235 = vpop.permute.xlu0 %4234
    %4236 = vrot.lane.b32.xlu0 %v3631, 30
    %v4237 = vpop.permute.xlu0 %4236
    %4238 = vrot.lane.b32.xlu0 %v3767, 30
    %v4239 = vpop.permute.xlu0 %4238
    %vm4248 = vcmask 15360
    %v4249 = vsel %vm4248, %v1720, %v3777
    %v4250 = vsel %vm4248, %v1856, %v3779
    %v4251 = vsel %vm4248, %v2264, %v3781
    %v4252 = vsel %vm4248, %v2400, %v3783
    %v4253 = vsel %vm4248, %v2808, %v3785
    %v4254 = vsel %vm4248, %v2944, %v3787
    %v4255 = vsel %vm4248, %v3352, %v3789
    %v4256 = vsel %vm4248, %v3488, %v3791
    %vm4257 = vcmask 31744
    %v4258 = vsel %vm4257, %v4249, %v3809
    %v4259 = vsel %vm4257, %v4250, %v3811
    %v4260 = vsel %vm4257, %v4251, %v3813
    %v4261 = vsel %vm4257, %v4252, %v3815
    %v4262 = vsel %vm4257, %v4253, %v3817
    %v4263 = vsel %vm4257, %v4254, %v3819
    %v4264 = vsel %vm4257, %v4255, %v3821
    %v4265 = vsel %vm4257, %v4256, %v3823
    %vm4266 = vcmask 48128
    %v4267 = vsel %vm4266, %v4258, %v3841
    %v4268 = vsel %vm4266, %v4259, %v3843
    %v4269 = vsel %vm4266, %v4260, %v3845
    %v4270 = vsel %vm4266, %v4261, %v3847
    %v4271 = vsel %vm4266, %v4262, %v3849
    %v4272 = vsel %vm4266, %v4263, %v3851
    %v4273 = vsel %vm4266, %v4264, %v3853
    %v4274 = vsel %vm4266, %v4265, %v3855
    %vm4275 = vcmask 64512
    %v4276 = vsel %vm4275, %v4267, %v3873
    %v4277 = vsel %vm4275, %v4268, %v3875
    %v4278 = vsel %vm4275, %v4269, %v3877
    %v4279 = vsel %vm4275, %v4270, %v3879
    %v4280 = vsel %vm4275, %v4271, %v3881
    %v4281 = vsel %vm4275, %v4272, %v3883
    %v4282 = vsel %vm4275, %v4273, %v3885
    %v4283 = vsel %vm4275, %v4274, %v3887
    %vm4284 = vcmask 80896
    %v4285 = vsel %vm4284, %v4276, %v3905
    %v4286 = vsel %vm4284, %v4277, %v3907
    %v4287 = vsel %vm4284, %v4278, %v3909
    %v4288 = vsel %vm4284, %v4279, %v3911
    %v4289 = vsel %vm4284, %v4280, %v3913
    %v4290 = vsel %vm4284, %v4281, %v3915
    %v4291 = vsel %vm4284, %v4282, %v3917
    %v4292 = vsel %vm4284, %v4283, %v3919
    %vm4293 = vcmask 97280
    %v4294 = vsel %vm4293, %v4285, %v3937
    %v4295 = vsel %vm4293, %v4286, %v3939
    %v4296 = vsel %vm4293, %v4287, %v3941
    %v4297 = vsel %vm4293, %v4288, %v3943
    %v4298 = vsel %vm4293, %v4289, %v3945
    %v4299 = vsel %vm4293, %v4290, %v3947
    %v4300 = vsel %vm4293, %v4291, %v3949
    %v4301 = vsel %vm4293, %v4292, %v3951
    %vm4302 = vcmask 113664
    %v4303 = vsel %vm4302, %v4294, %v3969
    %v4304 = vsel %vm4302, %v4295, %v3971
    %v4305 = vsel %vm4302, %v4296, %v3973
    %v4306 = vsel %vm4302, %v4297, %v3975
    %v4307 = vsel %vm4302, %v4298, %v3977
    %v4308 = vsel %vm4302, %v4299, %v3979
    %v4309 = vsel %vm4302, %v4300, %v3981
    %v4310 = vsel %vm4302, %v4301, %v3983
    %vm4311 = vcmask 130048
    %v4312 = vsel %vm4311, %v4303, %v4001
    %v4313 = vsel %vm4311, %v4304, %v4003
    %v4314 = vsel %vm4311, %v4305, %v4005
    %v4315 = vsel %vm4311, %v4306, %v4007
    %v4316 = vsel %vm4311, %v4307, %v4009
    %v4317 = vsel %vm4311, %v4308, %v4011
    %v4318 = vsel %vm4311, %v4309, %v4013
    %v4319 = vsel %vm4311, %v4310, %v4015
    %vm4320 = vcmask 146432
    %v4321 = vsel %vm4320, %v4312, %v4033
    %v4322 = vsel %vm4320, %v4313, %v4035
    %v4323 = vsel %vm4320, %v4314, %v4037
    %v4324 = vsel %vm4320, %v4315, %v4039
    %v4325 = vsel %vm4320, %v4316, %v4041
    %v4326 = vsel %vm4320, %v4317, %v4043
    %v4327 = vsel %vm4320, %v4318, %v4045
    %v4328 = vsel %vm4320, %v4319, %v4047
    %vm4329 = vcmask 162816
    %v4330 = vsel %vm4329, %v4321, %v4065
    %v4331 = vsel %vm4329, %v4322, %v4067
    %v4332 = vsel %vm4329, %v4323, %v4069
    %v4333 = vsel %vm4329, %v4324, %v4071
    %v4334 = vsel %vm4329, %v4325, %v4073
    %v4335 = vsel %vm4329, %v4326, %v4075
    %v4336 = vsel %vm4329, %v4327, %v4077
    %v4337 = vsel %vm4329, %v4328, %v4079
    %vm4338 = vcmask 179200
    %v4339 = vsel %vm4338, %v4330, %v4097
    %v4340 = vsel %vm4338, %v4331, %v4099
    %v4341 = vsel %vm4338, %v4332, %v4101
    %v4342 = vsel %vm4338, %v4333, %v4103
    %v4343 = vsel %vm4338, %v4334, %v4105
    %v4344 = vsel %vm4338, %v4335, %v4107
    %v4345 = vsel %vm4338, %v4336, %v4109
    %v4346 = vsel %vm4338, %v4337, %v4111
    %vm4347 = vcmask 195584
    %v4348 = vsel %vm4347, %v4339, %v4129
    %v4349 = vsel %vm4347, %v4340, %v4131
    %v4350 = vsel %vm4347, %v4341, %v4133
    %v4351 = vsel %vm4347, %v4342, %v4135
    %v4352 = vsel %vm4347, %v4343, %v4137
    %v4353 = vsel %vm4347, %v4344, %v4139
    %v4354 = vsel %vm4347, %v4345, %v4141
    %v4355 = vsel %vm4347, %v4346, %v4143
    %vm4356 = vcmask 211968
    %v4357 = vsel %vm4356, %v4348, %v4161
    %v4358 = vsel %vm4356, %v4349, %v4163
    %v4359 = vsel %vm4356, %v4350, %v4165
    %v4360 = vsel %vm4356, %v4351, %v4167
    %v4361 = vsel %vm4356, %v4352, %v4169
    %v4362 = vsel %vm4356, %v4353, %v4171
    %v4363 = vsel %vm4356, %v4354, %v4173
    %v4364 = vsel %vm4356, %v4355, %v4175
    %vm4365 = vcmask 228352
    %v4366 = vsel %vm4365, %v4357, %v4193
    %v4367 = vsel %vm4365, %v4358, %v4195
    %v4368 = vsel %vm4365, %v4359, %v4197
    %v4369 = vsel %vm4365, %v4360, %v4199
    %v4370 = vsel %vm4365, %v4361, %v4201
    %v4371 = vsel %vm4365, %v4362, %v4203
    %v4372 = vsel %vm4365, %v4363, %v4205
    %v4373 = vsel %vm4365, %v4364, %v4207
    %vm4374 = vcmask 244736
    %v4375 = vsel %vm4374, %v4366, %v4225
    %v4376 = vsel %vm4374, %v4367, %v4227
    %v4377 = vsel %vm4374, %v4368, %v4229
    %v4378 = vsel %vm4374, %v4369, %v4231
    %v4379 = vsel %vm4374, %v4370, %v4233
    %v4380 = vsel %vm4374, %v4371, %v4235
    %v4381 = vsel %vm4374, %v4372, %v4237
    %v4382 = vsel %vm4374, %v4373, %v4239
    %v4383 = vlaneseq
    %v4384 = vshrl.u32 %v4383, 7
    %v4385 = vsub.s32 0, %v4384
    %v4386 = vrot.slane %v27, %v4385
    %4388 = vbcast.lane.b32.xlu0 %v4386, 256
    %v4389 = vpop.permute.xlu0 %4388
    %s4391 = sor.u32 256, 8
    %4392 = vbcast.lane.b32.xlu0 %v4386, %s4391
    %v4393 = vpop.permute.xlu0 %4392
    %v4394 = vlaneseq
    %v4395 = vshrl.u32 %v4394, 7
    %v4396 = vsub.s32 1, %v4395
    %v4397 = vrot.slane %v27, %v4396
    %4399 = vbcast.lane.b32.xlu0 %v4397, 256
    %v4400 = vpop.permute.xlu0 %4399
    %s4402 = sor.u32 256, 8
    %4403 = vbcast.lane.b32.xlu0 %v4397, %s4402
    %v4404 = vpop.permute.xlu0 %4403
    %v4405 = vlaneseq
    %v4406 = vshrl.u32 %v4405, 7
    %v4407 = vsub.s32 2, %v4406
    %v4408 = vrot.slane %v27, %v4407
    %4410 = vbcast.lane.b32.xlu0 %v4408, 256
    %v4411 = vpop.permute.xlu0 %4410
    %s4413 = sor.u32 256, 8
    %4414 = vbcast.lane.b32.xlu0 %v4408, %s4413
    %v4415 = vpop.permute.xlu0 %4414
    %v4416 = vlaneseq
    %v4417 = vshrl.u32 %v4416, 7
    %v4418 = vsub.s32 3, %v4417
    %v4419 = vrot.slane %v27, %v4418
    %4421 = vbcast.lane.b32.xlu0 %v4419, 256
    %v4422 = vpop.permute.xlu0 %4421
    %s4424 = sor.u32 256, 8
    %4425 = vbcast.lane.b32.xlu0 %v4419, %s4424
    %v4426 = vpop.permute.xlu0 %4425
    %v4427 = vlaneseq
    %v4428 = vshrl.u32 %v4427, 7
    %v4429 = vsub.s32 4, %v4428
    %v4430 = vrot.slane %v27, %v4429
    %4432 = vbcast.lane.b32.xlu0 %v4430, 256
    %v4433 = vpop.permute.xlu0 %4432
    %s4435 = sor.u32 256, 8
    %4436 = vbcast.lane.b32.xlu0 %v4430, %s4435
    %v4437 = vpop.permute.xlu0 %4436
    %v4438 = vlaneseq
    %v4439 = vshrl.u32 %v4438, 7
    %v4440 = vsub.s32 5, %v4439
    %v4441 = vrot.slane %v27, %v4440
    %4443 = vbcast.lane.b32.xlu0 %v4441, 256
    %v4444 = vpop.permute.xlu0 %4443
    %s4446 = sor.u32 256, 8
    %4447 = vbcast.lane.b32.xlu0 %v4441, %s4446
    %v4448 = vpop.permute.xlu0 %4447
    %v4449 = vlaneseq
    %v4450 = vshrl.u32 %v4449, 7
    %v4451 = vsub.s32 6, %v4450
    %v4452 = vrot.slane %v27, %v4451
    %4454 = vbcast.lane.b32.xlu0 %v4452, 256
    %v4455 = vpop.permute.xlu0 %4454
    %s4457 = sor.u32 256, 8
    %4458 = vbcast.lane.b32.xlu0 %v4452, %s4457
    %v4459 = vpop.permute.xlu0 %4458
    %v4460 = vlaneseq
    %v4461 = vshrl.u32 %v4460, 7
    %v4462 = vsub.s32 7, %v4461
    %v4463 = vrot.slane %v27, %v4462
    %4465 = vbcast.lane.b32.xlu0 %v4463, 256
    %v4466 = vpop.permute.xlu0 %4465
    %s4468 = sor.u32 256, 8
    %4469 = vbcast.lane.b32.xlu0 %v4463, %s4468
    %v4470 = vpop.permute.xlu0 %4469
    %v4471 = vlaneseq
    %v4472 = vshrl.u32 %v4471, 7
    %v4473 = vsub.s32 0, %v4472
    %v4474 = vrot.slane %v28, %v4473
    %4476 = vbcast.lane.b32.xlu0 %v4474, 256
    %v4477 = vpop.permute.xlu0 %4476
    %s4479 = sor.u32 256, 8
    %4480 = vbcast.lane.b32.xlu0 %v4474, %s4479
    %v4481 = vpop.permute.xlu0 %4480
    %v4482 = vlaneseq
    %v4483 = vshrl.u32 %v4482, 7
    %v4484 = vsub.s32 1, %v4483
    %v4485 = vrot.slane %v28, %v4484
    %4487 = vbcast.lane.b32.xlu0 %v4485, 256
    %v4488 = vpop.permute.xlu0 %4487
    %s4490 = sor.u32 256, 8
    %4491 = vbcast.lane.b32.xlu0 %v4485, %s4490
    %v4492 = vpop.permute.xlu0 %4491
    %v4493 = vlaneseq
    %v4494 = vshrl.u32 %v4493, 7
    %v4495 = vsub.s32 2, %v4494
    %v4496 = vrot.slane %v28, %v4495
    %4498 = vbcast.lane.b32.xlu0 %v4496, 256
    %v4499 = vpop.permute.xlu0 %4498
    %s4501 = sor.u32 256, 8
    %4502 = vbcast.lane.b32.xlu0 %v4496, %s4501
    %v4503 = vpop.permute.xlu0 %4502
    %v4504 = vlaneseq
    %v4505 = vshrl.u32 %v4504, 7
    %v4506 = vsub.s32 3, %v4505
    %v4507 = vrot.slane %v28, %v4506
    %4509 = vbcast.lane.b32.xlu0 %v4507, 256
    %v4510 = vpop.permute.xlu0 %4509
    %s4512 = sor.u32 256, 8
    %4513 = vbcast.lane.b32.xlu0 %v4507, %s4512
    %v4514 = vpop.permute.xlu0 %4513
    %v4515 = vlaneseq
    %v4516 = vshrl.u32 %v4515, 7
    %v4517 = vsub.s32 4, %v4516
    %v4518 = vrot.slane %v28, %v4517
    %4520 = vbcast.lane.b32.xlu0 %v4518, 256
    %v4521 = vpop.permute.xlu0 %4520
    %s4523 = sor.u32 256, 8
    %4524 = vbcast.lane.b32.xlu0 %v4518, %s4523
    %v4525 = vpop.permute.xlu0 %4524
    %v4526 = vlaneseq
    %v4527 = vshrl.u32 %v4526, 7
    %v4528 = vsub.s32 5, %v4527
    %v4529 = vrot.slane %v28, %v4528
    %4531 = vbcast.lane.b32.xlu0 %v4529, 256
    %v4532 = vpop.permute.xlu0 %4531
    %s4534 = sor.u32 256, 8
    %4535 = vbcast.lane.b32.xlu0 %v4529, %s4534
    %v4536 = vpop.permute.xlu0 %4535
    %v4537 = vlaneseq
    %v4538 = vshrl.u32 %v4537, 7
    %v4539 = vsub.s32 6, %v4538
    %v4540 = vrot.slane %v28, %v4539
    %4542 = vbcast.lane.b32.xlu0 %v4540, 256
    %v4543 = vpop.permute.xlu0 %4542
    %s4545 = sor.u32 256, 8
    %4546 = vbcast.lane.b32.xlu0 %v4540, %s4545
    %v4547 = vpop.permute.xlu0 %4546
    %v4548 = vlaneseq
    %v4549 = vshrl.u32 %v4548, 7
    %v4550 = vsub.s32 7, %v4549
    %v4551 = vrot.slane %v28, %v4550
    %4553 = vbcast.lane.b32.xlu0 %v4551, 256
    %v4554 = vpop.permute.xlu0 %4553
    %s4556 = sor.u32 256, 8
    %4557 = vbcast.lane.b32.xlu0 %v4551, %s4556
    %v4558 = vpop.permute.xlu0 %4557
    %v4559 = vlaneseq
    %v4560 = vshrl.u32 %v4559, 7
    %v4561 = vsub.s32 0, %v4560
    %v4562 = vrot.slane %v35, %v4561
    %4564 = vbcast.lane.b32.xlu0 %v4562, 256
    %v4565 = vpop.permute.xlu0 %4564
    %s4567 = sor.u32 256, 8
    %4568 = vbcast.lane.b32.xlu0 %v4562, %s4567
    %v4569 = vpop.permute.xlu0 %4568
    %v4570 = vlaneseq
    %v4571 = vshrl.u32 %v4570, 7
    %v4572 = vsub.s32 1, %v4571
    %v4573 = vrot.slane %v35, %v4572
    %4575 = vbcast.lane.b32.xlu0 %v4573, 256
    %v4576 = vpop.permute.xlu0 %4575
    %s4578 = sor.u32 256, 8
    %4579 = vbcast.lane.b32.xlu0 %v4573, %s4578
    %v4580 = vpop.permute.xlu0 %4579
    %v4581 = vlaneseq
    %v4582 = vshrl.u32 %v4581, 7
    %v4583 = vsub.s32 2, %v4582
    %v4584 = vrot.slane %v35, %v4583
    %4586 = vbcast.lane.b32.xlu0 %v4584, 256
    %v4587 = vpop.permute.xlu0 %4586
    %s4589 = sor.u32 256, 8
    %4590 = vbcast.lane.b32.xlu0 %v4584, %s4589
    %v4591 = vpop.permute.xlu0 %4590
    %v4592 = vlaneseq
    %v4593 = vshrl.u32 %v4592, 7
    %v4594 = vsub.s32 3, %v4593
    %v4595 = vrot.slane %v35, %v4594
    %4597 = vbcast.lane.b32.xlu0 %v4595, 256
    %v4598 = vpop.permute.xlu0 %4597
    %s4600 = sor.u32 256, 8
    %4601 = vbcast.lane.b32.xlu0 %v4595, %s4600
    %v4602 = vpop.permute.xlu0 %4601
    %v4603 = vlaneseq
    %v4604 = vshrl.u32 %v4603, 7
    %v4605 = vsub.s32 4, %v4604
    %v4606 = vrot.slane %v35, %v4605
    %4608 = vbcast.lane.b32.xlu0 %v4606, 256
    %v4609 = vpop.permute.xlu0 %4608
    %s4611 = sor.u32 256, 8
    %4612 = vbcast.lane.b32.xlu0 %v4606, %s4611
    %v4613 = vpop.permute.xlu0 %4612
    %v4614 = vlaneseq
    %v4615 = vshrl.u32 %v4614, 7
    %v4616 = vsub.s32 5, %v4615
    %v4617 = vrot.slane %v35, %v4616
    %4619 = vbcast.lane.b32.xlu0 %v4617, 256
    %v4620 = vpop.permute.xlu0 %4619
    %s4622 = sor.u32 256, 8
    %4623 = vbcast.lane.b32.xlu0 %v4617, %s4622
    %v4624 = vpop.permute.xlu0 %4623
    %v4625 = vlaneseq
    %v4626 = vshrl.u32 %v4625, 7
    %v4627 = vsub.s32 6, %v4626
    %v4628 = vrot.slane %v35, %v4627
    %4630 = vbcast.lane.b32.xlu0 %v4628, 256
    %v4631 = vpop.permute.xlu0 %4630
    %s4633 = sor.u32 256, 8
    %4634 = vbcast.lane.b32.xlu0 %v4628, %s4633
    %v4635 = vpop.permute.xlu0 %4634
    %v4636 = vlaneseq
    %v4637 = vshrl.u32 %v4636, 7
    %v4638 = vsub.s32 7, %v4637
    %v4639 = vrot.slane %v35, %v4638
    %4641 = vbcast.lane.b32.xlu0 %v4639, 256
    %v4642 = vpop.permute.xlu0 %4641
    %s4644 = sor.u32 256, 8
    %4645 = vbcast.lane.b32.xlu0 %v4639, %s4644
    %v4646 = vpop.permute.xlu0 %4645
    %v4647 = vlaneseq
    %v4648 = vshrl.u32 %v4647, 7
    %v4649 = vsub.s32 0, %v4648
    %v4650 = vrot.slane %v36, %v4649
    %4652 = vbcast.lane.b32.xlu0 %v4650, 256
    %v4653 = vpop.permute.xlu0 %4652
    %s4655 = sor.u32 256, 8
    %4656 = vbcast.lane.b32.xlu0 %v4650, %s4655
    %v4657 = vpop.permute.xlu0 %4656
    %v4658 = vlaneseq
    %v4659 = vshrl.u32 %v4658, 7
    %v4660 = vsub.s32 1, %v4659
    %v4661 = vrot.slane %v36, %v4660
    %4663 = vbcast.lane.b32.xlu0 %v4661, 256
    %v4664 = vpop.permute.xlu0 %4663
    %s4666 = sor.u32 256, 8
    %4667 = vbcast.lane.b32.xlu0 %v4661, %s4666
    %v4668 = vpop.permute.xlu0 %4667
    %v4669 = vlaneseq
    %v4670 = vshrl.u32 %v4669, 7
    %v4671 = vsub.s32 2, %v4670
    %v4672 = vrot.slane %v36, %v4671
    %4674 = vbcast.lane.b32.xlu0 %v4672, 256
    %v4675 = vpop.permute.xlu0 %4674
    %s4677 = sor.u32 256, 8
    %4678 = vbcast.lane.b32.xlu0 %v4672, %s4677
    %v4679 = vpop.permute.xlu0 %4678
    %v4680 = vlaneseq
    %v4681 = vshrl.u32 %v4680, 7
    %v4682 = vsub.s32 3, %v4681
    %v4683 = vrot.slane %v36, %v4682
    %4685 = vbcast.lane.b32.xlu0 %v4683, 256
    %v4686 = vpop.permute.xlu0 %4685
    %s4688 = sor.u32 256, 8
    %4689 = vbcast.lane.b32.xlu0 %v4683, %s4688
    %v4690 = vpop.permute.xlu0 %4689
    %v4691 = vlaneseq
    %v4692 = vshrl.u32 %v4691, 7
    %v4693 = vsub.s32 4, %v4692
    %v4694 = vrot.slane %v36, %v4693
    %4696 = vbcast.lane.b32.xlu0 %v4694, 256
    %v4697 = vpop.permute.xlu0 %4696
    %s4699 = sor.u32 256, 8
    %4700 = vbcast.lane.b32.xlu0 %v4694, %s4699
    %v4701 = vpop.permute.xlu0 %4700
    %v4702 = vlaneseq
    %v4703 = vshrl.u32 %v4702, 7
    %v4704 = vsub.s32 5, %v4703
    %v4705 = vrot.slane %v36, %v4704
    %4707 = vbcast.lane.b32.xlu0 %v4705, 256
    %v4708 = vpop.permute.xlu0 %4707
    %s4710 = sor.u32 256, 8
    %4711 = vbcast.lane.b32.xlu0 %v4705, %s4710
    %v4712 = vpop.permute.xlu0 %4711
    %v4713 = vlaneseq
    %v4714 = vshrl.u32 %v4713, 7
    %v4715 = vsub.s32 6, %v4714
    %v4716 = vrot.slane %v36, %v4715
    %4718 = vbcast.lane.b32.xlu0 %v4716, 256
    %v4719 = vpop.permute.xlu0 %4718
    %s4721 = sor.u32 256, 8
    %4722 = vbcast.lane.b32.xlu0 %v4716, %s4721
    %v4723 = vpop.permute.xlu0 %4722
    %v4724 = vlaneseq
    %v4725 = vshrl.u32 %v4724, 7
    %v4726 = vsub.s32 7, %v4725
    %v4727 = vrot.slane %v36, %v4726
    %4729 = vbcast.lane.b32.xlu0 %v4727, 256
    %v4730 = vpop.permute.xlu0 %4729
    %s4732 = sor.u32 256, 8
    %4733 = vbcast.lane.b32.xlu0 %v4727, %s4732
    %v4734 = vpop.permute.xlu0 %4733
    %v4735 = vlaneseq
    %v4736 = vshrl.u32 %v4735, 7
    %v4737 = vsub.s32 0, %v4736
    %v4738 = vrot.slane %v43, %v4737
    %4740 = vbcast.lane.b32.xlu0 %v4738, 256
    %v4741 = vpop.permute.xlu0 %4740
    %s4743 = sor.u32 256, 8
    %4744 = vbcast.lane.b32.xlu0 %v4738, %s4743
    %v4745 = vpop.permute.xlu0 %4744
    %v4746 = vlaneseq
    %v4747 = vshrl.u32 %v4746, 7
    %v4748 = vsub.s32 1, %v4747
    %v4749 = vrot.slane %v43, %v4748
    %4751 = vbcast.lane.b32.xlu0 %v4749, 256
    %v4752 = vpop.permute.xlu0 %4751
    %s4754 = sor.u32 256, 8
    %4755 = vbcast.lane.b32.xlu0 %v4749, %s4754
    %v4756 = vpop.permute.xlu0 %4755
    %v4757 = vlaneseq
    %v4758 = vshrl.u32 %v4757, 7
    %v4759 = vsub.s32 2, %v4758
    %v4760 = vrot.slane %v43, %v4759
    %4762 = vbcast.lane.b32.xlu0 %v4760, 256
    %v4763 = vpop.permute.xlu0 %4762
    %s4765 = sor.u32 256, 8
    %4766 = vbcast.lane.b32.xlu0 %v4760, %s4765
    %v4767 = vpop.permute.xlu0 %4766
    %v4768 = vlaneseq
    %v4769 = vshrl.u32 %v4768, 7
    %v4770 = vsub.s32 3, %v4769
    %v4771 = vrot.slane %v43, %v4770
    %4773 = vbcast.lane.b32.xlu0 %v4771, 256
    %v4774 = vpop.permute.xlu0 %4773
    %s4776 = sor.u32 256, 8
    %4777 = vbcast.lane.b32.xlu0 %v4771, %s4776
    %v4778 = vpop.permute.xlu0 %4777
    %v4779 = vlaneseq
    %v4780 = vshrl.u32 %v4779, 7
    %v4781 = vsub.s32 4, %v4780
    %v4782 = vrot.slane %v43, %v4781
    %4784 = vbcast.lane.b32.xlu0 %v4782, 256
    %v4785 = vpop.permute.xlu0 %4784
    %s4787 = sor.u32 256, 8
    %4788 = vbcast.lane.b32.xlu0 %v4782, %s4787
    %v4789 = vpop.permute.xlu0 %4788
    %v4790 = vlaneseq
    %v4791 = vshrl.u32 %v4790, 7
    %v4792 = vsub.s32 5, %v4791
    %v4793 = vrot.slane %v43, %v4792
    %4795 = vbcast.lane.b32.xlu0 %v4793, 256
    %v4796 = vpop.permute.xlu0 %4795
    %s4798 = sor.u32 256, 8
    %4799 = vbcast.lane.b32.xlu0 %v4793, %s4798
    %v4800 = vpop.permute.xlu0 %4799
    %v4801 = vlaneseq
    %v4802 = vshrl.u32 %v4801, 7
    %v4803 = vsub.s32 6, %v4802
    %v4804 = vrot.slane %v43, %v4803
    %4806 = vbcast.lane.b32.xlu0 %v4804, 256
    %v4807 = vpop.permute.xlu0 %4806
    %s4809 = sor.u32 256, 8
    %4810 = vbcast.lane.b32.xlu0 %v4804, %s4809
    %v4811 = vpop.permute.xlu0 %4810
    %v4812 = vlaneseq
    %v4813 = vshrl.u32 %v4812, 7
    %v4814 = vsub.s32 7, %v4813
    %v4815 = vrot.slane %v43, %v4814
    %4817 = vbcast.lane.b32.xlu0 %v4815, 256
    %v4818 = vpop.permute.xlu0 %4817
    %s4820 = sor.u32 256, 8
    %4821 = vbcast.lane.b32.xlu0 %v4815, %s4820
    %v4822 = vpop.permute.xlu0 %4821
    %v4823 = vlaneseq
    %v4824 = vshrl.u32 %v4823, 7
    %v4825 = vsub.s32 0, %v4824
    %v4826 = vrot.slane %v44, %v4825
    %4828 = vbcast.lane.b32.xlu0 %v4826, 256
    %v4829 = vpop.permute.xlu0 %4828
    %s4831 = sor.u32 256, 8
    %4832 = vbcast.lane.b32.xlu0 %v4826, %s4831
    %v4833 = vpop.permute.xlu0 %4832
    %v4834 = vlaneseq
    %v4835 = vshrl.u32 %v4834, 7
    %v4836 = vsub.s32 1, %v4835
    %v4837 = vrot.slane %v44, %v4836
    %4839 = vbcast.lane.b32.xlu0 %v4837, 256
    %v4840 = vpop.permute.xlu0 %4839
    %s4842 = sor.u32 256, 8
    %4843 = vbcast.lane.b32.xlu0 %v4837, %s4842
    %v4844 = vpop.permute.xlu0 %4843
    %v4845 = vlaneseq
    %v4846 = vshrl.u32 %v4845, 7
    %v4847 = vsub.s32 2, %v4846
    %v4848 = vrot.slane %v44, %v4847
    %4850 = vbcast.lane.b32.xlu0 %v4848, 256
    %v4851 = vpop.permute.xlu0 %4850
    %s4853 = sor.u32 256, 8
    %4854 = vbcast.lane.b32.xlu0 %v4848, %s4853
    %v4855 = vpop.permute.xlu0 %4854
    %v4856 = vlaneseq
    %v4857 = vshrl.u32 %v4856, 7
    %v4858 = vsub.s32 3, %v4857
    %v4859 = vrot.slane %v44, %v4858
    %4861 = vbcast.lane.b32.xlu0 %v4859, 256
    %v4862 = vpop.permute.xlu0 %4861
    %s4864 = sor.u32 256, 8
    %4865 = vbcast.lane.b32.xlu0 %v4859, %s4864
    %v4866 = vpop.permute.xlu0 %4865
    %v4867 = vlaneseq
    %v4868 = vshrl.u32 %v4867, 7
    %v4869 = vsub.s32 4, %v4868
    %v4870 = vrot.slane %v44, %v4869
    %4872 = vbcast.lane.b32.xlu0 %v4870, 256
    %v4873 = vpop.permute.xlu0 %4872
    %s4875 = sor.u32 256, 8
    %4876 = vbcast.lane.b32.xlu0 %v4870, %s4875
    %v4877 = vpop.permute.xlu0 %4876
    %v4878 = vlaneseq
    %v4879 = vshrl.u32 %v4878, 7
    %v4880 = vsub.s32 5, %v4879
    %v4881 = vrot.slane %v44, %v4880
    %4883 = vbcast.lane.b32.xlu0 %v4881, 256
    %v4884 = vpop.permute.xlu0 %4883
    %s4886 = sor.u32 256, 8
    %4887 = vbcast.lane.b32.xlu0 %v4881, %s4886
    %v4888 = vpop.permute.xlu0 %4887
    %v4889 = vlaneseq
    %v4890 = vshrl.u32 %v4889, 7
    %v4891 = vsub.s32 6, %v4890
    %v4892 = vrot.slane %v44, %v4891
    %4894 = vbcast.lane.b32.xlu0 %v4892, 256
    %v4895 = vpop.permute.xlu0 %4894
    %s4897 = sor.u32 256, 8
    %4898 = vbcast.lane.b32.xlu0 %v4892, %s4897
    %v4899 = vpop.permute.xlu0 %4898
    %v4900 = vlaneseq
    %v4901 = vshrl.u32 %v4900, 7
    %v4902 = vsub.s32 7, %v4901
    %v4903 = vrot.slane %v44, %v4902
    %4905 = vbcast.lane.b32.xlu0 %v4903, 256
    %v4906 = vpop.permute.xlu0 %4905
    %s4908 = sor.u32 256, 8
    %4909 = vbcast.lane.b32.xlu0 %v4903, %s4908
    %v4910 = vpop.permute.xlu0 %4909
    %v4911 = vlaneseq
    %v4912 = vshrl.u32 %v4911, 7
    %v4913 = vsub.s32 0, %v4912
    %v4914 = vrot.slane %v51, %v4913
    %4916 = vbcast.lane.b32.xlu0 %v4914, 256
    %v4917 = vpop.permute.xlu0 %4916
    %s4919 = sor.u32 256, 8
    %4920 = vbcast.lane.b32.xlu0 %v4914, %s4919
    %v4921 = vpop.permute.xlu0 %4920
    %v4922 = vlaneseq
    %v4923 = vshrl.u32 %v4922, 7
    %v4924 = vsub.s32 1, %v4923
    %v4925 = vrot.slane %v51, %v4924
    %4927 = vbcast.lane.b32.xlu0 %v4925, 256
    %v4928 = vpop.permute.xlu0 %4927
    %s4930 = sor.u32 256, 8
    %4931 = vbcast.lane.b32.xlu0 %v4925, %s4930
    %v4932 = vpop.permute.xlu0 %4931
    %v4933 = vlaneseq
    %v4934 = vshrl.u32 %v4933, 7
    %v4935 = vsub.s32 2, %v4934
    %v4936 = vrot.slane %v51, %v4935
    %4938 = vbcast.lane.b32.xlu0 %v4936, 256
    %v4939 = vpop.permute.xlu0 %4938
    %s4941 = sor.u32 256, 8
    %4942 = vbcast.lane.b32.xlu0 %v4936, %s4941
    %v4943 = vpop.permute.xlu0 %4942
    %v4944 = vlaneseq
    %v4945 = vshrl.u32 %v4944, 7
    %v4946 = vsub.s32 3, %v4945
    %v4947 = vrot.slane %v51, %v4946
    %4949 = vbcast.lane.b32.xlu0 %v4947, 256
    %v4950 = vpop.permute.xlu0 %4949
    %s4952 = sor.u32 256, 8
    %4953 = vbcast.lane.b32.xlu0 %v4947, %s4952
    %v4954 = vpop.permute.xlu0 %4953
    %v4955 = vlaneseq
    %v4956 = vshrl.u32 %v4955, 7
    %v4957 = vsub.s32 4, %v4956
    %v4958 = vrot.slane %v51, %v4957
    %4960 = vbcast.lane.b32.xlu0 %v4958, 256
    %v4961 = vpop.permute.xlu0 %4960
    %s4963 = sor.u32 256, 8
    %4964 = vbcast.lane.b32.xlu0 %v4958, %s4963
    %v4965 = vpop.permute.xlu0 %4964
    %v4966 = vlaneseq
    %v4967 = vshrl.u32 %v4966, 7
    %v4968 = vsub.s32 5, %v4967
    %v4969 = vrot.slane %v51, %v4968
    %4971 = vbcast.lane.b32.xlu0 %v4969, 256
    %v4972 = vpop.permute.xlu0 %4971
    %s4974 = sor.u32 256, 8
    %4975 = vbcast.lane.b32.xlu0 %v4969, %s4974
    %v4976 = vpop.permute.xlu0 %4975
    %v4977 = vlaneseq
    %v4978 = vshrl.u32 %v4977, 7
    %v4979 = vsub.s32 6, %v4978
    %v4980 = vrot.slane %v51, %v4979
    %4982 = vbcast.lane.b32.xlu0 %v4980, 256
    %v4983 = vpop.permute.xlu0 %4982
    %s4985 = sor.u32 256, 8
    %4986 = vbcast.lane.b32.xlu0 %v4980, %s4985
    %v4987 = vpop.permute.xlu0 %4986
    %v4988 = vlaneseq
    %v4989 = vshrl.u32 %v4988, 7
    %v4990 = vsub.s32 7, %v4989
    %v4991 = vrot.slane %v51, %v4990
    %4993 = vbcast.lane.b32.xlu0 %v4991, 256
    %v4994 = vpop.permute.xlu0 %4993
    %s4996 = sor.u32 256, 8
    %4997 = vbcast.lane.b32.xlu0 %v4991, %s4996
    %v4998 = vpop.permute.xlu0 %4997
    %v4999 = vlaneseq
    %v5000 = vshrl.u32 %v4999, 7
    %v5001 = vsub.s32 0, %v5000
    %v5002 = vrot.slane %v52, %v5001
    %5004 = vbcast.lane.b32.xlu0 %v5002, 256
    %v5005 = vpop.permute.xlu0 %5004
    %s5007 = sor.u32 256, 8
    %5008 = vbcast.lane.b32.xlu0 %v5002, %s5007
    %v5009 = vpop.permute.xlu0 %5008
    %v5010 = vlaneseq
    %v5011 = vshrl.u32 %v5010, 7
    %v5012 = vsub.s32 1, %v5011
    %v5013 = vrot.slane %v52, %v5012
    %5015 = vbcast.lane.b32.xlu0 %v5013, 256
    %v5016 = vpop.permute.xlu0 %5015
    %s5018 = sor.u32 256, 8
    %5019 = vbcast.lane.b32.xlu0 %v5013, %s5018
    %v5020 = vpop.permute.xlu0 %5019
    %v5021 = vlaneseq
    %v5022 = vshrl.u32 %v5021, 7
    %v5023 = vsub.s32 2, %v5022
    %v5024 = vrot.slane %v52, %v5023
    %5026 = vbcast.lane.b32.xlu0 %v5024, 256
    %v5027 = vpop.permute.xlu0 %5026
    %s5029 = sor.u32 256, 8
    %5030 = vbcast.lane.b32.xlu0 %v5024, %s5029
    %v5031 = vpop.permute.xlu0 %5030
    %v5032 = vlaneseq
    %v5033 = vshrl.u32 %v5032, 7
    %v5034 = vsub.s32 3, %v5033
    %v5035 = vrot.slane %v52, %v5034
    %5037 = vbcast.lane.b32.xlu0 %v5035, 256
    %v5038 = vpop.permute.xlu0 %5037
    %s5040 = sor.u32 256, 8
    %5041 = vbcast.lane.b32.xlu0 %v5035, %s5040
    %v5042 = vpop.permute.xlu0 %5041
    %v5043 = vlaneseq
    %v5044 = vshrl.u32 %v5043, 7
    %v5045 = vsub.s32 4, %v5044
    %v5046 = vrot.slane %v52, %v5045
    %5048 = vbcast.lane.b32.xlu0 %v5046, 256
    %v5049 = vpop.permute.xlu0 %5048
    %s5051 = sor.u32 256, 8
    %5052 = vbcast.lane.b32.xlu0 %v5046, %s5051
    %v5053 = vpop.permute.xlu0 %5052
    %v5054 = vlaneseq
    %v5055 = vshrl.u32 %v5054, 7
    %v5056 = vsub.s32 5, %v5055
    %v5057 = vrot.slane %v52, %v5056
    %5059 = vbcast.lane.b32.xlu0 %v5057, 256
    %v5060 = vpop.permute.xlu0 %5059
    %s5062 = sor.u32 256, 8
    %5063 = vbcast.lane.b32.xlu0 %v5057, %s5062
    %v5064 = vpop.permute.xlu0 %5063
    %v5065 = vlaneseq
    %v5066 = vshrl.u32 %v5065, 7
    %v5067 = vsub.s32 6, %v5066
    %v5068 = vrot.slane %v52, %v5067
    %5070 = vbcast.lane.b32.xlu0 %v5068, 256
    %v5071 = vpop.permute.xlu0 %5070
    %s5073 = sor.u32 256, 8
    %5074 = vbcast.lane.b32.xlu0 %v5068, %s5073
    %v5075 = vpop.permute.xlu0 %5074
    %v5076 = vlaneseq
    %v5077 = vshrl.u32 %v5076, 7
    %v5078 = vsub.s32 7, %v5077
    %v5079 = vrot.slane %v52, %v5078
    %5081 = vbcast.lane.b32.xlu0 %v5079, 256
    %v5082 = vpop.permute.xlu0 %5081
    %s5084 = sor.u32 256, 8
    %5085 = vbcast.lane.b32.xlu0 %v5079, %s5084
    %v5086 = vpop.permute.xlu0 %5085
    %v5087 = vlaneseq
    %v5088 = vshrl.u32 %v5087, 7
    %v5089 = vsub.s32 0, %v5088
    %v5090 = vrot.slane %v29, %v5089
    %5092 = vbcast.lane.b32.xlu0 %v5090, 256
    %v5093 = vpop.permute.xlu0 %5092
    %s5095 = sor.u32 256, 8
    %5096 = vbcast.lane.b32.xlu0 %v5090, %s5095
    %v5097 = vpop.permute.xlu0 %5096
    %v5098 = vlaneseq
    %v5099 = vshrl.u32 %v5098, 7
    %v5100 = vsub.s32 1, %v5099
    %v5101 = vrot.slane %v29, %v5100
    %5103 = vbcast.lane.b32.xlu0 %v5101, 256
    %v5104 = vpop.permute.xlu0 %5103
    %s5106 = sor.u32 256, 8
    %5107 = vbcast.lane.b32.xlu0 %v5101, %s5106
    %v5108 = vpop.permute.xlu0 %5107
    %v5109 = vlaneseq
    %v5110 = vshrl.u32 %v5109, 7
    %v5111 = vsub.s32 2, %v5110
    %v5112 = vrot.slane %v29, %v5111
    %5114 = vbcast.lane.b32.xlu0 %v5112, 256
    %v5115 = vpop.permute.xlu0 %5114
    %s5117 = sor.u32 256, 8
    %5118 = vbcast.lane.b32.xlu0 %v5112, %s5117
    %v5119 = vpop.permute.xlu0 %5118
    %v5120 = vlaneseq
    %v5121 = vshrl.u32 %v5120, 7
    %v5122 = vsub.s32 3, %v5121
    %v5123 = vrot.slane %v29, %v5122
    %5125 = vbcast.lane.b32.xlu0 %v5123, 256
    %v5126 = vpop.permute.xlu0 %5125
    %s5128 = sor.u32 256, 8
    %5129 = vbcast.lane.b32.xlu0 %v5123, %s5128
    %v5130 = vpop.permute.xlu0 %5129
    %v5131 = vlaneseq
    %v5132 = vshrl.u32 %v5131, 7
    %v5133 = vsub.s32 4, %v5132
    %v5134 = vrot.slane %v29, %v5133
    %5136 = vbcast.lane.b32.xlu0 %v5134, 256
    %v5137 = vpop.permute.xlu0 %5136
    %s5139 = sor.u32 256, 8
    %5140 = vbcast.lane.b32.xlu0 %v5134, %s5139
    %v5141 = vpop.permute.xlu0 %5140
    %v5142 = vlaneseq
    %v5143 = vshrl.u32 %v5142, 7
    %v5144 = vsub.s32 5, %v5143
    %v5145 = vrot.slane %v29, %v5144
    %5147 = vbcast.lane.b32.xlu0 %v5145, 256
    %v5148 = vpop.permute.xlu0 %5147
    %s5150 = sor.u32 256, 8
    %5151 = vbcast.lane.b32.xlu0 %v5145, %s5150
    %v5152 = vpop.permute.xlu0 %5151
    %v5153 = vlaneseq
    %v5154 = vshrl.u32 %v5153, 7
    %v5155 = vsub.s32 6, %v5154
    %v5156 = vrot.slane %v29, %v5155
    %5158 = vbcast.lane.b32.xlu0 %v5156, 256
    %v5159 = vpop.permute.xlu0 %5158
    %s5161 = sor.u32 256, 8
    %5162 = vbcast.lane.b32.xlu0 %v5156, %s5161
    %v5163 = vpop.permute.xlu0 %5162
    %v5164 = vlaneseq
    %v5165 = vshrl.u32 %v5164, 7
    %v5166 = vsub.s32 7, %v5165
    %v5167 = vrot.slane %v29, %v5166
    %5169 = vbcast.lane.b32.xlu0 %v5167, 256
    %v5170 = vpop.permute.xlu0 %5169
    %s5172 = sor.u32 256, 8
    %5173 = vbcast.lane.b32.xlu0 %v5167, %s5172
    %v5174 = vpop.permute.xlu0 %5173
    %v5175 = vlaneseq
    %v5176 = vshrl.u32 %v5175, 7
    %v5177 = vsub.s32 0, %v5176
    %v5178 = vrot.slane %v30, %v5177
    %5180 = vbcast.lane.b32.xlu0 %v5178, 256
    %v5181 = vpop.permute.xlu0 %5180
    %s5183 = sor.u32 256, 8
    %5184 = vbcast.lane.b32.xlu0 %v5178, %s5183
    %v5185 = vpop.permute.xlu0 %5184
    %v5186 = vlaneseq
    %v5187 = vshrl.u32 %v5186, 7
    %v5188 = vsub.s32 1, %v5187
    %v5189 = vrot.slane %v30, %v5188
    %5191 = vbcast.lane.b32.xlu0 %v5189, 256
    %v5192 = vpop.permute.xlu0 %5191
    %s5194 = sor.u32 256, 8
    %5195 = vbcast.lane.b32.xlu0 %v5189, %s5194
    %v5196 = vpop.permute.xlu0 %5195
    %v5197 = vlaneseq
    %v5198 = vshrl.u32 %v5197, 7
    %v5199 = vsub.s32 2, %v5198
    %v5200 = vrot.slane %v30, %v5199
    %5202 = vbcast.lane.b32.xlu0 %v5200, 256
    %v5203 = vpop.permute.xlu0 %5202
    %s5205 = sor.u32 256, 8
    %5206 = vbcast.lane.b32.xlu0 %v5200, %s5205
    %v5207 = vpop.permute.xlu0 %5206
    %v5208 = vlaneseq
    %v5209 = vshrl.u32 %v5208, 7
    %v5210 = vsub.s32 3, %v5209
    %v5211 = vrot.slane %v30, %v5210
    %5213 = vbcast.lane.b32.xlu0 %v5211, 256
    %v5214 = vpop.permute.xlu0 %5213
    %s5216 = sor.u32 256, 8
    %5217 = vbcast.lane.b32.xlu0 %v5211, %s5216
    %v5218 = vpop.permute.xlu0 %5217
    %v5219 = vlaneseq
    %v5220 = vshrl.u32 %v5219, 7
    %v5221 = vsub.s32 4, %v5220
    %v5222 = vrot.slane %v30, %v5221
    %5224 = vbcast.lane.b32.xlu0 %v5222, 256
    %v5225 = vpop.permute.xlu0 %5224
    %s5227 = sor.u32 256, 8
    %5228 = vbcast.lane.b32.xlu0 %v5222, %s5227
    %v5229 = vpop.permute.xlu0 %5228
    %v5230 = vlaneseq
    %v5231 = vshrl.u32 %v5230, 7
    %v5232 = vsub.s32 5, %v5231
    %v5233 = vrot.slane %v30, %v5232
    %5235 = vbcast.lane.b32.xlu0 %v5233, 256
    %v5236 = vpop.permute.xlu0 %5235
    %s5238 = sor.u32 256, 8
    %5239 = vbcast.lane.b32.xlu0 %v5233, %s5238
    %v5240 = vpop.permute.xlu0 %5239
    %v5241 = vlaneseq
    %v5242 = vshrl.u32 %v5241, 7
    %v5243 = vsub.s32 6, %v5242
    %v5244 = vrot.slane %v30, %v5243
    %5246 = vbcast.lane.b32.xlu0 %v5244, 256
    %v5247 = vpop.permute.xlu0 %5246
    %s5249 = sor.u32 256, 8
    %5250 = vbcast.lane.b32.xlu0 %v5244, %s5249
    %v5251 = vpop.permute.xlu0 %5250
    %v5252 = vlaneseq
    %v5253 = vshrl.u32 %v5252, 7
    %v5254 = vsub.s32 7, %v5253
    %v5255 = vrot.slane %v30, %v5254
    %5257 = vbcast.lane.b32.xlu0 %v5255, 256
    %v5258 = vpop.permute.xlu0 %5257
    %s5260 = sor.u32 256, 8
    %5261 = vbcast.lane.b32.xlu0 %v5255, %s5260
    %v5262 = vpop.permute.xlu0 %5261
    %v5263 = vlaneseq
    %v5264 = vshrl.u32 %v5263, 7
    %v5265 = vsub.s32 0, %v5264
    %v5266 = vrot.slane %v37, %v5265
    %5268 = vbcast.lane.b32.xlu0 %v5266, 256
    %v5269 = vpop.permute.xlu0 %5268
    %s5271 = sor.u32 256, 8
    %5272 = vbcast.lane.b32.xlu0 %v5266, %s5271
    %v5273 = vpop.permute.xlu0 %5272
    %v5274 = vlaneseq
    %v5275 = vshrl.u32 %v5274, 7
    %v5276 = vsub.s32 1, %v5275
    %v5277 = vrot.slane %v37, %v5276
    %5279 = vbcast.lane.b32.xlu0 %v5277, 256
    %v5280 = vpop.permute.xlu0 %5279
    %s5282 = sor.u32 256, 8
    %5283 = vbcast.lane.b32.xlu0 %v5277, %s5282
    %v5284 = vpop.permute.xlu0 %5283
    %v5285 = vlaneseq
    %v5286 = vshrl.u32 %v5285, 7
    %v5287 = vsub.s32 2, %v5286
    %v5288 = vrot.slane %v37, %v5287
    %5290 = vbcast.lane.b32.xlu0 %v5288, 256
    %v5291 = vpop.permute.xlu0 %5290
    %s5293 = sor.u32 256, 8
    %5294 = vbcast.lane.b32.xlu0 %v5288, %s5293
    %v5295 = vpop.permute.xlu0 %5294
    %v5296 = vlaneseq
    %v5297 = vshrl.u32 %v5296, 7
    %v5298 = vsub.s32 3, %v5297
    %v5299 = vrot.slane %v37, %v5298
    %5301 = vbcast.lane.b32.xlu0 %v5299, 256
    %v5302 = vpop.permute.xlu0 %5301
    %s5304 = sor.u32 256, 8
    %5305 = vbcast.lane.b32.xlu0 %v5299, %s5304
    %v5306 = vpop.permute.xlu0 %5305
    %v5307 = vlaneseq
    %v5308 = vshrl.u32 %v5307, 7
    %v5309 = vsub.s32 4, %v5308
    %v5310 = vrot.slane %v37, %v5309
    %5312 = vbcast.lane.b32.xlu0 %v5310, 256
    %v5313 = vpop.permute.xlu0 %5312
    %s5315 = sor.u32 256, 8
    %5316 = vbcast.lane.b32.xlu0 %v5310, %s5315
    %v5317 = vpop.permute.xlu0 %5316
    %v5318 = vlaneseq
    %v5319 = vshrl.u32 %v5318, 7
    %v5320 = vsub.s32 5, %v5319
    %v5321 = vrot.slane %v37, %v5320
    %5323 = vbcast.lane.b32.xlu0 %v5321, 256
    %v5324 = vpop.permute.xlu0 %5323
    %s5326 = sor.u32 256, 8
    %5327 = vbcast.lane.b32.xlu0 %v5321, %s5326
    %v5328 = vpop.permute.xlu0 %5327
    %v5329 = vlaneseq
    %v5330 = vshrl.u32 %v5329, 7
    %v5331 = vsub.s32 6, %v5330
    %v5332 = vrot.slane %v37, %v5331
    %5334 = vbcast.lane.b32.xlu0 %v5332, 256
    %v5335 = vpop.permute.xlu0 %5334
    %s5337 = sor.u32 256, 8
    %5338 = vbcast.lane.b32.xlu0 %v5332, %s5337
    %v5339 = vpop.permute.xlu0 %5338
    %v5340 = vlaneseq
    %v5341 = vshrl.u32 %v5340, 7
    %v5342 = vsub.s32 7, %v5341
    %v5343 = vrot.slane %v37, %v5342
    %5345 = vbcast.lane.b32.xlu0 %v5343, 256
    %v5346 = vpop.permute.xlu0 %5345
    %s5348 = sor.u32 256, 8
    %5349 = vbcast.lane.b32.xlu0 %v5343, %s5348
    %v5350 = vpop.permute.xlu0 %5349
    %v5351 = vlaneseq
    %v5352 = vshrl.u32 %v5351, 7
    %v5353 = vsub.s32 0, %v5352
    %v5354 = vrot.slane %v38, %v5353
    %5356 = vbcast.lane.b32.xlu0 %v5354, 256
    %v5357 = vpop.permute.xlu0 %5356
    %s5359 = sor.u32 256, 8
    %5360 = vbcast.lane.b32.xlu0 %v5354, %s5359
    %v5361 = vpop.permute.xlu0 %5360
    %v5362 = vlaneseq
    %v5363 = vshrl.u32 %v5362, 7
    %v5364 = vsub.s32 1, %v5363
    %v5365 = vrot.slane %v38, %v5364
    %5367 = vbcast.lane.b32.xlu0 %v5365, 256
    %v5368 = vpop.permute.xlu0 %5367
    %s5370 = sor.u32 256, 8
    %5371 = vbcast.lane.b32.xlu0 %v5365, %s5370
    %v5372 = vpop.permute.xlu0 %5371
    %v5373 = vlaneseq
    %v5374 = vshrl.u32 %v5373, 7
    %v5375 = vsub.s32 2, %v5374
    %v5376 = vrot.slane %v38, %v5375
    %5378 = vbcast.lane.b32.xlu0 %v5376, 256
    %v5379 = vpop.permute.xlu0 %5378
    %s5381 = sor.u32 256, 8
    %5382 = vbcast.lane.b32.xlu0 %v5376, %s5381
    %v5383 = vpop.permute.xlu0 %5382
    %v5384 = vlaneseq
    %v5385 = vshrl.u32 %v5384, 7
    %v5386 = vsub.s32 3, %v5385
    %v5387 = vrot.slane %v38, %v5386
    %5389 = vbcast.lane.b32.xlu0 %v5387, 256
    %v5390 = vpop.permute.xlu0 %5389
    %s5392 = sor.u32 256, 8
    %5393 = vbcast.lane.b32.xlu0 %v5387, %s5392
    %v5394 = vpop.permute.xlu0 %5393
    %v5395 = vlaneseq
    %v5396 = vshrl.u32 %v5395, 7
    %v5397 = vsub.s32 4, %v5396
    %v5398 = vrot.slane %v38, %v5397
    %5400 = vbcast.lane.b32.xlu0 %v5398, 256
    %v5401 = vpop.permute.xlu0 %5400
    %s5403 = sor.u32 256, 8
    %5404 = vbcast.lane.b32.xlu0 %v5398, %s5403
    %v5405 = vpop.permute.xlu0 %5404
    %v5406 = vlaneseq
    %v5407 = vshrl.u32 %v5406, 7
    %v5408 = vsub.s32 5, %v5407
    %v5409 = vrot.slane %v38, %v5408
    %5411 = vbcast.lane.b32.xlu0 %v5409, 256
    %v5412 = vpop.permute.xlu0 %5411
    %s5414 = sor.u32 256, 8
    %5415 = vbcast.lane.b32.xlu0 %v5409, %s5414
    %v5416 = vpop.permute.xlu0 %5415
    %v5417 = vlaneseq
    %v5418 = vshrl.u32 %v5417, 7
    %v5419 = vsub.s32 6, %v5418
    %v5420 = vrot.slane %v38, %v5419
    %5422 = vbcast.lane.b32.xlu0 %v5420, 256
    %v5423 = vpop.permute.xlu0 %5422
    %s5425 = sor.u32 256, 8
    %5426 = vbcast.lane.b32.xlu0 %v5420, %s5425
    %v5427 = vpop.permute.xlu0 %5426
    %v5428 = vlaneseq
    %v5429 = vshrl.u32 %v5428, 7
    %v5430 = vsub.s32 7, %v5429
    %v5431 = vrot.slane %v38, %v5430
    %5433 = vbcast.lane.b32.xlu0 %v5431, 256
    %v5434 = vpop.permute.xlu0 %5433
    %s5436 = sor.u32 256, 8
    %5437 = vbcast.lane.b32.xlu0 %v5431, %s5436
    %v5438 = vpop.permute.xlu0 %5437
    %v5439 = vlaneseq
    %v5440 = vshrl.u32 %v5439, 7
    %v5441 = vsub.s32 0, %v5440
    %v5442 = vrot.slane %v45, %v5441
    %5444 = vbcast.lane.b32.xlu0 %v5442, 256
    %v5445 = vpop.permute.xlu0 %5444
    %s5447 = sor.u32 256, 8
    %5448 = vbcast.lane.b32.xlu0 %v5442, %s5447
    %v5449 = vpop.permute.xlu0 %5448
    %v5450 = vlaneseq
    %v5451 = vshrl.u32 %v5450, 7
    %v5452 = vsub.s32 1, %v5451
    %v5453 = vrot.slane %v45, %v5452
    %5455 = vbcast.lane.b32.xlu0 %v5453, 256
    %v5456 = vpop.permute.xlu0 %5455
    %s5458 = sor.u32 256, 8
    %5459 = vbcast.lane.b32.xlu0 %v5453, %s5458
    %v5460 = vpop.permute.xlu0 %5459
    %v5461 = vlaneseq
    %v5462 = vshrl.u32 %v5461, 7
    %v5463 = vsub.s32 2, %v5462
    %v5464 = vrot.slane %v45, %v5463
    %5466 = vbcast.lane.b32.xlu0 %v5464, 256
    %v5467 = vpop.permute.xlu0 %5466
    %s5469 = sor.u32 256, 8
    %5470 = vbcast.lane.b32.xlu0 %v5464, %s5469
    %v5471 = vpop.permute.xlu0 %5470
    %v5472 = vlaneseq
    %v5473 = vshrl.u32 %v5472, 7
    %v5474 = vsub.s32 3, %v5473
    %v5475 = vrot.slane %v45, %v5474
    %5477 = vbcast.lane.b32.xlu0 %v5475, 256
    %v5478 = vpop.permute.xlu0 %5477
    %s5480 = sor.u32 256, 8
    %5481 = vbcast.lane.b32.xlu0 %v5475, %s5480
    %v5482 = vpop.permute.xlu0 %5481
    %v5483 = vlaneseq
    %v5484 = vshrl.u32 %v5483, 7
    %v5485 = vsub.s32 4, %v5484
    %v5486 = vrot.slane %v45, %v5485
    %5488 = vbcast.lane.b32.xlu0 %v5486, 256
    %v5489 = vpop.permute.xlu0 %5488
    %s5491 = sor.u32 256, 8
    %5492 = vbcast.lane.b32.xlu0 %v5486, %s5491
    %v5493 = vpop.permute.xlu0 %5492
    %v5494 = vlaneseq
    %v5495 = vshrl.u32 %v5494, 7
    %v5496 = vsub.s32 5, %v5495
    %v5497 = vrot.slane %v45, %v5496
    %5499 = vbcast.lane.b32.xlu0 %v5497, 256
    %v5500 = vpop.permute.xlu0 %5499
    %s5502 = sor.u32 256, 8
    %5503 = vbcast.lane.b32.xlu0 %v5497, %s5502
    %v5504 = vpop.permute.xlu0 %5503
    %v5505 = vlaneseq
    %v5506 = vshrl.u32 %v5505, 7
    %v5507 = vsub.s32 6, %v5506
    %v5508 = vrot.slane %v45, %v5507
    %5510 = vbcast.lane.b32.xlu0 %v5508, 256
    %v5511 = vpop.permute.xlu0 %5510
    %s5513 = sor.u32 256, 8
    %5514 = vbcast.lane.b32.xlu0 %v5508, %s5513
    %v5515 = vpop.permute.xlu0 %5514
    %v5516 = vlaneseq
    %v5517 = vshrl.u32 %v5516, 7
    %v5518 = vsub.s32 7, %v5517
    %v5519 = vrot.slane %v45, %v5518
    %5521 = vbcast.lane.b32.xlu0 %v5519, 256
    %v5522 = vpop.permute.xlu0 %5521
    %s5524 = sor.u32 256, 8
    %5525 = vbcast.lane.b32.xlu0 %v5519, %s5524
    %v5526 = vpop.permute.xlu0 %5525
    %v5527 = vlaneseq
    %v5528 = vshrl.u32 %v5527, 7
    %v5529 = vsub.s32 0, %v5528
    %v5530 = vrot.slane %v46, %v5529
    %5532 = vbcast.lane.b32.xlu0 %v5530, 256
    %v5533 = vpop.permute.xlu0 %5532
    %s5535 = sor.u32 256, 8
    %5536 = vbcast.lane.b32.xlu0 %v5530, %s5535
    %v5537 = vpop.permute.xlu0 %5536
    %v5538 = vlaneseq
    %v5539 = vshrl.u32 %v5538, 7
    %v5540 = vsub.s32 1, %v5539
    %v5541 = vrot.slane %v46, %v5540
    %5543 = vbcast.lane.b32.xlu0 %v5541, 256
    %v5544 = vpop.permute.xlu0 %5543
    %s5546 = sor.u32 256, 8
    %5547 = vbcast.lane.b32.xlu0 %v5541, %s5546
    %v5548 = vpop.permute.xlu0 %5547
    %v5549 = vlaneseq
    %v5550 = vshrl.u32 %v5549, 7
    %v5551 = vsub.s32 2, %v5550
    %v5552 = vrot.slane %v46, %v5551
    %5554 = vbcast.lane.b32.xlu0 %v5552, 256
    %v5555 = vpop.permute.xlu0 %5554
    %s5557 = sor.u32 256, 8
    %5558 = vbcast.lane.b32.xlu0 %v5552, %s5557
    %v5559 = vpop.permute.xlu0 %5558
    %v5560 = vlaneseq
    %v5561 = vshrl.u32 %v5560, 7
    %v5562 = vsub.s32 3, %v5561
    %v5563 = vrot.slane %v46, %v5562
    %5565 = vbcast.lane.b32.xlu0 %v5563, 256
    %v5566 = vpop.permute.xlu0 %5565
    %s5568 = sor.u32 256, 8
    %5569 = vbcast.lane.b32.xlu0 %v5563, %s5568
    %v5570 = vpop.permute.xlu0 %5569
    %v5571 = vlaneseq
    %v5572 = vshrl.u32 %v5571, 7
    %v5573 = vsub.s32 4, %v5572
    %v5574 = vrot.slane %v46, %v5573
    %5576 = vbcast.lane.b32.xlu0 %v5574, 256
    %v5577 = vpop.permute.xlu0 %5576
    %s5579 = sor.u32 256, 8
    %5580 = vbcast.lane.b32.xlu0 %v5574, %s5579
    %v5581 = vpop.permute.xlu0 %5580
    %v5582 = vlaneseq
    %v5583 = vshrl.u32 %v5582, 7
    %v5584 = vsub.s32 5, %v5583
    %v5585 = vrot.slane %v46, %v5584
    %5587 = vbcast.lane.b32.xlu0 %v5585, 256
    %v5588 = vpop.permute.xlu0 %5587
    %s5590 = sor.u32 256, 8
    %5591 = vbcast.lane.b32.xlu0 %v5585, %s5590
    %v5592 = vpop.permute.xlu0 %5591
    %v5593 = vlaneseq
    %v5594 = vshrl.u32 %v5593, 7
    %v5595 = vsub.s32 6, %v5594
    %v5596 = vrot.slane %v46, %v5595
    %5598 = vbcast.lane.b32.xlu0 %v5596, 256
    %v5599 = vpop.permute.xlu0 %5598
    %s5601 = sor.u32 256, 8
    %5602 = vbcast.lane.b32.xlu0 %v5596, %s5601
    %v5603 = vpop.permute.xlu0 %5602
    %v5604 = vlaneseq
    %v5605 = vshrl.u32 %v5604, 7
    %v5606 = vsub.s32 7, %v5605
    %v5607 = vrot.slane %v46, %v5606
    %5609 = vbcast.lane.b32.xlu0 %v5607, 256
    %v5610 = vpop.permute.xlu0 %5609
    %s5612 = sor.u32 256, 8
    %5613 = vbcast.lane.b32.xlu0 %v5607, %s5612
    %v5614 = vpop.permute.xlu0 %5613
    %v5615 = vlaneseq
    %v5616 = vshrl.u32 %v5615, 7
    %v5617 = vsub.s32 0, %v5616
    %v5618 = vrot.slane %v53, %v5617
    %5620 = vbcast.lane.b32.xlu0 %v5618, 256
    %v5621 = vpop.permute.xlu0 %5620
    %s5623 = sor.u32 256, 8
    %5624 = vbcast.lane.b32.xlu0 %v5618, %s5623
    %v5625 = vpop.permute.xlu0 %5624
    %v5626 = vlaneseq
    %v5627 = vshrl.u32 %v5626, 7
    %v5628 = vsub.s32 1, %v5627
    %v5629 = vrot.slane %v53, %v5628
    %5631 = vbcast.lane.b32.xlu0 %v5629, 256
    %v5632 = vpop.permute.xlu0 %5631
    %s5634 = sor.u32 256, 8
    %5635 = vbcast.lane.b32.xlu0 %v5629, %s5634
    %v5636 = vpop.permute.xlu0 %5635
    %v5637 = vlaneseq
    %v5638 = vshrl.u32 %v5637, 7
    %v5639 = vsub.s32 2, %v5638
    %v5640 = vrot.slane %v53, %v5639
    %5642 = vbcast.lane.b32.xlu0 %v5640, 256
    %v5643 = vpop.permute.xlu0 %5642
    %s5645 = sor.u32 256, 8
    %5646 = vbcast.lane.b32.xlu0 %v5640, %s5645
    %v5647 = vpop.permute.xlu0 %5646
    %v5648 = vlaneseq
    %v5649 = vshrl.u32 %v5648, 7
    %v5650 = vsub.s32 3, %v5649
    %v5651 = vrot.slane %v53, %v5650
    %5653 = vbcast.lane.b32.xlu0 %v5651, 256
    %v5654 = vpop.permute.xlu0 %5653
    %s5656 = sor.u32 256, 8
    %5657 = vbcast.lane.b32.xlu0 %v5651, %s5656
    %v5658 = vpop.permute.xlu0 %5657
    %v5659 = vlaneseq
    %v5660 = vshrl.u32 %v5659, 7
    %v5661 = vsub.s32 4, %v5660
    %v5662 = vrot.slane %v53, %v5661
    %5664 = vbcast.lane.b32.xlu0 %v5662, 256
    %v5665 = vpop.permute.xlu0 %5664
    %s5667 = sor.u32 256, 8
    %5668 = vbcast.lane.b32.xlu0 %v5662, %s5667
    %v5669 = vpop.permute.xlu0 %5668
    %v5670 = vlaneseq
    %v5671 = vshrl.u32 %v5670, 7
    %v5672 = vsub.s32 5, %v5671
    %v5673 = vrot.slane %v53, %v5672
    %5675 = vbcast.lane.b32.xlu0 %v5673, 256
    %v5676 = vpop.permute.xlu0 %5675
    %s5678 = sor.u32 256, 8
    %5679 = vbcast.lane.b32.xlu0 %v5673, %s5678
    %v5680 = vpop.permute.xlu0 %5679
    %v5681 = vlaneseq
    %v5682 = vshrl.u32 %v5681, 7
    %v5683 = vsub.s32 6, %v5682
    %v5684 = vrot.slane %v53, %v5683
    %5686 = vbcast.lane.b32.xlu0 %v5684, 256
    %v5687 = vpop.permute.xlu0 %5686
    %s5689 = sor.u32 256, 8
    %5690 = vbcast.lane.b32.xlu0 %v5684, %s5689
    %v5691 = vpop.permute.xlu0 %5690
    %v5692 = vlaneseq
    %v5693 = vshrl.u32 %v5692, 7
    %v5694 = vsub.s32 7, %v5693
    %v5695 = vrot.slane %v53, %v5694
    %5697 = vbcast.lane.b32.xlu0 %v5695, 256
    %v5698 = vpop.permute.xlu0 %5697
    %s5700 = sor.u32 256, 8
    %5701 = vbcast.lane.b32.xlu0 %v5695, %s5700
    %v5702 = vpop.permute.xlu0 %5701
    %v5703 = vlaneseq
    %v5704 = vshrl.u32 %v5703, 7
    %v5705 = vsub.s32 0, %v5704
    %v5706 = vrot.slane %v54, %v5705
    %5708 = vbcast.lane.b32.xlu0 %v5706, 256
    %v5709 = vpop.permute.xlu0 %5708
    %s5711 = sor.u32 256, 8
    %5712 = vbcast.lane.b32.xlu0 %v5706, %s5711
    %v5713 = vpop.permute.xlu0 %5712
    %v5714 = vlaneseq
    %v5715 = vshrl.u32 %v5714, 7
    %v5716 = vsub.s32 1, %v5715
    %v5717 = vrot.slane %v54, %v5716
    %5719 = vbcast.lane.b32.xlu0 %v5717, 256
    %v5720 = vpop.permute.xlu0 %5719
    %s5722 = sor.u32 256, 8
    %5723 = vbcast.lane.b32.xlu0 %v5717, %s5722
    %v5724 = vpop.permute.xlu0 %5723
    %v5725 = vlaneseq
    %v5726 = vshrl.u32 %v5725, 7
    %v5727 = vsub.s32 2, %v5726
    %v5728 = vrot.slane %v54, %v5727
    %5730 = vbcast.lane.b32.xlu0 %v5728, 256
    %v5731 = vpop.permute.xlu0 %5730
    %s5733 = sor.u32 256, 8
    %5734 = vbcast.lane.b32.xlu0 %v5728, %s5733
    %v5735 = vpop.permute.xlu0 %5734
    %v5736 = vlaneseq
    %v5737 = vshrl.u32 %v5736, 7
    %v5738 = vsub.s32 3, %v5737
    %v5739 = vrot.slane %v54, %v5738
    %5741 = vbcast.lane.b32.xlu0 %v5739, 256
    %v5742 = vpop.permute.xlu0 %5741
    %s5744 = sor.u32 256, 8
    %5745 = vbcast.lane.b32.xlu0 %v5739, %s5744
    %v5746 = vpop.permute.xlu0 %5745
    %v5747 = vlaneseq
    %v5748 = vshrl.u32 %v5747, 7
    %v5749 = vsub.s32 4, %v5748
    %v5750 = vrot.slane %v54, %v5749
    %5752 = vbcast.lane.b32.xlu0 %v5750, 256
    %v5753 = vpop.permute.xlu0 %5752
    %s5755 = sor.u32 256, 8
    %5756 = vbcast.lane.b32.xlu0 %v5750, %s5755
    %v5757 = vpop.permute.xlu0 %5756
    %v5758 = vlaneseq
    %v5759 = vshrl.u32 %v5758, 7
    %v5760 = vsub.s32 5, %v5759
    %v5761 = vrot.slane %v54, %v5760
    %5763 = vbcast.lane.b32.xlu0 %v5761, 256
    %v5764 = vpop.permute.xlu0 %5763
    %s5766 = sor.u32 256, 8
    %5767 = vbcast.lane.b32.xlu0 %v5761, %s5766
    %v5768 = vpop.permute.xlu0 %5767
    %v5769 = vlaneseq
    %v5770 = vshrl.u32 %v5769, 7
    %v5771 = vsub.s32 6, %v5770
    %v5772 = vrot.slane %v54, %v5771
    %5774 = vbcast.lane.b32.xlu0 %v5772, 256
    %v5775 = vpop.permute.xlu0 %5774
    %s5777 = sor.u32 256, 8
    %5778 = vbcast.lane.b32.xlu0 %v5772, %s5777
    %v5779 = vpop.permute.xlu0 %5778
    %v5780 = vlaneseq
    %v5781 = vshrl.u32 %v5780, 7
    %v5782 = vsub.s32 7, %v5781
    %v5783 = vrot.slane %v54, %v5782
    %5785 = vbcast.lane.b32.xlu0 %v5783, 256
    %v5786 = vpop.permute.xlu0 %5785
    %s5788 = sor.u32 256, 8
    %5789 = vbcast.lane.b32.xlu0 %v5783, %s5788
    %v5790 = vpop.permute.xlu0 %5789
    %v5791 = vsel %vm1463, %v4389, %v5093
    %v5792 = vsel %vm1463, %v4393, %v5097
    %v5793 = vsel %vm1463, %v4400, %v5104
    %v5794 = vsel %vm1463, %v4404, %v5108
    %v5795 = vsel %vm1463, %v4411, %v5115
    %v5796 = vsel %vm1463, %v4415, %v5119
    %v5797 = vsel %vm1463, %v4422, %v5126
    %v5798 = vsel %vm1463, %v4426, %v5130
    %v5799 = vsel %vm1463, %v4433, %v5137
    %v5800 = vsel %vm1463, %v4437, %v5141
    %v5801 = vsel %vm1463, %v4444, %v5148
    %v5802 = vsel %vm1463, %v4448, %v5152
    %v5803 = vsel %vm1463, %v4455, %v5159
    %v5804 = vsel %vm1463, %v4459, %v5163
    %v5805 = vsel %vm1463, %v4466, %v5170
    %v5806 = vsel %vm1463, %v4470, %v5174
    %v5807 = vsel %vm1463, %v4477, %v5181
    %v5808 = vsel %vm1463, %v4481, %v5185
    %v5809 = vsel %vm1463, %v4488, %v5192
    %v5810 = vsel %vm1463, %v4492, %v5196
    %v5811 = vsel %vm1463, %v4499, %v5203
    %v5812 = vsel %vm1463, %v4503, %v5207
    %v5813 = vsel %vm1463, %v4510, %v5214
    %v5814 = vsel %vm1463, %v4514, %v5218
    %v5815 = vsel %vm1463, %v4521, %v5225
    %v5816 = vsel %vm1463, %v4525, %v5229
    %v5817 = vsel %vm1463, %v4532, %v5236
    %v5818 = vsel %vm1463, %v4536, %v5240
    %v5819 = vsel %vm1463, %v4543, %v5247
    %v5820 = vsel %vm1463, %v4547, %v5251
    %v5821 = vsel %vm1463, %v4554, %v5258
    %v5822 = vsel %vm1463, %v4558, %v5262
    %v5823 = vsel %vm1463, %v4565, %v5269
    %v5824 = vsel %vm1463, %v4569, %v5273
    %v5825 = vsel %vm1463, %v4576, %v5280
    %v5826 = vsel %vm1463, %v4580, %v5284
    %v5827 = vsel %vm1463, %v4587, %v5291
    %v5828 = vsel %vm1463, %v4591, %v5295
    %v5829 = vsel %vm1463, %v4598, %v5302
    %v5830 = vsel %vm1463, %v4602, %v5306
    %v5831 = vsel %vm1463, %v4609, %v5313
    %v5832 = vsel %vm1463, %v4613, %v5317
    %v5833 = vsel %vm1463, %v4620, %v5324
    %v5834 = vsel %vm1463, %v4624, %v5328
    %v5835 = vsel %vm1463, %v4631, %v5335
    %v5836 = vsel %vm1463, %v4635, %v5339
    %v5837 = vsel %vm1463, %v4642, %v5346
    %v5838 = vsel %vm1463, %v4646, %v5350
    %v5839 = vsel %vm1463, %v4653, %v5357
    %v5840 = vsel %vm1463, %v4657, %v5361
    %v5841 = vsel %vm1463, %v4664, %v5368
    %v5842 = vsel %vm1463, %v4668, %v5372
    %v5843 = vsel %vm1463, %v4675, %v5379
    %v5844 = vsel %vm1463, %v4679, %v5383
    %v5845 = vsel %vm1463, %v4686, %v5390
    %v5846 = vsel %vm1463, %v4690, %v5394
    %v5847 = vsel %vm1463, %v4697, %v5401
    %v5848 = vsel %vm1463, %v4701, %v5405
    %v5849 = vsel %vm1463, %v4708, %v5412
    %v5850 = vsel %vm1463, %v4712, %v5416
    %v5851 = vsel %vm1463, %v4719, %v5423
    %v5852 = vsel %vm1463, %v4723, %v5427
    %v5853 = vsel %vm1463, %v4730, %v5434
    %v5854 = vsel %vm1463, %v4734, %v5438
    %v5855 = vsel %vm1463, %v4741, %v5445
    %v5856 = vsel %vm1463, %v4745, %v5449
    %v5857 = vsel %vm1463, %v4752, %v5456
    %v5858 = vsel %vm1463, %v4756, %v5460
    %v5859 = vsel %vm1463, %v4763, %v5467
    %v5860 = vsel %vm1463, %v4767, %v5471
    %v5861 = vsel %vm1463, %v4774, %v5478
    %v5862 = vsel %vm1463, %v4778, %v5482
    %v5863 = vsel %vm1463, %v4785, %v5489
    %v5864 = vsel %vm1463, %v4789, %v5493
    %v5865 = vsel %vm1463, %v4796, %v5500
    %v5866 = vsel %vm1463, %v4800, %v5504
    %v5867 = vsel %vm1463, %v4807, %v5511
    %v5868 = vsel %vm1463, %v4811, %v5515
    %v5869 = vsel %vm1463, %v4818, %v5522
    %v5870 = vsel %vm1463, %v4822, %v5526
    %v5871 = vsel %vm1463, %v4829, %v5533
    %v5872 = vsel %vm1463, %v4833, %v5537
    %v5873 = vsel %vm1463, %v4840, %v5544
    %v5874 = vsel %vm1463, %v4844, %v5548
    %v5875 = vsel %vm1463, %v4851, %v5555
    %v5876 = vsel %vm1463, %v4855, %v5559
    %v5877 = vsel %vm1463, %v4862, %v5566
    %v5878 = vsel %vm1463, %v4866, %v5570
    %v5879 = vsel %vm1463, %v4873, %v5577
    %v5880 = vsel %vm1463, %v4877, %v5581
    %v5881 = vsel %vm1463, %v4884, %v5588
    %v5882 = vsel %vm1463, %v4888, %v5592
    %v5883 = vsel %vm1463, %v4895, %v5599
    %v5884 = vsel %vm1463, %v4899, %v5603
    %v5885 = vsel %vm1463, %v4906, %v5610
    %v5886 = vsel %vm1463, %v4910, %v5614
    %v5887 = vsel %vm1463, %v4917, %v5621
    %v5888 = vsel %vm1463, %v4921, %v5625
    %v5889 = vsel %vm1463, %v4928, %v5632
    %v5890 = vsel %vm1463, %v4932, %v5636
    %v5891 = vsel %vm1463, %v4939, %v5643
    %v5892 = vsel %vm1463, %v4943, %v5647
    %v5893 = vsel %vm1463, %v4950, %v5654
    %v5894 = vsel %vm1463, %v4954, %v5658
    %v5895 = vsel %vm1463, %v4961, %v5665
    %v5896 = vsel %vm1463, %v4965, %v5669
    %v5897 = vsel %vm1463, %v4972, %v5676
    %v5898 = vsel %vm1463, %v4976, %v5680
    %v5899 = vsel %vm1463, %v4983, %v5687
    %v5900 = vsel %vm1463, %v4987, %v5691
    %v5901 = vsel %vm1463, %v4994, %v5698
    %v5902 = vsel %vm1463, %v4998, %v5702
    %v5903 = vsel %vm1463, %v5005, %v5709
    %v5904 = vsel %vm1463, %v5009, %v5713
    %v5905 = vsel %vm1463, %v5016, %v5720
    %v5906 = vsel %vm1463, %v5020, %v5724
    %v5907 = vsel %vm1463, %v5027, %v5731
    %v5908 = vsel %vm1463, %v5031, %v5735
    %v5909 = vsel %vm1463, %v5038, %v5742
    %v5910 = vsel %vm1463, %v5042, %v5746
    %v5911 = vsel %vm1463, %v5049, %v5753
    %v5912 = vsel %vm1463, %v5053, %v5757
    %v5913 = vsel %vm1463, %v5060, %v5764
    %v5914 = vsel %vm1463, %v5064, %v5768
    %v5915 = vsel %vm1463, %v5071, %v5775
    %v5916 = vsel %vm1463, %v5075, %v5779
    %v5917 = vsel %vm1463, %v5082, %v5786
    %v5918 = vsel %vm1463, %v5086, %v5790
    %v5919 = vcombine.low %v5791, %v5795
    %v5920 = vcombine.high %v5791, %v5795
    %v5922 = vunpack.c.l.s4 1983009808
    %v5923 = vunpack.c.0.s8 %v5922
    %v5924 = vlaneseq
    %v5925 = vshrl.u32 %v5924, 7
    %v5926 = vsub.s32 %v5923, %v5925
    %v5927 = vrot.slane %v5919, %v5926
    %v5929 = vunpack.c.l.s4 1983009808
    %v5930 = vunpack.c.0.s8 %v5929
    %v5931 = vlaneseq
    %v5932 = vshrl.u32 %v5931, 7
    %v5933 = vsub.s32 %v5930, %v5932
    %v5934 = vrot.slane %v5920, %v5933
    %v5935 = vcombine.low %v5793, %v5797
    %v5936 = vcombine.high %v5793, %v5797
    %v5938 = vunpack.c.l.s4 1983009808
    %v5939 = vunpack.c.0.s8 %v5938
    %v5940 = vlaneseq
    %v5941 = vshrl.u32 %v5940, 7
    %v5942 = vsub.s32 %v5939, %v5941
    %v5943 = vrot.slane %v5935, %v5942
    %v5945 = vunpack.c.l.s4 1983009808
    %v5946 = vunpack.c.0.s8 %v5945
    %v5947 = vlaneseq
    %v5948 = vshrl.u32 %v5947, 7
    %v5949 = vsub.s32 %v5946, %v5948
    %v5950 = vrot.slane %v5936, %v5949
    %v5951 = vcombine.low %v5799, %v5803
    %v5952 = vcombine.high %v5799, %v5803
    %v5954 = vunpack.c.l.s4 1983009808
    %v5955 = vunpack.c.0.s8 %v5954
    %v5956 = vlaneseq
    %v5957 = vshrl.u32 %v5956, 7
    %v5958 = vsub.s32 %v5955, %v5957
    %v5959 = vrot.slane %v5951, %v5958
    %v5961 = vunpack.c.l.s4 1983009808
    %v5962 = vunpack.c.0.s8 %v5961
    %v5963 = vlaneseq
    %v5964 = vshrl.u32 %v5963, 7
    %v5965 = vsub.s32 %v5962, %v5964
    %v5966 = vrot.slane %v5952, %v5965
    %v5967 = vcombine.low %v5801, %v5805
    %v5968 = vcombine.high %v5801, %v5805
    %v5970 = vunpack.c.l.s4 1983009808
    %v5971 = vunpack.c.0.s8 %v5970
    %v5972 = vlaneseq
    %v5973 = vshrl.u32 %v5972, 7
    %v5974 = vsub.s32 %v5971, %v5973
    %v5975 = vrot.slane %v5967, %v5974
    %v5977 = vunpack.c.l.s4 1983009808
    %v5978 = vunpack.c.0.s8 %v5977
    %v5979 = vlaneseq
    %v5980 = vshrl.u32 %v5979, 7
    %v5981 = vsub.s32 %v5978, %v5980
    %v5982 = vrot.slane %v5968, %v5981
    %v5983 = vcombine.low %v5927, %v5943
    %v5984 = vcombine.high %v5927, %v5943
    %v5986 = vunpack.c.l.s4 1934713408
    %v5987 = vunpack.c.0.s8 %v5986
    %v5988 = vlaneseq
    %v5989 = vshrl.u32 %v5988, 7
    %v5990 = vsub.s32 %v5987, %v5989
    %v5991 = vrot.slane %v5983, %v5990
    %v5993 = vunpack.c.l.s4 1934713408
    %v5994 = vunpack.c.0.s8 %v5993
    %v5995 = vlaneseq
    %v5996 = vshrl.u32 %v5995, 7
    %v5997 = vsub.s32 %v5994, %v5996
    %v5998 = vrot.slane %v5984, %v5997
    %v5999 = vcombine.low %v5934, %v5950
    %v6000 = vcombine.high %v5934, %v5950
    %v6002 = vunpack.c.l.s4 1934713408
    %v6003 = vunpack.c.0.s8 %v6002
    %v6004 = vlaneseq
    %v6005 = vshrl.u32 %v6004, 7
    %v6006 = vsub.s32 %v6003, %v6005
    %v6007 = vrot.slane %v5999, %v6006
    %v6009 = vunpack.c.l.s4 1934713408
    %v6010 = vunpack.c.0.s8 %v6009
    %v6011 = vlaneseq
    %v6012 = vshrl.u32 %v6011, 7
    %v6013 = vsub.s32 %v6010, %v6012
    %v6014 = vrot.slane %v6000, %v6013
    %v6015 = vcombine.low %v5959, %v5975
    %v6016 = vcombine.high %v5959, %v5975
    %v6018 = vunpack.c.l.s4 1934713408
    %v6019 = vunpack.c.0.s8 %v6018
    %v6020 = vlaneseq
    %v6021 = vshrl.u32 %v6020, 7
    %v6022 = vsub.s32 %v6019, %v6021
    %v6023 = vrot.slane %v6015, %v6022
    %v6025 = vunpack.c.l.s4 1934713408
    %v6026 = vunpack.c.0.s8 %v6025
    %v6027 = vlaneseq
    %v6028 = vshrl.u32 %v6027, 7
    %v6029 = vsub.s32 %v6026, %v6028
    %v6030 = vrot.slane %v6016, %v6029
    %v6031 = vcombine.low %v5966, %v5982
    %v6032 = vcombine.high %v5966, %v5982
    %v6034 = vunpack.c.l.s4 1934713408
    %v6035 = vunpack.c.0.s8 %v6034
    %v6036 = vlaneseq
    %v6037 = vshrl.u32 %v6036, 7
    %v6038 = vsub.s32 %v6035, %v6037
    %v6039 = vrot.slane %v6031, %v6038
    %v6041 = vunpack.c.l.s4 1934713408
    %v6042 = vunpack.c.0.s8 %v6041
    %v6043 = vlaneseq
    %v6044 = vshrl.u32 %v6043, 7
    %v6045 = vsub.s32 %v6042, %v6044
    %v6046 = vrot.slane %v6032, %v6045
    %v6047 = vcombine.low %v5991, %v6023
    %v6048 = vcombine.high %v5991, %v6023
    %v6049 = vcombine.low %v5998, %v6030
    %v6050 = vcombine.high %v5998, %v6030
    %v6051 = vcombine.low %v6007, %v6039
    %v6052 = vcombine.high %v6007, %v6039
    %v6053 = vcombine.low %v6014, %v6046
    %v6054 = vcombine.high %v6014, %v6046
    %v6055 = vcombine.low %v5807, %v5811
    %v6056 = vcombine.high %v5807, %v5811
    %v6058 = vunpack.c.l.s4 1983009808
    %v6059 = vunpack.c.0.s8 %v6058
    %v6060 = vlaneseq
    %v6061 = vshrl.u32 %v6060, 7
    %v6062 = vsub.s32 %v6059, %v6061
    %v6063 = vrot.slane %v6055, %v6062
    %v6065 = vunpack.c.l.s4 1983009808
    %v6066 = vunpack.c.0.s8 %v6065
    %v6067 = vlaneseq
    %v6068 = vshrl.u32 %v6067, 7
    %v6069 = vsub.s32 %v6066, %v6068
    %v6070 = vrot.slane %v6056, %v6069
    %v6071 = vcombine.low %v5809, %v5813
    %v6072 = vcombine.high %v5809, %v5813
    %v6074 = vunpack.c.l.s4 1983009808
    %v6075 = vunpack.c.0.s8 %v6074
    %v6076 = vlaneseq
    %v6077 = vshrl.u32 %v6076, 7
    %v6078 = vsub.s32 %v6075, %v6077
    %v6079 = vrot.slane %v6071, %v6078
    %v6081 = vunpack.c.l.s4 1983009808
    %v6082 = vunpack.c.0.s8 %v6081
    %v6083 = vlaneseq
    %v6084 = vshrl.u32 %v6083, 7
    %v6085 = vsub.s32 %v6082, %v6084
    %v6086 = vrot.slane %v6072, %v6085
    %v6087 = vcombine.low %v5815, %v5819
    %v6088 = vcombine.high %v5815, %v5819
    %v6090 = vunpack.c.l.s4 1983009808
    %v6091 = vunpack.c.0.s8 %v6090
    %v6092 = vlaneseq
    %v6093 = vshrl.u32 %v6092, 7
    %v6094 = vsub.s32 %v6091, %v6093
    %v6095 = vrot.slane %v6087, %v6094
    %v6097 = vunpack.c.l.s4 1983009808
    %v6098 = vunpack.c.0.s8 %v6097
    %v6099 = vlaneseq
    %v6100 = vshrl.u32 %v6099, 7
    %v6101 = vsub.s32 %v6098, %v6100
    %v6102 = vrot.slane %v6088, %v6101
    %v6103 = vcombine.low %v5817, %v5821
    %v6104 = vcombine.high %v5817, %v5821
    %v6106 = vunpack.c.l.s4 1983009808
    %v6107 = vunpack.c.0.s8 %v6106
    %v6108 = vlaneseq
    %v6109 = vshrl.u32 %v6108, 7
    %v6110 = vsub.s32 %v6107, %v6109
    %v6111 = vrot.slane %v6103, %v6110
    %v6113 = vunpack.c.l.s4 1983009808
    %v6114 = vunpack.c.0.s8 %v6113
    %v6115 = vlaneseq
    %v6116 = vshrl.u32 %v6115, 7
    %v6117 = vsub.s32 %v6114, %v6116
    %v6118 = vrot.slane %v6104, %v6117
    %v6119 = vcombine.low %v6063, %v6079
    %v6120 = vcombine.high %v6063, %v6079
    %v6122 = vunpack.c.l.s4 1934713408
    %v6123 = vunpack.c.0.s8 %v6122
    %v6124 = vlaneseq
    %v6125 = vshrl.u32 %v6124, 7
    %v6126 = vsub.s32 %v6123, %v6125
    %v6127 = vrot.slane %v6119, %v6126
    %v6129 = vunpack.c.l.s4 1934713408
    %v6130 = vunpack.c.0.s8 %v6129
    %v6131 = vlaneseq
    %v6132 = vshrl.u32 %v6131, 7
    %v6133 = vsub.s32 %v6130, %v6132
    %v6134 = vrot.slane %v6120, %v6133
    %v6135 = vcombine.low %v6070, %v6086
    %v6136 = vcombine.high %v6070, %v6086
    %v6138 = vunpack.c.l.s4 1934713408
    %v6139 = vunpack.c.0.s8 %v6138
    %v6140 = vlaneseq
    %v6141 = vshrl.u32 %v6140, 7
    %v6142 = vsub.s32 %v6139, %v6141
    %v6143 = vrot.slane %v6135, %v6142
    %v6145 = vunpack.c.l.s4 1934713408
    %v6146 = vunpack.c.0.s8 %v6145
    %v6147 = vlaneseq
    %v6148 = vshrl.u32 %v6147, 7
    %v6149 = vsub.s32 %v6146, %v6148
    %v6150 = vrot.slane %v6136, %v6149
    %v6151 = vcombine.low %v6095, %v6111
    %v6152 = vcombine.high %v6095, %v6111
    %v6154 = vunpack.c.l.s4 1934713408
    %v6155 = vunpack.c.0.s8 %v6154
    %v6156 = vlaneseq
    %v6157 = vshrl.u32 %v6156, 7
    %v6158 = vsub.s32 %v6155, %v6157
    %v6159 = vrot.slane %v6151, %v6158
    %v6161 = vunpack.c.l.s4 1934713408
    %v6162 = vunpack.c.0.s8 %v6161
    %v6163 = vlaneseq
    %v6164 = vshrl.u32 %v6163, 7
    %v6165 = vsub.s32 %v6162, %v6164
    %v6166 = vrot.slane %v6152, %v6165
    %v6167 = vcombine.low %v6102, %v6118
    %v6168 = vcombine.high %v6102, %v6118
    %v6170 = vunpack.c.l.s4 1934713408
    %v6171 = vunpack.c.0.s8 %v6170
    %v6172 = vlaneseq
    %v6173 = vshrl.u32 %v6172, 7
    %v6174 = vsub.s32 %v6171, %v6173
    %v6175 = vrot.slane %v6167, %v6174
    %v6177 = vunpack.c.l.s4 1934713408
    %v6178 = vunpack.c.0.s8 %v6177
    %v6179 = vlaneseq
    %v6180 = vshrl.u32 %v6179, 7
    %v6181 = vsub.s32 %v6178, %v6180
    %v6182 = vrot.slane %v6168, %v6181
    %v6183 = vcombine.low %v6127, %v6159
    %v6184 = vcombine.high %v6127, %v6159
    %v6185 = vcombine.low %v6134, %v6166
    %v6186 = vcombine.high %v6134, %v6166
    %v6187 = vcombine.low %v6143, %v6175
    %v6188 = vcombine.high %v6143, %v6175
    %v6189 = vcombine.low %v6150, %v6182
    %v6190 = vcombine.high %v6150, %v6182
    %v6191 = vcombine.low %v5792, %v5796
    %v6192 = vcombine.high %v5792, %v5796
    %v6194 = vunpack.c.l.s4 1983009808
    %v6195 = vunpack.c.0.s8 %v6194
    %v6196 = vlaneseq
    %v6197 = vshrl.u32 %v6196, 7
    %v6198 = vsub.s32 %v6195, %v6197
    %v6199 = vrot.slane %v6191, %v6198
    %v6201 = vunpack.c.l.s4 1983009808
    %v6202 = vunpack.c.0.s8 %v6201
    %v6203 = vlaneseq
    %v6204 = vshrl.u32 %v6203, 7
    %v6205 = vsub.s32 %v6202, %v6204
    %v6206 = vrot.slane %v6192, %v6205
    %v6207 = vcombine.low %v5794, %v5798
    %v6208 = vcombine.high %v5794, %v5798
    %v6210 = vunpack.c.l.s4 1983009808
    %v6211 = vunpack.c.0.s8 %v6210
    %v6212 = vlaneseq
    %v6213 = vshrl.u32 %v6212, 7
    %v6214 = vsub.s32 %v6211, %v6213
    %v6215 = vrot.slane %v6207, %v6214
    %v6217 = vunpack.c.l.s4 1983009808
    %v6218 = vunpack.c.0.s8 %v6217
    %v6219 = vlaneseq
    %v6220 = vshrl.u32 %v6219, 7
    %v6221 = vsub.s32 %v6218, %v6220
    %v6222 = vrot.slane %v6208, %v6221
    %v6223 = vcombine.low %v5800, %v5804
    %v6224 = vcombine.high %v5800, %v5804
    %v6226 = vunpack.c.l.s4 1983009808
    %v6227 = vunpack.c.0.s8 %v6226
    %v6228 = vlaneseq
    %v6229 = vshrl.u32 %v6228, 7
    %v6230 = vsub.s32 %v6227, %v6229
    %v6231 = vrot.slane %v6223, %v6230
    %v6233 = vunpack.c.l.s4 1983009808
    %v6234 = vunpack.c.0.s8 %v6233
    %v6235 = vlaneseq
    %v6236 = vshrl.u32 %v6235, 7
    %v6237 = vsub.s32 %v6234, %v6236
    %v6238 = vrot.slane %v6224, %v6237
    %v6239 = vcombine.low %v5802, %v5806
    %v6240 = vcombine.high %v5802, %v5806
    %v6242 = vunpack.c.l.s4 1983009808
    %v6243 = vunpack.c.0.s8 %v6242
    %v6244 = vlaneseq
    %v6245 = vshrl.u32 %v6244, 7
    %v6246 = vsub.s32 %v6243, %v6245
    %v6247 = vrot.slane %v6239, %v6246
    %v6249 = vunpack.c.l.s4 1983009808
    %v6250 = vunpack.c.0.s8 %v6249
    %v6251 = vlaneseq
    %v6252 = vshrl.u32 %v6251, 7
    %v6253 = vsub.s32 %v6250, %v6252
    %v6254 = vrot.slane %v6240, %v6253
    %v6255 = vcombine.low %v6199, %v6215
    %v6256 = vcombine.high %v6199, %v6215
    %v6258 = vunpack.c.l.s4 1934713408
    %v6259 = vunpack.c.0.s8 %v6258
    %v6260 = vlaneseq
    %v6261 = vshrl.u32 %v6260, 7
    %v6262 = vsub.s32 %v6259, %v6261
    %v6263 = vrot.slane %v6255, %v6262
    %v6265 = vunpack.c.l.s4 1934713408
    %v6266 = vunpack.c.0.s8 %v6265
    %v6267 = vlaneseq
    %v6268 = vshrl.u32 %v6267, 7
    %v6269 = vsub.s32 %v6266, %v6268
    %v6270 = vrot.slane %v6256, %v6269
    %v6271 = vcombine.low %v6206, %v6222
    %v6272 = vcombine.high %v6206, %v6222
    %v6274 = vunpack.c.l.s4 1934713408
    %v6275 = vunpack.c.0.s8 %v6274
    %v6276 = vlaneseq
    %v6277 = vshrl.u32 %v6276, 7
    %v6278 = vsub.s32 %v6275, %v6277
    %v6279 = vrot.slane %v6271, %v6278
    %v6281 = vunpack.c.l.s4 1934713408
    %v6282 = vunpack.c.0.s8 %v6281
    %v6283 = vlaneseq
    %v6284 = vshrl.u32 %v6283, 7
    %v6285 = vsub.s32 %v6282, %v6284
    %v6286 = vrot.slane %v6272, %v6285
    %v6287 = vcombine.low %v6231, %v6247
    %v6288 = vcombine.high %v6231, %v6247
    %v6290 = vunpack.c.l.s4 1934713408
    %v6291 = vunpack.c.0.s8 %v6290
    %v6292 = vlaneseq
    %v6293 = vshrl.u32 %v6292, 7
    %v6294 = vsub.s32 %v6291, %v6293
    %v6295 = vrot.slane %v6287, %v6294
    %v6297 = vunpack.c.l.s4 1934713408
    %v6298 = vunpack.c.0.s8 %v6297
    %v6299 = vlaneseq
    %v6300 = vshrl.u32 %v6299, 7
    %v6301 = vsub.s32 %v6298, %v6300
    %v6302 = vrot.slane %v6288, %v6301
    %v6303 = vcombine.low %v6238, %v6254
    %v6304 = vcombine.high %v6238, %v6254
    %v6306 = vunpack.c.l.s4 1934713408
    %v6307 = vunpack.c.0.s8 %v6306
    %v6308 = vlaneseq
    %v6309 = vshrl.u32 %v6308, 7
    %v6310 = vsub.s32 %v6307, %v6309
    %v6311 = vrot.slane %v6303, %v6310
    %v6313 = vunpack.c.l.s4 1934713408
    %v6314 = vunpack.c.0.s8 %v6313
    %v6315 = vlaneseq
    %v6316 = vshrl.u32 %v6315, 7
    %v6317 = vsub.s32 %v6314, %v6316
    %v6318 = vrot.slane %v6304, %v6317
    %v6319 = vcombine.low %v6263, %v6295
    %v6320 = vcombine.high %v6263, %v6295
    %v6321 = vcombine.low %v6270, %v6302
    %v6322 = vcombine.high %v6270, %v6302
    %v6323 = vcombine.low %v6279, %v6311
    %v6324 = vcombine.high %v6279, %v6311
    %v6325 = vcombine.low %v6286, %v6318
    %v6326 = vcombine.high %v6286, %v6318
    %v6327 = vcombine.low %v5808, %v5812
    %v6328 = vcombine.high %v5808, %v5812
    %v6330 = vunpack.c.l.s4 1983009808
    %v6331 = vunpack.c.0.s8 %v6330
    %v6332 = vlaneseq
    %v6333 = vshrl.u32 %v6332, 7
    %v6334 = vsub.s32 %v6331, %v6333
    %v6335 = vrot.slane %v6327, %v6334
    %v6337 = vunpack.c.l.s4 1983009808
    %v6338 = vunpack.c.0.s8 %v6337
    %v6339 = vlaneseq
    %v6340 = vshrl.u32 %v6339, 7
    %v6341 = vsub.s32 %v6338, %v6340
    %v6342 = vrot.slane %v6328, %v6341
    %v6343 = vcombine.low %v5810, %v5814
    %v6344 = vcombine.high %v5810, %v5814
    %v6346 = vunpack.c.l.s4 1983009808
    %v6347 = vunpack.c.0.s8 %v6346
    %v6348 = vlaneseq
    %v6349 = vshrl.u32 %v6348, 7
    %v6350 = vsub.s32 %v6347, %v6349
    %v6351 = vrot.slane %v6343, %v6350
    %v6353 = vunpack.c.l.s4 1983009808
    %v6354 = vunpack.c.0.s8 %v6353
    %v6355 = vlaneseq
    %v6356 = vshrl.u32 %v6355, 7
    %v6357 = vsub.s32 %v6354, %v6356
    %v6358 = vrot.slane %v6344, %v6357
    %v6359 = vcombine.low %v5816, %v5820
    %v6360 = vcombine.high %v5816, %v5820
    %v6362 = vunpack.c.l.s4 1983009808
    %v6363 = vunpack.c.0.s8 %v6362
    %v6364 = vlaneseq
    %v6365 = vshrl.u32 %v6364, 7
    %v6366 = vsub.s32 %v6363, %v6365
    %v6367 = vrot.slane %v6359, %v6366
    %v6369 = vunpack.c.l.s4 1983009808
    %v6370 = vunpack.c.0.s8 %v6369
    %v6371 = vlaneseq
    %v6372 = vshrl.u32 %v6371, 7
    %v6373 = vsub.s32 %v6370, %v6372
    %v6374 = vrot.slane %v6360, %v6373
    %v6375 = vcombine.low %v5818, %v5822
    %v6376 = vcombine.high %v5818, %v5822
    %v6378 = vunpack.c.l.s4 1983009808
    %v6379 = vunpack.c.0.s8 %v6378
    %v6380 = vlaneseq
    %v6381 = vshrl.u32 %v6380, 7
    %v6382 = vsub.s32 %v6379, %v6381
    %v6383 = vrot.slane %v6375, %v6382
    %v6385 = vunpack.c.l.s4 1983009808
    %v6386 = vunpack.c.0.s8 %v6385
    %v6387 = vlaneseq
    %v6388 = vshrl.u32 %v6387, 7
    %v6389 = vsub.s32 %v6386, %v6388
    %v6390 = vrot.slane %v6376, %v6389
    %v6391 = vcombine.low %v6335, %v6351
    %v6392 = vcombine.high %v6335, %v6351
    %v6394 = vunpack.c.l.s4 1934713408
    %v6395 = vunpack.c.0.s8 %v6394
    %v6396 = vlaneseq
    %v6397 = vshrl.u32 %v6396, 7
    %v6398 = vsub.s32 %v6395, %v6397
    %v6399 = vrot.slane %v6391, %v6398
    %v6401 = vunpack.c.l.s4 1934713408
    %v6402 = vunpack.c.0.s8 %v6401
    %v6403 = vlaneseq
    %v6404 = vshrl.u32 %v6403, 7
    %v6405 = vsub.s32 %v6402, %v6404
    %v6406 = vrot.slane %v6392, %v6405
    %v6407 = vcombine.low %v6342, %v6358
    %v6408 = vcombine.high %v6342, %v6358
    %v6410 = vunpack.c.l.s4 1934713408
    %v6411 = vunpack.c.0.s8 %v6410
    %v6412 = vlaneseq
    %v6413 = vshrl.u32 %v6412, 7
    %v6414 = vsub.s32 %v6411, %v6413
    %v6415 = vrot.slane %v6407, %v6414
    %v6417 = vunpack.c.l.s4 1934713408
    %v6418 = vunpack.c.0.s8 %v6417
    %v6419 = vlaneseq
    %v6420 = vshrl.u32 %v6419, 7
    %v6421 = vsub.s32 %v6418, %v6420
    %v6422 = vrot.slane %v6408, %v6421
    %v6423 = vcombine.low %v6367, %v6383
    %v6424 = vcombine.high %v6367, %v6383
    %v6426 = vunpack.c.l.s4 1934713408
    %v6427 = vunpack.c.0.s8 %v6426
    %v6428 = vlaneseq
    %v6429 = vshrl.u32 %v6428, 7
    %v6430 = vsub.s32 %v6427, %v6429
    %v6431 = vrot.slane %v6423, %v6430
    %v6433 = vunpack.c.l.s4 1934713408
    %v6434 = vunpack.c.0.s8 %v6433
    %v6435 = vlaneseq
    %v6436 = vshrl.u32 %v6435, 7
    %v6437 = vsub.s32 %v6434, %v6436
    %v6438 = vrot.slane %v6424, %v6437
    %v6439 = vcombine.low %v6374, %v6390
    %v6440 = vcombine.high %v6374, %v6390
    %v6442 = vunpack.c.l.s4 1934713408
    %v6443 = vunpack.c.0.s8 %v6442
    %v6444 = vlaneseq
    %v6445 = vshrl.u32 %v6444, 7
    %v6446 = vsub.s32 %v6443, %v6445
    %v6447 = vrot.slane %v6439, %v6446
    %v6449 = vunpack.c.l.s4 1934713408
    %v6450 = vunpack.c.0.s8 %v6449
    %v6451 = vlaneseq
    %v6452 = vshrl.u32 %v6451, 7
    %v6453 = vsub.s32 %v6450, %v6452
    %v6454 = vrot.slane %v6440, %v6453
    %v6455 = vcombine.low %v6399, %v6431
    %v6456 = vcombine.high %v6399, %v6431
    %v6457 = vcombine.low %v6406, %v6438
    %v6458 = vcombine.high %v6406, %v6438
    %v6459 = vcombine.low %v6415, %v6447
    %v6460 = vcombine.high %v6415, %v6447
    %v6461 = vcombine.low %v6422, %v6454
    %v6462 = vcombine.high %v6422, %v6454
    %v6463 = vcombine.low %v5823, %v5827
    %v6464 = vcombine.high %v5823, %v5827
    %v6466 = vunpack.c.l.s4 1983009808
    %v6467 = vunpack.c.0.s8 %v6466
    %v6468 = vlaneseq
    %v6469 = vshrl.u32 %v6468, 7
    %v6470 = vsub.s32 %v6467, %v6469
    %v6471 = vrot.slane %v6463, %v6470
    %v6473 = vunpack.c.l.s4 1983009808
    %v6474 = vunpack.c.0.s8 %v6473
    %v6475 = vlaneseq
    %v6476 = vshrl.u32 %v6475, 7
    %v6477 = vsub.s32 %v6474, %v6476
    %v6478 = vrot.slane %v6464, %v6477
    %v6479 = vcombine.low %v5825, %v5829
    %v6480 = vcombine.high %v5825, %v5829
    %v6482 = vunpack.c.l.s4 1983009808
    %v6483 = vunpack.c.0.s8 %v6482
    %v6484 = vlaneseq
    %v6485 = vshrl.u32 %v6484, 7
    %v6486 = vsub.s32 %v6483, %v6485
    %v6487 = vrot.slane %v6479, %v6486
    %v6489 = vunpack.c.l.s4 1983009808
    %v6490 = vunpack.c.0.s8 %v6489
    %v6491 = vlaneseq
    %v6492 = vshrl.u32 %v6491, 7
    %v6493 = vsub.s32 %v6490, %v6492
    %v6494 = vrot.slane %v6480, %v6493
    %v6495 = vcombine.low %v5831, %v5835
    %v6496 = vcombine.high %v5831, %v5835
    %v6498 = vunpack.c.l.s4 1983009808
    %v6499 = vunpack.c.0.s8 %v6498
    %v6500 = vlaneseq
    %v6501 = vshrl.u32 %v6500, 7
    %v6502 = vsub.s32 %v6499, %v6501
    %v6503 = vrot.slane %v6495, %v6502
    %v6505 = vunpack.c.l.s4 1983009808
    %v6506 = vunpack.c.0.s8 %v6505
    %v6507 = vlaneseq
    %v6508 = vshrl.u32 %v6507, 7
    %v6509 = vsub.s32 %v6506, %v6508
    %v6510 = vrot.slane %v6496, %v6509
    %v6511 = vcombine.low %v5833, %v5837
    %v6512 = vcombine.high %v5833, %v5837
    %v6514 = vunpack.c.l.s4 1983009808
    %v6515 = vunpack.c.0.s8 %v6514
    %v6516 = vlaneseq
    %v6517 = vshrl.u32 %v6516, 7
    %v6518 = vsub.s32 %v6515, %v6517
    %v6519 = vrot.slane %v6511, %v6518
    %v6521 = vunpack.c.l.s4 1983009808
    %v6522 = vunpack.c.0.s8 %v6521
    %v6523 = vlaneseq
    %v6524 = vshrl.u32 %v6523, 7
    %v6525 = vsub.s32 %v6522, %v6524
    %v6526 = vrot.slane %v6512, %v6525
    %v6527 = vcombine.low %v6471, %v6487
    %v6528 = vcombine.high %v6471, %v6487
    %v6530 = vunpack.c.l.s4 1934713408
    %v6531 = vunpack.c.0.s8 %v6530
    %v6532 = vlaneseq
    %v6533 = vshrl.u32 %v6532, 7
    %v6534 = vsub.s32 %v6531, %v6533
    %v6535 = vrot.slane %v6527, %v6534
    %v6537 = vunpack.c.l.s4 1934713408
    %v6538 = vunpack.c.0.s8 %v6537
    %v6539 = vlaneseq
    %v6540 = vshrl.u32 %v6539, 7
    %v6541 = vsub.s32 %v6538, %v6540
    %v6542 = vrot.slane %v6528, %v6541
    %v6543 = vcombine.low %v6478, %v6494
    %v6544 = vcombine.high %v6478, %v6494
    %v6546 = vunpack.c.l.s4 1934713408
    %v6547 = vunpack.c.0.s8 %v6546
    %v6548 = vlaneseq
    %v6549 = vshrl.u32 %v6548, 7
    %v6550 = vsub.s32 %v6547, %v6549
    %v6551 = vrot.slane %v6543, %v6550
    %v6553 = vunpack.c.l.s4 1934713408
    %v6554 = vunpack.c.0.s8 %v6553
    %v6555 = vlaneseq
    %v6556 = vshrl.u32 %v6555, 7
    %v6557 = vsub.s32 %v6554, %v6556
    %v6558 = vrot.slane %v6544, %v6557
    %v6559 = vcombine.low %v6503, %v6519
    %v6560 = vcombine.high %v6503, %v6519
    %v6562 = vunpack.c.l.s4 1934713408
    %v6563 = vunpack.c.0.s8 %v6562
    %v6564 = vlaneseq
    %v6565 = vshrl.u32 %v6564, 7
    %v6566 = vsub.s32 %v6563, %v6565
    %v6567 = vrot.slane %v6559, %v6566
    %v6569 = vunpack.c.l.s4 1934713408
    %v6570 = vunpack.c.0.s8 %v6569
    %v6571 = vlaneseq
    %v6572 = vshrl.u32 %v6571, 7
    %v6573 = vsub.s32 %v6570, %v6572
    %v6574 = vrot.slane %v6560, %v6573
    %v6575 = vcombine.low %v6510, %v6526
    %v6576 = vcombine.high %v6510, %v6526
    %v6578 = vunpack.c.l.s4 1934713408
    %v6579 = vunpack.c.0.s8 %v6578
    %v6580 = vlaneseq
    %v6581 = vshrl.u32 %v6580, 7
    %v6582 = vsub.s32 %v6579, %v6581
    %v6583 = vrot.slane %v6575, %v6582
    %v6585 = vunpack.c.l.s4 1934713408
    %v6586 = vunpack.c.0.s8 %v6585
    %v6587 = vlaneseq
    %v6588 = vshrl.u32 %v6587, 7
    %v6589 = vsub.s32 %v6586, %v6588
    %v6590 = vrot.slane %v6576, %v6589
    %v6591 = vcombine.low %v6535, %v6567
    %v6592 = vcombine.high %v6535, %v6567
    %v6593 = vcombine.low %v6542, %v6574
    %v6594 = vcombine.high %v6542, %v6574
    %v6595 = vcombine.low %v6551, %v6583
    %v6596 = vcombine.high %v6551, %v6583
    %v6597 = vcombine.low %v6558, %v6590
    %v6598 = vcombine.high %v6558, %v6590
    %v6599 = vcombine.low %v5839, %v5843
    %v6600 = vcombine.high %v5839, %v5843
    %v6602 = vunpack.c.l.s4 1983009808
    %v6603 = vunpack.c.0.s8 %v6602
    %v6604 = vlaneseq
    %v6605 = vshrl.u32 %v6604, 7
    %v6606 = vsub.s32 %v6603, %v6605
    %v6607 = vrot.slane %v6599, %v6606
    %v6609 = vunpack.c.l.s4 1983009808
    %v6610 = vunpack.c.0.s8 %v6609
    %v6611 = vlaneseq
    %v6612 = vshrl.u32 %v6611, 7
    %v6613 = vsub.s32 %v6610, %v6612
    %v6614 = vrot.slane %v6600, %v6613
    %v6615 = vcombine.low %v5841, %v5845
    %v6616 = vcombine.high %v5841, %v5845
    %v6618 = vunpack.c.l.s4 1983009808
    %v6619 = vunpack.c.0.s8 %v6618
    %v6620 = vlaneseq
    %v6621 = vshrl.u32 %v6620, 7
    %v6622 = vsub.s32 %v6619, %v6621
    %v6623 = vrot.slane %v6615, %v6622
    %v6625 = vunpack.c.l.s4 1983009808
    %v6626 = vunpack.c.0.s8 %v6625
    %v6627 = vlaneseq
    %v6628 = vshrl.u32 %v6627, 7
    %v6629 = vsub.s32 %v6626, %v6628
    %v6630 = vrot.slane %v6616, %v6629
    %v6631 = vcombine.low %v5847, %v5851
    %v6632 = vcombine.high %v5847, %v5851
    %v6634 = vunpack.c.l.s4 1983009808
    %v6635 = vunpack.c.0.s8 %v6634
    %v6636 = vlaneseq
    %v6637 = vshrl.u32 %v6636, 7
    %v6638 = vsub.s32 %v6635, %v6637
    %v6639 = vrot.slane %v6631, %v6638
    %v6641 = vunpack.c.l.s4 1983009808
    %v6642 = vunpack.c.0.s8 %v6641
    %v6643 = vlaneseq
    %v6644 = vshrl.u32 %v6643, 7
    %v6645 = vsub.s32 %v6642, %v6644
    %v6646 = vrot.slane %v6632, %v6645
    %v6647 = vcombine.low %v5849, %v5853
    %v6648 = vcombine.high %v5849, %v5853
    %v6650 = vunpack.c.l.s4 1983009808
    %v6651 = vunpack.c.0.s8 %v6650
    %v6652 = vlaneseq
    %v6653 = vshrl.u32 %v6652, 7
    %v6654 = vsub.s32 %v6651, %v6653
    %v6655 = vrot.slane %v6647, %v6654
    %v6657 = vunpack.c.l.s4 1983009808
    %v6658 = vunpack.c.0.s8 %v6657
    %v6659 = vlaneseq
    %v6660 = vshrl.u32 %v6659, 7
    %v6661 = vsub.s32 %v6658, %v6660
    %v6662 = vrot.slane %v6648, %v6661
    %v6663 = vcombine.low %v6607, %v6623
    %v6664 = vcombine.high %v6607, %v6623
    %v6666 = vunpack.c.l.s4 1934713408
    %v6667 = vunpack.c.0.s8 %v6666
    %v6668 = vlaneseq
    %v6669 = vshrl.u32 %v6668, 7
    %v6670 = vsub.s32 %v6667, %v6669
    %v6671 = vrot.slane %v6663, %v6670
    %v6673 = vunpack.c.l.s4 1934713408
    %v6674 = vunpack.c.0.s8 %v6673
    %v6675 = vlaneseq
    %v6676 = vshrl.u32 %v6675, 7
    %v6677 = vsub.s32 %v6674, %v6676
    %v6678 = vrot.slane %v6664, %v6677
    %v6679 = vcombine.low %v6614, %v6630
    %v6680 = vcombine.high %v6614, %v6630
    %v6682 = vunpack.c.l.s4 1934713408
    %v6683 = vunpack.c.0.s8 %v6682
    %v6684 = vlaneseq
    %v6685 = vshrl.u32 %v6684, 7
    %v6686 = vsub.s32 %v6683, %v6685
    %v6687 = vrot.slane %v6679, %v6686
    %v6689 = vunpack.c.l.s4 1934713408
    %v6690 = vunpack.c.0.s8 %v6689
    %v6691 = vlaneseq
    %v6692 = vshrl.u32 %v6691, 7
    %v6693 = vsub.s32 %v6690, %v6692
    %v6694 = vrot.slane %v6680, %v6693
    %v6695 = vcombine.low %v6639, %v6655
    %v6696 = vcombine.high %v6639, %v6655
    %v6698 = vunpack.c.l.s4 1934713408
    %v6699 = vunpack.c.0.s8 %v6698
    %v6700 = vlaneseq
    %v6701 = vshrl.u32 %v6700, 7
    %v6702 = vsub.s32 %v6699, %v6701
    %v6703 = vrot.slane %v6695, %v6702
    %v6705 = vunpack.c.l.s4 1934713408
    %v6706 = vunpack.c.0.s8 %v6705
    %v6707 = vlaneseq
    %v6708 = vshrl.u32 %v6707, 7
    %v6709 = vsub.s32 %v6706, %v6708
    %v6710 = vrot.slane %v6696, %v6709
    %v6711 = vcombine.low %v6646, %v6662
    %v6712 = vcombine.high %v6646, %v6662
    %v6714 = vunpack.c.l.s4 1934713408
    %v6715 = vunpack.c.0.s8 %v6714
    %v6716 = vlaneseq
    %v6717 = vshrl.u32 %v6716, 7
    %v6718 = vsub.s32 %v6715, %v6717
    %v6719 = vrot.slane %v6711, %v6718
    %v6721 = vunpack.c.l.s4 1934713408
    %v6722 = vunpack.c.0.s8 %v6721
    %v6723 = vlaneseq
    %v6724 = vshrl.u32 %v6723, 7
    %v6725 = vsub.s32 %v6722, %v6724
    %v6726 = vrot.slane %v6712, %v6725
    %v6727 = vcombine.low %v6671, %v6703
    %v6728 = vcombine.high %v6671, %v6703
    %v6729 = vcombine.low %v6678, %v6710
    %v6730 = vcombine.high %v6678, %v6710
    %v6731 = vcombine.low %v6687, %v6719
    %v6732 = vcombine.high %v6687, %v6719
    %v6733 = vcombine.low %v6694, %v6726
    %v6734 = vcombine.high %v6694, %v6726
    %v6735 = vcombine.low %v5824, %v5828
    %v6736 = vcombine.high %v5824, %v5828
    %v6738 = vunpack.c.l.s4 1983009808
    %v6739 = vunpack.c.0.s8 %v6738
    %v6740 = vlaneseq
    %v6741 = vshrl.u32 %v6740, 7
    %v6742 = vsub.s32 %v6739, %v6741
    %v6743 = vrot.slane %v6735, %v6742
    %v6745 = vunpack.c.l.s4 1983009808
    %v6746 = vunpack.c.0.s8 %v6745
    %v6747 = vlaneseq
    %v6748 = vshrl.u32 %v6747, 7
    %v6749 = vsub.s32 %v6746, %v6748
    %v6750 = vrot.slane %v6736, %v6749
    %v6751 = vcombine.low %v5826, %v5830
    %v6752 = vcombine.high %v5826, %v5830
    %v6754 = vunpack.c.l.s4 1983009808
    %v6755 = vunpack.c.0.s8 %v6754
    %v6756 = vlaneseq
    %v6757 = vshrl.u32 %v6756, 7
    %v6758 = vsub.s32 %v6755, %v6757
    %v6759 = vrot.slane %v6751, %v6758
    %v6761 = vunpack.c.l.s4 1983009808
    %v6762 = vunpack.c.0.s8 %v6761
    %v6763 = vlaneseq
    %v6764 = vshrl.u32 %v6763, 7
    %v6765 = vsub.s32 %v6762, %v6764
    %v6766 = vrot.slane %v6752, %v6765
    %v6767 = vcombine.low %v5832, %v5836
    %v6768 = vcombine.high %v5832, %v5836
    %v6770 = vunpack.c.l.s4 1983009808
    %v6771 = vunpack.c.0.s8 %v6770
    %v6772 = vlaneseq
    %v6773 = vshrl.u32 %v6772, 7
    %v6774 = vsub.s32 %v6771, %v6773
    %v6775 = vrot.slane %v6767, %v6774
    %v6777 = vunpack.c.l.s4 1983009808
    %v6778 = vunpack.c.0.s8 %v6777
    %v6779 = vlaneseq
    %v6780 = vshrl.u32 %v6779, 7
    %v6781 = vsub.s32 %v6778, %v6780
    %v6782 = vrot.slane %v6768, %v6781
    %v6783 = vcombine.low %v5834, %v5838
    %v6784 = vcombine.high %v5834, %v5838
    %v6786 = vunpack.c.l.s4 1983009808
    %v6787 = vunpack.c.0.s8 %v6786
    %v6788 = vlaneseq
    %v6789 = vshrl.u32 %v6788, 7
    %v6790 = vsub.s32 %v6787, %v6789
    %v6791 = vrot.slane %v6783, %v6790
    %v6793 = vunpack.c.l.s4 1983009808
    %v6794 = vunpack.c.0.s8 %v6793
    %v6795 = vlaneseq
    %v6796 = vshrl.u32 %v6795, 7
    %v6797 = vsub.s32 %v6794, %v6796
    %v6798 = vrot.slane %v6784, %v6797
    %v6799 = vcombine.low %v6743, %v6759
    %v6800 = vcombine.high %v6743, %v6759
    %v6802 = vunpack.c.l.s4 1934713408
    %v6803 = vunpack.c.0.s8 %v6802
    %v6804 = vlaneseq
    %v6805 = vshrl.u32 %v6804, 7
    %v6806 = vsub.s32 %v6803, %v6805
    %v6807 = vrot.slane %v6799, %v6806
    %v6809 = vunpack.c.l.s4 1934713408
    %v6810 = vunpack.c.0.s8 %v6809
    %v6811 = vlaneseq
    %v6812 = vshrl.u32 %v6811, 7
    %v6813 = vsub.s32 %v6810, %v6812
    %v6814 = vrot.slane %v6800, %v6813
    %v6815 = vcombine.low %v6750, %v6766
    %v6816 = vcombine.high %v6750, %v6766
    %v6818 = vunpack.c.l.s4 1934713408
    %v6819 = vunpack.c.0.s8 %v6818
    %v6820 = vlaneseq
    %v6821 = vshrl.u32 %v6820, 7
    %v6822 = vsub.s32 %v6819, %v6821
    %v6823 = vrot.slane %v6815, %v6822
    %v6825 = vunpack.c.l.s4 1934713408
    %v6826 = vunpack.c.0.s8 %v6825
    %v6827 = vlaneseq
    %v6828 = vshrl.u32 %v6827, 7
    %v6829 = vsub.s32 %v6826, %v6828
    %v6830 = vrot.slane %v6816, %v6829
    %v6831 = vcombine.low %v6775, %v6791
    %v6832 = vcombine.high %v6775, %v6791
    %v6834 = vunpack.c.l.s4 1934713408
    %v6835 = vunpack.c.0.s8 %v6834
    %v6836 = vlaneseq
    %v6837 = vshrl.u32 %v6836, 7
    %v6838 = vsub.s32 %v6835, %v6837
    %v6839 = vrot.slane %v6831, %v6838
    %v6841 = vunpack.c.l.s4 1934713408
    %v6842 = vunpack.c.0.s8 %v6841
    %v6843 = vlaneseq
    %v6844 = vshrl.u32 %v6843, 7
    %v6845 = vsub.s32 %v6842, %v6844
    %v6846 = vrot.slane %v6832, %v6845
    %v6847 = vcombine.low %v6782, %v6798
    %v6848 = vcombine.high %v6782, %v6798
    %v6850 = vunpack.c.l.s4 1934713408
    %v6851 = vunpack.c.0.s8 %v6850
    %v6852 = vlaneseq
    %v6853 = vshrl.u32 %v6852, 7
    %v6854 = vsub.s32 %v6851, %v6853
    %v6855 = vrot.slane %v6847, %v6854
    %v6857 = vunpack.c.l.s4 1934713408
    %v6858 = vunpack.c.0.s8 %v6857
    %v6859 = vlaneseq
    %v6860 = vshrl.u32 %v6859, 7
    %v6861 = vsub.s32 %v6858, %v6860
    %v6862 = vrot.slane %v6848, %v6861
    %v6863 = vcombine.low %v6807, %v6839
    %v6864 = vcombine.high %v6807, %v6839
    %v6865 = vcombine.low %v6814, %v6846
    %v6866 = vcombine.high %v6814, %v6846
    %v6867 = vcombine.low %v6823, %v6855
    %v6868 = vcombine.high %v6823, %v6855
    %v6869 = vcombine.low %v6830, %v6862
    %v6870 = vcombine.high %v6830, %v6862
    %v6871 = vcombine.low %v5840, %v5844
    %v6872 = vcombine.high %v5840, %v5844
    %v6874 = vunpack.c.l.s4 1983009808
    %v6875 = vunpack.c.0.s8 %v6874
    %v6876 = vlaneseq
    %v6877 = vshrl.u32 %v6876, 7
    %v6878 = vsub.s32 %v6875, %v6877
    %v6879 = vrot.slane %v6871, %v6878
    %v6881 = vunpack.c.l.s4 1983009808
    %v6882 = vunpack.c.0.s8 %v6881
    %v6883 = vlaneseq
    %v6884 = vshrl.u32 %v6883, 7
    %v6885 = vsub.s32 %v6882, %v6884
    %v6886 = vrot.slane %v6872, %v6885
    %v6887 = vcombine.low %v5842, %v5846
    %v6888 = vcombine.high %v5842, %v5846
    %v6890 = vunpack.c.l.s4 1983009808
    %v6891 = vunpack.c.0.s8 %v6890
    %v6892 = vlaneseq
    %v6893 = vshrl.u32 %v6892, 7
    %v6894 = vsub.s32 %v6891, %v6893
    %v6895 = vrot.slane %v6887, %v6894
    %v6897 = vunpack.c.l.s4 1983009808
    %v6898 = vunpack.c.0.s8 %v6897
    %v6899 = vlaneseq
    %v6900 = vshrl.u32 %v6899, 7
    %v6901 = vsub.s32 %v6898, %v6900
    %v6902 = vrot.slane %v6888, %v6901
    %v6903 = vcombine.low %v5848, %v5852
    %v6904 = vcombine.high %v5848, %v5852
    %v6906 = vunpack.c.l.s4 1983009808
    %v6907 = vunpack.c.0.s8 %v6906
    %v6908 = vlaneseq
    %v6909 = vshrl.u32 %v6908, 7
    %v6910 = vsub.s32 %v6907, %v6909
    %v6911 = vrot.slane %v6903, %v6910
    %v6913 = vunpack.c.l.s4 1983009808
    %v6914 = vunpack.c.0.s8 %v6913
    %v6915 = vlaneseq
    %v6916 = vshrl.u32 %v6915, 7
    %v6917 = vsub.s32 %v6914, %v6916
    %v6918 = vrot.slane %v6904, %v6917
    %v6919 = vcombine.low %v5850, %v5854
    %v6920 = vcombine.high %v5850, %v5854
    %v6922 = vunpack.c.l.s4 1983009808
    %v6923 = vunpack.c.0.s8 %v6922
    %v6924 = vlaneseq
    %v6925 = vshrl.u32 %v6924, 7
    %v6926 = vsub.s32 %v6923, %v6925
    %v6927 = vrot.slane %v6919, %v6926
    %v6929 = vunpack.c.l.s4 1983009808
    %v6930 = vunpack.c.0.s8 %v6929
    %v6931 = vlaneseq
    %v6932 = vshrl.u32 %v6931, 7
    %v6933 = vsub.s32 %v6930, %v6932
    %v6934 = vrot.slane %v6920, %v6933
    %v6935 = vcombine.low %v6879, %v6895
    %v6936 = vcombine.high %v6879, %v6895
    %v6938 = vunpack.c.l.s4 1934713408
    %v6939 = vunpack.c.0.s8 %v6938
    %v6940 = vlaneseq
    %v6941 = vshrl.u32 %v6940, 7
    %v6942 = vsub.s32 %v6939, %v6941
    %v6943 = vrot.slane %v6935, %v6942
    %v6945 = vunpack.c.l.s4 1934713408
    %v6946 = vunpack.c.0.s8 %v6945
    %v6947 = vlaneseq
    %v6948 = vshrl.u32 %v6947, 7
    %v6949 = vsub.s32 %v6946, %v6948
    %v6950 = vrot.slane %v6936, %v6949
    %v6951 = vcombine.low %v6886, %v6902
    %v6952 = vcombine.high %v6886, %v6902
    %v6954 = vunpack.c.l.s4 1934713408
    %v6955 = vunpack.c.0.s8 %v6954
    %v6956 = vlaneseq
    %v6957 = vshrl.u32 %v6956, 7
    %v6958 = vsub.s32 %v6955, %v6957
    %v6959 = vrot.slane %v6951, %v6958
    %v6961 = vunpack.c.l.s4 1934713408
    %v6962 = vunpack.c.0.s8 %v6961
    %v6963 = vlaneseq
    %v6964 = vshrl.u32 %v6963, 7
    %v6965 = vsub.s32 %v6962, %v6964
    %v6966 = vrot.slane %v6952, %v6965
    %v6967 = vcombine.low %v6911, %v6927
    %v6968 = vcombine.high %v6911, %v6927
    %v6970 = vunpack.c.l.s4 1934713408
    %v6971 = vunpack.c.0.s8 %v6970
    %v6972 = vlaneseq
    %v6973 = vshrl.u32 %v6972, 7
    %v6974 = vsub.s32 %v6971, %v6973
    %v6975 = vrot.slane %v6967, %v6974
    %v6977 = vunpack.c.l.s4 1934713408
    %v6978 = vunpack.c.0.s8 %v6977
    %v6979 = vlaneseq
    %v6980 = vshrl.u32 %v6979, 7
    %v6981 = vsub.s32 %v6978, %v6980
    %v6982 = vrot.slane %v6968, %v6981
    %v6983 = vcombine.low %v6918, %v6934
    %v6984 = vcombine.high %v6918, %v6934
    %v6986 = vunpack.c.l.s4 1934713408
    %v6987 = vunpack.c.0.s8 %v6986
    %v6988 = vlaneseq
    %v6989 = vshrl.u32 %v6988, 7
    %v6990 = vsub.s32 %v6987, %v6989
    %v6991 = vrot.slane %v6983, %v6990
    %v6993 = vunpack.c.l.s4 1934713408
    %v6994 = vunpack.c.0.s8 %v6993
    %v6995 = vlaneseq
    %v6996 = vshrl.u32 %v6995, 7
    %v6997 = vsub.s32 %v6994, %v6996
    %v6998 = vrot.slane %v6984, %v6997
    %v6999 = vcombine.low %v6943, %v6975
    %v7000 = vcombine.high %v6943, %v6975
    %v7001 = vcombine.low %v6950, %v6982
    %v7002 = vcombine.high %v6950, %v6982
    %v7003 = vcombine.low %v6959, %v6991
    %v7004 = vcombine.high %v6959, %v6991
    %v7005 = vcombine.low %v6966, %v6998
    %v7006 = vcombine.high %v6966, %v6998
    %v7007 = vcombine.low %v5855, %v5859
    %v7008 = vcombine.high %v5855, %v5859
    %v7010 = vunpack.c.l.s4 1983009808
    %v7011 = vunpack.c.0.s8 %v7010
    %v7012 = vlaneseq
    %v7013 = vshrl.u32 %v7012, 7
    %v7014 = vsub.s32 %v7011, %v7013
    %v7015 = vrot.slane %v7007, %v7014
    %v7017 = vunpack.c.l.s4 1983009808
    %v7018 = vunpack.c.0.s8 %v7017
    %v7019 = vlaneseq
    %v7020 = vshrl.u32 %v7019, 7
    %v7021 = vsub.s32 %v7018, %v7020
    %v7022 = vrot.slane %v7008, %v7021
    %v7023 = vcombine.low %v5857, %v5861
    %v7024 = vcombine.high %v5857, %v5861
    %v7026 = vunpack.c.l.s4 1983009808
    %v7027 = vunpack.c.0.s8 %v7026
    %v7028 = vlaneseq
    %v7029 = vshrl.u32 %v7028, 7
    %v7030 = vsub.s32 %v7027, %v7029
    %v7031 = vrot.slane %v7023, %v7030
    %v7033 = vunpack.c.l.s4 1983009808
    %v7034 = vunpack.c.0.s8 %v7033
    %v7035 = vlaneseq
    %v7036 = vshrl.u32 %v7035, 7
    %v7037 = vsub.s32 %v7034, %v7036
    %v7038 = vrot.slane %v7024, %v7037
    %v7039 = vcombine.low %v5863, %v5867
    %v7040 = vcombine.high %v5863, %v5867
    %v7042 = vunpack.c.l.s4 1983009808
    %v7043 = vunpack.c.0.s8 %v7042
    %v7044 = vlaneseq
    %v7045 = vshrl.u32 %v7044, 7
    %v7046 = vsub.s32 %v7043, %v7045
    %v7047 = vrot.slane %v7039, %v7046
    %v7049 = vunpack.c.l.s4 1983009808
    %v7050 = vunpack.c.0.s8 %v7049
    %v7051 = vlaneseq
    %v7052 = vshrl.u32 %v7051, 7
    %v7053 = vsub.s32 %v7050, %v7052
    %v7054 = vrot.slane %v7040, %v7053
    %v7055 = vcombine.low %v5865, %v5869
    %v7056 = vcombine.high %v5865, %v5869
    %v7058 = vunpack.c.l.s4 1983009808
    %v7059 = vunpack.c.0.s8 %v7058
    %v7060 = vlaneseq
    %v7061 = vshrl.u32 %v7060, 7
    %v7062 = vsub.s32 %v7059, %v7061
    %v7063 = vrot.slane %v7055, %v7062
    %v7065 = vunpack.c.l.s4 1983009808
    %v7066 = vunpack.c.0.s8 %v7065
    %v7067 = vlaneseq
    %v7068 = vshrl.u32 %v7067, 7
    %v7069 = vsub.s32 %v7066, %v7068
    %v7070 = vrot.slane %v7056, %v7069
    %v7071 = vcombine.low %v7015, %v7031
    %v7072 = vcombine.high %v7015, %v7031
    %v7074 = vunpack.c.l.s4 1934713408
    %v7075 = vunpack.c.0.s8 %v7074
    %v7076 = vlaneseq
    %v7077 = vshrl.u32 %v7076, 7
    %v7078 = vsub.s32 %v7075, %v7077
    %v7079 = vrot.slane %v7071, %v7078
    %v7081 = vunpack.c.l.s4 1934713408
    %v7082 = vunpack.c.0.s8 %v7081
    %v7083 = vlaneseq
    %v7084 = vshrl.u32 %v7083, 7
    %v7085 = vsub.s32 %v7082, %v7084
    %v7086 = vrot.slane %v7072, %v7085
    %v7087 = vcombine.low %v7022, %v7038
    %v7088 = vcombine.high %v7022, %v7038
    %v7090 = vunpack.c.l.s4 1934713408
    %v7091 = vunpack.c.0.s8 %v7090
    %v7092 = vlaneseq
    %v7093 = vshrl.u32 %v7092, 7
    %v7094 = vsub.s32 %v7091, %v7093
    %v7095 = vrot.slane %v7087, %v7094
    %v7097 = vunpack.c.l.s4 1934713408
    %v7098 = vunpack.c.0.s8 %v7097
    %v7099 = vlaneseq
    %v7100 = vshrl.u32 %v7099, 7
    %v7101 = vsub.s32 %v7098, %v7100
    %v7102 = vrot.slane %v7088, %v7101
    %v7103 = vcombine.low %v7047, %v7063
    %v7104 = vcombine.high %v7047, %v7063
    %v7106 = vunpack.c.l.s4 1934713408
    %v7107 = vunpack.c.0.s8 %v7106
    %v7108 = vlaneseq
    %v7109 = vshrl.u32 %v7108, 7
    %v7110 = vsub.s32 %v7107, %v7109
    %v7111 = vrot.slane %v7103, %v7110
    %v7113 = vunpack.c.l.s4 1934713408
    %v7114 = vunpack.c.0.s8 %v7113
    %v7115 = vlaneseq
    %v7116 = vshrl.u32 %v7115, 7
    %v7117 = vsub.s32 %v7114, %v7116
    %v7118 = vrot.slane %v7104, %v7117
    %v7119 = vcombine.low %v7054, %v7070
    %v7120 = vcombine.high %v7054, %v7070
    %v7122 = vunpack.c.l.s4 1934713408
    %v7123 = vunpack.c.0.s8 %v7122
    %v7124 = vlaneseq
    %v7125 = vshrl.u32 %v7124, 7
    %v7126 = vsub.s32 %v7123, %v7125
    %v7127 = vrot.slane %v7119, %v7126
    %v7129 = vunpack.c.l.s4 1934713408
    %v7130 = vunpack.c.0.s8 %v7129
    %v7131 = vlaneseq
    %v7132 = vshrl.u32 %v7131, 7
    %v7133 = vsub.s32 %v7130, %v7132
    %v7134 = vrot.slane %v7120, %v7133
    %v7135 = vcombine.low %v7079, %v7111
    %v7136 = vcombine.high %v7079, %v7111
    %v7137 = vcombine.low %v7086, %v7118
    %v7138 = vcombine.high %v7086, %v7118
    %v7139 = vcombine.low %v7095, %v7127
    %v7140 = vcombine.high %v7095, %v7127
    %v7141 = vcombine.low %v7102, %v7134
    %v7142 = vcombine.high %v7102, %v7134
    %v7143 = vcombine.low %v5871, %v5875
    %v7144 = vcombine.high %v5871, %v5875
    %v7146 = vunpack.c.l.s4 1983009808
    %v7147 = vunpack.c.0.s8 %v7146
    %v7148 = vlaneseq
    %v7149 = vshrl.u32 %v7148, 7
    %v7150 = vsub.s32 %v7147, %v7149
    %v7151 = vrot.slane %v7143, %v7150
    %v7153 = vunpack.c.l.s4 1983009808
    %v7154 = vunpack.c.0.s8 %v7153
    %v7155 = vlaneseq
    %v7156 = vshrl.u32 %v7155, 7
    %v7157 = vsub.s32 %v7154, %v7156
    %v7158 = vrot.slane %v7144, %v7157
    %v7159 = vcombine.low %v5873, %v5877
    %v7160 = vcombine.high %v5873, %v5877
    %v7162 = vunpack.c.l.s4 1983009808
    %v7163 = vunpack.c.0.s8 %v7162
    %v7164 = vlaneseq
    %v7165 = vshrl.u32 %v7164, 7
    %v7166 = vsub.s32 %v7163, %v7165
    %v7167 = vrot.slane %v7159, %v7166
    %v7169 = vunpack.c.l.s4 1983009808
    %v7170 = vunpack.c.0.s8 %v7169
    %v7171 = vlaneseq
    %v7172 = vshrl.u32 %v7171, 7
    %v7173 = vsub.s32 %v7170, %v7172
    %v7174 = vrot.slane %v7160, %v7173
    %v7175 = vcombine.low %v5879, %v5883
    %v7176 = vcombine.high %v5879, %v5883
    %v7178 = vunpack.c.l.s4 1983009808
    %v7179 = vunpack.c.0.s8 %v7178
    %v7180 = vlaneseq
    %v7181 = vshrl.u32 %v7180, 7
    %v7182 = vsub.s32 %v7179, %v7181
    %v7183 = vrot.slane %v7175, %v7182
    %v7185 = vunpack.c.l.s4 1983009808
    %v7186 = vunpack.c.0.s8 %v7185
    %v7187 = vlaneseq
    %v7188 = vshrl.u32 %v7187, 7
    %v7189 = vsub.s32 %v7186, %v7188
    %v7190 = vrot.slane %v7176, %v7189
    %v7191 = vcombine.low %v5881, %v5885
    %v7192 = vcombine.high %v5881, %v5885
    %v7194 = vunpack.c.l.s4 1983009808
    %v7195 = vunpack.c.0.s8 %v7194
    %v7196 = vlaneseq
    %v7197 = vshrl.u32 %v7196, 7
    %v7198 = vsub.s32 %v7195, %v7197
    %v7199 = vrot.slane %v7191, %v7198
    %v7201 = vunpack.c.l.s4 1983009808
    %v7202 = vunpack.c.0.s8 %v7201
    %v7203 = vlaneseq
    %v7204 = vshrl.u32 %v7203, 7
    %v7205 = vsub.s32 %v7202, %v7204
    %v7206 = vrot.slane %v7192, %v7205
    %v7207 = vcombine.low %v7151, %v7167
    %v7208 = vcombine.high %v7151, %v7167
    %v7210 = vunpack.c.l.s4 1934713408
    %v7211 = vunpack.c.0.s8 %v7210
    %v7212 = vlaneseq
    %v7213 = vshrl.u32 %v7212, 7
    %v7214 = vsub.s32 %v7211, %v7213
    %v7215 = vrot.slane %v7207, %v7214
    %v7217 = vunpack.c.l.s4 1934713408
    %v7218 = vunpack.c.0.s8 %v7217
    %v7219 = vlaneseq
    %v7220 = vshrl.u32 %v7219, 7
    %v7221 = vsub.s32 %v7218, %v7220
    %v7222 = vrot.slane %v7208, %v7221
    %v7223 = vcombine.low %v7158, %v7174
    %v7224 = vcombine.high %v7158, %v7174
    %v7226 = vunpack.c.l.s4 1934713408
    %v7227 = vunpack.c.0.s8 %v7226
    %v7228 = vlaneseq
    %v7229 = vshrl.u32 %v7228, 7
    %v7230 = vsub.s32 %v7227, %v7229
    %v7231 = vrot.slane %v7223, %v7230
    %v7233 = vunpack.c.l.s4 1934713408
    %v7234 = vunpack.c.0.s8 %v7233
    %v7235 = vlaneseq
    %v7236 = vshrl.u32 %v7235, 7
    %v7237 = vsub.s32 %v7234, %v7236
    %v7238 = vrot.slane %v7224, %v7237
    %v7239 = vcombine.low %v7183, %v7199
    %v7240 = vcombine.high %v7183, %v7199
    %v7242 = vunpack.c.l.s4 1934713408
    %v7243 = vunpack.c.0.s8 %v7242
    %v7244 = vlaneseq
    %v7245 = vshrl.u32 %v7244, 7
    %v7246 = vsub.s32 %v7243, %v7245
    %v7247 = vrot.slane %v7239, %v7246
    %v7249 = vunpack.c.l.s4 1934713408
    %v7250 = vunpack.c.0.s8 %v7249
    %v7251 = vlaneseq
    %v7252 = vshrl.u32 %v7251, 7
    %v7253 = vsub.s32 %v7250, %v7252
    %v7254 = vrot.slane %v7240, %v7253
    %v7255 = vcombine.low %v7190, %v7206
    %v7256 = vcombine.high %v7190, %v7206
    %v7258 = vunpack.c.l.s4 1934713408
    %v7259 = vunpack.c.0.s8 %v7258
    %v7260 = vlaneseq
    %v7261 = vshrl.u32 %v7260, 7
    %v7262 = vsub.s32 %v7259, %v7261
    %v7263 = vrot.slane %v7255, %v7262
    %v7265 = vunpack.c.l.s4 1934713408
    %v7266 = vunpack.c.0.s8 %v7265
    %v7267 = vlaneseq
    %v7268 = vshrl.u32 %v7267, 7
    %v7269 = vsub.s32 %v7266, %v7268
    %v7270 = vrot.slane %v7256, %v7269
    %v7271 = vcombine.low %v7215, %v7247
    %v7272 = vcombine.high %v7215, %v7247
    %v7273 = vcombine.low %v7222, %v7254
    %v7274 = vcombine.high %v7222, %v7254
    %v7275 = vcombine.low %v7231, %v7263
    %v7276 = vcombine.high %v7231, %v7263
    %v7277 = vcombine.low %v7238, %v7270
    %v7278 = vcombine.high %v7238, %v7270
    %v7279 = vcombine.low %v5856, %v5860
    %v7280 = vcombine.high %v5856, %v5860
    %v7282 = vunpack.c.l.s4 1983009808
    %v7283 = vunpack.c.0.s8 %v7282
    %v7284 = vlaneseq
    %v7285 = vshrl.u32 %v7284, 7
    %v7286 = vsub.s32 %v7283, %v7285
    %v7287 = vrot.slane %v7279, %v7286
    %v7289 = vunpack.c.l.s4 1983009808
    %v7290 = vunpack.c.0.s8 %v7289
    %v7291 = vlaneseq
    %v7292 = vshrl.u32 %v7291, 7
    %v7293 = vsub.s32 %v7290, %v7292
    %v7294 = vrot.slane %v7280, %v7293
    %v7295 = vcombine.low %v5858, %v5862
    %v7296 = vcombine.high %v5858, %v5862
    %v7298 = vunpack.c.l.s4 1983009808
    %v7299 = vunpack.c.0.s8 %v7298
    %v7300 = vlaneseq
    %v7301 = vshrl.u32 %v7300, 7
    %v7302 = vsub.s32 %v7299, %v7301
    %v7303 = vrot.slane %v7295, %v7302
    %v7305 = vunpack.c.l.s4 1983009808
    %v7306 = vunpack.c.0.s8 %v7305
    %v7307 = vlaneseq
    %v7308 = vshrl.u32 %v7307, 7
    %v7309 = vsub.s32 %v7306, %v7308
    %v7310 = vrot.slane %v7296, %v7309
    %v7311 = vcombine.low %v5864, %v5868
    %v7312 = vcombine.high %v5864, %v5868
    %v7314 = vunpack.c.l.s4 1983009808
    %v7315 = vunpack.c.0.s8 %v7314
    %v7316 = vlaneseq
    %v7317 = vshrl.u32 %v7316, 7
    %v7318 = vsub.s32 %v7315, %v7317
    %v7319 = vrot.slane %v7311, %v7318
    %v7321 = vunpack.c.l.s4 1983009808
    %v7322 = vunpack.c.0.s8 %v7321
    %v7323 = vlaneseq
    %v7324 = vshrl.u32 %v7323, 7
    %v7325 = vsub.s32 %v7322, %v7324
    %v7326 = vrot.slane %v7312, %v7325
    %v7327 = vcombine.low %v5866, %v5870
    %v7328 = vcombine.high %v5866, %v5870
    %v7330 = vunpack.c.l.s4 1983009808
    %v7331 = vunpack.c.0.s8 %v7330
    %v7332 = vlaneseq
    %v7333 = vshrl.u32 %v7332, 7
    %v7334 = vsub.s32 %v7331, %v7333
    %v7335 = vrot.slane %v7327, %v7334
    %v7337 = vunpack.c.l.s4 1983009808
    %v7338 = vunpack.c.0.s8 %v7337
    %v7339 = vlaneseq
    %v7340 = vshrl.u32 %v7339, 7
    %v7341 = vsub.s32 %v7338, %v7340
    %v7342 = vrot.slane %v7328, %v7341
    %v7343 = vcombine.low %v7287, %v7303
    %v7344 = vcombine.high %v7287, %v7303
    %v7346 = vunpack.c.l.s4 1934713408
    %v7347 = vunpack.c.0.s8 %v7346
    %v7348 = vlaneseq
    %v7349 = vshrl.u32 %v7348, 7
    %v7350 = vsub.s32 %v7347, %v7349
    %v7351 = vrot.slane %v7343, %v7350
    %v7353 = vunpack.c.l.s4 1934713408
    %v7354 = vunpack.c.0.s8 %v7353
    %v7355 = vlaneseq
    %v7356 = vshrl.u32 %v7355, 7
    %v7357 = vsub.s32 %v7354, %v7356
    %v7358 = vrot.slane %v7344, %v7357
    %v7359 = vcombine.low %v7294, %v7310
    %v7360 = vcombine.high %v7294, %v7310
    %v7362 = vunpack.c.l.s4 1934713408
    %v7363 = vunpack.c.0.s8 %v7362
    %v7364 = vlaneseq
    %v7365 = vshrl.u32 %v7364, 7
    %v7366 = vsub.s32 %v7363, %v7365
    %v7367 = vrot.slane %v7359, %v7366
    %v7369 = vunpack.c.l.s4 1934713408
    %v7370 = vunpack.c.0.s8 %v7369
    %v7371 = vlaneseq
    %v7372 = vshrl.u32 %v7371, 7
    %v7373 = vsub.s32 %v7370, %v7372
    %v7374 = vrot.slane %v7360, %v7373
    %v7375 = vcombine.low %v7319, %v7335
    %v7376 = vcombine.high %v7319, %v7335
    %v7378 = vunpack.c.l.s4 1934713408
    %v7379 = vunpack.c.0.s8 %v7378
    %v7380 = vlaneseq
    %v7381 = vshrl.u32 %v7380, 7
    %v7382 = vsub.s32 %v7379, %v7381
    %v7383 = vrot.slane %v7375, %v7382
    %v7385 = vunpack.c.l.s4 1934713408
    %v7386 = vunpack.c.0.s8 %v7385
    %v7387 = vlaneseq
    %v7388 = vshrl.u32 %v7387, 7
    %v7389 = vsub.s32 %v7386, %v7388
    %v7390 = vrot.slane %v7376, %v7389
    %v7391 = vcombine.low %v7326, %v7342
    %v7392 = vcombine.high %v7326, %v7342
    %v7394 = vunpack.c.l.s4 1934713408
    %v7395 = vunpack.c.0.s8 %v7394
    %v7396 = vlaneseq
    %v7397 = vshrl.u32 %v7396, 7
    %v7398 = vsub.s32 %v7395, %v7397
    %v7399 = vrot.slane %v7391, %v7398
    %v7401 = vunpack.c.l.s4 1934713408
    %v7402 = vunpack.c.0.s8 %v7401
    %v7403 = vlaneseq
    %v7404 = vshrl.u32 %v7403, 7
    %v7405 = vsub.s32 %v7402, %v7404
    %v7406 = vrot.slane %v7392, %v7405
    %v7407 = vcombine.low %v7351, %v7383
    %v7408 = vcombine.high %v7351, %v7383
    %v7409 = vcombine.low %v7358, %v7390
    %v7410 = vcombine.high %v7358, %v7390
    %v7411 = vcombine.low %v7367, %v7399
    %v7412 = vcombine.high %v7367, %v7399
    %v7413 = vcombine.low %v7374, %v7406
    %v7414 = vcombine.high %v7374, %v7406
    %v7415 = vcombine.low %v5872, %v5876
    %v7416 = vcombine.high %v5872, %v5876
    %v7418 = vunpack.c.l.s4 1983009808
    %v7419 = vunpack.c.0.s8 %v7418
    %v7420 = vlaneseq
    %v7421 = vshrl.u32 %v7420, 7
    %v7422 = vsub.s32 %v7419, %v7421
    %v7423 = vrot.slane %v7415, %v7422
    %v7425 = vunpack.c.l.s4 1983009808
    %v7426 = vunpack.c.0.s8 %v7425
    %v7427 = vlaneseq
    %v7428 = vshrl.u32 %v7427, 7
    %v7429 = vsub.s32 %v7426, %v7428
    %v7430 = vrot.slane %v7416, %v7429
    %v7431 = vcombine.low %v5874, %v5878
    %v7432 = vcombine.high %v5874, %v5878
    %v7434 = vunpack.c.l.s4 1983009808
    %v7435 = vunpack.c.0.s8 %v7434
    %v7436 = vlaneseq
    %v7437 = vshrl.u32 %v7436, 7
    %v7438 = vsub.s32 %v7435, %v7437
    %v7439 = vrot.slane %v7431, %v7438
    %v7441 = vunpack.c.l.s4 1983009808
    %v7442 = vunpack.c.0.s8 %v7441
    %v7443 = vlaneseq
    %v7444 = vshrl.u32 %v7443, 7
    %v7445 = vsub.s32 %v7442, %v7444
    %v7446 = vrot.slane %v7432, %v7445
    %v7447 = vcombine.low %v5880, %v5884
    %v7448 = vcombine.high %v5880, %v5884
    %v7450 = vunpack.c.l.s4 1983009808
    %v7451 = vunpack.c.0.s8 %v7450
    %v7452 = vlaneseq
    %v7453 = vshrl.u32 %v7452, 7
    %v7454 = vsub.s32 %v7451, %v7453
    %v7455 = vrot.slane %v7447, %v7454
    %v7457 = vunpack.c.l.s4 1983009808
    %v7458 = vunpack.c.0.s8 %v7457
    %v7459 = vlaneseq
    %v7460 = vshrl.u32 %v7459, 7
    %v7461 = vsub.s32 %v7458, %v7460
    %v7462 = vrot.slane %v7448, %v7461
    %v7463 = vcombine.low %v5882, %v5886
    %v7464 = vcombine.high %v5882, %v5886
    %v7466 = vunpack.c.l.s4 1983009808
    %v7467 = vunpack.c.0.s8 %v7466
    %v7468 = vlaneseq
    %v7469 = vshrl.u32 %v7468, 7
    %v7470 = vsub.s32 %v7467, %v7469
    %v7471 = vrot.slane %v7463, %v7470
    %v7473 = vunpack.c.l.s4 1983009808
    %v7474 = vunpack.c.0.s8 %v7473
    %v7475 = vlaneseq
    %v7476 = vshrl.u32 %v7475, 7
    %v7477 = vsub.s32 %v7474, %v7476
    %v7478 = vrot.slane %v7464, %v7477
    %v7479 = vcombine.low %v7423, %v7439
    %v7480 = vcombine.high %v7423, %v7439
    %v7482 = vunpack.c.l.s4 1934713408
    %v7483 = vunpack.c.0.s8 %v7482
    %v7484 = vlaneseq
    %v7485 = vshrl.u32 %v7484, 7
    %v7486 = vsub.s32 %v7483, %v7485
    %v7487 = vrot.slane %v7479, %v7486
    %v7489 = vunpack.c.l.s4 1934713408
    %v7490 = vunpack.c.0.s8 %v7489
    %v7491 = vlaneseq
    %v7492 = vshrl.u32 %v7491, 7
    %v7493 = vsub.s32 %v7490, %v7492
    %v7494 = vrot.slane %v7480, %v7493
    %v7495 = vcombine.low %v7430, %v7446
    %v7496 = vcombine.high %v7430, %v7446
    %v7498 = vunpack.c.l.s4 1934713408
    %v7499 = vunpack.c.0.s8 %v7498
    %v7500 = vlaneseq
    %v7501 = vshrl.u32 %v7500, 7
    %v7502 = vsub.s32 %v7499, %v7501
    %v7503 = vrot.slane %v7495, %v7502
    %v7505 = vunpack.c.l.s4 1934713408
    %v7506 = vunpack.c.0.s8 %v7505
    %v7507 = vlaneseq
    %v7508 = vshrl.u32 %v7507, 7
    %v7509 = vsub.s32 %v7506, %v7508
    %v7510 = vrot.slane %v7496, %v7509
    %v7511 = vcombine.low %v7455, %v7471
    %v7512 = vcombine.high %v7455, %v7471
    %v7514 = vunpack.c.l.s4 1934713408
    %v7515 = vunpack.c.0.s8 %v7514
    %v7516 = vlaneseq
    %v7517 = vshrl.u32 %v7516, 7
    %v7518 = vsub.s32 %v7515, %v7517
    %v7519 = vrot.slane %v7511, %v7518
    %v7521 = vunpack.c.l.s4 1934713408
    %v7522 = vunpack.c.0.s8 %v7521
    %v7523 = vlaneseq
    %v7524 = vshrl.u32 %v7523, 7
    %v7525 = vsub.s32 %v7522, %v7524
    %v7526 = vrot.slane %v7512, %v7525
    %v7527 = vcombine.low %v7462, %v7478
    %v7528 = vcombine.high %v7462, %v7478
    %v7530 = vunpack.c.l.s4 1934713408
    %v7531 = vunpack.c.0.s8 %v7530
    %v7532 = vlaneseq
    %v7533 = vshrl.u32 %v7532, 7
    %v7534 = vsub.s32 %v7531, %v7533
    %v7535 = vrot.slane %v7527, %v7534
    %v7537 = vunpack.c.l.s4 1934713408
    %v7538 = vunpack.c.0.s8 %v7537
    %v7539 = vlaneseq
    %v7540 = vshrl.u32 %v7539, 7
    %v7541 = vsub.s32 %v7538, %v7540
    %v7542 = vrot.slane %v7528, %v7541
    %v7543 = vcombine.low %v7487, %v7519
    %v7544 = vcombine.high %v7487, %v7519
    %v7545 = vcombine.low %v7494, %v7526
    %v7546 = vcombine.high %v7494, %v7526
    %v7547 = vcombine.low %v7503, %v7535
    %v7548 = vcombine.high %v7503, %v7535
    %v7549 = vcombine.low %v7510, %v7542
    %v7550 = vcombine.high %v7510, %v7542
    %v7551 = vcombine.low %v5887, %v5891
    %v7552 = vcombine.high %v5887, %v5891
    %v7554 = vunpack.c.l.s4 1983009808
    %v7555 = vunpack.c.0.s8 %v7554
    %v7556 = vlaneseq
    %v7557 = vshrl.u32 %v7556, 7
    %v7558 = vsub.s32 %v7555, %v7557
    %v7559 = vrot.slane %v7551, %v7558
    %v7561 = vunpack.c.l.s4 1983009808
    %v7562 = vunpack.c.0.s8 %v7561
    %v7563 = vlaneseq
    %v7564 = vshrl.u32 %v7563, 7
    %v7565 = vsub.s32 %v7562, %v7564
    %v7566 = vrot.slane %v7552, %v7565
    %v7567 = vcombine.low %v5889, %v5893
    %v7568 = vcombine.high %v5889, %v5893
    %v7570 = vunpack.c.l.s4 1983009808
    %v7571 = vunpack.c.0.s8 %v7570
    %v7572 = vlaneseq
    %v7573 = vshrl.u32 %v7572, 7
    %v7574 = vsub.s32 %v7571, %v7573
    %v7575 = vrot.slane %v7567, %v7574
    %v7577 = vunpack.c.l.s4 1983009808
    %v7578 = vunpack.c.0.s8 %v7577
    %v7579 = vlaneseq
    %v7580 = vshrl.u32 %v7579, 7
    %v7581 = vsub.s32 %v7578, %v7580
    %v7582 = vrot.slane %v7568, %v7581
    %v7583 = vcombine.low %v5895, %v5899
    %v7584 = vcombine.high %v5895, %v5899
    %v7586 = vunpack.c.l.s4 1983009808
    %v7587 = vunpack.c.0.s8 %v7586
    %v7588 = vlaneseq
    %v7589 = vshrl.u32 %v7588, 7
    %v7590 = vsub.s32 %v7587, %v7589
    %v7591 = vrot.slane %v7583, %v7590
    %v7593 = vunpack.c.l.s4 1983009808
    %v7594 = vunpack.c.0.s8 %v7593
    %v7595 = vlaneseq
    %v7596 = vshrl.u32 %v7595, 7
    %v7597 = vsub.s32 %v7594, %v7596
    %v7598 = vrot.slane %v7584, %v7597
    %v7599 = vcombine.low %v5897, %v5901
    %v7600 = vcombine.high %v5897, %v5901
    %v7602 = vunpack.c.l.s4 1983009808
    %v7603 = vunpack.c.0.s8 %v7602
    %v7604 = vlaneseq
    %v7605 = vshrl.u32 %v7604, 7
    %v7606 = vsub.s32 %v7603, %v7605
    %v7607 = vrot.slane %v7599, %v7606
    %v7609 = vunpack.c.l.s4 1983009808
    %v7610 = vunpack.c.0.s8 %v7609
    %v7611 = vlaneseq
    %v7612 = vshrl.u32 %v7611, 7
    %v7613 = vsub.s32 %v7610, %v7612
    %v7614 = vrot.slane %v7600, %v7613
    %v7615 = vcombine.low %v7559, %v7575
    %v7616 = vcombine.high %v7559, %v7575
    %v7618 = vunpack.c.l.s4 1934713408
    %v7619 = vunpack.c.0.s8 %v7618
    %v7620 = vlaneseq
    %v7621 = vshrl.u32 %v7620, 7
    %v7622 = vsub.s32 %v7619, %v7621
    %v7623 = vrot.slane %v7615, %v7622
    %v7625 = vunpack.c.l.s4 1934713408
    %v7626 = vunpack.c.0.s8 %v7625
    %v7627 = vlaneseq
    %v7628 = vshrl.u32 %v7627, 7
    %v7629 = vsub.s32 %v7626, %v7628
    %v7630 = vrot.slane %v7616, %v7629
    %v7631 = vcombine.low %v7566, %v7582
    %v7632 = vcombine.high %v7566, %v7582
    %v7634 = vunpack.c.l.s4 1934713408
    %v7635 = vunpack.c.0.s8 %v7634
    %v7636 = vlaneseq
    %v7637 = vshrl.u32 %v7636, 7
    %v7638 = vsub.s32 %v7635, %v7637
    %v7639 = vrot.slane %v7631, %v7638
    %v7641 = vunpack.c.l.s4 1934713408
    %v7642 = vunpack.c.0.s8 %v7641
    %v7643 = vlaneseq
    %v7644 = vshrl.u32 %v7643, 7
    %v7645 = vsub.s32 %v7642, %v7644
    %v7646 = vrot.slane %v7632, %v7645
    %v7647 = vcombine.low %v7591, %v7607
    %v7648 = vcombine.high %v7591, %v7607
    %v7650 = vunpack.c.l.s4 1934713408
    %v7651 = vunpack.c.0.s8 %v7650
    %v7652 = vlaneseq
    %v7653 = vshrl.u32 %v7652, 7
    %v7654 = vsub.s32 %v7651, %v7653
    %v7655 = vrot.slane %v7647, %v7654
    %v7657 = vunpack.c.l.s4 1934713408
    %v7658 = vunpack.c.0.s8 %v7657
    %v7659 = vlaneseq
    %v7660 = vshrl.u32 %v7659, 7
    %v7661 = vsub.s32 %v7658, %v7660
    %v7662 = vrot.slane %v7648, %v7661
    %v7663 = vcombine.low %v7598, %v7614
    %v7664 = vcombine.high %v7598, %v7614
    %v7666 = vunpack.c.l.s4 1934713408
    %v7667 = vunpack.c.0.s8 %v7666
    %v7668 = vlaneseq
    %v7669 = vshrl.u32 %v7668, 7
    %v7670 = vsub.s32 %v7667, %v7669
    %v7671 = vrot.slane %v7663, %v7670
    %v7673 = vunpack.c.l.s4 1934713408
    %v7674 = vunpack.c.0.s8 %v7673
    %v7675 = vlaneseq
    %v7676 = vshrl.u32 %v7675, 7
    %v7677 = vsub.s32 %v7674, %v7676
    %v7678 = vrot.slane %v7664, %v7677
    %v7679 = vcombine.low %v7623, %v7655
    %v7680 = vcombine.high %v7623, %v7655
    %v7681 = vcombine.low %v7630, %v7662
    %v7682 = vcombine.high %v7630, %v7662
    %v7683 = vcombine.low %v7639, %v7671
    %v7684 = vcombine.high %v7639, %v7671
    %v7685 = vcombine.low %v7646, %v7678
    %v7686 = vcombine.high %v7646, %v7678
    %v7687 = vcombine.low %v5903, %v5907
    %v7688 = vcombine.high %v5903, %v5907
    %v7690 = vunpack.c.l.s4 1983009808
    %v7691 = vunpack.c.0.s8 %v7690
    %v7692 = vlaneseq
    %v7693 = vshrl.u32 %v7692, 7
    %v7694 = vsub.s32 %v7691, %v7693
    %v7695 = vrot.slane %v7687, %v7694
    %v7697 = vunpack.c.l.s4 1983009808
    %v7698 = vunpack.c.0.s8 %v7697
    %v7699 = vlaneseq
    %v7700 = vshrl.u32 %v7699, 7
    %v7701 = vsub.s32 %v7698, %v7700
    %v7702 = vrot.slane %v7688, %v7701
    %v7703 = vcombine.low %v5905, %v5909
    %v7704 = vcombine.high %v5905, %v5909
    %v7706 = vunpack.c.l.s4 1983009808
    %v7707 = vunpack.c.0.s8 %v7706
    %v7708 = vlaneseq
    %v7709 = vshrl.u32 %v7708, 7
    %v7710 = vsub.s32 %v7707, %v7709
    %v7711 = vrot.slane %v7703, %v7710
    %v7713 = vunpack.c.l.s4 1983009808
    %v7714 = vunpack.c.0.s8 %v7713
    %v7715 = vlaneseq
    %v7716 = vshrl.u32 %v7715, 7
    %v7717 = vsub.s32 %v7714, %v7716
    %v7718 = vrot.slane %v7704, %v7717
    %v7719 = vcombine.low %v5911, %v5915
    %v7720 = vcombine.high %v5911, %v5915
    %v7722 = vunpack.c.l.s4 1983009808
    %v7723 = vunpack.c.0.s8 %v7722
    %v7724 = vlaneseq
    %v7725 = vshrl.u32 %v7724, 7
    %v7726 = vsub.s32 %v7723, %v7725
    %v7727 = vrot.slane %v7719, %v7726
    %v7729 = vunpack.c.l.s4 1983009808
    %v7730 = vunpack.c.0.s8 %v7729
    %v7731 = vlaneseq
    %v7732 = vshrl.u32 %v7731, 7
    %v7733 = vsub.s32 %v7730, %v7732
    %v7734 = vrot.slane %v7720, %v7733
    %v7735 = vcombine.low %v5913, %v5917
    %v7736 = vcombine.high %v5913, %v5917
    %v7738 = vunpack.c.l.s4 1983009808
    %v7739 = vunpack.c.0.s8 %v7738
    %v7740 = vlaneseq
    %v7741 = vshrl.u32 %v7740, 7
    %v7742 = vsub.s32 %v7739, %v7741
    %v7743 = vrot.slane %v7735, %v7742
    %v7745 = vunpack.c.l.s4 1983009808
    %v7746 = vunpack.c.0.s8 %v7745
    %v7747 = vlaneseq
    %v7748 = vshrl.u32 %v7747, 7
    %v7749 = vsub.s32 %v7746, %v7748
    %v7750 = vrot.slane %v7736, %v7749
    %v7751 = vcombine.low %v7695, %v7711
    %v7752 = vcombine.high %v7695, %v7711
    %v7754 = vunpack.c.l.s4 1934713408
    %v7755 = vunpack.c.0.s8 %v7754
    %v7756 = vlaneseq
    %v7757 = vshrl.u32 %v7756, 7
    %v7758 = vsub.s32 %v7755, %v7757
    %v7759 = vrot.slane %v7751, %v7758
    %v7761 = vunpack.c.l.s4 1934713408
    %v7762 = vunpack.c.0.s8 %v7761
    %v7763 = vlaneseq
    %v7764 = vshrl.u32 %v7763, 7
    %v7765 = vsub.s32 %v7762, %v7764
    %v7766 = vrot.slane %v7752, %v7765
    %v7767 = vcombine.low %v7702, %v7718
    %v7768 = vcombine.high %v7702, %v7718
    %v7770 = vunpack.c.l.s4 1934713408
    %v7771 = vunpack.c.0.s8 %v7770
    %v7772 = vlaneseq
    %v7773 = vshrl.u32 %v7772, 7
    %v7774 = vsub.s32 %v7771, %v7773
    %v7775 = vrot.slane %v7767, %v7774
    %v7777 = vunpack.c.l.s4 1934713408
    %v7778 = vunpack.c.0.s8 %v7777
    %v7779 = vlaneseq
    %v7780 = vshrl.u32 %v7779, 7
    %v7781 = vsub.s32 %v7778, %v7780
    %v7782 = vrot.slane %v7768, %v7781
    %v7783 = vcombine.low %v7727, %v7743
    %v7784 = vcombine.high %v7727, %v7743
    %v7786 = vunpack.c.l.s4 1934713408
    %v7787 = vunpack.c.0.s8 %v7786
    %v7788 = vlaneseq
    %v7789 = vshrl.u32 %v7788, 7
    %v7790 = vsub.s32 %v7787, %v7789
    %v7791 = vrot.slane %v7783, %v7790
    %v7793 = vunpack.c.l.s4 1934713408
    %v7794 = vunpack.c.0.s8 %v7793
    %v7795 = vlaneseq
    %v7796 = vshrl.u32 %v7795, 7
    %v7797 = vsub.s32 %v7794, %v7796
    %v7798 = vrot.slane %v7784, %v7797
    %v7799 = vcombine.low %v7734, %v7750
    %v7800 = vcombine.high %v7734, %v7750
    %v7802 = vunpack.c.l.s4 1934713408
    %v7803 = vunpack.c.0.s8 %v7802
    %v7804 = vlaneseq
    %v7805 = vshrl.u32 %v7804, 7
    %v7806 = vsub.s32 %v7803, %v7805
    %v7807 = vrot.slane %v7799, %v7806
    %v7809 = vunpack.c.l.s4 1934713408
    %v7810 = vunpack.c.0.s8 %v7809
    %v7811 = vlaneseq
    %v7812 = vshrl.u32 %v7811, 7
    %v7813 = vsub.s32 %v7810, %v7812
    %v7814 = vrot.slane %v7800, %v7813
    %v7815 = vcombine.low %v7759, %v7791
    %v7816 = vcombine.high %v7759, %v7791
    %v7817 = vcombine.low %v7766, %v7798
    %v7818 = vcombine.high %v7766, %v7798
    %v7819 = vcombine.low %v7775, %v7807
    %v7820 = vcombine.high %v7775, %v7807
    %v7821 = vcombine.low %v7782, %v7814
    %v7822 = vcombine.high %v7782, %v7814
    %v7823 = vcombine.low %v5888, %v5892
    %v7824 = vcombine.high %v5888, %v5892
    %v7826 = vunpack.c.l.s4 1983009808
    %v7827 = vunpack.c.0.s8 %v7826
    %v7828 = vlaneseq
    %v7829 = vshrl.u32 %v7828, 7
    %v7830 = vsub.s32 %v7827, %v7829
    %v7831 = vrot.slane %v7823, %v7830
    %v7833 = vunpack.c.l.s4 1983009808
    %v7834 = vunpack.c.0.s8 %v7833
    %v7835 = vlaneseq
    %v7836 = vshrl.u32 %v7835, 7
    %v7837 = vsub.s32 %v7834, %v7836
    %v7838 = vrot.slane %v7824, %v7837
    %v7839 = vcombine.low %v5890, %v5894
    %v7840 = vcombine.high %v5890, %v5894
    %v7842 = vunpack.c.l.s4 1983009808
    %v7843 = vunpack.c.0.s8 %v7842
    %v7844 = vlaneseq
    %v7845 = vshrl.u32 %v7844, 7
    %v7846 = vsub.s32 %v7843, %v7845
    %v7847 = vrot.slane %v7839, %v7846
    %v7849 = vunpack.c.l.s4 1983009808
    %v7850 = vunpack.c.0.s8 %v7849
    %v7851 = vlaneseq
    %v7852 = vshrl.u32 %v7851, 7
    %v7853 = vsub.s32 %v7850, %v7852
    %v7854 = vrot.slane %v7840, %v7853
    %v7855 = vcombine.low %v5896, %v5900
    %v7856 = vcombine.high %v5896, %v5900
    %v7858 = vunpack.c.l.s4 1983009808
    %v7859 = vunpack.c.0.s8 %v7858
    %v7860 = vlaneseq
    %v7861 = vshrl.u32 %v7860, 7
    %v7862 = vsub.s32 %v7859, %v7861
    %v7863 = vrot.slane %v7855, %v7862
    %v7865 = vunpack.c.l.s4 1983009808
    %v7866 = vunpack.c.0.s8 %v7865
    %v7867 = vlaneseq
    %v7868 = vshrl.u32 %v7867, 7
    %v7869 = vsub.s32 %v7866, %v7868
    %v7870 = vrot.slane %v7856, %v7869
    %v7871 = vcombine.low %v5898, %v5902
    %v7872 = vcombine.high %v5898, %v5902
    %v7874 = vunpack.c.l.s4 1983009808
    %v7875 = vunpack.c.0.s8 %v7874
    %v7876 = vlaneseq
    %v7877 = vshrl.u32 %v7876, 7
    %v7878 = vsub.s32 %v7875, %v7877
    %v7879 = vrot.slane %v7871, %v7878
    %v7881 = vunpack.c.l.s4 1983009808
    %v7882 = vunpack.c.0.s8 %v7881
    %v7883 = vlaneseq
    %v7884 = vshrl.u32 %v7883, 7
    %v7885 = vsub.s32 %v7882, %v7884
    %v7886 = vrot.slane %v7872, %v7885
    %v7887 = vcombine.low %v7831, %v7847
    %v7888 = vcombine.high %v7831, %v7847
    %v7890 = vunpack.c.l.s4 1934713408
    %v7891 = vunpack.c.0.s8 %v7890
    %v7892 = vlaneseq
    %v7893 = vshrl.u32 %v7892, 7
    %v7894 = vsub.s32 %v7891, %v7893
    %v7895 = vrot.slane %v7887, %v7894
    %v7897 = vunpack.c.l.s4 1934713408
    %v7898 = vunpack.c.0.s8 %v7897
    %v7899 = vlaneseq
    %v7900 = vshrl.u32 %v7899, 7
    %v7901 = vsub.s32 %v7898, %v7900
    %v7902 = vrot.slane %v7888, %v7901
    %v7903 = vcombine.low %v7838, %v7854
    %v7904 = vcombine.high %v7838, %v7854
    %v7906 = vunpack.c.l.s4 1934713408
    %v7907 = vunpack.c.0.s8 %v7906
    %v7908 = vlaneseq
    %v7909 = vshrl.u32 %v7908, 7
    %v7910 = vsub.s32 %v7907, %v7909
    %v7911 = vrot.slane %v7903, %v7910
    %v7913 = vunpack.c.l.s4 1934713408
    %v7914 = vunpack.c.0.s8 %v7913
    %v7915 = vlaneseq
    %v7916 = vshrl.u32 %v7915, 7
    %v7917 = vsub.s32 %v7914, %v7916
    %v7918 = vrot.slane %v7904, %v7917
    %v7919 = vcombine.low %v7863, %v7879
    %v7920 = vcombine.high %v7863, %v7879
    %v7922 = vunpack.c.l.s4 1934713408
    %v7923 = vunpack.c.0.s8 %v7922
    %v7924 = vlaneseq
    %v7925 = vshrl.u32 %v7924, 7
    %v7926 = vsub.s32 %v7923, %v7925
    %v7927 = vrot.slane %v7919, %v7926
    %v7929 = vunpack.c.l.s4 1934713408
    %v7930 = vunpack.c.0.s8 %v7929
    %v7931 = vlaneseq
    %v7932 = vshrl.u32 %v7931, 7
    %v7933 = vsub.s32 %v7930, %v7932
    %v7934 = vrot.slane %v7920, %v7933
    %v7935 = vcombine.low %v7870, %v7886
    %v7936 = vcombine.high %v7870, %v7886
    %v7938 = vunpack.c.l.s4 1934713408
    %v7939 = vunpack.c.0.s8 %v7938
    %v7940 = vlaneseq
    %v7941 = vshrl.u32 %v7940, 7
    %v7942 = vsub.s32 %v7939, %v7941
    %v7943 = vrot.slane %v7935, %v7942
    %v7945 = vunpack.c.l.s4 1934713408
    %v7946 = vunpack.c.0.s8 %v7945
    %v7947 = vlaneseq
    %v7948 = vshrl.u32 %v7947, 7
    %v7949 = vsub.s32 %v7946, %v7948
    %v7950 = vrot.slane %v7936, %v7949
    %v7951 = vcombine.low %v7895, %v7927
    %v7952 = vcombine.high %v7895, %v7927
    %v7953 = vcombine.low %v7902, %v7934
    %v7954 = vcombine.high %v7902, %v7934
    %v7955 = vcombine.low %v7911, %v7943
    %v7956 = vcombine.high %v7911, %v7943
    %v7957 = vcombine.low %v7918, %v7950
    %v7958 = vcombine.high %v7918, %v7950
    %v7959 = vcombine.low %v5904, %v5908
    %v7960 = vcombine.high %v5904, %v5908
    %v7962 = vunpack.c.l.s4 1983009808
    %v7963 = vunpack.c.0.s8 %v7962
    %v7964 = vlaneseq
    %v7965 = vshrl.u32 %v7964, 7
    %v7966 = vsub.s32 %v7963, %v7965
    %v7967 = vrot.slane %v7959, %v7966
    %v7969 = vunpack.c.l.s4 1983009808
    %v7970 = vunpack.c.0.s8 %v7969
    %v7971 = vlaneseq
    %v7972 = vshrl.u32 %v7971, 7
    %v7973 = vsub.s32 %v7970, %v7972
    %v7974 = vrot.slane %v7960, %v7973
    %v7975 = vcombine.low %v5906, %v5910
    %v7976 = vcombine.high %v5906, %v5910
    %v7978 = vunpack.c.l.s4 1983009808
    %v7979 = vunpack.c.0.s8 %v7978
    %v7980 = vlaneseq
    %v7981 = vshrl.u32 %v7980, 7
    %v7982 = vsub.s32 %v7979, %v7981
    %v7983 = vrot.slane %v7975, %v7982
    %v7985 = vunpack.c.l.s4 1983009808
    %v7986 = vunpack.c.0.s8 %v7985
    %v7987 = vlaneseq
    %v7988 = vshrl.u32 %v7987, 7
    %v7989 = vsub.s32 %v7986, %v7988
    %v7990 = vrot.slane %v7976, %v7989
    %v7991 = vcombine.low %v5912, %v5916
    %v7992 = vcombine.high %v5912, %v5916
    %v7994 = vunpack.c.l.s4 1983009808
    %v7995 = vunpack.c.0.s8 %v7994
    %v7996 = vlaneseq
    %v7997 = vshrl.u32 %v7996, 7
    %v7998 = vsub.s32 %v7995, %v7997
    %v7999 = vrot.slane %v7991, %v7998
    %v8001 = vunpack.c.l.s4 1983009808
    %v8002 = vunpack.c.0.s8 %v8001
    %v8003 = vlaneseq
    %v8004 = vshrl.u32 %v8003, 7
    %v8005 = vsub.s32 %v8002, %v8004
    %v8006 = vrot.slane %v7992, %v8005
    %v8007 = vcombine.low %v5914, %v5918
    %v8008 = vcombine.high %v5914, %v5918
    %v8010 = vunpack.c.l.s4 1983009808
    %v8011 = vunpack.c.0.s8 %v8010
    %v8012 = vlaneseq
    %v8013 = vshrl.u32 %v8012, 7
    %v8014 = vsub.s32 %v8011, %v8013
    %v8015 = vrot.slane %v8007, %v8014
    %v8017 = vunpack.c.l.s4 1983009808
    %v8018 = vunpack.c.0.s8 %v8017
    %v8019 = vlaneseq
    %v8020 = vshrl.u32 %v8019, 7
    %v8021 = vsub.s32 %v8018, %v8020
    %v8022 = vrot.slane %v8008, %v8021
    %v8023 = vcombine.low %v7967, %v7983
    %v8024 = vcombine.high %v7967, %v7983
    %v8026 = vunpack.c.l.s4 1934713408
    %v8027 = vunpack.c.0.s8 %v8026
    %v8028 = vlaneseq
    %v8029 = vshrl.u32 %v8028, 7
    %v8030 = vsub.s32 %v8027, %v8029
    %v8031 = vrot.slane %v8023, %v8030
    %v8033 = vunpack.c.l.s4 1934713408
    %v8034 = vunpack.c.0.s8 %v8033
    %v8035 = vlaneseq
    %v8036 = vshrl.u32 %v8035, 7
    %v8037 = vsub.s32 %v8034, %v8036
    %v8038 = vrot.slane %v8024, %v8037
    %v8039 = vcombine.low %v7974, %v7990
    %v8040 = vcombine.high %v7974, %v7990
    %v8042 = vunpack.c.l.s4 1934713408
    %v8043 = vunpack.c.0.s8 %v8042
    %v8044 = vlaneseq
    %v8045 = vshrl.u32 %v8044, 7
    %v8046 = vsub.s32 %v8043, %v8045
    %v8047 = vrot.slane %v8039, %v8046
    %v8049 = vunpack.c.l.s4 1934713408
    %v8050 = vunpack.c.0.s8 %v8049
    %v8051 = vlaneseq
    %v8052 = vshrl.u32 %v8051, 7
    %v8053 = vsub.s32 %v8050, %v8052
    %v8054 = vrot.slane %v8040, %v8053
    %v8055 = vcombine.low %v7999, %v8015
    %v8056 = vcombine.high %v7999, %v8015
    %v8058 = vunpack.c.l.s4 1934713408
    %v8059 = vunpack.c.0.s8 %v8058
    %v8060 = vlaneseq
    %v8061 = vshrl.u32 %v8060, 7
    %v8062 = vsub.s32 %v8059, %v8061
    %v8063 = vrot.slane %v8055, %v8062
    %v8065 = vunpack.c.l.s4 1934713408
    %v8066 = vunpack.c.0.s8 %v8065
    %v8067 = vlaneseq
    %v8068 = vshrl.u32 %v8067, 7
    %v8069 = vsub.s32 %v8066, %v8068
    %v8070 = vrot.slane %v8056, %v8069
    %v8071 = vcombine.low %v8006, %v8022
    %v8072 = vcombine.high %v8006, %v8022
    %v8074 = vunpack.c.l.s4 1934713408
    %v8075 = vunpack.c.0.s8 %v8074
    %v8076 = vlaneseq
    %v8077 = vshrl.u32 %v8076, 7
    %v8078 = vsub.s32 %v8075, %v8077
    %v8079 = vrot.slane %v8071, %v8078
    %v8081 = vunpack.c.l.s4 1934713408
    %v8082 = vunpack.c.0.s8 %v8081
    %v8083 = vlaneseq
    %v8084 = vshrl.u32 %v8083, 7
    %v8085 = vsub.s32 %v8082, %v8084
    %v8086 = vrot.slane %v8072, %v8085
    %v8087 = vcombine.low %v8031, %v8063
    %v8088 = vcombine.high %v8031, %v8063
    %v8089 = vcombine.low %v8038, %v8070
    %v8090 = vcombine.high %v8038, %v8070
    %v8091 = vcombine.low %v8047, %v8079
    %v8092 = vcombine.high %v8047, %v8079
    %v8093 = vcombine.low %v8054, %v8086
    %v8094 = vcombine.high %v8054, %v8086
    %8103 = vrot.lane.b32.xlu0 %v6048, 2
    %v8104 = vpop.permute.xlu0 %8103
    %8105 = vrot.lane.b32.xlu0 %v6184, 2
    %v8106 = vpop.permute.xlu0 %8105
    %8107 = vrot.lane.b32.xlu0 %v6592, 2
    %v8108 = vpop.permute.xlu0 %8107
    %8109 = vrot.lane.b32.xlu0 %v6728, 2
    %v8110 = vpop.permute.xlu0 %8109
    %8111 = vrot.lane.b32.xlu0 %v7136, 2
    %v8112 = vpop.permute.xlu0 %8111
    %8113 = vrot.lane.b32.xlu0 %v7272, 2
    %v8114 = vpop.permute.xlu0 %8113
    %8115 = vrot.lane.b32.xlu0 %v7680, 2
    %v8116 = vpop.permute.xlu0 %8115
    %8117 = vrot.lane.b32.xlu0 %v7816, 2
    %v8118 = vpop.permute.xlu0 %8117
    %8135 = vrot.lane.b32.xlu0 %v6049, 4
    %v8136 = vpop.permute.xlu0 %8135
    %8137 = vrot.lane.b32.xlu0 %v6185, 4
    %v8138 = vpop.permute.xlu0 %8137
    %8139 = vrot.lane.b32.xlu0 %v6593, 4
    %v8140 = vpop.permute.xlu0 %8139
    %8141 = vrot.lane.b32.xlu0 %v6729, 4
    %v8142 = vpop.permute.xlu0 %8141
    %8143 = vrot.lane.b32.xlu0 %v7137, 4
    %v8144 = vpop.permute.xlu0 %8143
    %8145 = vrot.lane.b32.xlu0 %v7273, 4
    %v8146 = vpop.permute.xlu0 %8145
    %8147 = vrot.lane.b32.xlu0 %v7681, 4
    %v8148 = vpop.permute.xlu0 %8147
    %8149 = vrot.lane.b32.xlu0 %v7817, 4
    %v8150 = vpop.permute.xlu0 %8149
    %8167 = vrot.lane.b32.xlu0 %v6050, 6
    %v8168 = vpop.permute.xlu0 %8167
    %8169 = vrot.lane.b32.xlu0 %v6186, 6
    %v8170 = vpop.permute.xlu0 %8169
    %8171 = vrot.lane.b32.xlu0 %v6594, 6
    %v8172 = vpop.permute.xlu0 %8171
    %8173 = vrot.lane.b32.xlu0 %v6730, 6
    %v8174 = vpop.permute.xlu0 %8173
    %8175 = vrot.lane.b32.xlu0 %v7138, 6
    %v8176 = vpop.permute.xlu0 %8175
    %8177 = vrot.lane.b32.xlu0 %v7274, 6
    %v8178 = vpop.permute.xlu0 %8177
    %8179 = vrot.lane.b32.xlu0 %v7682, 6
    %v8180 = vpop.permute.xlu0 %8179
    %8181 = vrot.lane.b32.xlu0 %v7818, 6
    %v8182 = vpop.permute.xlu0 %8181
    %8199 = vrot.lane.b32.xlu0 %v6051, 8
    %v8200 = vpop.permute.xlu0 %8199
    %8201 = vrot.lane.b32.xlu0 %v6187, 8
    %v8202 = vpop.permute.xlu0 %8201
    %8203 = vrot.lane.b32.xlu0 %v6595, 8
    %v8204 = vpop.permute.xlu0 %8203
    %8205 = vrot.lane.b32.xlu0 %v6731, 8
    %v8206 = vpop.permute.xlu0 %8205
    %8207 = vrot.lane.b32.xlu0 %v7139, 8
    %v8208 = vpop.permute.xlu0 %8207
    %8209 = vrot.lane.b32.xlu0 %v7275, 8
    %v8210 = vpop.permute.xlu0 %8209
    %8211 = vrot.lane.b32.xlu0 %v7683, 8
    %v8212 = vpop.permute.xlu0 %8211
    %8213 = vrot.lane.b32.xlu0 %v7819, 8
    %v8214 = vpop.permute.xlu0 %8213
    %8231 = vrot.lane.b32.xlu0 %v6052, 10
    %v8232 = vpop.permute.xlu0 %8231
    %8233 = vrot.lane.b32.xlu0 %v6188, 10
    %v8234 = vpop.permute.xlu0 %8233
    %8235 = vrot.lane.b32.xlu0 %v6596, 10
    %v8236 = vpop.permute.xlu0 %8235
    %8237 = vrot.lane.b32.xlu0 %v6732, 10
    %v8238 = vpop.permute.xlu0 %8237
    %8239 = vrot.lane.b32.xlu0 %v7140, 10
    %v8240 = vpop.permute.xlu0 %8239
    %8241 = vrot.lane.b32.xlu0 %v7276, 10
    %v8242 = vpop.permute.xlu0 %8241
    %8243 = vrot.lane.b32.xlu0 %v7684, 10
    %v8244 = vpop.permute.xlu0 %8243
    %8245 = vrot.lane.b32.xlu0 %v7820, 10
    %v8246 = vpop.permute.xlu0 %8245
    %8263 = vrot.lane.b32.xlu0 %v6053, 12
    %v8264 = vpop.permute.xlu0 %8263
    %8265 = vrot.lane.b32.xlu0 %v6189, 12
    %v8266 = vpop.permute.xlu0 %8265
    %8267 = vrot.lane.b32.xlu0 %v6597, 12
    %v8268 = vpop.permute.xlu0 %8267
    %8269 = vrot.lane.b32.xlu0 %v6733, 12
    %v8270 = vpop.permute.xlu0 %8269
    %8271 = vrot.lane.b32.xlu0 %v7141, 12
    %v8272 = vpop.permute.xlu0 %8271
    %8273 = vrot.lane.b32.xlu0 %v7277, 12
    %v8274 = vpop.permute.xlu0 %8273
    %8275 = vrot.lane.b32.xlu0 %v7685, 12
    %v8276 = vpop.permute.xlu0 %8275
    %8277 = vrot.lane.b32.xlu0 %v7821, 12
    %v8278 = vpop.permute.xlu0 %8277
    %8295 = vrot.lane.b32.xlu0 %v6054, 14
    %v8296 = vpop.permute.xlu0 %8295
    %8297 = vrot.lane.b32.xlu0 %v6190, 14
    %v8298 = vpop.permute.xlu0 %8297
    %8299 = vrot.lane.b32.xlu0 %v6598, 14
    %v8300 = vpop.permute.xlu0 %8299
    %8301 = vrot.lane.b32.xlu0 %v6734, 14
    %v8302 = vpop.permute.xlu0 %8301
    %8303 = vrot.lane.b32.xlu0 %v7142, 14
    %v8304 = vpop.permute.xlu0 %8303
    %8305 = vrot.lane.b32.xlu0 %v7278, 14
    %v8306 = vpop.permute.xlu0 %8305
    %8307 = vrot.lane.b32.xlu0 %v7686, 14
    %v8308 = vpop.permute.xlu0 %8307
    %8309 = vrot.lane.b32.xlu0 %v7822, 14
    %v8310 = vpop.permute.xlu0 %8309
    %8327 = vrot.lane.b32.xlu0 %v6319, 16
    %v8328 = vpop.permute.xlu0 %8327
    %8329 = vrot.lane.b32.xlu0 %v6455, 16
    %v8330 = vpop.permute.xlu0 %8329
    %8331 = vrot.lane.b32.xlu0 %v6863, 16
    %v8332 = vpop.permute.xlu0 %8331
    %8333 = vrot.lane.b32.xlu0 %v6999, 16
    %v8334 = vpop.permute.xlu0 %8333
    %8335 = vrot.lane.b32.xlu0 %v7407, 16
    %v8336 = vpop.permute.xlu0 %8335
    %8337 = vrot.lane.b32.xlu0 %v7543, 16
    %v8338 = vpop.permute.xlu0 %8337
    %8339 = vrot.lane.b32.xlu0 %v7951, 16
    %v8340 = vpop.permute.xlu0 %8339
    %8341 = vrot.lane.b32.xlu0 %v8087, 16
    %v8342 = vpop.permute.xlu0 %8341
    %8359 = vrot.lane.b32.xlu0 %v6320, 18
    %v8360 = vpop.permute.xlu0 %8359
    %8361 = vrot.lane.b32.xlu0 %v6456, 18
    %v8362 = vpop.permute.xlu0 %8361
    %8363 = vrot.lane.b32.xlu0 %v6864, 18
    %v8364 = vpop.permute.xlu0 %8363
    %8365 = vrot.lane.b32.xlu0 %v7000, 18
    %v8366 = vpop.permute.xlu0 %8365
    %8367 = vrot.lane.b32.xlu0 %v7408, 18
    %v8368 = vpop.permute.xlu0 %8367
    %8369 = vrot.lane.b32.xlu0 %v7544, 18
    %v8370 = vpop.permute.xlu0 %8369
    %8371 = vrot.lane.b32.xlu0 %v7952, 18
    %v8372 = vpop.permute.xlu0 %8371
    %8373 = vrot.lane.b32.xlu0 %v8088, 18
    %v8374 = vpop.permute.xlu0 %8373
    %8391 = vrot.lane.b32.xlu0 %v6321, 20
    %v8392 = vpop.permute.xlu0 %8391
    %8393 = vrot.lane.b32.xlu0 %v6457, 20
    %v8394 = vpop.permute.xlu0 %8393
    %8395 = vrot.lane.b32.xlu0 %v6865, 20
    %v8396 = vpop.permute.xlu0 %8395
    %8397 = vrot.lane.b32.xlu0 %v7001, 20
    %v8398 = vpop.permute.xlu0 %8397
    %8399 = vrot.lane.b32.xlu0 %v7409, 20
    %v8400 = vpop.permute.xlu0 %8399
    %8401 = vrot.lane.b32.xlu0 %v7545, 20
    %v8402 = vpop.permute.xlu0 %8401
    %8403 = vrot.lane.b32.xlu0 %v7953, 20
    %v8404 = vpop.permute.xlu0 %8403
    %8405 = vrot.lane.b32.xlu0 %v8089, 20
    %v8406 = vpop.permute.xlu0 %8405
    %8423 = vrot.lane.b32.xlu0 %v6322, 22
    %v8424 = vpop.permute.xlu0 %8423
    %8425 = vrot.lane.b32.xlu0 %v6458, 22
    %v8426 = vpop.permute.xlu0 %8425
    %8427 = vrot.lane.b32.xlu0 %v6866, 22
    %v8428 = vpop.permute.xlu0 %8427
    %8429 = vrot.lane.b32.xlu0 %v7002, 22
    %v8430 = vpop.permute.xlu0 %8429
    %8431 = vrot.lane.b32.xlu0 %v7410, 22
    %v8432 = vpop.permute.xlu0 %8431
    %8433 = vrot.lane.b32.xlu0 %v7546, 22
    %v8434 = vpop.permute.xlu0 %8433
    %8435 = vrot.lane.b32.xlu0 %v7954, 22
    %v8436 = vpop.permute.xlu0 %8435
    %8437 = vrot.lane.b32.xlu0 %v8090, 22
    %v8438 = vpop.permute.xlu0 %8437
    %8455 = vrot.lane.b32.xlu0 %v6323, 24
    %v8456 = vpop.permute.xlu0 %8455
    %8457 = vrot.lane.b32.xlu0 %v6459, 24
    %v8458 = vpop.permute.xlu0 %8457
    %8459 = vrot.lane.b32.xlu0 %v6867, 24
    %v8460 = vpop.permute.xlu0 %8459
    %8461 = vrot.lane.b32.xlu0 %v7003, 24
    %v8462 = vpop.permute.xlu0 %8461
    %8463 = vrot.lane.b32.xlu0 %v7411, 24
    %v8464 = vpop.permute.xlu0 %8463
    %8465 = vrot.lane.b32.xlu0 %v7547, 24
    %v8466 = vpop.permute.xlu0 %8465
    %8467 = vrot.lane.b32.xlu0 %v7955, 24
    %v8468 = vpop.permute.xlu0 %8467
    %8469 = vrot.lane.b32.xlu0 %v8091, 24
    %v8470 = vpop.permute.xlu0 %8469
    %8487 = vrot.lane.b32.xlu0 %v6324, 26
    %v8488 = vpop.permute.xlu0 %8487
    %8489 = vrot.lane.b32.xlu0 %v6460, 26
    %v8490 = vpop.permute.xlu0 %8489
    %8491 = vrot.lane.b32.xlu0 %v6868, 26
    %v8492 = vpop.permute.xlu0 %8491
    %8493 = vrot.lane.b32.xlu0 %v7004, 26
    %v8494 = vpop.permute.xlu0 %8493
    %8495 = vrot.lane.b32.xlu0 %v7412, 26
    %v8496 = vpop.permute.xlu0 %8495
    %8497 = vrot.lane.b32.xlu0 %v7548, 26
    %v8498 = vpop.permute.xlu0 %8497
    %8499 = vrot.lane.b32.xlu0 %v7956, 26
    %v8500 = vpop.permute.xlu0 %8499
    %8501 = vrot.lane.b32.xlu0 %v8092, 26
    %v8502 = vpop.permute.xlu0 %8501
    %8519 = vrot.lane.b32.xlu0 %v6325, 28
    %v8520 = vpop.permute.xlu0 %8519
    %8521 = vrot.lane.b32.xlu0 %v6461, 28
    %v8522 = vpop.permute.xlu0 %8521
    %8523 = vrot.lane.b32.xlu0 %v6869, 28
    %v8524 = vpop.permute.xlu0 %8523
    %8525 = vrot.lane.b32.xlu0 %v7005, 28
    %v8526 = vpop.permute.xlu0 %8525
    %8527 = vrot.lane.b32.xlu0 %v7413, 28
    %v8528 = vpop.permute.xlu0 %8527
    %8529 = vrot.lane.b32.xlu0 %v7549, 28
    %v8530 = vpop.permute.xlu0 %8529
    %8531 = vrot.lane.b32.xlu0 %v7957, 28
    %v8532 = vpop.permute.xlu0 %8531
    %8533 = vrot.lane.b32.xlu0 %v8093, 28
    %v8534 = vpop.permute.xlu0 %8533
    %8551 = vrot.lane.b32.xlu0 %v6326, 30
    %v8552 = vpop.permute.xlu0 %8551
    %8553 = vrot.lane.b32.xlu0 %v6462, 30
    %v8554 = vpop.permute.xlu0 %8553
    %8555 = vrot.lane.b32.xlu0 %v6870, 30
    %v8556 = vpop.permute.xlu0 %8555
    %8557 = vrot.lane.b32.xlu0 %v7006, 30
    %v8558 = vpop.permute.xlu0 %8557
    %8559 = vrot.lane.b32.xlu0 %v7414, 30
    %v8560 = vpop.permute.xlu0 %8559
    %8561 = vrot.lane.b32.xlu0 %v7550, 30
    %v8562 = vpop.permute.xlu0 %8561
    %8563 = vrot.lane.b32.xlu0 %v7958, 30
    %v8564 = vpop.permute.xlu0 %8563
    %8565 = vrot.lane.b32.xlu0 %v8094, 30
    %v8566 = vpop.permute.xlu0 %8565
    %v8575 = vsel %vm4248, %v6047, %v8104
    %v8576 = vsel %vm4248, %v6183, %v8106
    %v8577 = vsel %vm4248, %v6591, %v8108
    %v8578 = vsel %vm4248, %v6727, %v8110
    %v8579 = vsel %vm4248, %v7135, %v8112
    %v8580 = vsel %vm4248, %v7271, %v8114
    %v8581 = vsel %vm4248, %v7679, %v8116
    %v8582 = vsel %vm4248, %v7815, %v8118
    %v8583 = vsel %vm4257, %v8575, %v8136
    %v8584 = vsel %vm4257, %v8576, %v8138
    %v8585 = vsel %vm4257, %v8577, %v8140
    %v8586 = vsel %vm4257, %v8578, %v8142
    %v8587 = vsel %vm4257, %v8579, %v8144
    %v8588 = vsel %vm4257, %v8580, %v8146
    %v8589 = vsel %vm4257, %v8581, %v8148
    %v8590 = vsel %vm4257, %v8582, %v8150
    %v8591 = vsel %vm4266, %v8583, %v8168
    %v8592 = vsel %vm4266, %v8584, %v8170
    %v8593 = vsel %vm4266, %v8585, %v8172
    %v8594 = vsel %vm4266, %v8586, %v8174
    %v8595 = vsel %vm4266, %v8587, %v8176
    %v8596 = vsel %vm4266, %v8588, %v8178
    %v8597 = vsel %vm4266, %v8589, %v8180
    %v8598 = vsel %vm4266, %v8590, %v8182
    %v8599 = vsel %vm4275, %v8591, %v8200
    %v8600 = vsel %vm4275, %v8592, %v8202
    %v8601 = vsel %vm4275, %v8593, %v8204
    %v8602 = vsel %vm4275, %v8594, %v8206
    %v8603 = vsel %vm4275, %v8595, %v8208
    %v8604 = vsel %vm4275, %v8596, %v8210
    %v8605 = vsel %vm4275, %v8597, %v8212
    %v8606 = vsel %vm4275, %v8598, %v8214
    %v8607 = vsel %vm4284, %v8599, %v8232
    %v8608 = vsel %vm4284, %v8600, %v8234
    %v8609 = vsel %vm4284, %v8601, %v8236
    %v8610 = vsel %vm4284, %v8602, %v8238
    %v8611 = vsel %vm4284, %v8603, %v8240
    %v8612 = vsel %vm4284, %v8604, %v8242
    %v8613 = vsel %vm4284, %v8605, %v8244
    %v8614 = vsel %vm4284, %v8606, %v8246
    %v8615 = vsel %vm4293, %v8607, %v8264
    %v8616 = vsel %vm4293, %v8608, %v8266
    %v8617 = vsel %vm4293, %v8609, %v8268
    %v8618 = vsel %vm4293, %v8610, %v8270
    %v8619 = vsel %vm4293, %v8611, %v8272
    %v8620 = vsel %vm4293, %v8612, %v8274
    %v8621 = vsel %vm4293, %v8613, %v8276
    %v8622 = vsel %vm4293, %v8614, %v8278
    %v8623 = vsel %vm4302, %v8615, %v8296
    %v8624 = vsel %vm4302, %v8616, %v8298
    %v8625 = vsel %vm4302, %v8617, %v8300
    %v8626 = vsel %vm4302, %v8618, %v8302
    %v8627 = vsel %vm4302, %v8619, %v8304
    %v8628 = vsel %vm4302, %v8620, %v8306
    %v8629 = vsel %vm4302, %v8621, %v8308
    %v8630 = vsel %vm4302, %v8622, %v8310
    %v8631 = vsel %vm4311, %v8623, %v8328
    %v8632 = vsel %vm4311, %v8624, %v8330
    %v8633 = vsel %vm4311, %v8625, %v8332
    %v8634 = vsel %vm4311, %v8626, %v8334
    %v8635 = vsel %vm4311, %v8627, %v8336
    %v8636 = vsel %vm4311, %v8628, %v8338
    %v8637 = vsel %vm4311, %v8629, %v8340
    %v8638 = vsel %vm4311, %v8630, %v8342
    %v8639 = vsel %vm4320, %v8631, %v8360
    %v8640 = vsel %vm4320, %v8632, %v8362
    %v8641 = vsel %vm4320, %v8633, %v8364
    %v8642 = vsel %vm4320, %v8634, %v8366
    %v8643 = vsel %vm4320, %v8635, %v8368
    %v8644 = vsel %vm4320, %v8636, %v8370
    %v8645 = vsel %vm4320, %v8637, %v8372
    %v8646 = vsel %vm4320, %v8638, %v8374
    %v8647 = vsel %vm4329, %v8639, %v8392
    %v8648 = vsel %vm4329, %v8640, %v8394
    %v8649 = vsel %vm4329, %v8641, %v8396
    %v8650 = vsel %vm4329, %v8642, %v8398
    %v8651 = vsel %vm4329, %v8643, %v8400
    %v8652 = vsel %vm4329, %v8644, %v8402
    %v8653 = vsel %vm4329, %v8645, %v8404
    %v8654 = vsel %vm4329, %v8646, %v8406
    %v8655 = vsel %vm4338, %v8647, %v8424
    %v8656 = vsel %vm4338, %v8648, %v8426
    %v8657 = vsel %vm4338, %v8649, %v8428
    %v8658 = vsel %vm4338, %v8650, %v8430
    %v8659 = vsel %vm4338, %v8651, %v8432
    %v8660 = vsel %vm4338, %v8652, %v8434
    %v8661 = vsel %vm4338, %v8653, %v8436
    %v8662 = vsel %vm4338, %v8654, %v8438
    %v8663 = vsel %vm4347, %v8655, %v8456
    %v8664 = vsel %vm4347, %v8656, %v8458
    %v8665 = vsel %vm4347, %v8657, %v8460
    %v8666 = vsel %vm4347, %v8658, %v8462
    %v8667 = vsel %vm4347, %v8659, %v8464
    %v8668 = vsel %vm4347, %v8660, %v8466
    %v8669 = vsel %vm4347, %v8661, %v8468
    %v8670 = vsel %vm4347, %v8662, %v8470
    %v8671 = vsel %vm4356, %v8663, %v8488
    %v8672 = vsel %vm4356, %v8664, %v8490
    %v8673 = vsel %vm4356, %v8665, %v8492
    %v8674 = vsel %vm4356, %v8666, %v8494
    %v8675 = vsel %vm4356, %v8667, %v8496
    %v8676 = vsel %vm4356, %v8668, %v8498
    %v8677 = vsel %vm4356, %v8669, %v8500
    %v8678 = vsel %vm4356, %v8670, %v8502
    %v8679 = vsel %vm4365, %v8671, %v8520
    %v8680 = vsel %vm4365, %v8672, %v8522
    %v8681 = vsel %vm4365, %v8673, %v8524
    %v8682 = vsel %vm4365, %v8674, %v8526
    %v8683 = vsel %vm4365, %v8675, %v8528
    %v8684 = vsel %vm4365, %v8676, %v8530
    %v8685 = vsel %vm4365, %v8677, %v8532
    %v8686 = vsel %vm4365, %v8678, %v8534
    %v8687 = vsel %vm4374, %v8679, %v8552
    %v8688 = vsel %vm4374, %v8680, %v8554
    %v8689 = vsel %vm4374, %v8681, %v8556
    %v8690 = vsel %vm4374, %v8682, %v8558
    %v8691 = vsel %vm4374, %v8683, %v8560
    %v8692 = vsel %vm4374, %v8684, %v8562
    %v8693 = vsel %vm4374, %v8685, %v8564
    %v8694 = vsel %vm4374, %v8686, %v8566
    %8703 = vrot.lane.b32.xlu0 %v8687, 32
    %v8704 = vpop.permute.xlu0 %8703
    %8705 = vrot.lane.b32.xlu0 %v8688, 32
    %v8706 = vpop.permute.xlu0 %8705
    %8707 = vrot.lane.b32.xlu0 %v8689, 32
    %v8708 = vpop.permute.xlu0 %8707
    %8709 = vrot.lane.b32.xlu0 %v8690, 32
    %v8710 = vpop.permute.xlu0 %8709
    %8711 = vrot.lane.b32.xlu0 %v8691, 32
    %v8712 = vpop.permute.xlu0 %8711
    %8713 = vrot.lane.b32.xlu0 %v8692, 32
    %v8714 = vpop.permute.xlu0 %8713
    %8715 = vrot.lane.b32.xlu0 %v8693, 32
    %v8716 = vpop.permute.xlu0 %8715
    %8717 = vrot.lane.b32.xlu0 %v8694, 32
    %v8718 = vpop.permute.xlu0 %8717
    %vm8727 = vcmask 261120
    %v8728 = vsel %vm8727, %v4375, %v8704
    %v8729 = vsel %vm8727, %v4376, %v8706
    %v8730 = vsel %vm8727, %v4377, %v8708
    %v8731 = vsel %vm8727, %v4378, %v8710
    %v8732 = vsel %vm8727, %v4379, %v8712
    %v8733 = vsel %vm8727, %v4380, %v8714
    %v8734 = vsel %vm8727, %v4381, %v8716
    %v8735 = vsel %vm8727, %v4382, %v8718
    %v8736 = vcombine.low %v8728, %v8732
    %v8737 = vcombine.high %v8728, %v8732
    %v8739 = vunpack.c.l.s4 1983009808
    %v8740 = vunpack.c.0.s8 %v8739
    %v8741 = vlaneseq
    %v8742 = vshrl.u32 %v8741, 7
    %v8743 = vsub.s32 %v8740, %v8742
    %v8744 = vrot.slane %v8736, %v8743
    %v8746 = vunpack.c.l.s4 1983009808
    %v8747 = vunpack.c.0.s8 %v8746
    %v8748 = vlaneseq
    %v8749 = vshrl.u32 %v8748, 7
    %v8750 = vsub.s32 %v8747, %v8749
    %v8751 = vrot.slane %v8737, %v8750
    %v8752 = vcombine.low %v8730, %v8734
    %v8753 = vcombine.high %v8730, %v8734
    %v8755 = vunpack.c.l.s4 1983009808
    %v8756 = vunpack.c.0.s8 %v8755
    %v8757 = vlaneseq
    %v8758 = vshrl.u32 %v8757, 7
    %v8759 = vsub.s32 %v8756, %v8758
    %v8760 = vrot.slane %v8752, %v8759
    %v8762 = vunpack.c.l.s4 1983009808
    %v8763 = vunpack.c.0.s8 %v8762
    %v8764 = vlaneseq
    %v8765 = vshrl.u32 %v8764, 7
    %v8766 = vsub.s32 %v8763, %v8765
    %v8767 = vrot.slane %v8753, %v8766
    %v8768 = vcombine.low %v8744, %v8760
    %v8769 = vcombine.high %v8744, %v8760
    %v8771 = vunpack.c.l.s4 1934713408
    %v8772 = vunpack.c.0.s8 %v8771
    %v8773 = vlaneseq
    %v8774 = vshrl.u32 %v8773, 7
    %v8775 = vsub.s32 %v8772, %v8774
    %v8776 = vrot.slane %v8768, %v8775
    %v8778 = vunpack.c.l.s4 1934713408
    %v8779 = vunpack.c.0.s8 %v8778
    %v8780 = vlaneseq
    %v8781 = vshrl.u32 %v8780, 7
    %v8782 = vsub.s32 %v8779, %v8781
    %v8783 = vrot.slane %v8769, %v8782
    %v8784 = vcombine.low %v8751, %v8767
    %v8785 = vcombine.high %v8751, %v8767
    %v8787 = vunpack.c.l.s4 1934713408
    %v8788 = vunpack.c.0.s8 %v8787
    %v8789 = vlaneseq
    %v8790 = vshrl.u32 %v8789, 7
    %v8791 = vsub.s32 %v8788, %v8790
    %v8792 = vrot.slane %v8784, %v8791
    %v8794 = vunpack.c.l.s4 1934713408
    %v8795 = vunpack.c.0.s8 %v8794
    %v8796 = vlaneseq
    %v8797 = vshrl.u32 %v8796, 7
    %v8798 = vsub.s32 %v8795, %v8797
    %v8799 = vrot.slane %v8785, %v8798
    %v8800 = vcombine.high %v8776, 0.0
    %v8801 = vcombine.high %v8783, 0.0
    %v8802 = vcombine.high %v8792, 0.0
    %v8803 = vcombine.high %v8799, 0.0
    %v8804 = vcombine.low %v8729, %v8733
    %v8805 = vcombine.high %v8729, %v8733
    %v8807 = vunpack.c.l.s4 1983009808
    %v8808 = vunpack.c.0.s8 %v8807
    %v8809 = vlaneseq
    %v8810 = vshrl.u32 %v8809, 7
    %v8811 = vsub.s32 %v8808, %v8810
    %v8812 = vrot.slane %v8804, %v8811
    %v8814 = vunpack.c.l.s4 1983009808
    %v8815 = vunpack.c.0.s8 %v8814
    %v8816 = vlaneseq
    %v8817 = vshrl.u32 %v8816, 7
    %v8818 = vsub.s32 %v8815, %v8817
    %v8819 = vrot.slane %v8805, %v8818
    %v8820 = vcombine.low %v8731, %v8735
    %v8821 = vcombine.high %v8731, %v8735
    %v8823 = vunpack.c.l.s4 1983009808
    %v8824 = vunpack.c.0.s8 %v8823
    %v8825 = vlaneseq
    %v8826 = vshrl.u32 %v8825, 7
    %v8827 = vsub.s32 %v8824, %v8826
    %v8828 = vrot.slane %v8820, %v8827
    %v8830 = vunpack.c.l.s4 1983009808
    %v8831 = vunpack.c.0.s8 %v8830
    %v8832 = vlaneseq
    %v8833 = vshrl.u32 %v8832, 7
    %v8834 = vsub.s32 %v8831, %v8833
    %v8835 = vrot.slane %v8821, %v8834
    %v8836 = vcombine.low %v8812, %v8828
    %v8837 = vcombine.high %v8812, %v8828
    %v8839 = vunpack.c.l.s4 1934713408
    %v8840 = vunpack.c.0.s8 %v8839
    %v8841 = vlaneseq
    %v8842 = vshrl.u32 %v8841, 7
    %v8843 = vsub.s32 %v8840, %v8842
    %v8844 = vrot.slane %v8836, %v8843
    %v8846 = vunpack.c.l.s4 1934713408
    %v8847 = vunpack.c.0.s8 %v8846
    %v8848 = vlaneseq
    %v8849 = vshrl.u32 %v8848, 7
    %v8850 = vsub.s32 %v8847, %v8849
    %v8851 = vrot.slane %v8837, %v8850
    %v8852 = vcombine.low %v8819, %v8835
    %v8853 = vcombine.high %v8819, %v8835
    %v8855 = vunpack.c.l.s4 1934713408
    %v8856 = vunpack.c.0.s8 %v8855
    %v8857 = vlaneseq
    %v8858 = vshrl.u32 %v8857, 7
    %v8859 = vsub.s32 %v8856, %v8858
    %v8860 = vrot.slane %v8852, %v8859
    %v8862 = vunpack.c.l.s4 1934713408
    %v8863 = vunpack.c.0.s8 %v8862
    %v8864 = vlaneseq
    %v8865 = vshrl.u32 %v8864, 7
    %v8866 = vsub.s32 %v8863, %v8865
    %v8867 = vrot.slane %v8853, %v8866
    %v8868 = vcombine.high %v8844, 0.0
    %v8869 = vcombine.high %v8851, 0.0
    %v8870 = vcombine.high %v8860, 0.0
    %v8871 = vcombine.high %v8867, 0.0
    %8873 = vrot.lane.b32.xlu0 %v8800, 64
    %v8874 = vpop.permute.xlu0 %8873
    %8877 = vrot.lane.b32.xlu0 %v8801, 64
    %v8878 = vpop.permute.xlu0 %8877
    %8881 = vrot.lane.b32.xlu0 %v8802, 64
    %v8882 = vpop.permute.xlu0 %8881
    %8885 = vrot.lane.b32.xlu0 %v8803, 64
    %v8886 = vpop.permute.xlu0 %8885
    %8889 = vrot.lane.b32.xlu0 %v8868, 64
    %v8890 = vpop.permute.xlu0 %8889
    %8893 = vrot.lane.b32.xlu0 %v8869, 64
    %v8894 = vpop.permute.xlu0 %8893
    %8897 = vrot.lane.b32.xlu0 %v8870, 64
    %v8898 = vpop.permute.xlu0 %8897
    %8901 = vrot.lane.b32.xlu0 %v8871, 64
    %v8902 = vpop.permute.xlu0 %8901
    %vm8904 = vcmask 523264
    %v8905 = vsel %vm8904, %v8776, %v8874
    %v8906 = vsel %vm8904, %v8783, %v8878
    %v8907 = vsel %vm8904, %v8792, %v8882
    %v8908 = vsel %vm8904, %v8799, %v8886
    %v8909 = vsel %vm8904, %v8844, %v8890
    %v8910 = vsel %vm8904, %v8851, %v8894
    %v8911 = vsel %vm8904, %v8860, %v8898
    %v8912 = vsel %vm8904, %v8867, %v8902
    %v8921 = vcombine.low %v8905, %v8906
    %v8922 = vcombine.low %v8907, %v8908
    %v8923 = vcombine.low %v8909, %v8910
    %v8924 = vcombine.low %v8911, %v8912
    %8929 = vst [vmem:[#allocation5] sm:$0xff] %v8921
    %8930 = vst [vmem:[#allocation5 + $0x8] sm:$0xff] %v8922
    %8931 = vst [vmem:[#allocation5 + $0x10] sm:$0xff] %v8923
    %8932 = vst [vmem:[#allocation5 + $0x18] sm:$0xff] %v8924
    // Predicated region
    $region10: #{tpu_custom_call.1} parent=1 // pred_check
      _
    $region11: #{tpu_custom_call.1} parent=1 // pred_check_branch
      %8934 = sbr.rel (0) target = $region13
    $region12: #{tpu_custom_call.1} parent=1 // pred_region
      %s8936 = ssub.s32 512, 512
      %8937 = vsyncadd [#allocation4], %s8936
      %s8939 = sshll.u32 [#allocation5], 4
      %s8940 = int_to_ptr.vmem [resolvable:$true] %s8939
      %8942 = dma.vmem_to_hbm [thread:$0]  %s8940, 512, %s1, [#allocation4]
    $region13: #{tpu_custom_call.1} parent=1 // pred_fallthru
      _
    // Predicated region
    $region14: #{tpu_custom_call.1} parent=1 // pred_check
      _
    $region15: #{tpu_custom_call.1} parent=1 // pred_check_branch
      %8944 = sbr.rel (0) target = $region17
    $region16: #{tpu_custom_call.1} parent=1 // pred_region
      %8945 = dma.done [#allocation4], 512
    $region17: #{tpu_custom_call.1} parent=1 // pred_fallthru
      _
    %8946 = vsyncpa [#allocation3], 1
    %8947 = vsyncpa [#allocation4], 1

</llo_original>
